<compile_context>
chip_gen: v7x
topology: tpu7x:2x2x1
jax: 0.10.0
libtpu: 0.0.40
codegen_flags: <defaults>
</compile_context>

<pallas_src>
import functools

import numpy as np

import jax
import jax.numpy as jnp
from jax.experimental import pallas as pl
from jax.experimental.pallas import tpu as pltpu


_VMEM_LIMIT = 32 * 1024 * 1024


# ---------------------------------------------------------------------------
# Kernel 1: fused conv1 -> conv2 -> conv3 on the 8x8 super-pixel grid.
# ---------------------------------------------------------------------------
def _conv_stack_kernel(x_ref, w1_ref, b1_ref, w2_ref, b2_ref, w3_ref, b3_ref,
                       out_ref, h1_ref, h2_ref):
    """One batch element per grid step.

    x_ref  : (9, 9, 64)  f32  phase-packed input, zero row 0 / col 0 (top-left pad)
    wK_ref : (4*CinS, CoutS) bf16  the 4 taps stacked along rows (t = 2*dY + dX)
    bK_ref : (1, CoutS)  f32
    out_ref: (64, 128)   f32  conv3 output; row = h*8 + w, col = channel
    h1_ref : (9, 9, 512) f32  scratch: padded super-grid activation after conv1
    h2_ref : (9, 9, 256) f32  scratch: after conv2
    """

    def super_conv(src_ref, w_ref, b_ref, cin_s):
        # 2x2 stride-1 conv over the padded 9x9 super grid -> (64, cout_s) f32.
        acc = None
        for t, (dy, dx) in enumerate(((0, 0), (0, 1), (1, 0), (1, 1))):
            a = src_ref[dy:dy + 8, dx:dx + 8, :].reshape(64, cin_s)
            part = jnp.dot(a.astype(jnp.bfloat16),          # bf16 MXU operands
                           w_ref[t * cin_s:(t + 1) * cin_s, :],
                           preferred_element_type=jnp.float32)
            acc = part if acc is None else acc + part
        return jnp.maximum(acc + b_ref[...], 0.0)            # bias + ReLU (f32)

    # conv1: 64 phase-channels (8x8 phases x 1 ch) -> 512 (4x4 phases x 32 ch)
    h1 = super_conv(x_ref, w1_ref, b1_ref, 64)
    h1_ref[...] = jnp.zeros_like(h1_ref)                     # zero top/left pad
    h1_ref[1:9, 1:9, :] = h1.reshape(8, 8, 512)

    # conv2: 512 -> 256 (2x2 phases x 64 ch)
    h2 = super_conv(h1_ref, w2_ref, b2_ref, 512)
    h2_ref[...] = jnp.zeros_like(h2_ref)
    h2_ref[1:9, 1:9, :] = h2.reshape(8, 8, 256)

    # conv3: 256 -> 128 channels (phases now trivial); rows are (h*8 + w).
    out_ref[...] = super_conv(h2_ref, w3_ref, b3_ref, 256)


# ---------------------------------------------------------------------------
# Kernel 2: fused fc_mu + fc_logvar (single GEMM, N padded to 128 lanes).
# ---------------------------------------------------------------------------
def _fc_heads_kernel(a_ref, w_ref, b_ref, o_ref):
    acc = jnp.dot(a_ref[...].astype(jnp.bfloat16), w_ref[...],
                  preferred_element_type=jnp.float32)
    o_ref[...] = acc + b_ref[...]


# ---------------------------------------------------------------------------
# Forward pass (wrapper around the two pallas_calls).
# ---------------------------------------------------------------------------
def _phase_pack_input(x_bhw):
    """[B, 64, 64] -> [B, 9, 9, 64] padded super-grid (phase index = p*8 + q)."""
    B = x_bhw.shape[0]
    r0 = (x_bhw.reshape(B, 8, 8, 8, 8)          # (b, I, p, J, q)
          .transpose(0, 1, 3, 2, 4)             # (b, I, J, p, q)
          .reshape(B, 8, 8, 64))
    return jnp.pad(r0, ((0, 0), (1, 0), (1, 0), (0, 0)))


def encoder_forward(prep, x, *, latent_dim):
    B, C, H, W = x.shape
    assert C == 1 and H == 64 and W == 64, "Encoder expects [B, 1, 64, 64] input"

    r0 = _phase_pack_input(x.astype(jnp.float32).reshape(B, 64, 64))

    w1, b1 = prep["w1"], prep["b1"]
    w2, b2 = prep["w2"], prep["b2"]
    w3, b3 = prep["w3"], prep["b3"]

    feat = pl.pallas_call(
        _conv_stack_kernel,
        out_shape=jax.ShapeDtypeStruct((B, 64, 128), jnp.float32),
        grid=(B,),
        in_specs=[
            pl.BlockSpec((None, 9, 9, 64), lambda b: (b, 0, 0, 0)),
            pl.BlockSpec(w1.shape, lambda b: (0, 0)),
            pl.BlockSpec(b1.shape, lambda b: (0, 0)),
            pl.BlockSpec(w2.shape, lambda b: (0, 0)),
            pl.BlockSpec(b2.shape, lambda b: (0, 0)),
            pl.BlockSpec(w3.shape, lambda b: (0, 0)),
            pl.BlockSpec(b3.shape, lambda b: (0, 0)),
        ],
        out_specs=pl.BlockSpec((None, 64, 128), lambda b: (b, 0, 0)),
        scratch_shapes=[
            pltpu.VMEM((9, 9, 512), jnp.float32),
            pltpu.VMEM((9, 9, 256), jnp.float32),
        ],
        compiler_params=pltpu.CompilerParams(
            dimension_semantics=("parallel",),
            vmem_limit_bytes=_VMEM_LIMIT),
    )(r0, w1, b1, w2, b2, w3, b3)

    # PyTorch flattens NCHW; the fc weight columns were permuted once at prep
    # time to the kernel's (h, w, c) feature order, so a plain reshape suffices.
    feat2d = feat.reshape(B, 64 * 128)

    wfc, bfc = prep["wfc"], prep["bfc"]
    npad = wfc.shape[1]
    fc_out = pl.pallas_call(
        _fc_heads_kernel,
        out_shape=jax.ShapeDtypeStruct((B, npad), jnp.float32),
        grid=(1,),
        in_specs=[
            pl.BlockSpec((B, 64 * 128), lambda i: (0, 0)),
            pl.BlockSpec(wfc.shape, lambda i: (0, 0)),
            pl.BlockSpec(bfc.shape, lambda i: (0, 0)),
        ],
        out_specs=pl.BlockSpec((B, npad), lambda i: (0, 0)),
        compiler_params=pltpu.CompilerParams(
            dimension_semantics=("arbitrary",),
            vmem_limit_bytes=_VMEM_LIMIT),
    )(feat2d, wfc, bfc)

    mu = fc_out[:, :latent_dim]
    logvar = fc_out[:, latent_dim:2 * latent_dim]
    return mu, logvar


# ---------------------------------------------------------------------------
# One-time parameter re-packing (runs outside jit, plain numpy).
# ---------------------------------------------------------------------------
def _superconv_weight(w_conv, f_out):
    """PyTorch conv weight [Cout, Cin, 3, 3] -> 2x2 'super conv' weight of shape
    [4 * f_in*f_in*Cin, f_out*f_out*Cout] on the 8x8 super-pixel grid
    (f_in = 2*f_out; the 4 taps are stacked along rows as t = 2*dY + dX)."""
    w = np.asarray(w_conv, np.float32)
    cout, cin = int(w.shape[0]), int(w.shape[1])
    f_in = 2 * f_out
    cin_s, cout_s = f_in * f_in * cin, f_out * f_out * cout
    wt = np.transpose(w, (2, 3, 1, 0))                       # [3, 3, cin, cout]
    ws = np.zeros((2, 2, cin_s, cout_s), np.float32)
    for p in range(f_out):
        for dy in range(3):
            ty = 2 * p + dy - 1
            d_y, pp = (1, ty) if ty >= 0 else (0, f_in - 1)
            for q in range(f_out):
                for dx in range(3):
                    tx = 2 * q + dx - 1
                    d_x, qq = (1, tx) if tx >= 0 else (0, f_in - 1)
                    ci = (pp * f_in + qq) * cin
                    co = (p * f_out + q) * cout
                    ws[d_y, d_x, ci:ci + cin, co:co + cout] = wt[dy, dx]
    return ws.reshape(4 * cin_s, cout_s)


def _superconv_bias(b_conv, f_out):
    b = np.asarray(b_conv, np.float32)
    return np.tile(b, f_out * f_out).reshape(1, -1)


def _fc_weight_cols(w_fc):
    """PyTorch fc weight [L, 128*8*8] (input index c*64 + h*8 + w) -> matrix
    [8192, L] whose row index is (h*8 + w)*128 + c (the kernel's layout)."""
    w = np.asarray(w_fc, np.float32)
    L = int(w.shape[0])
    w = w.reshape(L, 128, 8, 8)                              # (n, c, h, w)
    w = np.transpose(w, (2, 3, 1, 0))                        # (h, w, c, n)
    return w.reshape(64 * 128, L)


def prepare_encoder_params(params):
    """One-time re-packing of PyTorch-layout parameters for the kernels."""
    wmu = _fc_weight_cols(params["fc_mu_w"])
    wlv = _fc_weight_cols(params["fc_logvar_w"])
    L = wmu.shape[1]
    npad = max(128, ((2 * L + 127) // 128) * 128)            # lane-dense fused head
    wfc = np.zeros((64 * 128, npad), np.float32)
    wfc[:, :L] = wmu
    wfc[:, L:2 * L] = wlv
    bfc = np.zeros((1, npad), np.float32)
    bfc[0, :L] = np.asarray(params["fc_mu_b"], np.float32)
    bfc[0, L:2 * L] = np.asarray(params["fc_logvar_b"], np.float32)

    return {
        "w1": jnp.asarray(_superconv_weight(params["conv1_w"], 4), jnp.bfloat16),
        "b1": jnp.asarray(_superconv_bias(params["conv1_b"], 4), jnp.float32),
        "w2": jnp.asarray(_superconv_weight(params["conv2_w"], 2), jnp.bfloat16),
        "b2": jnp.asarray(_superconv_bias(params["conv2_b"], 2), jnp.float32),
        "w3": jnp.asarray(_superconv_weight(params["conv3_w"], 1), jnp.bfloat16),
        "b3": jnp.asarray(_superconv_bias(params["conv3_b"], 1), jnp.float32),
        "wfc": jnp.asarray(wfc, jnp.bfloat16),
        "bfc": jnp.asarray(bfc, jnp.float32),
    }


# ---------------------------------------------------------------------------
# Deterministic parameter init (PyTorch layouts) and plain-XLA reference.
# ---------------------------------------------------------------------------
def init_params(key, latent_dim):
    ks = jax.random.split(key, 10)

    def conv_w(k, cout, cin):
        return jax.random.normal(k, (cout, cin, 3, 3), jnp.float32) / jnp.sqrt(cin * 9)

    def lin_w(k, out_f, in_f):
        return jax.random.normal(k, (out_f, in_f), jnp.float32) / jnp.sqrt(in_f)

    feat = 128 * 8 * 8
    return {
        "conv1_w": conv_w(ks[0], 32, 1),
        "conv1_b": 0.01 * jax.random.normal(ks[1], (32,), jnp.float32),
        "conv2_w": conv_w(ks[2], 64, 32),
        "conv2_b": 0.01 * jax.random.normal(ks[3], (64,), jnp.float32),
        "conv3_w": conv_w(ks[4], 128, 64),
        "conv3_b": 0.01 * jax.random.normal(ks[5], (128,), jnp.float32),
        "fc_mu_w": lin_w(ks[6], latent_dim, feat),
        "fc_mu_b": 0.01 * jax.random.normal(ks[7], (latent_dim,), jnp.float32),
        "fc_logvar_w": lin_w(ks[8], latent_dim, feat),
        "fc_logvar_b": 0.01 * jax.random.normal(ks[9], (latent_dim,), jnp.float32),
    }


def reference_forward(params, x):
    def conv(h, w, b):
        y = jax.lax.conv_general_dilated(
            h, w, window_strides=(2, 2), padding=((1, 1), (1, 1)),
            dimension_numbers=("NCHW", "OIHW", "NCHW"))
        return jax.nn.relu(y + b.reshape(1, -1, 1, 1))

    h = conv(x, params["conv1_w"], params["conv1_b"])
    h = conv(h, params["conv2_w"], params["conv2_b"])
    h = conv(h, params["conv3_w"], params["conv3_b"])
    f = h.reshape(x.shape[0], -1)
    mu = f @ params["fc_mu_w"].T + params["fc_mu_b"]
    logvar = f @ params["fc_logvar_w"].T + params["fc_logvar_b"]
    return mu, logvar


if __name__ == "__main__":
    latent_dim = 16
    batch = 2

    key = jax.random.PRNGKey(0)
    k_params, k_x = jax.random.split(key)
    params = init_params(k_params, latent_dim)
    prep = prepare_encoder_params(params)           # one-time weight re-pack

    # input consistent with the module's fc layers: [B, 1, 64, 64] NCHW
    x = jax.random.normal(k_x, (batch, 1, 64, 64), jnp.float32)

    fwd = jax.jit(functools.partial(encoder_forward, latent_dim=latent_dim))
    mu, logvar = fwd(prep, x)
    jax.block_until_ready((mu, logvar))

    assert mu.shape == (batch, latent_dim)
    assert logvar.shape == (batch, latent_dim)

    # numerical check vs a plain-XLA reference (bf16 MXU operands -> loose tol)
    mu_ref, logvar_ref = reference_forward(params, x)
    assert jnp.allclose(mu, mu_ref, rtol=5e-2, atol=5e-2), \
        float(jnp.max(jnp.abs(mu - mu_ref)))
    assert jnp.allclose(logvar, logvar_ref, rtol=5e-2, atol=5e-2), \
        float(jnp.max(jnp.abs(logvar - logvar_ref)))

    print("KERNEL_OK")
</pallas_src>

<mosaic_0001>
module attributes {stable_mosaic.version = 11 : i64} {
  func.func @_conv_stack_kernel(%arg0: i32, %arg1: memref<1x9x9x64xf32, #tpu.memory_space<vmem>>, %arg2: memref<256x512xbf16, #tpu.memory_space<vmem>>, %arg3: memref<1x512xf32, #tpu.memory_space<vmem>>, %arg4: memref<2048x256xbf16, #tpu.memory_space<vmem>>, %arg5: memref<1x256xf32, #tpu.memory_space<vmem>>, %arg6: memref<1024x128xbf16, #tpu.memory_space<vmem>>, %arg7: memref<1x128xf32, #tpu.memory_space<vmem>>, %arg8: memref<1x64x128xf32, #tpu.memory_space<vmem>>, %arg9: memref<9x9x512xf32, #tpu.memory_space<vmem>>, %arg10: memref<9x9x256xf32, #tpu.memory_space<vmem>>) attributes {dimension_semantics = [#tpu.dimension_semantics<parallel>], iteration_bounds = array<i64: 2>, scalar_prefetch = 0 : i64, scratch_operands = 2 : i64, tpu.core_type = #tpu.core_type<tc>, window_params = [{transform_indices = @transform_0, window_bounds = array<i64: 1, 9, 9, 64>}, {pipeline_mode = #tpu.pipeline_mode<synchronous>, transform_indices = @transform_1, window_bounds = array<i64: 256, 512>}, {pipeline_mode = #tpu.pipeline_mode<synchronous>, transform_indices = @transform_2, window_bounds = array<i64: 1, 512>}, {pipeline_mode = #tpu.pipeline_mode<synchronous>, transform_indices = @transform_3, window_bounds = array<i64: 2048, 256>}, {pipeline_mode = #tpu.pipeline_mode<synchronous>, transform_indices = @transform_4, window_bounds = array<i64: 1, 256>}, {pipeline_mode = #tpu.pipeline_mode<synchronous>, transform_indices = @transform_5, window_bounds = array<i64: 1024, 128>}, {pipeline_mode = #tpu.pipeline_mode<synchronous>, transform_indices = @transform_6, window_bounds = array<i64: 1, 128>}, {transform_indices = @transform_7, window_bounds = array<i64: 1, 64, 128>}]} {
    %c0 = arith.constant 0 : index
    %c0_0 = arith.constant 0 : index
    %c0_1 = arith.constant 0 : index
    %c0_2 = arith.constant 0 : index
    %0 = vector.load %arg1[%c0, %c0_0, %c0_1, %c0_2] : memref<1x9x9x64xf32, #tpu.memory_space<vmem>>, vector<1x8x8x64xf32>
    %1 = vector.shape_cast %0 : vector<1x8x8x64xf32> to vector<8x8x64xf32>
    %2 = vector.shape_cast %1 : vector<8x8x64xf32> to vector<64x64xf32>
    %3 = arith.truncf %2 : vector<64x64xf32> to vector<64x64xbf16>
    %c0_3 = arith.constant 0 : index
    %c0_4 = arith.constant 0 : index
    %4 = vector.load %arg2[%c0_3, %c0_4] : memref<256x512xbf16, #tpu.memory_space<vmem>>, vector<64x512xbf16>
    %cst = arith.constant dense<0.000000e+00> : vector<64x512xf32>
    %5 = tpu.matmul %3, %4, %cst {dimension_numbers = #tpu.dot_dimension_numbers<[1], [0], [0], [1], [0, 0, 1, 1], [], []>} : vector<64x64xbf16>, vector<64x512xbf16>, vector<64x512xf32> -> vector<64x512xf32>
    %c0_5 = arith.constant 0 : index
    %c0_6 = arith.constant 0 : index
    %c1 = arith.constant 1 : index
    %c0_7 = arith.constant 0 : index
    %6 = vector.load %arg1[%c0_5, %c0_6, %c1, %c0_7] : memref<1x9x9x64xf32, #tpu.memory_space<vmem>>, vector<1x8x8x64xf32>
    %7 = vector.shape_cast %6 : vector<1x8x8x64xf32> to vector<8x8x64xf32>
    %8 = vector.shape_cast %7 : vector<8x8x64xf32> to vector<64x64xf32>
    %9 = arith.truncf %8 : vector<64x64xf32> to vector<64x64xbf16>
    %c64 = arith.constant 64 : index
    %c0_8 = arith.constant 0 : index
    %10 = vector.load %arg2[%c64, %c0_8] : memref<256x512xbf16, #tpu.memory_space<vmem>>, vector<64x512xbf16>
    %cst_9 = arith.constant dense<0.000000e+00> : vector<64x512xf32>
    %11 = tpu.matmul %9, %10, %cst_9 {dimension_numbers = #tpu.dot_dimension_numbers<[1], [0], [0], [1], [0, 0, 1, 1], [], []>} : vector<64x64xbf16>, vector<64x512xbf16>, vector<64x512xf32> -> vector<64x512xf32>
    %12 = arith.addf %5, %11 : vector<64x512xf32>
    %c0_10 = arith.constant 0 : index
    %c1_11 = arith.constant 1 : index
    %c0_12 = arith.constant 0 : index
    %c0_13 = arith.constant 0 : index
    %13 = vector.load %arg1[%c0_10, %c1_11, %c0_12, %c0_13] : memref<1x9x9x64xf32, #tpu.memory_space<vmem>>, vector<1x8x8x64xf32>
    %14 = vector.shape_cast %13 : vector<1x8x8x64xf32> to vector<8x8x64xf32>
    %15 = vector.shape_cast %14 : vector<8x8x64xf32> to vector<64x64xf32>
    %16 = arith.truncf %15 : vector<64x64xf32> to vector<64x64xbf16>
    %c128 = arith.constant 128 : index
    %c0_14 = arith.constant 0 : index
    %17 = vector.load %arg2[%c128, %c0_14] : memref<256x512xbf16, #tpu.memory_space<vmem>>, vector<64x512xbf16>
    %cst_15 = arith.constant dense<0.000000e+00> : vector<64x512xf32>
    %18 = tpu.matmul %16, %17, %cst_15 {dimension_numbers = #tpu.dot_dimension_numbers<[1], [0], [0], [1], [0, 0, 1, 1], [], []>} : vector<64x64xbf16>, vector<64x512xbf16>, vector<64x512xf32> -> vector<64x512xf32>
    %19 = arith.addf %12, %18 : vector<64x512xf32>
    %c0_16 = arith.constant 0 : index
    %c1_17 = arith.constant 1 : index
    %c1_18 = arith.constant 1 : index
    %c0_19 = arith.constant 0 : index
    %20 = vector.load %arg1[%c0_16, %c1_17, %c1_18, %c0_19] : memref<1x9x9x64xf32, #tpu.memory_space<vmem>>, vector<1x8x8x64xf32>
    %21 = vector.shape_cast %20 : vector<1x8x8x64xf32> to vector<8x8x64xf32>
    %22 = vector.shape_cast %21 : vector<8x8x64xf32> to vector<64x64xf32>
    %23 = arith.truncf %22 : vector<64x64xf32> to vector<64x64xbf16>
    %c192 = arith.constant 192 : index
    %c0_20 = arith.constant 0 : index
    %24 = vector.load %arg2[%c192, %c0_20] : memref<256x512xbf16, #tpu.memory_space<vmem>>, vector<64x512xbf16>
    %cst_21 = arith.constant dense<0.000000e+00> : vector<64x512xf32>
    %25 = tpu.matmul %23, %24, %cst_21 {dimension_numbers = #tpu.dot_dimension_numbers<[1], [0], [0], [1], [0, 0, 1, 1], [], []>} : vector<64x64xbf16>, vector<64x512xbf16>, vector<64x512xf32> -> vector<64x512xf32>
    %26 = arith.addf %19, %25 : vector<64x512xf32>
    %c0_22 = arith.constant 0 : index
    %c0_23 = arith.constant 0 : index
    %27 = vector.load %arg3[%c0_22, %c0_23] : memref<1x512xf32, #tpu.memory_space<vmem>>, vector<1x512xf32>
    %28 = vector.broadcast %27 : vector<1x512xf32> to vector<64x512xf32>
    %29 = arith.addf %26, %28 : vector<64x512xf32>
    %cst_24 = arith.constant 0.000000e+00 : f32
    %30 = vector.broadcast %cst_24 : f32 to vector<64x512xf32>
    %31 = arith.maximumf %29, %30 : vector<64x512xf32>
    %cst_25 = arith.constant 0.000000e+00 : f32
    %32 = vector.broadcast %cst_25 : f32 to vector<9x9x512xf32>
    %c0_26 = arith.constant 0 : index
    %c0_27 = arith.constant 0 : index
    %c0_28 = arith.constant 0 : index
    %33 = vector.load %arg9[%c0_26, %c0_27, %c0_28] : memref<9x9x512xf32, #tpu.memory_space<vmem>>, vector<9x9x512xf32>
    tpu.vector_store %arg9[%c0_26, %c0_27, %c0_28], %32 {strides = array<i32>} : memref<9x9x512xf32, #tpu.memory_space<vmem>>, vector<9x9x512xf32>,
    %34 = vector.shape_cast %31 : vector<64x512xf32> to vector<8x8x512xf32>
    %c1_29 = arith.constant 1 : index
    %c1_30 = arith.constant 1 : index
    %c0_31 = arith.constant 0 : index
    %35 = vector.load %arg9[%c1_29, %c1_30, %c0_31] : memref<9x9x512xf32, #tpu.memory_space<vmem>>, vector<8x8x512xf32>
    tpu.vector_store %arg9[%c1_29, %c1_30, %c0_31], %34 {strides = array<i32>} : memref<9x9x512xf32, #tpu.memory_space<vmem>>, vector<8x8x512xf32>,
    %c0_32 = arith.constant 0 : index
    %c0_33 = arith.constant 0 : index
    %c0_34 = arith.constant 0 : index
    %36 = vector.load %arg9[%c0_32, %c0_33, %c0_34] : memref<9x9x512xf32, #tpu.memory_space<vmem>>, vector<8x8x512xf32>
    %37 = vector.shape_cast %36 : vector<8x8x512xf32> to vector<64x512xf32>
    %38 = arith.truncf %37 : vector<64x512xf32> to vector<64x512xbf16>
    %c0_35 = arith.constant 0 : index
    %c0_36 = arith.constant 0 : index
    %39 = vector.load %arg4[%c0_35, %c0_36] : memref<2048x256xbf16, #tpu.memory_space<vmem>>, vector<512x256xbf16>
    %cst_37 = arith.constant dense<0.000000e+00> : vector<64x256xf32>
    %40 = tpu.matmul %38, %39, %cst_37 {dimension_numbers = #tpu.dot_dimension_numbers<[1], [0], [0], [1], [0, 0, 1, 1], [], []>} : vector<64x512xbf16>, vector<512x256xbf16>, vector<64x256xf32> -> vector<64x256xf32>
    %c0_38 = arith.constant 0 : index
    %c1_39 = arith.constant 1 : index
    %c0_40 = arith.constant 0 : index
    %41 = vector.load %arg9[%c0_38, %c1_39, %c0_40] : memref<9x9x512xf32, #tpu.memory_space<vmem>>, vector<8x8x512xf32>
    %42 = vector.shape_cast %41 : vector<8x8x512xf32> to vector<64x512xf32>
    %43 = arith.truncf %42 : vector<64x512xf32> to vector<64x512xbf16>
    %c512 = arith.constant 512 : index
    %c0_41 = arith.constant 0 : index
    %44 = vector.load %arg4[%c512, %c0_41] : memref<2048x256xbf16, #tpu.memory_space<vmem>>, vector<512x256xbf16>
    %cst_42 = arith.constant dense<0.000000e+00> : vector<64x256xf32>
    %45 = tpu.matmul %43, %44, %cst_42 {dimension_numbers = #tpu.dot_dimension_numbers<[1], [0], [0], [1], [0, 0, 1, 1], [], []>} : vector<64x512xbf16>, vector<512x256xbf16>, vector<64x256xf32> -> vector<64x256xf32>
    %46 = arith.addf %40, %45 : vector<64x256xf32>
    %c1_43 = arith.constant 1 : index
    %c0_44 = arith.constant 0 : index
    %c0_45 = arith.constant 0 : index
    %47 = vector.load %arg9[%c1_43, %c0_44, %c0_45] : memref<9x9x512xf32, #tpu.memory_space<vmem>>, vector<8x8x512xf32>
    %48 = vector.shape_cast %47 : vector<8x8x512xf32> to vector<64x512xf32>
    %49 = arith.truncf %48 : vector<64x512xf32> to vector<64x512xbf16>
    %c1024 = arith.constant 1024 : index
    %c0_46 = arith.constant 0 : index
    %50 = vector.load %arg4[%c1024, %c0_46] : memref<2048x256xbf16, #tpu.memory_space<vmem>>, vector<512x256xbf16>
    %cst_47 = arith.constant dense<0.000000e+00> : vector<64x256xf32>
    %51 = tpu.matmul %49, %50, %cst_47 {dimension_numbers = #tpu.dot_dimension_numbers<[1], [0], [0], [1], [0, 0, 1, 1], [], []>} : vector<64x512xbf16>, vector<512x256xbf16>, vector<64x256xf32> -> vector<64x256xf32>
    %52 = arith.addf %46, %51 : vector<64x256xf32>
    %c1_48 = arith.constant 1 : index
    %c1_49 = arith.constant 1 : index
    %c0_50 = arith.constant 0 : index
    %53 = vector.load %arg9[%c1_48, %c1_49, %c0_50] : memref<9x9x512xf32, #tpu.memory_space<vmem>>, vector<8x8x512xf32>
    %54 = vector.shape_cast %53 : vector<8x8x512xf32> to vector<64x512xf32>
    %55 = arith.truncf %54 : vector<64x512xf32> to vector<64x512xbf16>
    %c1536 = arith.constant 1536 : index
    %c0_51 = arith.constant 0 : index
    %56 = vector.load %arg4[%c1536, %c0_51] : memref<2048x256xbf16, #tpu.memory_space<vmem>>, vector<512x256xbf16>
    %cst_52 = arith.constant dense<0.000000e+00> : vector<64x256xf32>
    %57 = tpu.matmul %55, %56, %cst_52 {dimension_numbers = #tpu.dot_dimension_numbers<[1], [0], [0], [1], [0, 0, 1, 1], [], []>} : vector<64x512xbf16>, vector<512x256xbf16>, vector<64x256xf32> -> vector<64x256xf32>
    %58 = arith.addf %52, %57 : vector<64x256xf32>
    %c0_53 = arith.constant 0 : index
    %c0_54 = arith.constant 0 : index
    %59 = vector.load %arg5[%c0_53, %c0_54] : memref<1x256xf32, #tpu.memory_space<vmem>>, vector<1x256xf32>
    %60 = vector.broadcast %59 : vector<1x256xf32> to vector<64x256xf32>
    %61 = arith.addf %58, %60 : vector<64x256xf32>
    %cst_55 = arith.constant 0.000000e+00 : f32
    %62 = vector.broadcast %cst_55 : f32 to vector<64x256xf32>
    %63 = arith.maximumf %61, %62 : vector<64x256xf32>
    %cst_56 = arith.constant 0.000000e+00 : f32
    %64 = vector.broadcast %cst_56 : f32 to vector<9x9x256xf32>
    %c0_57 = arith.constant 0 : index
    %c0_58 = arith.constant 0 : index
    %c0_59 = arith.constant 0 : index
    %65 = vector.load %arg10[%c0_57, %c0_58, %c0_59] : memref<9x9x256xf32, #tpu.memory_space<vmem>>, vector<9x9x256xf32>
    tpu.vector_store %arg10[%c0_57, %c0_58, %c0_59], %64 {strides = array<i32>} : memref<9x9x256xf32, #tpu.memory_space<vmem>>, vector<9x9x256xf32>,
    %66 = vector.shape_cast %63 : vector<64x256xf32> to vector<8x8x256xf32>
    %c1_60 = arith.constant 1 : index
    %c1_61 = arith.constant 1 : index
    %c0_62 = arith.constant 0 : index
    %67 = vector.load %arg10[%c1_60, %c1_61, %c0_62] : memref<9x9x256xf32, #tpu.memory_space<vmem>>, vector<8x8x256xf32>
    tpu.vector_store %arg10[%c1_60, %c1_61, %c0_62], %66 {strides = array<i32>} : memref<9x9x256xf32, #tpu.memory_space<vmem>>, vector<8x8x256xf32>,
    %c0_63 = arith.constant 0 : index
    %c0_64 = arith.constant 0 : index
    %c0_65 = arith.constant 0 : index
    %68 = vector.load %arg10[%c0_63, %c0_64, %c0_65] : memref<9x9x256xf32, #tpu.memory_space<vmem>>, vector<8x8x256xf32>
    %69 = vector.shape_cast %68 : vector<8x8x256xf32> to vector<64x256xf32>
    %70 = arith.truncf %69 : vector<64x256xf32> to vector<64x256xbf16>
    %c0_66 = arith.constant 0 : index
    %c0_67 = arith.constant 0 : index
    %71 = vector.load %arg6[%c0_66, %c0_67] : memref<1024x128xbf16, #tpu.memory_space<vmem>>, vector<256x128xbf16>
    %cst_68 = arith.constant dense<0.000000e+00> : vector<64x128xf32>
    %72 = tpu.matmul %70, %71, %cst_68 {dimension_numbers = #tpu.dot_dimension_numbers<[1], [0], [0], [1], [0, 0, 1, 1], [], []>} : vector<64x256xbf16>, vector<256x128xbf16>, vector<64x128xf32> -> vector<64x128xf32>
    %c0_69 = arith.constant 0 : index
    %c1_70 = arith.constant 1 : index
    %c0_71 = arith.constant 0 : index
    %73 = vector.load %arg10[%c0_69, %c1_70, %c0_71] : memref<9x9x256xf32, #tpu.memory_space<vmem>>, vector<8x8x256xf32>
    %74 = vector.shape_cast %73 : vector<8x8x256xf32> to vector<64x256xf32>
    %75 = arith.truncf %74 : vector<64x256xf32> to vector<64x256xbf16>
    %c256 = arith.constant 256 : index
    %c0_72 = arith.constant 0 : index
    %76 = vector.load %arg6[%c256, %c0_72] : memref<1024x128xbf16, #tpu.memory_space<vmem>>, vector<256x128xbf16>
    %cst_73 = arith.constant dense<0.000000e+00> : vector<64x128xf32>
    %77 = tpu.matmul %75, %76, %cst_73 {dimension_numbers = #tpu.dot_dimension_numbers<[1], [0], [0], [1], [0, 0, 1, 1], [], []>} : vector<64x256xbf16>, vector<256x128xbf16>, vector<64x128xf32> -> vector<64x128xf32>
    %78 = arith.addf %72, %77 : vector<64x128xf32>
    %c1_74 = arith.constant 1 : index
    %c0_75 = arith.constant 0 : index
    %c0_76 = arith.constant 0 : index
    %79 = vector.load %arg10[%c1_74, %c0_75, %c0_76] : memref<9x9x256xf32, #tpu.memory_space<vmem>>, vector<8x8x256xf32>
    %80 = vector.shape_cast %79 : vector<8x8x256xf32> to vector<64x256xf32>
    %81 = arith.truncf %80 : vector<64x256xf32> to vector<64x256xbf16>
    %c512_77 = arith.constant 512 : index
    %c0_78 = arith.constant 0 : index
    %82 = vector.load %arg6[%c512_77, %c0_78] : memref<1024x128xbf16, #tpu.memory_space<vmem>>, vector<256x128xbf16>
    %cst_79 = arith.constant dense<0.000000e+00> : vector<64x128xf32>
    %83 = tpu.matmul %81, %82, %cst_79 {dimension_numbers = #tpu.dot_dimension_numbers<[1], [0], [0], [1], [0, 0, 1, 1], [], []>} : vector<64x256xbf16>, vector<256x128xbf16>, vector<64x128xf32> -> vector<64x128xf32>
    %84 = arith.addf %78, %83 : vector<64x128xf32>
    %c1_80 = arith.constant 1 : index
    %c1_81 = arith.constant 1 : index
    %c0_82 = arith.constant 0 : index
    %85 = vector.load %arg10[%c1_80, %c1_81, %c0_82] : memref<9x9x256xf32, #tpu.memory_space<vmem>>, vector<8x8x256xf32>
    %86 = vector.shape_cast %85 : vector<8x8x256xf32> to vector<64x256xf32>
    %87 = arith.truncf %86 : vector<64x256xf32> to vector<64x256xbf16>
    %c768 = arith.constant 768 : index
    %c0_83 = arith.constant 0 : index
    %88 = vector.load %arg6[%c768, %c0_83] : memref<1024x128xbf16, #tpu.memory_space<vmem>>, vector<256x128xbf16>
    %cst_84 = arith.constant dense<0.000000e+00> : vector<64x128xf32>
    %89 = tpu.matmul %87, %88, %cst_84 {dimension_numbers = #tpu.dot_dimension_numbers<[1], [0], [0], [1], [0, 0, 1, 1], [], []>} : vector<64x256xbf16>, vector<256x128xbf16>, vector<64x128xf32> -> vector<64x128xf32>
    %90 = arith.addf %84, %89 : vector<64x128xf32>
    %c0_85 = arith.constant 0 : index
    %c0_86 = arith.constant 0 : index
    %91 = vector.load %arg7[%c0_85, %c0_86] : memref<1x128xf32, #tpu.memory_space<vmem>>, vector<1x128xf32>
    %92 = vector.broadcast %91 : vector<1x128xf32> to vector<64x128xf32>
    %93 = arith.addf %90, %92 : vector<64x128xf32>
    %cst_87 = arith.constant 0.000000e+00 : f32
    %94 = vector.broadcast %cst_87 : f32 to vector<64x128xf32>
    %95 = arith.maximumf %93, %94 : vector<64x128xf32>
    %c0_88 = arith.constant 0 : index
    %c0_89 = arith.constant 0 : index
    %c0_90 = arith.constant 0 : index
    %96 = vector.load %arg8[%c0_88, %c0_89, %c0_90] : memref<1x64x128xf32, #tpu.memory_space<vmem>>, vector<1x64x128xf32>
    %97 = vector.shape_cast %96 : vector<1x64x128xf32> to vector<64x128xf32>
    %98 = vector.shape_cast %95 : vector<64x128xf32> to vector<1x64x128xf32>
    tpu.vector_store %arg8[%c0_88, %c0_89, %c0_90], %98 {strides = array<i32>} : memref<1x64x128xf32, #tpu.memory_space<vmem>>, vector<1x64x128xf32>,
    return
  }
  func.func @transform_0(%arg0: i32) -> (i32, i32, i32, i32) {
    %c0_i32 = arith.constant 0 : i32
    %c0_i32_0 = arith.constant 0 : i32
    %c0_i32_1 = arith.constant 0 : i32
    %c0_i32_2 = arith.constant 0 : i32
    return %arg0, %c0_i32, %c0_i32_0, %c0_i32_1 : i32, i32, i32, i32
  }
  func.func @transform_1(%arg0: i32) -> (i32, i32) {
    %c0_i32 = arith.constant 0 : i32
    %c0_i32_0 = arith.constant 0 : i32
    %c0_i32_1 = arith.constant 0 : i32
    return %c0_i32, %c0_i32_0 : i32, i32
  }
  func.func @transform_2(%arg0: i32) -> (i32, i32) {
    %c0_i32 = arith.constant 0 : i32
    %c0_i32_0 = arith.constant 0 : i32
    %c0_i32_1 = arith.constant 0 : i32
    return %c0_i32, %c0_i32_0 : i32, i32
  }
  func.func @transform_3(%arg0: i32) -> (i32, i32) {
    %c0_i32 = arith.constant 0 : i32
    %c0_i32_0 = arith.constant 0 : i32
    %c0_i32_1 = arith.constant 0 : i32
    return %c0_i32, %c0_i32_0 : i32, i32
  }
  func.func @transform_4(%arg0: i32) -> (i32, i32) {
    %c0_i32 = arith.constant 0 : i32
    %c0_i32_0 = arith.constant 0 : i32
    %c0_i32_1 = arith.constant 0 : i32
    return %c0_i32, %c0_i32_0 : i32, i32
  }
  func.func @transform_5(%arg0: i32) -> (i32, i32) {
    %c0_i32 = arith.constant 0 : i32
    %c0_i32_0 = arith.constant 0 : i32
    %c0_i32_1 = arith.constant 0 : i32
    return %c0_i32, %c0_i32_0 : i32, i32
  }
  func.func @transform_6(%arg0: i32) -> (i32, i32) {
    %c0_i32 = arith.constant 0 : i32
    %c0_i32_0 = arith.constant 0 : i32
    %c0_i32_1 = arith.constant 0 : i32
    return %c0_i32, %c0_i32_0 : i32, i32
  }
  func.func @transform_7(%arg0: i32) -> (i32, i32, i32) {
    %c0_i32 = arith.constant 0 : i32
    %c0_i32_0 = arith.constant 0 : i32
    %c0_i32_1 = arith.constant 0 : i32
    return %arg0, %c0_i32, %c0_i32_0 : i32, i32, i32
  }
}

module attributes {stable_mosaic.version = 11 : i64} {
  func.func @_fc_heads_kernel(%arg0: i32, %arg1: memref<2x8192xf32, #tpu.memory_space<vmem>>, %arg2: memref<8192x128xbf16, #tpu.memory_space<vmem>>, %arg3: memref<1x128xf32, #tpu.memory_space<vmem>>, %arg4: memref<2x128xf32, #tpu.memory_space<vmem>>) attributes {dimension_semantics = [#tpu.dimension_semantics<arbitrary>], iteration_bounds = array<i64: 1>, scalar_prefetch = 0 : i64, scratch_operands = 0 : i64, tpu.core_type = #tpu.core_type<tc>, window_params = [{pipeline_mode = #tpu.pipeline_mode<synchronous>, transform_indices = @transform_0, window_bounds = array<i64: 2, 8192>}, {pipeline_mode = #tpu.pipeline_mode<synchronous>, transform_indices = @transform_1, window_bounds = array<i64: 8192, 128>}, {pipeline_mode = #tpu.pipeline_mode<synchronous>, transform_indices = @transform_2, window_bounds = array<i64: 1, 128>}, {pipeline_mode = #tpu.pipeline_mode<synchronous>, transform_indices = @transform_3, window_bounds = array<i64: 2, 128>}]} {
    %c0 = arith.constant 0 : index
    %c0_0 = arith.constant 0 : index
    %0 = vector.load %arg1[%c0, %c0_0] : memref<2x8192xf32, #tpu.memory_space<vmem>>, vector<2x8192xf32>
    %1 = arith.truncf %0 : vector<2x8192xf32> to vector<2x8192xbf16>
    %c0_1 = arith.constant 0 : index
    %c0_2 = arith.constant 0 : index
    %2 = vector.load %arg2[%c0_1, %c0_2] : memref<8192x128xbf16, #tpu.memory_space<vmem>>, vector<8192x128xbf16>
    %cst = arith.constant dense<0.000000e+00> : vector<2x128xf32>
    %3 = tpu.matmul %1, %2, %cst {dimension_numbers = #tpu.dot_dimension_numbers<[1], [0], [0], [1], [0, 0, 1, 1], [], []>} : vector<2x8192xbf16>, vector<8192x128xbf16>, vector<2x128xf32> -> vector<2x128xf32>
    %c0_3 = arith.constant 0 : index
    %c0_4 = arith.constant 0 : index
    %4 = vector.load %arg3[%c0_3, %c0_4] : memref<1x128xf32, #tpu.memory_space<vmem>>, vector<1x128xf32>
    %5 = vector.broadcast %4 : vector<1x128xf32> to vector<2x128xf32>
    %6 = arith.addf %3, %5 : vector<2x128xf32>
    %c0_5 = arith.constant 0 : index
    %c0_6 = arith.constant 0 : index
    %7 = vector.load %arg4[%c0_5, %c0_6] : memref<2x128xf32, #tpu.memory_space<vmem>>, vector<2x128xf32>
    tpu.vector_store %arg4[%c0_5, %c0_6], %6 {strides = array<i32>} : memref<2x128xf32, #tpu.memory_space<vmem>>, vector<2x128xf32>,
    return
  }
  func.func @transform_0(%arg0: i32) -> (i32, i32) {
    %c0_i32 = arith.constant 0 : i32
    %c0_i32_0 = arith.constant 0 : i32
    %c0_i32_1 = arith.constant 0 : i32
    return %c0_i32, %c0_i32_0 : i32, i32
  }
  func.func @transform_1(%arg0: i32) -> (i32, i32) {
    %c0_i32 = arith.constant 0 : i32
    %c0_i32_0 = arith.constant 0 : i32
    %c0_i32_1 = arith.constant 0 : i32
    return %c0_i32, %c0_i32_0 : i32, i32
  }
  func.func @transform_2(%arg0: i32) -> (i32, i32) {
    %c0_i32 = arith.constant 0 : i32
    %c0_i32_0 = arith.constant 0 : i32
    %c0_i32_1 = arith.constant 0 : i32
    return %c0_i32, %c0_i32_0 : i32, i32
  }
  func.func @transform_3(%arg0: i32) -> (i32, i32) {
    %c0_i32 = arith.constant 0 : i32
    %c0_i32_0 = arith.constant 0 : i32
    %c0_i32_1 = arith.constant 0 : i32
    return %c0_i32, %c0_i32_0 : i32, i32
  }
}

</mosaic_0001>

<llo_original>
// kernel: encoder_forward.2
$region0: #{encoder_forward.2}
  #allocation0 [shape = 'u32[]', space=smem, size = 0x4, offset = 0x4, fixed_abs, tag = 'smem constant byte address 0x4 - core index']
  #allocation1 [shape = 'u32[144,128]{1,0:T(1,128)}', space=vmem, size = 0x12000, scoped, tag = 'internal scratch']
  #allocation2 [shape = 'f32[9,9,512]{2,1,0:T(8,128)}', space=vmem, size = 0x48000, scoped, tag = 'scratch operand']
  #allocation3 [shape = 'f32[9,9,256]{2,1,0:T(8,128)}', space=vmem, size = 0x24000, scoped, tag = 'scratch operand']
  %s0 = inlined_call_operand.vmem [shape: f32[2,9,9,64], index: 0, kind: input, shape index: {}]
  %s1 = inlined_call_operand.vmem [shape: bf16[256,512], index: 1, kind: input, shape index: {}]
  %s2 = inlined_call_operand.hbm [shape: f32[1,512], index: 2, kind: input, shape index: {}]
  %s3 = inlined_call_operand.vmem [shape: bf16[2048,256], index: 3, kind: input, shape index: {}]
  %s4 = inlined_call_operand.vmem [shape: f32[1,256], index: 4, kind: input, shape index: {}]
  %s5 = inlined_call_operand.vmem [shape: bf16[1024,128], index: 5, kind: input, shape index: {}]
  %s6 = inlined_call_operand.vmem [shape: f32[1,128], index: 6, kind: input, shape index: {}]
  %s7 = inlined_call_operand.vmem [shape: f32[2,64,128], index: 7, kind: output, shape index: {}]
  %s8 = sld [smem:[#allocation0]]
  $region65: #{encoder_forward.2} parent=0
    _
  %s10 = ssub.s32 1, %s8
  %s11 = scalar_select 0, %s10, %s8
  $region1: #{encoder_forward.2} parent=0
    #allocation4 [shape = 'u8[2048]{0}', space=vmem, size = 0x800, scoped, tag = 'input window, operand 2, single buffered']
    #allocation5 [shape = 's32[2]{0}', space=sflag, size = 0x8, scoped, tag = 'scoped memory for encoder_forward.2']
    %12 = vsyncpa [#allocation5], 0
    loop: start=0, step=1, limit=4
    $region2: #{encoder_forward.2} parent=1 // loop_pre_header
      _
    $region3: #{encoder_forward.2} parent=1 // loop_header
      %s14 = sphi 0, %s18
      %p15 = scmp.ge.s32.totalorder %s14, 4
      %s24 = sphi 0, %s26
      %s27 = sphi 0, %s24
      %s28 = sphi 0, %s27
      %s44 = sphi 0, %s28
      %s48 = sphi 0, %s48
      %s50 = sphi 0, %s48
      %s51 = sphi 0, %s50
      %s65 = sphi 0, %s51
      %s69 = sphi 0, %s69
      %s71 = sphi 0, %s69
      %s72 = sphi 0, %s71
      %s86 = sphi 0, %s72
      %s90 = sphi 0, %s90
      %s92 = sphi 0, %s90
      %s93 = sphi 0, %s92
      %s107 = sphi 0, %s93
      %s111 = sphi 0, %s111
      %s113 = sphi 0, %s111
      %s114 = sphi 0, %s113
      %s128 = sphi 0, %s114
      %s132 = sphi 0, %s132
      %s134 = sphi 0, %s132
      %s135 = sphi 0, %s134
      %s149 = sphi 0, %s135
      %s153 = sphi 0, %s153
      %s155 = sphi 0, %s153
      %s156 = sphi 0, %s155
      %s170 = sphi 0, %s156
      %s176 = sphi 0, %s178
      %s179 = sphi 0, %s176
      %s180 = sphi 0, %s179
      %s196 = sphi 0, %s180
    $region4: #{encoder_forward.2} parent=1 // loop_header_branch
      %17 = sbr.rel (%p15) target = $region8
    $region5: #{encoder_forward.2} parent=1 // loop_body
      %s19 = ssub.s32 %s14, 1
      %s20 = ssub.s32 %s14, 2
      %s21 = sadd.s32 %s14, 1
      %s22 = ssub.s32 %s14, %s21
      %p23 = scmp.eq.s32.totalorder %s22, 0
      %s25 = sadd.s32 %s24, 1
      %s26 = scalar_select %p23, %s24, %s25
      %p29 = pneg %p23
      %p30 = scmp.eq.s32.totalorder %s14, 1
      %p31 = por %p29, %p30
      %p32 = scmp.ne.s32.totalorder %s24, %s27
      %p33 = scmp.eq.s32.totalorder %s14, 0
      %p34 = por %p32, %p33
      %p35 = scmp.ne.s32.totalorder %s24, %s27
      %p36 = scmp.eq.s32.totalorder %s19, 1
      %p37 = por %p35, %p36
      %p38 = scmp.ne.s32.totalorder %s27, %s28
      %p39 = scmp.eq.s32.totalorder %s19, 0
      %p40 = por %p38, %p39
      %p41 = scmp.ne.s32.totalorder %s27, %s28
      %p42 = scmp.eq.s32.totalorder %s20, 1
      %p43 = por %p41, %p42
      %p45 = scmp.ne.s32.totalorder %s28, %s44
      %p46 = scmp.eq.s32.totalorder %s20, 0
      %p47 = por %p45, %p46
      %s49 = sadd.s32 %s48, 1
      %p52 = scmp.eq.s32.totalorder %s14, 1
      %p53 = scmp.ne.s32.totalorder %s48, %s50
      %p54 = scmp.eq.s32.totalorder %s14, 0
      %p55 = por %p53, %p54
      %p56 = scmp.ne.s32.totalorder %s48, %s50
      %p57 = scmp.eq.s32.totalorder %s19, 1
      %p58 = por %p56, %p57
      %p59 = scmp.ne.s32.totalorder %s50, %s51
      %p60 = scmp.eq.s32.totalorder %s19, 0
      %p61 = por %p59, %p60
      %p62 = scmp.ne.s32.totalorder %s50, %s51
      %p63 = scmp.eq.s32.totalorder %s20, 1
      %p64 = por %p62, %p63
      %p66 = scmp.ne.s32.totalorder %s51, %s65
      %p67 = scmp.eq.s32.totalorder %s20, 0
      %p68 = por %p66, %p67
      %s70 = sadd.s32 %s69, 1
      %p73 = scmp.eq.s32.totalorder %s14, 1
      %p74 = scmp.ne.s32.totalorder %s69, %s71
      %p75 = scmp.eq.s32.totalorder %s14, 0
      %p76 = por %p74, %p75
      %p77 = scmp.ne.s32.totalorder %s69, %s71
      %p78 = scmp.eq.s32.totalorder %s19, 1
      %p79 = por %p77, %p78
      %p80 = scmp.ne.s32.totalorder %s71, %s72
      %p81 = scmp.eq.s32.totalorder %s19, 0
      %p82 = por %p80, %p81
      %p83 = scmp.ne.s32.totalorder %s71, %s72
      %p84 = scmp.eq.s32.totalorder %s20, 1
      %p85 = por %p83, %p84
      %p87 = scmp.ne.s32.totalorder %s72, %s86
      %p88 = scmp.eq.s32.totalorder %s20, 0
      %p89 = por %p87, %p88
      %s91 = sadd.s32 %s90, 1
      %p94 = scmp.eq.s32.totalorder %s14, 1
      %p95 = scmp.ne.s32.totalorder %s90, %s92
      %p96 = scmp.eq.s32.totalorder %s14, 0
      %p97 = por %p95, %p96
      %p98 = scmp.ne.s32.totalorder %s90, %s92
      %p99 = scmp.eq.s32.totalorder %s19, 1
      %p100 = por %p98, %p99
      %p101 = scmp.ne.s32.totalorder %s92, %s93
      %p102 = scmp.eq.s32.totalorder %s19, 0
      %p103 = por %p101, %p102
      %p104 = scmp.ne.s32.totalorder %s92, %s93
      %p105 = scmp.eq.s32.totalorder %s20, 1
      %p106 = por %p104, %p105
      %p108 = scmp.ne.s32.totalorder %s93, %s107
      %p109 = scmp.eq.s32.totalorder %s20, 0
      %p110 = por %p108, %p109
      %s112 = sadd.s32 %s111, 1
      %p115 = scmp.eq.s32.totalorder %s14, 1
      %p116 = scmp.ne.s32.totalorder %s111, %s113
      %p117 = scmp.eq.s32.totalorder %s14, 0
      %p118 = por %p116, %p117
      %p119 = scmp.ne.s32.totalorder %s111, %s113
      %p120 = scmp.eq.s32.totalorder %s19, 1
      %p121 = por %p119, %p120
      %p122 = scmp.ne.s32.totalorder %s113, %s114
      %p123 = scmp.eq.s32.totalorder %s19, 0
      %p124 = por %p122, %p123
      %p125 = scmp.ne.s32.totalorder %s113, %s114
      %p126 = scmp.eq.s32.totalorder %s20, 1
      %p127 = por %p125, %p126
      %p129 = scmp.ne.s32.totalorder %s114, %s128
      %p130 = scmp.eq.s32.totalorder %s20, 0
      %p131 = por %p129, %p130
      %s133 = sadd.s32 %s132, 1
      %p136 = scmp.eq.s32.totalorder %s14, 1
      %p137 = scmp.ne.s32.totalorder %s132, %s134
      %p138 = scmp.eq.s32.totalorder %s14, 0
      %p139 = por %p137, %p138
      %p140 = scmp.ne.s32.totalorder %s132, %s134
      %p141 = scmp.eq.s32.totalorder %s19, 1
      %p142 = por %p140, %p141
      %p143 = scmp.ne.s32.totalorder %s134, %s135
      %p144 = scmp.eq.s32.totalorder %s19, 0
      %p145 = por %p143, %p144
      %p146 = scmp.ne.s32.totalorder %s134, %s135
      %p147 = scmp.eq.s32.totalorder %s20, 1
      %p148 = por %p146, %p147
      %p150 = scmp.ne.s32.totalorder %s135, %s149
      %p151 = scmp.eq.s32.totalorder %s20, 0
      %p152 = por %p150, %p151
      %s154 = sadd.s32 %s153, 1
      %p157 = scmp.eq.s32.totalorder %s14, 1
      %p158 = scmp.ne.s32.totalorder %s153, %s155
      %p159 = scmp.eq.s32.totalorder %s14, 0
      %p160 = por %p158, %p159
      %p161 = scmp.ne.s32.totalorder %s153, %s155
      %p162 = scmp.eq.s32.totalorder %s19, 1
      %p163 = por %p161, %p162
      %p164 = scmp.ne.s32.totalorder %s155, %s156
      %p165 = scmp.eq.s32.totalorder %s19, 0
      %p166 = por %p164, %p165
      %p167 = scmp.ne.s32.totalorder %s155, %s156
      %p168 = scmp.eq.s32.totalorder %s20, 1
      %p169 = por %p167, %p168
      %p171 = scmp.ne.s32.totalorder %s156, %s170
      %p172 = scmp.eq.s32.totalorder %s20, 0
      %p173 = por %p171, %p172
      %s174 = ssub.s32 %s14, %s21
      %p175 = scmp.eq.s32.totalorder %s174, 0
      %s177 = sadd.s32 %s176, 1
      %s178 = scalar_select %p175, %s176, %s177
      %p181 = pneg %p175
      %p182 = scmp.eq.s32.totalorder %s14, 1
      %p183 = por %p181, %p182
      %p184 = scmp.ne.s32.totalorder %s176, %s179
      %p185 = scmp.eq.s32.totalorder %s14, 0
      %p186 = por %p184, %p185
      %p187 = scmp.ne.s32.totalorder %s176, %s179
      %p188 = scmp.eq.s32.totalorder %s19, 1
      %p189 = por %p187, %p188
      %p190 = scmp.ne.s32.totalorder %s179, %s180
      %p191 = scmp.eq.s32.totalorder %s19, 0
      %p192 = por %p190, %p191
      %p193 = scmp.ne.s32.totalorder %s179, %s180
      %p194 = scmp.eq.s32.totalorder %s20, 1
      %p195 = por %p193, %p194
      %p197 = scmp.ne.s32.totalorder %s180, %s196
      %p198 = scmp.eq.s32.totalorder %s20, 0
      %p199 = por %p197, %p198
      %p200 = scmp.le.s32.totalorder 1, %s14
      %p201 = scmp.lt.s32.totalorder %s14, 3
      %p202 = pnand %p200, %p201
      %p203 = pneg %p202
      // Predicated region
      $region9: #{encoder_forward.2} parent=5 // pred_check
        _
      $region10: #{encoder_forward.2} parent=5 // pred_check_branch
        %205 = sbr.rel (%p202) target = $region12
      $region11: #{encoder_forward.2} parent=5 // pred_region
        %s206 = ssub.s32 %s14, 1
        // Predicated region
        $region13: #{encoder_forward.2} parent=11 // pred_check
          %p207 = pneg %p61
        $region14: #{encoder_forward.2} parent=11 // pred_check_branch
          %209 = sbr.rel (%p207) target = $region16
        $region15: #{encoder_forward.2} parent=11 // pred_region
          _
        $region16: #{encoder_forward.2} parent=11 // pred_fallthru
          _
        // Predicated region
        $region17: #{encoder_forward.2} parent=11 // pred_check
          %p210 = pneg %p82
        $region18: #{encoder_forward.2} parent=11 // pred_check_branch
          %212 = sbr.rel (%p210) target = $region20
        $region19: #{encoder_forward.2} parent=11 // pred_region
          %s214 = ssub.s32 64, 64
          %215 = vsyncadd [#allocation5], %s214
          %s217 = sshll.u32 [#allocation4], 4
          %s218 = int_to_ptr.vmem [resolvable:$true] %s217
          %220 = dma.hbm_to_vmem [thread:$0]  %s2, 64, %s218, [#allocation5]
        $region20: #{encoder_forward.2} parent=11 // pred_fallthru
          _
        // Predicated region
        $region21: #{encoder_forward.2} parent=11 // pred_check
          %p221 = pneg %p103
        $region22: #{encoder_forward.2} parent=11 // pred_check_branch
          %223 = sbr.rel (%p221) target = $region24
        $region23: #{encoder_forward.2} parent=11 // pred_region
          _
        $region24: #{encoder_forward.2} parent=11 // pred_fallthru
          _
        // Predicated region
        $region25: #{encoder_forward.2} parent=11 // pred_check
          %p224 = pneg %p124
        $region26: #{encoder_forward.2} parent=11 // pred_check_branch
          %226 = sbr.rel (%p224) target = $region28
        $region27: #{encoder_forward.2} parent=11 // pred_region
          _
        $region28: #{encoder_forward.2} parent=11 // pred_fallthru
          _
        // Predicated region
        $region29: #{encoder_forward.2} parent=11 // pred_check
          %p227 = pneg %p145
        $region30: #{encoder_forward.2} parent=11 // pred_check_branch
          %229 = sbr.rel (%p227) target = $region32
        $region31: #{encoder_forward.2} parent=11 // pred_region
          _
        $region32: #{encoder_forward.2} parent=11 // pred_fallthru
          _
        // Predicated region
        $region33: #{encoder_forward.2} parent=11 // pred_check
          %p230 = pneg %p166
        $region34: #{encoder_forward.2} parent=11 // pred_check_branch
          %232 = sbr.rel (%p230) target = $region36
        $region35: #{encoder_forward.2} parent=11 // pred_region
          _
        $region36: #{encoder_forward.2} parent=11 // pred_fallthru
          _
      $region12: #{encoder_forward.2} parent=5 // pred_fallthru
        _
      %p233 = scmp.lt.s32.totalorder %s14, 2
      // Predicated region
      $region37: #{encoder_forward.2} parent=5 // pred_check
        %p234 = pneg %p233
      $region38: #{encoder_forward.2} parent=5 // pred_check_branch
        %236 = sbr.rel (%p234) target = $region40
      $region39: #{encoder_forward.2} parent=5 // pred_region
        // Predicated region
        $region41: #{encoder_forward.2} parent=39 // pred_check
          %p237 = pneg %p34
        $region42: #{encoder_forward.2} parent=39 // pred_check_branch
          %239 = sbr.rel (%p237) target = $region44
        $region43: #{encoder_forward.2} parent=39 // pred_region
          %p240 = scmp.lt.s32.totalorder %s14, 1
          %s241 = scalar_select %p240, %s14, 1
          %s242 = smul.addr %s241, 18
          %s243 = smul.addr %s242, 8
          %s244 = scalar_lea.vmem %s0, %s243
        $region44: #{encoder_forward.2} parent=39 // pred_fallthru
          _
      $region40: #{encoder_forward.2} parent=5 // pred_fallthru
        _
      %p245 = scmp.le.s32.totalorder 1, %s14
      %p246 = scmp.lt.s32.totalorder %s14, 3
      %p247 = pnand %p245, %p246
      %p248 = pneg %p247
      // Predicated region
      $region45: #{encoder_forward.2} parent=5 // pred_check
        _
      $region46: #{encoder_forward.2} parent=5 // pred_check_branch
        %250 = sbr.rel (%p247) target = $region48
      $region47: #{encoder_forward.2} parent=5 // pred_region
        %s251 = ssub.s32 %s14, 1
        // Predicated region
        $region49: #{encoder_forward.2} parent=47 // pred_check
          %p252 = pneg %p82
        $region50: #{encoder_forward.2} parent=47 // pred_check_branch
          %254 = sbr.rel (%p252) target = $region52
        $region51: #{encoder_forward.2} parent=47 // pred_region
          %255 = dma.done [#allocation5], 64
        $region52: #{encoder_forward.2} parent=47 // pred_fallthru
          _
        %p256 = scmp.lt.s32.totalorder %s19, 1
        %s257 = scalar_select %p256, %s19, 1
        %s258 = smul.addr %s257, 18
        %s259 = smul.addr %s258, 8
        %s260 = scalar_lea.vmem %s0, %s259
        %p261 = pneg %p40
        %p262 = pneg %p37
        %p263 = pneg %p61
        %p264 = pneg %p58
        %p265 = pneg %p82
        %p266 = pneg %p79
        %p267 = pneg %p103
        %p268 = pneg %p100
        %p269 = pneg %p124
        %p270 = pneg %p121
        %p271 = pneg %p145
        %p272 = pneg %p142
        %p273 = pneg %p166
        %p274 = pneg %p163
        %p275 = pneg %p192
        %p276 = pneg %p189
        %p277 = scmp.lt.s32.totalorder %s19, 1
        %s278 = scalar_select %p277, %s19, 1
        %s279 = smul.addr %s278, 8
        %s280 = smul.addr %s279, 8
        %s281 = scalar_lea.vmem %s7, %s280
        %p282 = scmp.lt.s32.totalorder %s19, 1
        %s283 = scalar_select %p282, %s19, 1
        %s284 = smul.addr %s283, 18
        %s285 = smul.addr %s284, 8
        %s286 = scalar_lea.vmem %s0, %s285
        %p287 = scmp.lt.s32.totalorder %s19, 1
        %s288 = scalar_select %p287, %s19, 1
        %s289 = smul.addr %s288, 8
        %s290 = smul.addr %s289, 8
        %s291 = scalar_lea.vmem %s7, %s290
        %v293 = vld [vmem:[%s286] sm:$0xff]
        %v294 = vld [vmem:[%s286 + $0x10] sm:$0xff]
        %v295 = vld [vmem:[%s286 + $0x20] sm:$0xff]
        %v296 = vld [vmem:[%s286 + $0x30] sm:$0xff]
        %v297 = vld [vmem:[%s286 + $0x40] sm:$0xff]
        %v298 = vld [vmem:[%s286 + $0x50] sm:$0xff]
        %v299 = vld [vmem:[%s286 + $0x60] sm:$0xff]
        %v300 = vld [vmem:[%s286 + $0x70] sm:$0xff]
        %v301 = vpack.c.bf16 %v294, %v293
        %v302 = vpack.c.bf16 %v296, %v295
        %v303 = vpack.c.bf16 %v298, %v297
        %v304 = vpack.c.bf16 %v300, %v299
        %v305 = vld [vmem:[%s1] sm:$0xff]
        %v306 = vld [vmem:[%s1 + $0x8] sm:$0xff]
        %v307 = vld [vmem:[%s1 + $0x10] sm:$0xff]
        %v308 = vld [vmem:[%s1 + $0x18] sm:$0xff]
        %v309 = vld [vmem:[%s1 + $0x20] sm:$0xff]
        %v310 = vld [vmem:[%s1 + $0x28] sm:$0xff]
        %v311 = vld [vmem:[%s1 + $0x30] sm:$0xff]
        %v312 = vld [vmem:[%s1 + $0x38] sm:$0xff]
        %v313 = vld [vmem:[%s1 + $0x40] sm:$0xff]
        %v314 = vld [vmem:[%s1 + $0x48] sm:$0xff]
        %v315 = vld [vmem:[%s1 + $0x50] sm:$0xff]
        %v316 = vld [vmem:[%s1 + $0x58] sm:$0xff]
        %v317 = vld [vmem:[%s1 + $0x60] sm:$0xff]
        %v318 = vld [vmem:[%s1 + $0x68] sm:$0xff]
        %v319 = vld [vmem:[%s1 + $0x70] sm:$0xff]
        %v320 = vld [vmem:[%s1 + $0x78] sm:$0xff]
        %v321 = vld [vmem:[%s286 + $0x1] sm:$0xff]
        %v322 = vld [vmem:[%s286 + $0x11] sm:$0xff]
        %v323 = vld [vmem:[%s286 + $0x21] sm:$0xff]
        %v324 = vld [vmem:[%s286 + $0x31] sm:$0xff]
        %v325 = vld [vmem:[%s286 + $0x41] sm:$0xff]
        %v326 = vld [vmem:[%s286 + $0x51] sm:$0xff]
        %v327 = vld [vmem:[%s286 + $0x61] sm:$0xff]
        %v328 = vld [vmem:[%s286 + $0x71] sm:$0xff]
        %v329 = vpack.c.bf16 %v322, %v321
        %v330 = vpack.c.bf16 %v324, %v323
        %v331 = vpack.c.bf16 %v326, %v325
        %v332 = vpack.c.bf16 %v328, %v327
        %v333 = vld [vmem:[%s1 + $0x80] sm:$0xff]
        %v334 = vld [vmem:[%s1 + $0x88] sm:$0xff]
        %v335 = vld [vmem:[%s1 + $0x90] sm:$0xff]
        %v336 = vld [vmem:[%s1 + $0x98] sm:$0xff]
        %v337 = vld [vmem:[%s1 + $0xa0] sm:$0xff]
        %v338 = vld [vmem:[%s1 + $0xa8] sm:$0xff]
        %v339 = vld [vmem:[%s1 + $0xb0] sm:$0xff]
        %v340 = vld [vmem:[%s1 + $0xb8] sm:$0xff]
        %v341 = vld [vmem:[%s1 + $0xc0] sm:$0xff]
        %v342 = vld [vmem:[%s1 + $0xc8] sm:$0xff]
        %v343 = vld [vmem:[%s1 + $0xd0] sm:$0xff]
        %v344 = vld [vmem:[%s1 + $0xd8] sm:$0xff]
        %v345 = vld [vmem:[%s1 + $0xe0] sm:$0xff]
        %v346 = vld [vmem:[%s1 + $0xe8] sm:$0xff]
        %v347 = vld [vmem:[%s1 + $0xf0] sm:$0xff]
        %v348 = vld [vmem:[%s1 + $0xf8] sm:$0xff]
        %v365 = vunpack.c.l.b16 %v333
        %v366 = vunpack.c.h.b16 %v333
        %v367 = vunpack.c.l.b16 %v334
        %v368 = vunpack.c.h.b16 %v334
        %v369 = vunpack.c.l.b16 %v335
        %v370 = vunpack.c.h.b16 %v335
        %v371 = vunpack.c.l.b16 %v336
        %v372 = vunpack.c.h.b16 %v336
        %v373 = vunpack.c.l.b16 %v337
        %v374 = vunpack.c.h.b16 %v337
        %v375 = vunpack.c.l.b16 %v338
        %v376 = vunpack.c.h.b16 %v338
        %v377 = vunpack.c.l.b16 %v339
        %v378 = vunpack.c.h.b16 %v339
        %v379 = vunpack.c.l.b16 %v340
        %v380 = vunpack.c.h.b16 %v340
        %v381 = vunpack.c.l.b16 %v341
        %v382 = vunpack.c.h.b16 %v341
        %v383 = vunpack.c.l.b16 %v342
        %v384 = vunpack.c.h.b16 %v342
        %v385 = vunpack.c.l.b16 %v343
        %v386 = vunpack.c.h.b16 %v343
        %v387 = vunpack.c.l.b16 %v344
        %v388 = vunpack.c.h.b16 %v344
        %v389 = vunpack.c.l.b16 %v345
        %v390 = vunpack.c.h.b16 %v345
        %v391 = vunpack.c.l.b16 %v346
        %v392 = vunpack.c.h.b16 %v346
        %v393 = vunpack.c.l.b16 %v347
        %v394 = vunpack.c.h.b16 %v347
        %v395 = vunpack.c.l.b16 %v348
        %v396 = vunpack.c.h.b16 %v348
        %v397 = vpack.c.b16 %v369, %v365
        %v398 = vpack.c.b16 %v370, %v366
        %v399 = vpack.c.b16 %v371, %v367
        %v400 = vpack.c.b16 %v372, %v368
        %v401 = vpack.c.b16 %v377, %v373
        %v402 = vpack.c.b16 %v378, %v374
        %v403 = vpack.c.b16 %v379, %v375
        %v404 = vpack.c.b16 %v380, %v376
        %v405 = vpack.c.b16 %v385, %v381
        %v406 = vpack.c.b16 %v386, %v382
        %v407 = vpack.c.b16 %v387, %v383
        %v408 = vpack.c.b16 %v388, %v384
        %v409 = vpack.c.b16 %v393, %v389
        %v410 = vpack.c.b16 %v394, %v390
        %v411 = vpack.c.b16 %v395, %v391
        %v412 = vpack.c.b16 %v396, %v392
        %vm429 = vcmask 523264
        %v431 = vsel %vm429, %v329, 0
        %v434 = vsel %vm429, %v330, 0
        %v437 = vsel %vm429, %v331, 0
        %v440 = vsel %vm429, %v332, 0
        %442 = vmatprep.subr.bf16.mxu0 %v398
        %443 = vmatpush1.bf16.msra.mxu0 %v397
        %444 = vmatprep.subr.bf16.mxu0 %v402
        %445 = vmatpush1.bf16.msra.mxu0 %v401
        %446 = vmatprep.subr.bf16.mxu0 %v406
        %447 = vmatpush1.bf16.msra.mxu0 %v405
        %448 = vmatprep.subr.bf16.mxu0 %v410
        %449 = vmatpush1.bf16.msra.mxu0 %v409
        %450 = vmatprep.subr.bf16.mxu0 0
        %451 = vmatpush1.bf16.msra.mxu0 0
        %452 = vmatprep.subr.bf16.mxu0 0
        %453 = vmatpush1.bf16.msra.mxu0 0
        %454 = vmatprep.subr.bf16.mxu0 0
        %455 = vmatpush1.bf16.msra.mxu0 0
        %456 = vmatprep.subr.bf16.mxu0 0
        %457 = vmatpush1.bf16.msra.mxu0 0
        %458 = vmatprep.subr.bf16.mxu0 0
        %459 = vmatpush1.bf16.msra.mxu0 0
        %460 = vmatprep.subr.bf16.mxu0 0
        %461 = vmatpush1.bf16.msra.mxu0 0
        %462 = vmatprep.subr.bf16.mxu0 0
        %463 = vmatpush1.bf16.msra.mxu0 0
        %464 = vmatprep.subr.bf16.mxu0 0
        %465 = vmatpush1.bf16.msra.mxu0 0
        %466 = vmatprep.subr.bf16.mxu0 0
        %467 = vmatpush1.bf16.msra.mxu0 0
        %468 = vmatprep.subr.bf16.mxu0 0
        %469 = vmatpush1.bf16.msra.mxu0 0
        %470 = vmatprep.subr.bf16.mxu0 0
        %471 = vmatpush1.bf16.msra.mxu0 0
        %472 = vmatprep.subr.bf16.mxu0 0
        %473 = vmatpush1.bf16.msra.mxu0 0
        %474 = vmatprep.mubr.bf16.mxu0 0
        %475 = vmatmul.mubr.bf16.gmra.mrb[0].mxu0 %v431
        %v476 = vpop.f32.mrb[0].mxu0
        %v477 = vadd.f32 0.0, %v476
        %v478 = vpop.f32.mrb[0].mxu0
        %v479 = vadd.f32 0.0, %v478
        %v480 = vpop.f32.mrb[0].mxu0
        %v481 = vadd.f32 0.0, %v480
        %v482 = vpop.f32.mrb[0].mxu0
        %v483 = vadd.f32 0.0, %v482
        %484 = vmatprep.mubr.bf16.mxu0 0
        %485 = vmatmul.mubr.bf16.gmra.mrb[0].mxu0 %v434
        %v486 = vpop.f32.mrb[0].mxu0
        %v487 = vadd.f32 0.0, %v486
        %v488 = vpop.f32.mrb[0].mxu0
        %v489 = vadd.f32 0.0, %v488
        %v490 = vpop.f32.mrb[0].mxu0
        %v491 = vadd.f32 0.0, %v490
        %v492 = vpop.f32.mrb[0].mxu0
        %v493 = vadd.f32 0.0, %v492
        %494 = vmatprep.mubr.bf16.mxu0 0
        %495 = vmatmul.mubr.bf16.gmra.mrb[0].mxu0 %v437
        %v496 = vpop.f32.mrb[0].mxu0
        %v497 = vadd.f32 0.0, %v496
        %v498 = vpop.f32.mrb[0].mxu0
        %v499 = vadd.f32 0.0, %v498
        %v500 = vpop.f32.mrb[0].mxu0
        %v501 = vadd.f32 0.0, %v500
        %v502 = vpop.f32.mrb[0].mxu0
        %v503 = vadd.f32 0.0, %v502
        %504 = vmatprep.mubr.bf16.mxu0 0
        %505 = vmatmul.mubr.bf16.gmra.mrb[0].mxu0 %v440
        %v506 = vpop.f32.mrb[0].mxu0
        %v507 = vadd.f32 0.0, %v506
        %v508 = vpop.f32.mrb[0].mxu0
        %v509 = vadd.f32 0.0, %v508
        %v510 = vpop.f32.mrb[0].mxu0
        %v511 = vadd.f32 0.0, %v510
        %v512 = vpop.f32.mrb[0].mxu0
        %v513 = vadd.f32 0.0, %v512
        %514 = vdwg.mxu0
        %515 = vmatprep.subr.bf16.mxu0 %v400
        %516 = vmatpush1.bf16.msra.mxu0 %v399
        %517 = vmatprep.subr.bf16.mxu0 %v404
        %518 = vmatpush1.bf16.msra.mxu0 %v403
        %519 = vmatprep.subr.bf16.mxu0 %v408
        %520 = vmatpush1.bf16.msra.mxu0 %v407
        %521 = vmatprep.subr.bf16.mxu0 %v412
        %522 = vmatpush1.bf16.msra.mxu0 %v411
        %523 = vmatprep.subr.bf16.mxu0 0
        %524 = vmatpush1.bf16.msra.mxu0 0
        %525 = vmatprep.subr.bf16.mxu0 0
        %526 = vmatpush1.bf16.msra.mxu0 0
        %527 = vmatprep.subr.bf16.mxu0 0
        %528 = vmatpush1.bf16.msra.mxu0 0
        %529 = vmatprep.subr.bf16.mxu0 0
        %530 = vmatpush1.bf16.msra.mxu0 0
        %531 = vmatprep.subr.bf16.mxu0 0
        %532 = vmatpush1.bf16.msra.mxu0 0
        %533 = vmatprep.subr.bf16.mxu0 0
        %534 = vmatpush1.bf16.msra.mxu0 0
        %535 = vmatprep.subr.bf16.mxu0 0
        %536 = vmatpush1.bf16.msra.mxu0 0
        %537 = vmatprep.subr.bf16.mxu0 0
        %538 = vmatpush1.bf16.msra.mxu0 0
        %539 = vmatprep.subr.bf16.mxu0 0
        %540 = vmatpush1.bf16.msra.mxu0 0
        %541 = vmatprep.subr.bf16.mxu0 0
        %542 = vmatpush1.bf16.msra.mxu0 0
        %543 = vmatprep.subr.bf16.mxu0 0
        %544 = vmatpush1.bf16.msra.mxu0 0
        %545 = vmatprep.subr.bf16.mxu0 0
        %546 = vmatpush1.bf16.msra.mxu0 0
        %547 = vmatprep.mubr.bf16.mxu0 0
        %548 = vmatmul.mubr.bf16.gmra.mrb[0].mxu0 %v431
        %v549 = vpop.f32.mrb[0].mxu0
        %v550 = vadd.f32 0.0, %v549
        %v551 = vpop.f32.mrb[0].mxu0
        %v552 = vadd.f32 0.0, %v551
        %v553 = vpop.f32.mrb[0].mxu0
        %v554 = vadd.f32 0.0, %v553
        %v555 = vpop.f32.mrb[0].mxu0
        %v556 = vadd.f32 0.0, %v555
        %557 = vmatprep.mubr.bf16.mxu0 0
        %558 = vmatmul.mubr.bf16.gmra.mrb[0].mxu0 %v434
        %v559 = vpop.f32.mrb[0].mxu0
        %v560 = vadd.f32 0.0, %v559
        %v561 = vpop.f32.mrb[0].mxu0
        %v562 = vadd.f32 0.0, %v561
        %v563 = vpop.f32.mrb[0].mxu0
        %v564 = vadd.f32 0.0, %v563
        %v565 = vpop.f32.mrb[0].mxu0
        %v566 = vadd.f32 0.0, %v565
        %567 = vmatprep.mubr.bf16.mxu0 0
        %568 = vmatmul.mubr.bf16.gmra.mrb[0].mxu0 %v437
        %v569 = vpop.f32.mrb[0].mxu0
        %v570 = vadd.f32 0.0, %v569
        %v571 = vpop.f32.mrb[0].mxu0
        %v572 = vadd.f32 0.0, %v571
        %v573 = vpop.f32.mrb[0].mxu0
        %v574 = vadd.f32 0.0, %v573
        %v575 = vpop.f32.mrb[0].mxu0
        %v576 = vadd.f32 0.0, %v575
        %577 = vmatprep.mubr.bf16.mxu0 0
        %578 = vmatmul.mubr.bf16.gmra.mrb[0].mxu0 %v440
        %v579 = vpop.f32.mrb[0].mxu0
        %v580 = vadd.f32 0.0, %v579
        %v581 = vpop.f32.mrb[0].mxu0
        %v582 = vadd.f32 0.0, %v581
        %v583 = vpop.f32.mrb[0].mxu0
        %v584 = vadd.f32 0.0, %v583
        %v585 = vpop.f32.mrb[0].mxu0
        %v586 = vadd.f32 0.0, %v585
        %587 = vdwg.mxu0
        %v604 = vunpack.c.l.b16 %v305
        %v605 = vunpack.c.h.b16 %v305
        %v606 = vunpack.c.l.b16 %v306
        %v607 = vunpack.c.h.b16 %v306
        %v608 = vunpack.c.l.b16 %v307
        %v609 = vunpack.c.h.b16 %v307
        %v610 = vunpack.c.l.b16 %v308
        %v611 = vunpack.c.h.b16 %v308
        %v612 = vunpack.c.l.b16 %v309
        %v613 = vunpack.c.h.b16 %v309
        %v614 = vunpack.c.l.b16 %v310
        %v615 = vunpack.c.h.b16 %v310
        %v616 = vunpack.c.l.b16 %v311
        %v617 = vunpack.c.h.b16 %v311
        %v618 = vunpack.c.l.b16 %v312
        %v619 = vunpack.c.h.b16 %v312
        %v620 = vunpack.c.l.b16 %v313
        %v621 = vunpack.c.h.b16 %v313
        %v622 = vunpack.c.l.b16 %v314
        %v623 = vunpack.c.h.b16 %v314
        %v624 = vunpack.c.l.b16 %v315
        %v625 = vunpack.c.h.b16 %v315
        %v626 = vunpack.c.l.b16 %v316
        %v627 = vunpack.c.h.b16 %v316
        %v628 = vunpack.c.l.b16 %v317
        %v629 = vunpack.c.h.b16 %v317
        %v630 = vunpack.c.l.b16 %v318
        %v631 = vunpack.c.h.b16 %v318
        %v632 = vunpack.c.l.b16 %v319
        %v633 = vunpack.c.h.b16 %v319
        %v634 = vunpack.c.l.b16 %v320
        %v635 = vunpack.c.h.b16 %v320
        %v636 = vpack.c.b16 %v608, %v604
        %v637 = vpack.c.b16 %v609, %v605
        %v638 = vpack.c.b16 %v610, %v606
        %v639 = vpack.c.b16 %v611, %v607
        %v640 = vpack.c.b16 %v616, %v612
        %v641 = vpack.c.b16 %v617, %v613
        %v642 = vpack.c.b16 %v618, %v614
        %v643 = vpack.c.b16 %v619, %v615
        %v644 = vpack.c.b16 %v624, %v620
        %v645 = vpack.c.b16 %v625, %v621
        %v646 = vpack.c.b16 %v626, %v622
        %v647 = vpack.c.b16 %v627, %v623
        %v648 = vpack.c.b16 %v632, %v628
        %v649 = vpack.c.b16 %v633, %v629
        %v650 = vpack.c.b16 %v634, %v630
        %v651 = vpack.c.b16 %v635, %v631
        %v669 = vsel %vm429, %v301, 0
        %v672 = vsel %vm429, %v302, 0
        %v675 = vsel %vm429, %v303, 0
        %v678 = vsel %vm429, %v304, 0
        %680 = vmatprep.subr.bf16.mxu0 %v637
        %681 = vmatpush1.bf16.msra.mxu0 %v636
        %682 = vmatprep.subr.bf16.mxu0 %v641
        %683 = vmatpush1.bf16.msra.mxu0 %v640
        %684 = vmatprep.subr.bf16.mxu0 %v645
        %685 = vmatpush1.bf16.msra.mxu0 %v644
        %686 = vmatprep.subr.bf16.mxu0 %v649
        %687 = vmatpush1.bf16.msra.mxu0 %v648
        %688 = vmatprep.subr.bf16.mxu0 0
        %689 = vmatpush1.bf16.msra.mxu0 0
        %690 = vmatprep.subr.bf16.mxu0 0
        %691 = vmatpush1.bf16.msra.mxu0 0
        %692 = vmatprep.subr.bf16.mxu0 0
        %693 = vmatpush1.bf16.msra.mxu0 0
        %694 = vmatprep.subr.bf16.mxu0 0
        %695 = vmatpush1.bf16.msra.mxu0 0
        %696 = vmatprep.subr.bf16.mxu0 0
        %697 = vmatpush1.bf16.msra.mxu0 0
        %698 = vmatprep.subr.bf16.mxu0 0
        %699 = vmatpush1.bf16.msra.mxu0 0
        %700 = vmatprep.subr.bf16.mxu0 0
        %701 = vmatpush1.bf16.msra.mxu0 0
        %702 = vmatprep.subr.bf16.mxu0 0
        %703 = vmatpush1.bf16.msra.mxu0 0
        %704 = vmatprep.subr.bf16.mxu0 0
        %705 = vmatpush1.bf16.msra.mxu0 0
        %706 = vmatprep.subr.bf16.mxu0 0
        %707 = vmatpush1.bf16.msra.mxu0 0
        %708 = vmatprep.subr.bf16.mxu0 0
        %709 = vmatpush1.bf16.msra.mxu0 0
        %710 = vmatprep.subr.bf16.mxu0 0
        %711 = vmatpush1.bf16.msra.mxu0 0
        %712 = vmatprep.mubr.bf16.mxu0 0
        %713 = vmatmul.mubr.bf16.gmra.mrb[0].mxu0 %v669
        %v714 = vpop.f32.mrb[0].mxu0
        %v715 = vadd.f32 %v477, %v714
        %v716 = vpop.f32.mrb[0].mxu0
        %v717 = vadd.f32 %v479, %v716
        %v718 = vpop.f32.mrb[0].mxu0
        %v719 = vadd.f32 %v481, %v718
        %v720 = vpop.f32.mrb[0].mxu0
        %v721 = vadd.f32 %v483, %v720
        %722 = vmatprep.mubr.bf16.mxu0 0
        %723 = vmatmul.mubr.bf16.gmra.mrb[0].mxu0 %v672
        %v724 = vpop.f32.mrb[0].mxu0
        %v725 = vadd.f32 %v487, %v724
        %v726 = vpop.f32.mrb[0].mxu0
        %v727 = vadd.f32 %v489, %v726
        %v728 = vpop.f32.mrb[0].mxu0
        %v729 = vadd.f32 %v491, %v728
        %v730 = vpop.f32.mrb[0].mxu0
        %v731 = vadd.f32 %v493, %v730
        %732 = vmatprep.mubr.bf16.mxu0 0
        %733 = vmatmul.mubr.bf16.gmra.mrb[0].mxu0 %v675
        %v734 = vpop.f32.mrb[0].mxu0
        %v735 = vadd.f32 %v497, %v734
        %v736 = vpop.f32.mrb[0].mxu0
        %v737 = vadd.f32 %v499, %v736
        %v738 = vpop.f32.mrb[0].mxu0
        %v739 = vadd.f32 %v501, %v738
        %v740 = vpop.f32.mrb[0].mxu0
        %v741 = vadd.f32 %v503, %v740
        %742 = vmatprep.mubr.bf16.mxu0 0
        %743 = vmatmul.mubr.bf16.gmra.mrb[0].mxu0 %v678
        %v744 = vpop.f32.mrb[0].mxu0
        %v745 = vadd.f32 %v507, %v744
        %v746 = vpop.f32.mrb[0].mxu0
        %v747 = vadd.f32 %v509, %v746
        %v748 = vpop.f32.mrb[0].mxu0
        %v749 = vadd.f32 %v511, %v748
        %v750 = vpop.f32.mrb[0].mxu0
        %v751 = vadd.f32 %v513, %v750
        %752 = vdwg.mxu0
        %753 = vmatprep.subr.bf16.mxu0 %v639
        %754 = vmatpush1.bf16.msra.mxu0 %v638
        %755 = vmatprep.subr.bf16.mxu0 %v643
        %756 = vmatpush1.bf16.msra.mxu0 %v642
        %757 = vmatprep.subr.bf16.mxu0 %v647
        %758 = vmatpush1.bf16.msra.mxu0 %v646
        %759 = vmatprep.subr.bf16.mxu0 %v651
        %760 = vmatpush1.bf16.msra.mxu0 %v650
        %761 = vmatprep.subr.bf16.mxu0 0
        %762 = vmatpush1.bf16.msra.mxu0 0
        %763 = vmatprep.subr.bf16.mxu0 0
        %764 = vmatpush1.bf16.msra.mxu0 0
        %765 = vmatprep.subr.bf16.mxu0 0
        %766 = vmatpush1.bf16.msra.mxu0 0
        %767 = vmatprep.subr.bf16.mxu0 0
        %768 = vmatpush1.bf16.msra.mxu0 0
        %769 = vmatprep.subr.bf16.mxu0 0
        %770 = vmatpush1.bf16.msra.mxu0 0
        %771 = vmatprep.subr.bf16.mxu0 0
        %772 = vmatpush1.bf16.msra.mxu0 0
        %773 = vmatprep.subr.bf16.mxu0 0
        %774 = vmatpush1.bf16.msra.mxu0 0
        %775 = vmatprep.subr.bf16.mxu0 0
        %776 = vmatpush1.bf16.msra.mxu0 0
        %777 = vmatprep.subr.bf16.mxu0 0
        %778 = vmatpush1.bf16.msra.mxu0 0
        %779 = vmatprep.subr.bf16.mxu0 0
        %780 = vmatpush1.bf16.msra.mxu0 0
        %781 = vmatprep.subr.bf16.mxu0 0
        %782 = vmatpush1.bf16.msra.mxu0 0
        %783 = vmatprep.subr.bf16.mxu0 0
        %784 = vmatpush1.bf16.msra.mxu0 0
        %785 = vmatprep.mubr.bf16.mxu0 0
        %786 = vmatmul.mubr.bf16.gmra.mrb[0].mxu0 %v669
        %v787 = vpop.f32.mrb[0].mxu0
        %v788 = vadd.f32 %v550, %v787
        %v789 = vpop.f32.mrb[0].mxu0
        %v790 = vadd.f32 %v552, %v789
        %v791 = vpop.f32.mrb[0].mxu0
        %v792 = vadd.f32 %v554, %v791
        %v793 = vpop.f32.mrb[0].mxu0
        %v794 = vadd.f32 %v556, %v793
        %795 = vmatprep.mubr.bf16.mxu0 0
        %796 = vmatmul.mubr.bf16.gmra.mrb[0].mxu0 %v672
        %v797 = vpop.f32.mrb[0].mxu0
        %v798 = vadd.f32 %v560, %v797
        %v799 = vpop.f32.mrb[0].mxu0
        %v800 = vadd.f32 %v562, %v799
        %v801 = vpop.f32.mrb[0].mxu0
        %v802 = vadd.f32 %v564, %v801
        %v803 = vpop.f32.mrb[0].mxu0
        %v804 = vadd.f32 %v566, %v803
        %805 = vmatprep.mubr.bf16.mxu0 0
        %806 = vmatmul.mubr.bf16.gmra.mrb[0].mxu0 %v675
        %v807 = vpop.f32.mrb[0].mxu0
        %v808 = vadd.f32 %v570, %v807
        %v809 = vpop.f32.mrb[0].mxu0
        %v810 = vadd.f32 %v572, %v809
        %v811 = vpop.f32.mrb[0].mxu0
        %v812 = vadd.f32 %v574, %v811
        %v813 = vpop.f32.mrb[0].mxu0
        %v814 = vadd.f32 %v576, %v813
        %815 = vmatprep.mubr.bf16.mxu0 0
        %816 = vmatmul.mubr.bf16.gmra.mrb[0].mxu0 %v678
        %v817 = vpop.f32.mrb[0].mxu0
        %v818 = vadd.f32 %v580, %v817
        %v819 = vpop.f32.mrb[0].mxu0
        %v820 = vadd.f32 %v582, %v819
        %v821 = vpop.f32.mrb[0].mxu0
        %v822 = vadd.f32 %v584, %v821
        %v823 = vpop.f32.mrb[0].mxu0
        %v824 = vadd.f32 %v586, %v823
        %825 = vdwg.mxu0
        %s826 = scalar_lea.vmem %s286, 16
        %v827 = vld [vmem:[%s826] sm:$0xff]
        %v828 = vld [vmem:[%s826 + $0x10] sm:$0xff]
        %v829 = vld [vmem:[%s826 + $0x20] sm:$0xff]
        %v830 = vld [vmem:[%s826 + $0x30] sm:$0xff]
        %v831 = vld [vmem:[%s826 + $0x40] sm:$0xff]
        %v832 = vld [vmem:[%s826 + $0x50] sm:$0xff]
        %v833 = vld [vmem:[%s826 + $0x60] sm:$0xff]
        %v834 = vld [vmem:[%s826 + $0x70] sm:$0xff]
        %v835 = vpack.c.bf16 %v828, %v827
        %v836 = vpack.c.bf16 %v830, %v829
        %v837 = vpack.c.bf16 %v832, %v831
        %v838 = vpack.c.bf16 %v834, %v833
        %v839 = vld [vmem:[%s1 + $0x100] sm:$0xff]
        %v840 = vld [vmem:[%s1 + $0x108] sm:$0xff]
        %v841 = vld [vmem:[%s1 + $0x110] sm:$0xff]
        %v842 = vld [vmem:[%s1 + $0x118] sm:$0xff]
        %v843 = vld [vmem:[%s1 + $0x120] sm:$0xff]
        %v844 = vld [vmem:[%s1 + $0x128] sm:$0xff]
        %v845 = vld [vmem:[%s1 + $0x130] sm:$0xff]
        %v846 = vld [vmem:[%s1 + $0x138] sm:$0xff]
        %v847 = vld [vmem:[%s1 + $0x140] sm:$0xff]
        %v848 = vld [vmem:[%s1 + $0x148] sm:$0xff]
        %v849 = vld [vmem:[%s1 + $0x150] sm:$0xff]
        %v850 = vld [vmem:[%s1 + $0x158] sm:$0xff]
        %v851 = vld [vmem:[%s1 + $0x160] sm:$0xff]
        %v852 = vld [vmem:[%s1 + $0x168] sm:$0xff]
        %v853 = vld [vmem:[%s1 + $0x170] sm:$0xff]
        %v854 = vld [vmem:[%s1 + $0x178] sm:$0xff]
        %v871 = vunpack.c.l.b16 %v839
        %v872 = vunpack.c.h.b16 %v839
        %v873 = vunpack.c.l.b16 %v840
        %v874 = vunpack.c.h.b16 %v840
        %v875 = vunpack.c.l.b16 %v841
        %v876 = vunpack.c.h.b16 %v841
        %v877 = vunpack.c.l.b16 %v842
        %v878 = vunpack.c.h.b16 %v842
        %v879 = vunpack.c.l.b16 %v843
        %v880 = vunpack.c.h.b16 %v843
        %v881 = vunpack.c.l.b16 %v844
        %v882 = vunpack.c.h.b16 %v844
        %v883 = vunpack.c.l.b16 %v845
        %v884 = vunpack.c.h.b16 %v845
        %v885 = vunpack.c.l.b16 %v846
        %v886 = vunpack.c.h.b16 %v846
        %v887 = vunpack.c.l.b16 %v847
        %v888 = vunpack.c.h.b16 %v847
        %v889 = vunpack.c.l.b16 %v848
        %v890 = vunpack.c.h.b16 %v848
        %v891 = vunpack.c.l.b16 %v849
        %v892 = vunpack.c.h.b16 %v849
        %v893 = vunpack.c.l.b16 %v850
        %v894 = vunpack.c.h.b16 %v850
        %v895 = vunpack.c.l.b16 %v851
        %v896 = vunpack.c.h.b16 %v851
        %v897 = vunpack.c.l.b16 %v852
        %v898 = vunpack.c.h.b16 %v852
        %v899 = vunpack.c.l.b16 %v853
        %v900 = vunpack.c.h.b16 %v853
        %v901 = vunpack.c.l.b16 %v854
        %v902 = vunpack.c.h.b16 %v854
        %v903 = vpack.c.b16 %v875, %v871
        %v904 = vpack.c.b16 %v876, %v872
        %v905 = vpack.c.b16 %v877, %v873
        %v906 = vpack.c.b16 %v878, %v874
        %v907 = vpack.c.b16 %v883, %v879
        %v908 = vpack.c.b16 %v884, %v880
        %v909 = vpack.c.b16 %v885, %v881
        %v910 = vpack.c.b16 %v886, %v882
        %v911 = vpack.c.b16 %v891, %v887
        %v912 = vpack.c.b16 %v892, %v888
        %v913 = vpack.c.b16 %v893, %v889
        %v914 = vpack.c.b16 %v894, %v890
        %v915 = vpack.c.b16 %v899, %v895
        %v916 = vpack.c.b16 %v900, %v896
        %v917 = vpack.c.b16 %v901, %v897
        %v918 = vpack.c.b16 %v902, %v898
        %v936 = vsel %vm429, %v835, 0
        %v939 = vsel %vm429, %v836, 0
        %v942 = vsel %vm429, %v837, 0
        %v945 = vsel %vm429, %v838, 0
        %947 = vmatprep.subr.bf16.mxu0 %v904
        %948 = vmatpush1.bf16.msra.mxu0 %v903
        %949 = vmatprep.subr.bf16.mxu0 %v908
        %950 = vmatpush1.bf16.msra.mxu0 %v907
        %951 = vmatprep.subr.bf16.mxu0 %v912
        %952 = vmatpush1.bf16.msra.mxu0 %v911
        %953 = vmatprep.subr.bf16.mxu0 %v916
        %954 = vmatpush1.bf16.msra.mxu0 %v915
        %955 = vmatprep.subr.bf16.mxu0 0
        %956 = vmatpush1.bf16.msra.mxu0 0
        %957 = vmatprep.subr.bf16.mxu0 0
        %958 = vmatpush1.bf16.msra.mxu0 0
        %959 = vmatprep.subr.bf16.mxu0 0
        %960 = vmatpush1.bf16.msra.mxu0 0
        %961 = vmatprep.subr.bf16.mxu0 0
        %962 = vmatpush1.bf16.msra.mxu0 0
        %963 = vmatprep.subr.bf16.mxu0 0
        %964 = vmatpush1.bf16.msra.mxu0 0
        %965 = vmatprep.subr.bf16.mxu0 0
        %966 = vmatpush1.bf16.msra.mxu0 0
        %967 = vmatprep.subr.bf16.mxu0 0
        %968 = vmatpush1.bf16.msra.mxu0 0
        %969 = vmatprep.subr.bf16.mxu0 0
        %970 = vmatpush1.bf16.msra.mxu0 0
        %971 = vmatprep.subr.bf16.mxu0 0
        %972 = vmatpush1.bf16.msra.mxu0 0
        %973 = vmatprep.subr.bf16.mxu0 0
        %974 = vmatpush1.bf16.msra.mxu0 0
        %975 = vmatprep.subr.bf16.mxu0 0
        %976 = vmatpush1.bf16.msra.mxu0 0
        %977 = vmatprep.subr.bf16.mxu0 0
        %978 = vmatpush1.bf16.msra.mxu0 0
        %979 = vmatprep.mubr.bf16.mxu0 0
        %980 = vmatmul.mubr.bf16.gmra.mrb[0].mxu0 %v936
        %v981 = vpop.f32.mrb[0].mxu0
        %v982 = vadd.f32 0.0, %v981
        %v983 = vpop.f32.mrb[0].mxu0
        %v984 = vadd.f32 0.0, %v983
        %v985 = vpop.f32.mrb[0].mxu0
        %v986 = vadd.f32 0.0, %v985
        %v987 = vpop.f32.mrb[0].mxu0
        %v988 = vadd.f32 0.0, %v987
        %989 = vmatprep.mubr.bf16.mxu0 0
        %990 = vmatmul.mubr.bf16.gmra.mrb[0].mxu0 %v939
        %v991 = vpop.f32.mrb[0].mxu0
        %v992 = vadd.f32 0.0, %v991
        %v993 = vpop.f32.mrb[0].mxu0
        %v994 = vadd.f32 0.0, %v993
        %v995 = vpop.f32.mrb[0].mxu0
        %v996 = vadd.f32 0.0, %v995
        %v997 = vpop.f32.mrb[0].mxu0
        %v998 = vadd.f32 0.0, %v997
        %999 = vmatprep.mubr.bf16.mxu0 0
        %1000 = vmatmul.mubr.bf16.gmra.mrb[0].mxu0 %v942
        %v1001 = vpop.f32.mrb[0].mxu0
        %v1002 = vadd.f32 0.0, %v1001
        %v1003 = vpop.f32.mrb[0].mxu0
        %v1004 = vadd.f32 0.0, %v1003
        %v1005 = vpop.f32.mrb[0].mxu0
        %v1006 = vadd.f32 0.0, %v1005
        %v1007 = vpop.f32.mrb[0].mxu0
        %v1008 = vadd.f32 0.0, %v1007
        %1009 = vmatprep.mubr.bf16.mxu0 0
        %1010 = vmatmul.mubr.bf16.gmra.mrb[0].mxu0 %v945
        %v1011 = vpop.f32.mrb[0].mxu0
        %v1012 = vadd.f32 0.0, %v1011
        %v1013 = vpop.f32.mrb[0].mxu0
        %v1014 = vadd.f32 0.0, %v1013
        %v1015 = vpop.f32.mrb[0].mxu0
        %v1016 = vadd.f32 0.0, %v1015
        %v1017 = vpop.f32.mrb[0].mxu0
        %v1018 = vadd.f32 0.0, %v1017
        %1019 = vdwg.mxu0
        %1020 = vmatprep.subr.bf16.mxu0 %v906
        %1021 = vmatpush1.bf16.msra.mxu0 %v905
        %1022 = vmatprep.subr.bf16.mxu0 %v910
        %1023 = vmatpush1.bf16.msra.mxu0 %v909
        %1024 = vmatprep.subr.bf16.mxu0 %v914
        %1025 = vmatpush1.bf16.msra.mxu0 %v913
        %1026 = vmatprep.subr.bf16.mxu0 %v918
        %1027 = vmatpush1.bf16.msra.mxu0 %v917
        %1028 = vmatprep.subr.bf16.mxu0 0
        %1029 = vmatpush1.bf16.msra.mxu0 0
        %1030 = vmatprep.subr.bf16.mxu0 0
        %1031 = vmatpush1.bf16.msra.mxu0 0
        %1032 = vmatprep.subr.bf16.mxu0 0
        %1033 = vmatpush1.bf16.msra.mxu0 0
        %1034 = vmatprep.subr.bf16.mxu0 0
        %1035 = vmatpush1.bf16.msra.mxu0 0
        %1036 = vmatprep.subr.bf16.mxu0 0
        %1037 = vmatpush1.bf16.msra.mxu0 0
        %1038 = vmatprep.subr.bf16.mxu0 0
        %1039 = vmatpush1.bf16.msra.mxu0 0
        %1040 = vmatprep.subr.bf16.mxu0 0
        %1041 = vmatpush1.bf16.msra.mxu0 0
        %1042 = vmatprep.subr.bf16.mxu0 0
        %1043 = vmatpush1.bf16.msra.mxu0 0
        %1044 = vmatprep.subr.bf16.mxu0 0
        %1045 = vmatpush1.bf16.msra.mxu0 0
        %1046 = vmatprep.subr.bf16.mxu0 0
        %1047 = vmatpush1.bf16.msra.mxu0 0
        %1048 = vmatprep.subr.bf16.mxu0 0
        %1049 = vmatpush1.bf16.msra.mxu0 0
        %1050 = vmatprep.subr.bf16.mxu0 0
        %1051 = vmatpush1.bf16.msra.mxu0 0
        %1052 = vmatprep.mubr.bf16.mxu0 0
        %1053 = vmatmul.mubr.bf16.gmra.mrb[0].mxu0 %v936
        %v1054 = vpop.f32.mrb[0].mxu0
        %v1055 = vadd.f32 0.0, %v1054
        %v1056 = vpop.f32.mrb[0].mxu0
        %v1057 = vadd.f32 0.0, %v1056
        %v1058 = vpop.f32.mrb[0].mxu0
        %v1059 = vadd.f32 0.0, %v1058
        %v1060 = vpop.f32.mrb[0].mxu0
        %v1061 = vadd.f32 0.0, %v1060
        %1062 = vmatprep.mubr.bf16.mxu0 0
        %1063 = vmatmul.mubr.bf16.gmra.mrb[0].mxu0 %v939
        %v1064 = vpop.f32.mrb[0].mxu0
        %v1065 = vadd.f32 0.0, %v1064
        %v1066 = vpop.f32.mrb[0].mxu0
        %v1067 = vadd.f32 0.0, %v1066
        %v1068 = vpop.f32.mrb[0].mxu0
        %v1069 = vadd.f32 0.0, %v1068
        %v1070 = vpop.f32.mrb[0].mxu0
        %v1071 = vadd.f32 0.0, %v1070
        %1072 = vmatprep.mubr.bf16.mxu0 0
        %1073 = vmatmul.mubr.bf16.gmra.mrb[0].mxu0 %v942
        %v1074 = vpop.f32.mrb[0].mxu0
        %v1075 = vadd.f32 0.0, %v1074
        %v1076 = vpop.f32.mrb[0].mxu0
        %v1077 = vadd.f32 0.0, %v1076
        %v1078 = vpop.f32.mrb[0].mxu0
        %v1079 = vadd.f32 0.0, %v1078
        %v1080 = vpop.f32.mrb[0].mxu0
        %v1081 = vadd.f32 0.0, %v1080
        %1082 = vmatprep.mubr.bf16.mxu0 0
        %1083 = vmatmul.mubr.bf16.gmra.mrb[0].mxu0 %v945
        %v1084 = vpop.f32.mrb[0].mxu0
        %v1085 = vadd.f32 0.0, %v1084
        %v1086 = vpop.f32.mrb[0].mxu0
        %v1087 = vadd.f32 0.0, %v1086
        %v1088 = vpop.f32.mrb[0].mxu0
        %v1089 = vadd.f32 0.0, %v1088
        %v1090 = vpop.f32.mrb[0].mxu0
        %v1091 = vadd.f32 0.0, %v1090
        %1092 = vdwg.mxu0
        %v1093 = vadd.f32 %v715, %v982
        %v1094 = vadd.f32 %v717, %v984
        %v1095 = vadd.f32 %v788, %v1055
        %v1096 = vadd.f32 %v790, %v1057
        %v1097 = vadd.f32 %v719, %v986
        %v1098 = vadd.f32 %v721, %v988
        %v1099 = vadd.f32 %v792, %v1059
        %v1100 = vadd.f32 %v794, %v1061
        %v1101 = vadd.f32 %v725, %v992
        %v1102 = vadd.f32 %v727, %v994
        %v1103 = vadd.f32 %v798, %v1065
        %v1104 = vadd.f32 %v800, %v1067
        %v1105 = vadd.f32 %v729, %v996
        %v1106 = vadd.f32 %v731, %v998
        %v1107 = vadd.f32 %v802, %v1069
        %v1108 = vadd.f32 %v804, %v1071
        %v1109 = vadd.f32 %v735, %v1002
        %v1110 = vadd.f32 %v737, %v1004
        %v1111 = vadd.f32 %v808, %v1075
        %v1112 = vadd.f32 %v810, %v1077
        %v1113 = vadd.f32 %v739, %v1006
        %v1114 = vadd.f32 %v741, %v1008
        %v1115 = vadd.f32 %v812, %v1079
        %v1116 = vadd.f32 %v814, %v1081
        %v1117 = vadd.f32 %v745, %v1012
        %v1118 = vadd.f32 %v747, %v1014
        %v1119 = vadd.f32 %v818, %v1085
        %v1120 = vadd.f32 %v820, %v1087
        %v1121 = vadd.f32 %v749, %v1016
        %v1122 = vadd.f32 %v751, %v1018
        %v1123 = vadd.f32 %v822, %v1089
        %v1124 = vadd.f32 %v824, %v1091
        %v1125 = vld [vmem:[%s826 + $0x1] sm:$0xff]
        %v1126 = vld [vmem:[%s826 + $0x11] sm:$0xff]
        %v1127 = vld [vmem:[%s826 + $0x21] sm:$0xff]
        %v1128 = vld [vmem:[%s826 + $0x31] sm:$0xff]
        %v1129 = vld [vmem:[%s826 + $0x41] sm:$0xff]
        %v1130 = vld [vmem:[%s826 + $0x51] sm:$0xff]
        %v1131 = vld [vmem:[%s826 + $0x61] sm:$0xff]
        %v1132 = vld [vmem:[%s826 + $0x71] sm:$0xff]
        %v1133 = vpack.c.bf16 %v1126, %v1125
        %v1134 = vpack.c.bf16 %v1128, %v1127
        %v1135 = vpack.c.bf16 %v1130, %v1129
        %v1136 = vpack.c.bf16 %v1132, %v1131
        %v1137 = vld [vmem:[%s1 + $0x180] sm:$0xff]
        %v1138 = vld [vmem:[%s1 + $0x188] sm:$0xff]
        %v1139 = vld [vmem:[%s1 + $0x190] sm:$0xff]
        %v1140 = vld [vmem:[%s1 + $0x198] sm:$0xff]
        %v1141 = vld [vmem:[%s1 + $0x1a0] sm:$0xff]
        %v1142 = vld [vmem:[%s1 + $0x1a8] sm:$0xff]
        %v1143 = vld [vmem:[%s1 + $0x1b0] sm:$0xff]
        %v1144 = vld [vmem:[%s1 + $0x1b8] sm:$0xff]
        %v1145 = vld [vmem:[%s1 + $0x1c0] sm:$0xff]
        %v1146 = vld [vmem:[%s1 + $0x1c8] sm:$0xff]
        %v1147 = vld [vmem:[%s1 + $0x1d0] sm:$0xff]
        %v1148 = vld [vmem:[%s1 + $0x1d8] sm:$0xff]
        %v1149 = vld [vmem:[%s1 + $0x1e0] sm:$0xff]
        %v1150 = vld [vmem:[%s1 + $0x1e8] sm:$0xff]
        %v1151 = vld [vmem:[%s1 + $0x1f0] sm:$0xff]
        %v1152 = vld [vmem:[%s1 + $0x1f8] sm:$0xff]
        %v1169 = vunpack.c.l.b16 %v1137
        %v1170 = vunpack.c.h.b16 %v1137
        %v1171 = vunpack.c.l.b16 %v1138
        %v1172 = vunpack.c.h.b16 %v1138
        %v1173 = vunpack.c.l.b16 %v1139
        %v1174 = vunpack.c.h.b16 %v1139
        %v1175 = vunpack.c.l.b16 %v1140
        %v1176 = vunpack.c.h.b16 %v1140
        %v1177 = vunpack.c.l.b16 %v1141
        %v1178 = vunpack.c.h.b16 %v1141
        %v1179 = vunpack.c.l.b16 %v1142
        %v1180 = vunpack.c.h.b16 %v1142
        %v1181 = vunpack.c.l.b16 %v1143
        %v1182 = vunpack.c.h.b16 %v1143
        %v1183 = vunpack.c.l.b16 %v1144
        %v1184 = vunpack.c.h.b16 %v1144
        %v1185 = vunpack.c.l.b16 %v1145
        %v1186 = vunpack.c.h.b16 %v1145
        %v1187 = vunpack.c.l.b16 %v1146
        %v1188 = vunpack.c.h.b16 %v1146
        %v1189 = vunpack.c.l.b16 %v1147
        %v1190 = vunpack.c.h.b16 %v1147
        %v1191 = vunpack.c.l.b16 %v1148
        %v1192 = vunpack.c.h.b16 %v1148
        %v1193 = vunpack.c.l.b16 %v1149
        %v1194 = vunpack.c.h.b16 %v1149
        %v1195 = vunpack.c.l.b16 %v1150
        %v1196 = vunpack.c.h.b16 %v1150
        %v1197 = vunpack.c.l.b16 %v1151
        %v1198 = vunpack.c.h.b16 %v1151
        %v1199 = vunpack.c.l.b16 %v1152
        %v1200 = vunpack.c.h.b16 %v1152
        %v1201 = vpack.c.b16 %v1173, %v1169
        %v1202 = vpack.c.b16 %v1174, %v1170
        %v1203 = vpack.c.b16 %v1175, %v1171
        %v1204 = vpack.c.b16 %v1176, %v1172
        %v1205 = vpack.c.b16 %v1181, %v1177
        %v1206 = vpack.c.b16 %v1182, %v1178
        %v1207 = vpack.c.b16 %v1183, %v1179
        %v1208 = vpack.c.b16 %v1184, %v1180
        %v1209 = vpack.c.b16 %v1189, %v1185
        %v1210 = vpack.c.b16 %v1190, %v1186
        %v1211 = vpack.c.b16 %v1191, %v1187
        %v1212 = vpack.c.b16 %v1192, %v1188
        %v1213 = vpack.c.b16 %v1197, %v1193
        %v1214 = vpack.c.b16 %v1198, %v1194
        %v1215 = vpack.c.b16 %v1199, %v1195
        %v1216 = vpack.c.b16 %v1200, %v1196
        %v1234 = vsel %vm429, %v1133, 0
        %v1237 = vsel %vm429, %v1134, 0
        %v1240 = vsel %vm429, %v1135, 0
        %v1243 = vsel %vm429, %v1136, 0
        %1245 = vmatprep.subr.bf16.mxu0 %v1202
        %1246 = vmatpush1.bf16.msra.mxu0 %v1201
        %1247 = vmatprep.subr.bf16.mxu0 %v1206
        %1248 = vmatpush1.bf16.msra.mxu0 %v1205
        %1249 = vmatprep.subr.bf16.mxu0 %v1210
        %1250 = vmatpush1.bf16.msra.mxu0 %v1209
        %1251 = vmatprep.subr.bf16.mxu0 %v1214
        %1252 = vmatpush1.bf16.msra.mxu0 %v1213
        %1253 = vmatprep.subr.bf16.mxu0 0
        %1254 = vmatpush1.bf16.msra.mxu0 0
        %1255 = vmatprep.subr.bf16.mxu0 0
        %1256 = vmatpush1.bf16.msra.mxu0 0
        %1257 = vmatprep.subr.bf16.mxu0 0
        %1258 = vmatpush1.bf16.msra.mxu0 0
        %1259 = vmatprep.subr.bf16.mxu0 0
        %1260 = vmatpush1.bf16.msra.mxu0 0
        %1261 = vmatprep.subr.bf16.mxu0 0
        %1262 = vmatpush1.bf16.msra.mxu0 0
        %1263 = vmatprep.subr.bf16.mxu0 0
        %1264 = vmatpush1.bf16.msra.mxu0 0
        %1265 = vmatprep.subr.bf16.mxu0 0
        %1266 = vmatpush1.bf16.msra.mxu0 0
        %1267 = vmatprep.subr.bf16.mxu0 0
        %1268 = vmatpush1.bf16.msra.mxu0 0
        %1269 = vmatprep.subr.bf16.mxu0 0
        %1270 = vmatpush1.bf16.msra.mxu0 0
        %1271 = vmatprep.subr.bf16.mxu0 0
        %1272 = vmatpush1.bf16.msra.mxu0 0
        %1273 = vmatprep.subr.bf16.mxu0 0
        %1274 = vmatpush1.bf16.msra.mxu0 0
        %1275 = vmatprep.subr.bf16.mxu0 0
        %1276 = vmatpush1.bf16.msra.mxu0 0
        %1277 = vmatprep.mubr.bf16.mxu0 0
        %1278 = vmatmul.mubr.bf16.gmra.mrb[0].mxu0 %v1234
        %v1279 = vpop.f32.mrb[0].mxu0
        %v1280 = vadd.f32 0.0, %v1279
        %v1281 = vpop.f32.mrb[0].mxu0
        %v1282 = vadd.f32 0.0, %v1281
        %v1283 = vpop.f32.mrb[0].mxu0
        %v1284 = vadd.f32 0.0, %v1283
        %v1285 = vpop.f32.mrb[0].mxu0
        %v1286 = vadd.f32 0.0, %v1285
        %1287 = vmatprep.mubr.bf16.mxu0 0
        %1288 = vmatmul.mubr.bf16.gmra.mrb[0].mxu0 %v1237
        %v1289 = vpop.f32.mrb[0].mxu0
        %v1290 = vadd.f32 0.0, %v1289
        %v1291 = vpop.f32.mrb[0].mxu0
        %v1292 = vadd.f32 0.0, %v1291
        %v1293 = vpop.f32.mrb[0].mxu0
        %v1294 = vadd.f32 0.0, %v1293
        %v1295 = vpop.f32.mrb[0].mxu0
        %v1296 = vadd.f32 0.0, %v1295
        %1297 = vmatprep.mubr.bf16.mxu0 0
        %1298 = vmatmul.mubr.bf16.gmra.mrb[0].mxu0 %v1240
        %v1299 = vpop.f32.mrb[0].mxu0
        %v1300 = vadd.f32 0.0, %v1299
        %v1301 = vpop.f32.mrb[0].mxu0
        %v1302 = vadd.f32 0.0, %v1301
        %v1303 = vpop.f32.mrb[0].mxu0
        %v1304 = vadd.f32 0.0, %v1303
        %v1305 = vpop.f32.mrb[0].mxu0
        %v1306 = vadd.f32 0.0, %v1305
        %1307 = vmatprep.mubr.bf16.mxu0 0
        %1308 = vmatmul.mubr.bf16.gmra.mrb[0].mxu0 %v1243
        %v1309 = vpop.f32.mrb[0].mxu0
        %v1310 = vadd.f32 0.0, %v1309
        %v1311 = vpop.f32.mrb[0].mxu0
        %v1312 = vadd.f32 0.0, %v1311
        %v1313 = vpop.f32.mrb[0].mxu0
        %v1314 = vadd.f32 0.0, %v1313
        %v1315 = vpop.f32.mrb[0].mxu0
        %v1316 = vadd.f32 0.0, %v1315
        %1317 = vdwg.mxu0
        %1318 = vmatprep.subr.bf16.mxu0 %v1204
        %1319 = vmatpush1.bf16.msra.mxu0 %v1203
        %1320 = vmatprep.subr.bf16.mxu0 %v1208
        %1321 = vmatpush1.bf16.msra.mxu0 %v1207
        %1322 = vmatprep.subr.bf16.mxu0 %v1212
        %1323 = vmatpush1.bf16.msra.mxu0 %v1211
        %1324 = vmatprep.subr.bf16.mxu0 %v1216
        %1325 = vmatpush1.bf16.msra.mxu0 %v1215
        %1326 = vmatprep.subr.bf16.mxu0 0
        %1327 = vmatpush1.bf16.msra.mxu0 0
        %1328 = vmatprep.subr.bf16.mxu0 0
        %1329 = vmatpush1.bf16.msra.mxu0 0
        %1330 = vmatprep.subr.bf16.mxu0 0
        %1331 = vmatpush1.bf16.msra.mxu0 0
        %1332 = vmatprep.subr.bf16.mxu0 0
        %1333 = vmatpush1.bf16.msra.mxu0 0
        %1334 = vmatprep.subr.bf16.mxu0 0
        %1335 = vmatpush1.bf16.msra.mxu0 0
        %1336 = vmatprep.subr.bf16.mxu0 0
        %1337 = vmatpush1.bf16.msra.mxu0 0
        %1338 = vmatprep.subr.bf16.mxu0 0
        %1339 = vmatpush1.bf16.msra.mxu0 0
        %1340 = vmatprep.subr.bf16.mxu0 0
        %1341 = vmatpush1.bf16.msra.mxu0 0
        %1342 = vmatprep.subr.bf16.mxu0 0
        %1343 = vmatpush1.bf16.msra.mxu0 0
        %1344 = vmatprep.subr.bf16.mxu0 0
        %1345 = vmatpush1.bf16.msra.mxu0 0
        %1346 = vmatprep.subr.bf16.mxu0 0
        %1347 = vmatpush1.bf16.msra.mxu0 0
        %1348 = vmatprep.subr.bf16.mxu0 0
        %1349 = vmatpush1.bf16.msra.mxu0 0
        %1350 = vmatprep.mubr.bf16.mxu0 0
        %1351 = vmatmul.mubr.bf16.gmra.mrb[0].mxu0 %v1234
        %v1352 = vpop.f32.mrb[0].mxu0
        %v1353 = vadd.f32 0.0, %v1352
        %v1354 = vpop.f32.mrb[0].mxu0
        %v1355 = vadd.f32 0.0, %v1354
        %v1356 = vpop.f32.mrb[0].mxu0
        %v1357 = vadd.f32 0.0, %v1356
        %v1358 = vpop.f32.mrb[0].mxu0
        %v1359 = vadd.f32 0.0, %v1358
        %1360 = vmatprep.mubr.bf16.mxu0 0
        %1361 = vmatmul.mubr.bf16.gmra.mrb[0].mxu0 %v1237
        %v1362 = vpop.f32.mrb[0].mxu0
        %v1363 = vadd.f32 0.0, %v1362
        %v1364 = vpop.f32.mrb[0].mxu0
        %v1365 = vadd.f32 0.0, %v1364
        %v1366 = vpop.f32.mrb[0].mxu0
        %v1367 = vadd.f32 0.0, %v1366
        %v1368 = vpop.f32.mrb[0].mxu0
        %v1369 = vadd.f32 0.0, %v1368
        %1370 = vmatprep.mubr.bf16.mxu0 0
        %1371 = vmatmul.mubr.bf16.gmra.mrb[0].mxu0 %v1240
        %v1372 = vpop.f32.mrb[0].mxu0
        %v1373 = vadd.f32 0.0, %v1372
        %v1374 = vpop.f32.mrb[0].mxu0
        %v1375 = vadd.f32 0.0, %v1374
        %v1376 = vpop.f32.mrb[0].mxu0
        %v1377 = vadd.f32 0.0, %v1376
        %v1378 = vpop.f32.mrb[0].mxu0
        %v1379 = vadd.f32 0.0, %v1378
        %1380 = vmatprep.mubr.bf16.mxu0 0
        %1381 = vmatmul.mubr.bf16.gmra.mrb[0].mxu0 %v1243
        %v1382 = vpop.f32.mrb[0].mxu0
        %v1383 = vadd.f32 0.0, %v1382
        %v1384 = vpop.f32.mrb[0].mxu0
        %v1385 = vadd.f32 0.0, %v1384
        %v1386 = vpop.f32.mrb[0].mxu0
        %v1387 = vadd.f32 0.0, %v1386
        %v1388 = vpop.f32.mrb[0].mxu0
        %v1389 = vadd.f32 0.0, %v1388
        %1390 = vdwg.mxu0
        %v1391 = vadd.f32 %v1093, %v1280
        %v1392 = vadd.f32 %v1094, %v1282
        %v1393 = vadd.f32 %v1095, %v1353
        %v1394 = vadd.f32 %v1096, %v1355
        %v1395 = vadd.f32 %v1097, %v1284
        %v1396 = vadd.f32 %v1098, %v1286
        %v1397 = vadd.f32 %v1099, %v1357
        %v1398 = vadd.f32 %v1100, %v1359
        %v1399 = vadd.f32 %v1101, %v1290
        %v1400 = vadd.f32 %v1102, %v1292
        %v1401 = vadd.f32 %v1103, %v1363
        %v1402 = vadd.f32 %v1104, %v1365
        %v1403 = vadd.f32 %v1105, %v1294
        %v1404 = vadd.f32 %v1106, %v1296
        %v1405 = vadd.f32 %v1107, %v1367
        %v1406 = vadd.f32 %v1108, %v1369
        %v1407 = vadd.f32 %v1109, %v1300
        %v1408 = vadd.f32 %v1110, %v1302
        %v1409 = vadd.f32 %v1111, %v1373
        %v1410 = vadd.f32 %v1112, %v1375
        %v1411 = vadd.f32 %v1113, %v1304
        %v1412 = vadd.f32 %v1114, %v1306
        %v1413 = vadd.f32 %v1115, %v1377
        %v1414 = vadd.f32 %v1116, %v1379
        %v1415 = vadd.f32 %v1117, %v1310
        %v1416 = vadd.f32 %v1118, %v1312
        %v1417 = vadd.f32 %v1119, %v1383
        %v1418 = vadd.f32 %v1120, %v1385
        %v1419 = vadd.f32 %v1121, %v1314
        %v1420 = vadd.f32 %v1122, %v1316
        %v1421 = vadd.f32 %v1123, %v1387
        %v1422 = vadd.f32 %v1124, %v1389
        %v1423 = vld [vmem:[#allocation4] sm:$0xf]
        %v1425 = vlaneseq
        %v1426 = vshrl.u32 %v1425, 7
        %v1427 = vsub.s32 0, %v1426
        %v1428 = vrot.slane %v1423, %v1427
        %v1429 = vlaneseq
        %v1430 = vshrl.u32 %v1429, 7
        %v1431 = vsub.s32 1, %v1430
        %v1432 = vrot.slane %v1423, %v1431
        %v1433 = vlaneseq
        %v1434 = vshrl.u32 %v1433, 7
        %v1435 = vsub.s32 2, %v1434
        %v1436 = vrot.slane %v1423, %v1435
        %v1437 = vlaneseq
        %v1438 = vshrl.u32 %v1437, 7
        %v1439 = vsub.s32 3, %v1438
        %v1440 = vrot.slane %v1423, %v1439
        %v1445 = vadd.f32 %v1391, %v1428
        %v1446 = vadd.f32 %v1392, %v1432
        %v1447 = vadd.f32 %v1393, %v1436
        %v1448 = vadd.f32 %v1394, %v1440
        %v1449 = vadd.f32 %v1395, %v1428
        %v1450 = vadd.f32 %v1396, %v1432
        %v1451 = vadd.f32 %v1397, %v1436
        %v1452 = vadd.f32 %v1398, %v1440
        %v1453 = vadd.f32 %v1399, %v1428
        %v1454 = vadd.f32 %v1400, %v1432
        %v1455 = vadd.f32 %v1401, %v1436
        %v1456 = vadd.f32 %v1402, %v1440
        %v1457 = vadd.f32 %v1403, %v1428
        %v1458 = vadd.f32 %v1404, %v1432
        %v1459 = vadd.f32 %v1405, %v1436
        %v1460 = vadd.f32 %v1406, %v1440
        %v1461 = vadd.f32 %v1407, %v1428
        %v1462 = vadd.f32 %v1408, %v1432
        %v1463 = vadd.f32 %v1409, %v1436
        %v1464 = vadd.f32 %v1410, %v1440
        %v1465 = vadd.f32 %v1411, %v1428
        %v1466 = vadd.f32 %v1412, %v1432
        %v1467 = vadd.f32 %v1413, %v1436
        %v1468 = vadd.f32 %v1414, %v1440
        %v1469 = vadd.f32 %v1415, %v1428
        %v1470 = vadd.f32 %v1416, %v1432
        %v1471 = vadd.f32 %v1417, %v1436
        %v1472 = vadd.f32 %v1418, %v1440
        %v1473 = vadd.f32 %v1419, %v1428
        %v1474 = vadd.f32 %v1420, %v1432
        %v1475 = vadd.f32 %v1421, %v1436
        %v1476 = vadd.f32 %v1422, %v1440
        %v1477 = vmax.f32 %v1445, 0.0
        %v1478 = vmax.f32 %v1446, 0.0
        %v1479 = vmax.f32 %v1447, 0.0
        %v1480 = vmax.f32 %v1448, 0.0
        %v1481 = vmax.f32 %v1449, 0.0
        %v1482 = vmax.f32 %v1450, 0.0
        %v1483 = vmax.f32 %v1451, 0.0
        %v1484 = vmax.f32 %v1452, 0.0
        %v1485 = vmax.f32 %v1453, 0.0
        %v1486 = vmax.f32 %v1454, 0.0
        %v1487 = vmax.f32 %v1455, 0.0
        %v1488 = vmax.f32 %v1456, 0.0
        %v1489 = vmax.f32 %v1457, 0.0
        %v1490 = vmax.f32 %v1458, 0.0
        %v1491 = vmax.f32 %v1459, 0.0
        %v1492 = vmax.f32 %v1460, 0.0
        %v1493 = vmax.f32 %v1461, 0.0
        %v1494 = vmax.f32 %v1462, 0.0
        %v1495 = vmax.f32 %v1463, 0.0
        %v1496 = vmax.f32 %v1464, 0.0
        %v1497 = vmax.f32 %v1465, 0.0
        %v1498 = vmax.f32 %v1466, 0.0
        %v1499 = vmax.f32 %v1467, 0.0
        %v1500 = vmax.f32 %v1468, 0.0
        %v1501 = vmax.f32 %v1469, 0.0
        %v1502 = vmax.f32 %v1470, 0.0
        %v1503 = vmax.f32 %v1471, 0.0
        %v1504 = vmax.f32 %v1472, 0.0
        %v1505 = vmax.f32 %v1473, 0.0
        %v1506 = vmax.f32 %v1474, 0.0
        %v1507 = vmax.f32 %v1475, 0.0
        %v1508 = vmax.f32 %v1476, 0.0
        %1509 = vst [vmem:[#allocation2] sm:$0xff] 0.0
        %1510 = vst [vmem:[#allocation2 + $0x8] sm:$0xff] 0.0
        %1511 = vst [vmem:[#allocation2 + $0x10] sm:$0xff] 0.0
        %1512 = vst [vmem:[#allocation2 + $0x18] sm:$0xff] 0.0
        %1513 = vst [vmem:[#allocation2 + $0x20] sm:$0x1] 0.0
        %1514 = vst [vmem:[#allocation2 + $0x28] sm:$0x1] 0.0
        %1515 = vst [vmem:[#allocation2 + $0x30] sm:$0x1] 0.0
        %1516 = vst [vmem:[#allocation2 + $0x38] sm:$0x1] 0.0
        %1517 = vst [vmem:[#allocation2 + $0x40] sm:$0xff] 0.0
        %1518 = vst [vmem:[#allocation2 + $0x48] sm:$0xff] 0.0
        %1519 = vst [vmem:[#allocation2 + $0x50] sm:$0xff] 0.0
        %1520 = vst [vmem:[#allocation2 + $0x58] sm:$0xff] 0.0
        %1521 = vst [vmem:[#allocation2 + $0x60] sm:$0x1] 0.0
        %1522 = vst [vmem:[#allocation2 + $0x68] sm:$0x1] 0.0
        %1523 = vst [vmem:[#allocation2 + $0x70] sm:$0x1] 0.0
        %1524 = vst [vmem:[#allocation2 + $0x78] sm:$0x1] 0.0
        %1525 = vst [vmem:[#allocation2 + $0x80] sm:$0xff] 0.0
        %1526 = vst [vmem:[#allocation2 + $0x88] sm:$0xff] 0.0
        %1527 = vst [vmem:[#allocation2 + $0x90] sm:$0xff] 0.0
        %1528 = vst [vmem:[#allocation2 + $0x98] sm:$0xff] 0.0
        %1529 = vst [vmem:[#allocation2 + $0xa0] sm:$0x1] 0.0
        %1530 = vst [vmem:[#allocation2 + $0xa8] sm:$0x1] 0.0
        %1531 = vst [vmem:[#allocation2 + $0xb0] sm:$0x1] 0.0
        %1532 = vst [vmem:[#allocation2 + $0xb8] sm:$0x1] 0.0
        %1533 = vst [vmem:[#allocation2 + $0xc0] sm:$0xff] 0.0
        %1534 = vst [vmem:[#allocation2 + $0xc8] sm:$0xff] 0.0
        %1535 = vst [vmem:[#allocation2 + $0xd0] sm:$0xff] 0.0
        %1536 = vst [vmem:[#allocation2 + $0xd8] sm:$0xff] 0.0
        %1537 = vst [vmem:[#allocation2 + $0xe0] sm:$0x1] 0.0
        %1538 = vst [vmem:[#allocation2 + $0xe8] sm:$0x1] 0.0
        %1539 = vst [vmem:[#allocation2 + $0xf0] sm:$0x1] 0.0
        %1540 = vst [vmem:[#allocation2 + $0xf8] sm:$0x1] 0.0
        %1541 = vst [vmem:[#allocation2 + $0x100] sm:$0xff] 0.0
        %1542 = vst [vmem:[#allocation2 + $0x108] sm:$0xff] 0.0
        %1543 = vst [vmem:[#allocation2 + $0x110] sm:$0xff] 0.0
        %1544 = vst [vmem:[#allocation2 + $0x118] sm:$0xff] 0.0
        %1545 = vst [vmem:[#allocation2 + $0x120] sm:$0x1] 0.0
        %1546 = vst [vmem:[#allocation2 + $0x128] sm:$0x1] 0.0
        %1547 = vst [vmem:[#allocation2 + $0x130] sm:$0x1] 0.0
        %1548 = vst [vmem:[#allocation2 + $0x138] sm:$0x1] 0.0
        %1549 = vst [vmem:[#allocation2 + $0x140] sm:$0xff] 0.0
        %1550 = vst [vmem:[#allocation2 + $0x148] sm:$0xff] 0.0
        %1551 = vst [vmem:[#allocation2 + $0x150] sm:$0xff] 0.0
        %1552 = vst [vmem:[#allocation2 + $0x158] sm:$0xff] 0.0
        %1553 = vst [vmem:[#allocation2 + $0x160] sm:$0x1] 0.0
        %1554 = vst [vmem:[#allocation2 + $0x168] sm:$0x1] 0.0
        %1555 = vst [vmem:[#allocation2 + $0x170] sm:$0x1] 0.0
        %1556 = vst [vmem:[#allocation2 + $0x178] sm:$0x1] 0.0
        %1557 = vst [vmem:[#allocation2 + $0x180] sm:$0xff] 0.0
        %1558 = vst [vmem:[#allocation2 + $0x188] sm:$0xff] 0.0
        %1559 = vst [vmem:[#allocation2 + $0x190] sm:$0xff] 0.0
        %1560 = vst [vmem:[#allocation2 + $0x198] sm:$0xff] 0.0
        %1561 = vst [vmem:[#allocation2 + $0x1a0] sm:$0x1] 0.0
        %1562 = vst [vmem:[#allocation2 + $0x1a8] sm:$0x1] 0.0
        %1563 = vst [vmem:[#allocation2 + $0x1b0] sm:$0x1] 0.0
        %1564 = vst [vmem:[#allocation2 + $0x1b8] sm:$0x1] 0.0
        %1565 = vst [vmem:[#allocation2 + $0x1c0] sm:$0xff] 0.0
        %1566 = vst [vmem:[#allocation2 + $0x1c8] sm:$0xff] 0.0
        %1567 = vst [vmem:[#allocation2 + $0x1d0] sm:$0xff] 0.0
        %1568 = vst [vmem:[#allocation2 + $0x1d8] sm:$0xff] 0.0
        %1569 = vst [vmem:[#allocation2 + $0x1e0] sm:$0x1] 0.0
        %1570 = vst [vmem:[#allocation2 + $0x1e8] sm:$0x1] 0.0
        %1571 = vst [vmem:[#allocation2 + $0x1f0] sm:$0x1] 0.0
        %1572 = vst [vmem:[#allocation2 + $0x1f8] sm:$0x1] 0.0
        %1573 = vst [vmem:[#allocation2 + $0x200] sm:$0xff] 0.0
        %1574 = vst [vmem:[#allocation2 + $0x208] sm:$0xff] 0.0
        %1575 = vst [vmem:[#allocation2 + $0x210] sm:$0xff] 0.0
        %1576 = vst [vmem:[#allocation2 + $0x218] sm:$0xff] 0.0
        %1577 = vst [vmem:[#allocation2 + $0x220] sm:$0x1] 0.0
        %1578 = vst [vmem:[#allocation2 + $0x228] sm:$0x1] 0.0
        %1579 = vst [vmem:[#allocation2 + $0x230] sm:$0x1] 0.0
        %1580 = vst [vmem:[#allocation2 + $0x238] sm:$0x1] 0.0
        %v1613 = vrot.slane %v1477, 7
        %v1614 = vrot.slane %v1478, 7
        %v1615 = vrot.slane %v1479, 7
        %v1616 = vrot.slane %v1480, 7
        %v1617 = vrot.slane %v1481, 7
        %v1618 = vrot.slane %v1482, 7
        %v1619 = vrot.slane %v1483, 7
        %v1620 = vrot.slane %v1484, 7
        %v1621 = vrot.slane %v1485, 7
        %v1622 = vrot.slane %v1486, 7
        %v1623 = vrot.slane %v1487, 7
        %v1624 = vrot.slane %v1488, 7
        %v1625 = vrot.slane %v1489, 7
        %v1626 = vrot.slane %v1490, 7
        %v1627 = vrot.slane %v1491, 7
        %v1628 = vrot.slane %v1492, 7
        %v1629 = vrot.slane %v1493, 7
        %v1630 = vrot.slane %v1494, 7
        %v1631 = vrot.slane %v1495, 7
        %v1632 = vrot.slane %v1496, 7
        %v1633 = vrot.slane %v1497, 7
        %v1634 = vrot.slane %v1498, 7
        %v1635 = vrot.slane %v1499, 7
        %v1636 = vrot.slane %v1500, 7
        %v1637 = vrot.slane %v1501, 7
        %v1638 = vrot.slane %v1502, 7
        %v1639 = vrot.slane %v1503, 7
        %v1640 = vrot.slane %v1504, 7
        %v1641 = vrot.slane %v1505, 7
        %v1642 = vrot.slane %v1506, 7
        %v1643 = vrot.slane %v1507, 7
        %v1644 = vrot.slane %v1508, 7
        %s1677 = scalar_lea.vmem [#allocation2], 64
        %1678 = vst [vmem:[%s1677] sm:$0xfe] %v1613
        %1679 = vst [vmem:[%s1677 + $0x8] sm:$0xfe] %v1614
        %1680 = vst [vmem:[%s1677 + $0x10] sm:$0xfe] %v1615
        %1681 = vst [vmem:[%s1677 + $0x18] sm:$0xfe] %v1616
        %1682 = vst [vmem:[%s1677 + $0x20] sm:$0x1] %v1613
        %1683 = vst [vmem:[%s1677 + $0x28] sm:$0x1] %v1614
        %1684 = vst [vmem:[%s1677 + $0x30] sm:$0x1] %v1615
        %1685 = vst [vmem:[%s1677 + $0x38] sm:$0x1] %v1616
        %1686 = vst [vmem:[%s1677 + $0x40] sm:$0xfe] %v1617
        %1687 = vst [vmem:[%s1677 + $0x48] sm:$0xfe] %v1618
        %1688 = vst [vmem:[%s1677 + $0x50] sm:$0xfe] %v1619
        %1689 = vst [vmem:[%s1677 + $0x58] sm:$0xfe] %v1620
        %1690 = vst [vmem:[%s1677 + $0x60] sm:$0x1] %v1617
        %1691 = vst [vmem:[%s1677 + $0x68] sm:$0x1] %v1618
        %1692 = vst [vmem:[%s1677 + $0x70] sm:$0x1] %v1619
        %1693 = vst [vmem:[%s1677 + $0x78] sm:$0x1] %v1620
        %1694 = vst [vmem:[%s1677 + $0x80] sm:$0xfe] %v1621
        %1695 = vst [vmem:[%s1677 + $0x88] sm:$0xfe] %v1622
        %1696 = vst [vmem:[%s1677 + $0x90] sm:$0xfe] %v1623
        %1697 = vst [vmem:[%s1677 + $0x98] sm:$0xfe] %v1624
        %1698 = vst [vmem:[%s1677 + $0xa0] sm:$0x1] %v1621
        %1699 = vst [vmem:[%s1677 + $0xa8] sm:$0x1] %v1622
        %1700 = vst [vmem:[%s1677 + $0xb0] sm:$0x1] %v1623
        %1701 = vst [vmem:[%s1677 + $0xb8] sm:$0x1] %v1624
        %1702 = vst [vmem:[%s1677 + $0xc0] sm:$0xfe] %v1625
        %1703 = vst [vmem:[%s1677 + $0xc8] sm:$0xfe] %v1626
        %1704 = vst [vmem:[%s1677 + $0xd0] sm:$0xfe] %v1627
        %1705 = vst [vmem:[%s1677 + $0xd8] sm:$0xfe] %v1628
        %1706 = vst [vmem:[%s1677 + $0xe0] sm:$0x1] %v1625
        %1707 = vst [vmem:[%s1677 + $0xe8] sm:$0x1] %v1626
        %1708 = vst [vmem:[%s1677 + $0xf0] sm:$0x1] %v1627
        %1709 = vst [vmem:[%s1677 + $0xf8] sm:$0x1] %v1628
        %1710 = vst [vmem:[%s1677 + $0x100] sm:$0xfe] %v1629
        %1711 = vst [vmem:[%s1677 + $0x108] sm:$0xfe] %v1630
        %1712 = vst [vmem:[%s1677 + $0x110] sm:$0xfe] %v1631
        %1713 = vst [vmem:[%s1677 + $0x118] sm:$0xfe] %v1632
        %1714 = vst [vmem:[%s1677 + $0x120] sm:$0x1] %v1629
        %1715 = vst [vmem:[%s1677 + $0x128] sm:$0x1] %v1630
        %1716 = vst [vmem:[%s1677 + $0x130] sm:$0x1] %v1631
        %1717 = vst [vmem:[%s1677 + $0x138] sm:$0x1] %v1632
        %1718 = vst [vmem:[%s1677 + $0x140] sm:$0xfe] %v1633
        %1719 = vst [vmem:[%s1677 + $0x148] sm:$0xfe] %v1634
        %1720 = vst [vmem:[%s1677 + $0x150] sm:$0xfe] %v1635
        %1721 = vst [vmem:[%s1677 + $0x158] sm:$0xfe] %v1636
        %1722 = vst [vmem:[%s1677 + $0x160] sm:$0x1] %v1633
        %1723 = vst [vmem:[%s1677 + $0x168] sm:$0x1] %v1634
        %1724 = vst [vmem:[%s1677 + $0x170] sm:$0x1] %v1635
        %1725 = vst [vmem:[%s1677 + $0x178] sm:$0x1] %v1636
        %1726 = vst [vmem:[%s1677 + $0x180] sm:$0xfe] %v1637
        %1727 = vst [vmem:[%s1677 + $0x188] sm:$0xfe] %v1638
        %1728 = vst [vmem:[%s1677 + $0x190] sm:$0xfe] %v1639
        %1729 = vst [vmem:[%s1677 + $0x198] sm:$0xfe] %v1640
        %1730 = vst [vmem:[%s1677 + $0x1a0] sm:$0x1] %v1637
        %1731 = vst [vmem:[%s1677 + $0x1a8] sm:$0x1] %v1638
        %1732 = vst [vmem:[%s1677 + $0x1b0] sm:$0x1] %v1639
        %1733 = vst [vmem:[%s1677 + $0x1b8] sm:$0x1] %v1640
        %1734 = vst [vmem:[%s1677 + $0x1c0] sm:$0xfe] %v1641
        %1735 = vst [vmem:[%s1677 + $0x1c8] sm:$0xfe] %v1642
        %1736 = vst [vmem:[%s1677 + $0x1d0] sm:$0xfe] %v1643
        %1737 = vst [vmem:[%s1677 + $0x1d8] sm:$0xfe] %v1644
        %1738 = vst [vmem:[%s1677 + $0x1e0] sm:$0x1] %v1641
        %1739 = vst [vmem:[%s1677 + $0x1e8] sm:$0x1] %v1642
        %1740 = vst [vmem:[%s1677 + $0x1f0] sm:$0x1] %v1643
        %1741 = vst [vmem:[%s1677 + $0x1f8] sm:$0x1] %v1644
        %v1742 = vld [vmem:[#allocation2] sm:$0xff]
        %v1743 = vld [vmem:[#allocation2 + $0x8] sm:$0xff]
        %v1744 = vld [vmem:[#allocation2 + $0x10] sm:$0xff]
        %v1745 = vld [vmem:[#allocation2 + $0x18] sm:$0xff]
        %v1746 = vld [vmem:[#allocation2 + $0x40] sm:$0xff]
        %v1747 = vld [vmem:[#allocation2 + $0x48] sm:$0xff]
        %v1748 = vld [vmem:[#allocation2 + $0x50] sm:$0xff]
        %v1749 = vld [vmem:[#allocation2 + $0x58] sm:$0xff]
        %v1750 = vld [vmem:[#allocation2 + $0x80] sm:$0xff]
        %v1751 = vld [vmem:[#allocation2 + $0x88] sm:$0xff]
        %v1752 = vld [vmem:[#allocation2 + $0x90] sm:$0xff]
        %v1753 = vld [vmem:[#allocation2 + $0x98] sm:$0xff]
        %v1754 = vld [vmem:[#allocation2 + $0xc0] sm:$0xff]
        %v1755 = vld [vmem:[#allocation2 + $0xc8] sm:$0xff]
        %v1756 = vld [vmem:[#allocation2 + $0xd0] sm:$0xff]
        %v1757 = vld [vmem:[#allocation2 + $0xd8] sm:$0xff]
        %v1758 = vld [vmem:[#allocation2 + $0x100] sm:$0xff]
        %v1759 = vld [vmem:[#allocation2 + $0x108] sm:$0xff]
        %v1760 = vld [vmem:[#allocation2 + $0x110] sm:$0xff]
        %v1761 = vld [vmem:[#allocation2 + $0x118] sm:$0xff]
        %v1762 = vld [vmem:[#allocation2 + $0x140] sm:$0xff]
        %v1763 = vld [vmem:[#allocation2 + $0x148] sm:$0xff]
        %v1764 = vld [vmem:[#allocation2 + $0x150] sm:$0xff]
        %v1765 = vld [vmem:[#allocation2 + $0x158] sm:$0xff]
        %v1766 = vld [vmem:[#allocation2 + $0x180] sm:$0xff]
        %v1767 = vld [vmem:[#allocation2 + $0x188] sm:$0xff]
        %v1768 = vld [vmem:[#allocation2 + $0x190] sm:$0xff]
        %v1769 = vld [vmem:[#allocation2 + $0x198] sm:$0xff]
        %v1770 = vld [vmem:[#allocation2 + $0x1c0] sm:$0xff]
        %v1771 = vld [vmem:[#allocation2 + $0x1c8] sm:$0xff]
        %v1772 = vld [vmem:[#allocation2 + $0x1d0] sm:$0xff]
        %v1773 = vld [vmem:[#allocation2 + $0x1d8] sm:$0xff]
        %v1774 = vpack.c.bf16 %v1746, %v1742
        %v1775 = vpack.c.bf16 %v1747, %v1743
        %v1776 = vpack.c.bf16 %v1748, %v1744
        %v1777 = vpack.c.bf16 %v1749, %v1745
        %v1778 = vpack.c.bf16 %v1754, %v1750
        %v1779 = vpack.c.bf16 %v1755, %v1751
        %v1780 = vpack.c.bf16 %v1756, %v1752
        %v1781 = vpack.c.bf16 %v1757, %v1753
        %v1782 = vpack.c.bf16 %v1762, %v1758
        %v1783 = vpack.c.bf16 %v1763, %v1759
        %v1784 = vpack.c.bf16 %v1764, %v1760
        %v1785 = vpack.c.bf16 %v1765, %v1761
        %v1786 = vpack.c.bf16 %v1770, %v1766
        %v1787 = vpack.c.bf16 %v1771, %v1767
        %v1788 = vpack.c.bf16 %v1772, %v1768
        %v1789 = vpack.c.bf16 %v1773, %v1769
        %v1790 = vld [vmem:[%s3] sm:$0xff]
        %v1791 = vld [vmem:[%s3 + $0x8] sm:$0xff]
        %v1792 = vld [vmem:[%s3 + $0x10] sm:$0xff]
        %v1793 = vld [vmem:[%s3 + $0x18] sm:$0xff]
        %v1794 = vld [vmem:[%s3 + $0x20] sm:$0xff]
        %v1795 = vld [vmem:[%s3 + $0x28] sm:$0xff]
        %v1796 = vld [vmem:[%s3 + $0x30] sm:$0xff]
        %v1797 = vld [vmem:[%s3 + $0x38] sm:$0xff]
        %v1798 = vld [vmem:[%s3 + $0x40] sm:$0xff]
        %v1799 = vld [vmem:[%s3 + $0x48] sm:$0xff]
        %v1800 = vld [vmem:[%s3 + $0x50] sm:$0xff]
        %v1801 = vld [vmem:[%s3 + $0x58] sm:$0xff]
        %v1802 = vld [vmem:[%s3 + $0x60] sm:$0xff]
        %v1803 = vld [vmem:[%s3 + $0x68] sm:$0xff]
        %v1804 = vld [vmem:[%s3 + $0x70] sm:$0xff]
        %v1805 = vld [vmem:[%s3 + $0x78] sm:$0xff]
        %v1806 = vld [vmem:[%s3 + $0x80] sm:$0xff]
        %v1807 = vld [vmem:[%s3 + $0x88] sm:$0xff]
        %v1808 = vld [vmem:[%s3 + $0x90] sm:$0xff]
        %v1809 = vld [vmem:[%s3 + $0x98] sm:$0xff]
        %v1810 = vld [vmem:[%s3 + $0xa0] sm:$0xff]
        %v1811 = vld [vmem:[%s3 + $0xa8] sm:$0xff]
        %v1812 = vld [vmem:[%s3 + $0xb0] sm:$0xff]
        %v1813 = vld [vmem:[%s3 + $0xb8] sm:$0xff]
        %v1814 = vld [vmem:[%s3 + $0xc0] sm:$0xff]
        %v1815 = vld [vmem:[%s3 + $0xc8] sm:$0xff]
        %v1816 = vld [vmem:[%s3 + $0xd0] sm:$0xff]
        %v1817 = vld [vmem:[%s3 + $0xd8] sm:$0xff]
        %v1818 = vld [vmem:[%s3 + $0xe0] sm:$0xff]
        %v1819 = vld [vmem:[%s3 + $0xe8] sm:$0xff]
        %v1820 = vld [vmem:[%s3 + $0xf0] sm:$0xff]
        %v1821 = vld [vmem:[%s3 + $0xf8] sm:$0xff]
        %v1822 = vld [vmem:[%s3 + $0x100] sm:$0xff]
        %v1823 = vld [vmem:[%s3 + $0x108] sm:$0xff]
        %v1824 = vld [vmem:[%s3 + $0x110] sm:$0xff]
        %v1825 = vld [vmem:[%s3 + $0x118] sm:$0xff]
        %v1826 = vld [vmem:[%s3 + $0x120] sm:$0xff]
        %v1827 = vld [vmem:[%s3 + $0x128] sm:$0xff]
        %v1828 = vld [vmem:[%s3 + $0x130] sm:$0xff]
        %v1829 = vld [vmem:[%s3 + $0x138] sm:$0xff]
        %v1830 = vld [vmem:[%s3 + $0x140] sm:$0xff]
        %v1831 = vld [vmem:[%s3 + $0x148] sm:$0xff]
        %v1832 = vld [vmem:[%s3 + $0x150] sm:$0xff]
        %v1833 = vld [vmem:[%s3 + $0x158] sm:$0xff]
        %v1834 = vld [vmem:[%s3 + $0x160] sm:$0xff]
        %v1835 = vld [vmem:[%s3 + $0x168] sm:$0xff]
        %v1836 = vld [vmem:[%s3 + $0x170] sm:$0xff]
        %v1837 = vld [vmem:[%s3 + $0x178] sm:$0xff]
        %v1838 = vld [vmem:[%s3 + $0x180] sm:$0xff]
        %v1839 = vld [vmem:[%s3 + $0x188] sm:$0xff]
        %v1840 = vld [vmem:[%s3 + $0x190] sm:$0xff]
        %v1841 = vld [vmem:[%s3 + $0x198] sm:$0xff]
        %v1842 = vld [vmem:[%s3 + $0x1a0] sm:$0xff]
        %v1843 = vld [vmem:[%s3 + $0x1a8] sm:$0xff]
        %v1844 = vld [vmem:[%s3 + $0x1b0] sm:$0xff]
        %v1845 = vld [vmem:[%s3 + $0x1b8] sm:$0xff]
        %v1846 = vld [vmem:[%s3 + $0x1c0] sm:$0xff]
        %v1847 = vld [vmem:[%s3 + $0x1c8] sm:$0xff]
        %v1848 = vld [vmem:[%s3 + $0x1d0] sm:$0xff]
        %v1849 = vld [vmem:[%s3 + $0x1d8] sm:$0xff]
        %v1850 = vld [vmem:[%s3 + $0x1e0] sm:$0xff]
        %v1851 = vld [vmem:[%s3 + $0x1e8] sm:$0xff]
        %v1852 = vld [vmem:[%s3 + $0x1f0] sm:$0xff]
        %v1853 = vld [vmem:[%s3 + $0x1f8] sm:$0xff]
        %v1854 = vld [vmem:[#allocation2] sm:$0xfe]
        %v1855 = vld [vmem:[#allocation2 + $0x8] sm:$0xfe]
        %v1856 = vld [vmem:[#allocation2 + $0x10] sm:$0xfe]
        %v1857 = vld [vmem:[#allocation2 + $0x18] sm:$0xfe]
        %v1858 = vld [vmem:[#allocation2 + $0x20] sm:$0x1]
        %v1859 = vld [vmem:[#allocation2 + $0x28] sm:$0x1]
        %v1860 = vld [vmem:[#allocation2 + $0x30] sm:$0x1]
        %v1861 = vld [vmem:[#allocation2 + $0x38] sm:$0x1]
        %v1862 = vld [vmem:[#allocation2 + $0x40] sm:$0xfe]
        %v1863 = vld [vmem:[#allocation2 + $0x48] sm:$0xfe]
        %v1864 = vld [vmem:[#allocation2 + $0x50] sm:$0xfe]
        %v1865 = vld [vmem:[#allocation2 + $0x58] sm:$0xfe]
        %v1866 = vld [vmem:[#allocation2 + $0x60] sm:$0x1]
        %v1867 = vld [vmem:[#allocation2 + $0x68] sm:$0x1]
        %v1868 = vld [vmem:[#allocation2 + $0x70] sm:$0x1]
        %v1869 = vld [vmem:[#allocation2 + $0x78] sm:$0x1]
        %v1870 = vld [vmem:[#allocation2 + $0x80] sm:$0xfe]
        %v1871 = vld [vmem:[#allocation2 + $0x88] sm:$0xfe]
        %v1872 = vld [vmem:[#allocation2 + $0x90] sm:$0xfe]
        %v1873 = vld [vmem:[#allocation2 + $0x98] sm:$0xfe]
        %v1874 = vld [vmem:[#allocation2 + $0xa0] sm:$0x1]
        %v1875 = vld [vmem:[#allocation2 + $0xa8] sm:$0x1]
        %v1876 = vld [vmem:[#allocation2 + $0xb0] sm:$0x1]
        %v1877 = vld [vmem:[#allocation2 + $0xb8] sm:$0x1]
        %v1878 = vld [vmem:[#allocation2 + $0xc0] sm:$0xfe]
        %v1879 = vld [vmem:[#allocation2 + $0xc8] sm:$0xfe]
        %v1880 = vld [vmem:[#allocation2 + $0xd0] sm:$0xfe]
        %v1881 = vld [vmem:[#allocation2 + $0xd8] sm:$0xfe]
        %v1882 = vld [vmem:[#allocation2 + $0xe0] sm:$0x1]
        %v1883 = vld [vmem:[#allocation2 + $0xe8] sm:$0x1]
        %v1884 = vld [vmem:[#allocation2 + $0xf0] sm:$0x1]
        %v1885 = vld [vmem:[#allocation2 + $0xf8] sm:$0x1]
        %v1886 = vld [vmem:[#allocation2 + $0x100] sm:$0xfe]
        %v1887 = vld [vmem:[#allocation2 + $0x108] sm:$0xfe]
        %v1888 = vld [vmem:[#allocation2 + $0x110] sm:$0xfe]
        %v1889 = vld [vmem:[#allocation2 + $0x118] sm:$0xfe]
        %v1890 = vld [vmem:[#allocation2 + $0x120] sm:$0x1]
        %v1891 = vld [vmem:[#allocation2 + $0x128] sm:$0x1]
        %v1892 = vld [vmem:[#allocation2 + $0x130] sm:$0x1]
        %v1893 = vld [vmem:[#allocation2 + $0x138] sm:$0x1]
        %v1894 = vld [vmem:[#allocation2 + $0x140] sm:$0xfe]
        %v1895 = vld [vmem:[#allocation2 + $0x148] sm:$0xfe]
        %v1896 = vld [vmem:[#allocation2 + $0x150] sm:$0xfe]
        %v1897 = vld [vmem:[#allocation2 + $0x158] sm:$0xfe]
        %v1898 = vld [vmem:[#allocation2 + $0x160] sm:$0x1]
        %v1899 = vld [vmem:[#allocation2 + $0x168] sm:$0x1]
        %v1900 = vld [vmem:[#allocation2 + $0x170] sm:$0x1]
        %v1901 = vld [vmem:[#allocation2 + $0x178] sm:$0x1]
        %v1902 = vld [vmem:[#allocation2 + $0x180] sm:$0xfe]
        %v1903 = vld [vmem:[#allocation2 + $0x188] sm:$0xfe]
        %v1904 = vld [vmem:[#allocation2 + $0x190] sm:$0xfe]
        %v1905 = vld [vmem:[#allocation2 + $0x198] sm:$0xfe]
        %v1906 = vld [vmem:[#allocation2 + $0x1a0] sm:$0x1]
        %v1907 = vld [vmem:[#allocation2 + $0x1a8] sm:$0x1]
        %v1908 = vld [vmem:[#allocation2 + $0x1b0] sm:$0x1]
        %v1909 = vld [vmem:[#allocation2 + $0x1b8] sm:$0x1]
        %v1910 = vld [vmem:[#allocation2 + $0x1c0] sm:$0xfe]
        %v1911 = vld [vmem:[#allocation2 + $0x1c8] sm:$0xfe]
        %v1912 = vld [vmem:[#allocation2 + $0x1d0] sm:$0xfe]
        %v1913 = vld [vmem:[#allocation2 + $0x1d8] sm:$0xfe]
        %v1914 = vld [vmem:[#allocation2 + $0x1e0] sm:$0x1]
        %v1915 = vld [vmem:[#allocation2 + $0x1e8] sm:$0x1]
        %v1916 = vld [vmem:[#allocation2 + $0x1f0] sm:$0x1]
        %v1917 = vld [vmem:[#allocation2 + $0x1f8] sm:$0x1]
        %vm1982 = vcmask 1046528
        %v1983 = vrot.slane %v1854, 1
        %v1984 = vrot.slane %v1858, 1
        %v1985 = vsel %vm1982, %v1983, %v1984
        %v1986 = vrot.slane %v1855, 1
        %v1987 = vrot.slane %v1859, 1
        %v1988 = vsel %vm1982, %v1986, %v1987
        %v1989 = vrot.slane %v1856, 1
        %v1990 = vrot.slane %v1860, 1
        %v1991 = vsel %vm1982, %v1989, %v1990
        %v1992 = vrot.slane %v1857, 1
        %v1993 = vrot.slane %v1861, 1
        %v1994 = vsel %vm1982, %v1992, %v1993
        %v1995 = vrot.slane %v1862, 1
        %v1996 = vrot.slane %v1866, 1
        %v1997 = vsel %vm1982, %v1995, %v1996
        %v1998 = vrot.slane %v1863, 1
        %v1999 = vrot.slane %v1867, 1
        %v2000 = vsel %vm1982, %v1998, %v1999
        %v2001 = vrot.slane %v1864, 1
        %v2002 = vrot.slane %v1868, 1
        %v2003 = vsel %vm1982, %v2001, %v2002
        %v2004 = vrot.slane %v1865, 1
        %v2005 = vrot.slane %v1869, 1
        %v2006 = vsel %vm1982, %v2004, %v2005
        %v2007 = vrot.slane %v1870, 1
        %v2008 = vrot.slane %v1874, 1
        %v2009 = vsel %vm1982, %v2007, %v2008
        %v2010 = vrot.slane %v1871, 1
        %v2011 = vrot.slane %v1875, 1
        %v2012 = vsel %vm1982, %v2010, %v2011
        %v2013 = vrot.slane %v1872, 1
        %v2014 = vrot.slane %v1876, 1
        %v2015 = vsel %vm1982, %v2013, %v2014
        %v2016 = vrot.slane %v1873, 1
        %v2017 = vrot.slane %v1877, 1
        %v2018 = vsel %vm1982, %v2016, %v2017
        %v2019 = vrot.slane %v1878, 1
        %v2020 = vrot.slane %v1882, 1
        %v2021 = vsel %vm1982, %v2019, %v2020
        %v2022 = vrot.slane %v1879, 1
        %v2023 = vrot.slane %v1883, 1
        %v2024 = vsel %vm1982, %v2022, %v2023
        %v2025 = vrot.slane %v1880, 1
        %v2026 = vrot.slane %v1884, 1
        %v2027 = vsel %vm1982, %v2025, %v2026
        %v2028 = vrot.slane %v1881, 1
        %v2029 = vrot.slane %v1885, 1
        %v2030 = vsel %vm1982, %v2028, %v2029
        %v2031 = vrot.slane %v1886, 1
        %v2032 = vrot.slane %v1890, 1
        %v2033 = vsel %vm1982, %v2031, %v2032
        %v2034 = vrot.slane %v1887, 1
        %v2035 = vrot.slane %v1891, 1
        %v2036 = vsel %vm1982, %v2034, %v2035
        %v2037 = vrot.slane %v1888, 1
        %v2038 = vrot.slane %v1892, 1
        %v2039 = vsel %vm1982, %v2037, %v2038
        %v2040 = vrot.slane %v1889, 1
        %v2041 = vrot.slane %v1893, 1
        %v2042 = vsel %vm1982, %v2040, %v2041
        %v2043 = vrot.slane %v1894, 1
        %v2044 = vrot.slane %v1898, 1
        %v2045 = vsel %vm1982, %v2043, %v2044
        %v2046 = vrot.slane %v1895, 1
        %v2047 = vrot.slane %v1899, 1
        %v2048 = vsel %vm1982, %v2046, %v2047
        %v2049 = vrot.slane %v1896, 1
        %v2050 = vrot.slane %v1900, 1
        %v2051 = vsel %vm1982, %v2049, %v2050
        %v2052 = vrot.slane %v1897, 1
        %v2053 = vrot.slane %v1901, 1
        %v2054 = vsel %vm1982, %v2052, %v2053
        %v2055 = vrot.slane %v1902, 1
        %v2056 = vrot.slane %v1906, 1
        %v2057 = vsel %vm1982, %v2055, %v2056
        %v2058 = vrot.slane %v1903, 1
        %v2059 = vrot.slane %v1907, 1
        %v2060 = vsel %vm1982, %v2058, %v2059
        %v2061 = vrot.slane %v1904, 1
        %v2062 = vrot.slane %v1908, 1
        %v2063 = vsel %vm1982, %v2061, %v2062
        %v2064 = vrot.slane %v1905, 1
        %v2065 = vrot.slane %v1909, 1
        %v2066 = vsel %vm1982, %v2064, %v2065
        %v2067 = vrot.slane %v1910, 1
        %v2068 = vrot.slane %v1914, 1
        %v2069 = vsel %vm1982, %v2067, %v2068
        %v2070 = vrot.slane %v1911, 1
        %v2071 = vrot.slane %v1915, 1
        %v2072 = vsel %vm1982, %v2070, %v2071
        %v2073 = vrot.slane %v1912, 1
        %v2074 = vrot.slane %v1916, 1
        %v2075 = vsel %vm1982, %v2073, %v2074
        %v2076 = vrot.slane %v1913, 1
        %v2077 = vrot.slane %v1917, 1
        %v2078 = vsel %vm1982, %v2076, %v2077
        %v2111 = vpack.c.bf16 %v1997, %v1985
        %v2112 = vpack.c.bf16 %v2000, %v1988
        %v2113 = vpack.c.bf16 %v2003, %v1991
        %v2114 = vpack.c.bf16 %v2006, %v1994
        %v2115 = vpack.c.bf16 %v2021, %v2009
        %v2116 = vpack.c.bf16 %v2024, %v2012
        %v2117 = vpack.c.bf16 %v2027, %v2015
        %v2118 = vpack.c.bf16 %v2030, %v2018
        %v2119 = vpack.c.bf16 %v2045, %v2033
        %v2120 = vpack.c.bf16 %v2048, %v2036
        %v2121 = vpack.c.bf16 %v2051, %v2039
        %v2122 = vpack.c.bf16 %v2054, %v2042
        %v2123 = vpack.c.bf16 %v2069, %v2057
        %v2124 = vpack.c.bf16 %v2072, %v2060
        %v2125 = vpack.c.bf16 %v2075, %v2063
        %v2126 = vpack.c.bf16 %v2078, %v2066
        %v2127 = vld [vmem:[%s3 + $0x200] sm:$0xff]
        %v2128 = vld [vmem:[%s3 + $0x208] sm:$0xff]
        %v2129 = vld [vmem:[%s3 + $0x210] sm:$0xff]
        %v2130 = vld [vmem:[%s3 + $0x218] sm:$0xff]
        %v2131 = vld [vmem:[%s3 + $0x220] sm:$0xff]
        %v2132 = vld [vmem:[%s3 + $0x228] sm:$0xff]
        %v2133 = vld [vmem:[%s3 + $0x230] sm:$0xff]
        %v2134 = vld [vmem:[%s3 + $0x238] sm:$0xff]
        %v2135 = vld [vmem:[%s3 + $0x240] sm:$0xff]
        %v2136 = vld [vmem:[%s3 + $0x248] sm:$0xff]
        %v2137 = vld [vmem:[%s3 + $0x250] sm:$0xff]
        %v2138 = vld [vmem:[%s3 + $0x258] sm:$0xff]
        %v2139 = vld [vmem:[%s3 + $0x260] sm:$0xff]
        %v2140 = vld [vmem:[%s3 + $0x268] sm:$0xff]
        %v2141 = vld [vmem:[%s3 + $0x270] sm:$0xff]
        %v2142 = vld [vmem:[%s3 + $0x278] sm:$0xff]
        %v2143 = vld [vmem:[%s3 + $0x280] sm:$0xff]
        %v2144 = vld [vmem:[%s3 + $0x288] sm:$0xff]
        %v2145 = vld [vmem:[%s3 + $0x290] sm:$0xff]
        %v2146 = vld [vmem:[%s3 + $0x298] sm:$0xff]
        %v2147 = vld [vmem:[%s3 + $0x2a0] sm:$0xff]
        %v2148 = vld [vmem:[%s3 + $0x2a8] sm:$0xff]
        %v2149 = vld [vmem:[%s3 + $0x2b0] sm:$0xff]
        %v2150 = vld [vmem:[%s3 + $0x2b8] sm:$0xff]
        %v2151 = vld [vmem:[%s3 + $0x2c0] sm:$0xff]
        %v2152 = vld [vmem:[%s3 + $0x2c8] sm:$0xff]
        %v2153 = vld [vmem:[%s3 + $0x2d0] sm:$0xff]
        %v2154 = vld [vmem:[%s3 + $0x2d8] sm:$0xff]
        %v2155 = vld [vmem:[%s3 + $0x2e0] sm:$0xff]
        %v2156 = vld [vmem:[%s3 + $0x2e8] sm:$0xff]
        %v2157 = vld [vmem:[%s3 + $0x2f0] sm:$0xff]
        %v2158 = vld [vmem:[%s3 + $0x2f8] sm:$0xff]
        %v2159 = vld [vmem:[%s3 + $0x300] sm:$0xff]
        %v2160 = vld [vmem:[%s3 + $0x308] sm:$0xff]
        %v2161 = vld [vmem:[%s3 + $0x310] sm:$0xff]
        %v2162 = vld [vmem:[%s3 + $0x318] sm:$0xff]
        %v2163 = vld [vmem:[%s3 + $0x320] sm:$0xff]
        %v2164 = vld [vmem:[%s3 + $0x328] sm:$0xff]
        %v2165 = vld [vmem:[%s3 + $0x330] sm:$0xff]
        %v2166 = vld [vmem:[%s3 + $0x338] sm:$0xff]
        %v2167 = vld [vmem:[%s3 + $0x340] sm:$0xff]
        %v2168 = vld [vmem:[%s3 + $0x348] sm:$0xff]
        %v2169 = vld [vmem:[%s3 + $0x350] sm:$0xff]
        %v2170 = vld [vmem:[%s3 + $0x358] sm:$0xff]
        %v2171 = vld [vmem:[%s3 + $0x360] sm:$0xff]
        %v2172 = vld [vmem:[%s3 + $0x368] sm:$0xff]
        %v2173 = vld [vmem:[%s3 + $0x370] sm:$0xff]
        %v2174 = vld [vmem:[%s3 + $0x378] sm:$0xff]
        %v2175 = vld [vmem:[%s3 + $0x380] sm:$0xff]
        %v2176 = vld [vmem:[%s3 + $0x388] sm:$0xff]
        %v2177 = vld [vmem:[%s3 + $0x390] sm:$0xff]
        %v2178 = vld [vmem:[%s3 + $0x398] sm:$0xff]
        %v2179 = vld [vmem:[%s3 + $0x3a0] sm:$0xff]
        %v2180 = vld [vmem:[%s3 + $0x3a8] sm:$0xff]
        %v2181 = vld [vmem:[%s3 + $0x3b0] sm:$0xff]
        %v2182 = vld [vmem:[%s3 + $0x3b8] sm:$0xff]
        %v2183 = vld [vmem:[%s3 + $0x3c0] sm:$0xff]
        %v2184 = vld [vmem:[%s3 + $0x3c8] sm:$0xff]
        %v2185 = vld [vmem:[%s3 + $0x3d0] sm:$0xff]
        %v2186 = vld [vmem:[%s3 + $0x3d8] sm:$0xff]
        %v2187 = vld [vmem:[%s3 + $0x3e0] sm:$0xff]
        %v2188 = vld [vmem:[%s3 + $0x3e8] sm:$0xff]
        %v2189 = vld [vmem:[%s3 + $0x3f0] sm:$0xff]
        %v2190 = vld [vmem:[%s3 + $0x3f8] sm:$0xff]
        %v2255 = vunpack.c.l.b16 %v2127
        %v2256 = vunpack.c.h.b16 %v2127
        %v2257 = vunpack.c.l.b16 %v2128
        %v2258 = vunpack.c.h.b16 %v2128
        %v2259 = vunpack.c.l.b16 %v2129
        %v2260 = vunpack.c.h.b16 %v2129
        %v2261 = vunpack.c.l.b16 %v2130
        %v2262 = vunpack.c.h.b16 %v2130
        %v2263 = vunpack.c.l.b16 %v2131
        %v2264 = vunpack.c.h.b16 %v2131
        %v2265 = vunpack.c.l.b16 %v2132
        %v2266 = vunpack.c.h.b16 %v2132
        %v2267 = vunpack.c.l.b16 %v2133
        %v2268 = vunpack.c.h.b16 %v2133
        %v2269 = vunpack.c.l.b16 %v2134
        %v2270 = vunpack.c.h.b16 %v2134
        %v2271 = vunpack.c.l.b16 %v2135
        %v2272 = vunpack.c.h.b16 %v2135
        %v2273 = vunpack.c.l.b16 %v2136
        %v2274 = vunpack.c.h.b16 %v2136
        %v2275 = vunpack.c.l.b16 %v2137
        %v2276 = vunpack.c.h.b16 %v2137
        %v2277 = vunpack.c.l.b16 %v2138
        %v2278 = vunpack.c.h.b16 %v2138
        %v2279 = vunpack.c.l.b16 %v2139
        %v2280 = vunpack.c.h.b16 %v2139
        %v2281 = vunpack.c.l.b16 %v2140
        %v2282 = vunpack.c.h.b16 %v2140
        %v2283 = vunpack.c.l.b16 %v2141
        %v2284 = vunpack.c.h.b16 %v2141
        %v2285 = vunpack.c.l.b16 %v2142
        %v2286 = vunpack.c.h.b16 %v2142
        %v2287 = vunpack.c.l.b16 %v2143
        %v2288 = vunpack.c.h.b16 %v2143
        %v2289 = vunpack.c.l.b16 %v2144
        %v2290 = vunpack.c.h.b16 %v2144
        %v2291 = vunpack.c.l.b16 %v2145
        %v2292 = vunpack.c.h.b16 %v2145
        %v2293 = vunpack.c.l.b16 %v2146
        %v2294 = vunpack.c.h.b16 %v2146
        %v2295 = vunpack.c.l.b16 %v2147
        %v2296 = vunpack.c.h.b16 %v2147
        %v2297 = vunpack.c.l.b16 %v2148
        %v2298 = vunpack.c.h.b16 %v2148
        %v2299 = vunpack.c.l.b16 %v2149
        %v2300 = vunpack.c.h.b16 %v2149
        %v2301 = vunpack.c.l.b16 %v2150
        %v2302 = vunpack.c.h.b16 %v2150
        %v2303 = vunpack.c.l.b16 %v2151
        %v2304 = vunpack.c.h.b16 %v2151
        %v2305 = vunpack.c.l.b16 %v2152
        %v2306 = vunpack.c.h.b16 %v2152
        %v2307 = vunpack.c.l.b16 %v2153
        %v2308 = vunpack.c.h.b16 %v2153
        %v2309 = vunpack.c.l.b16 %v2154
        %v2310 = vunpack.c.h.b16 %v2154
        %v2311 = vunpack.c.l.b16 %v2155
        %v2312 = vunpack.c.h.b16 %v2155
        %v2313 = vunpack.c.l.b16 %v2156
        %v2314 = vunpack.c.h.b16 %v2156
        %v2315 = vunpack.c.l.b16 %v2157
        %v2316 = vunpack.c.h.b16 %v2157
        %v2317 = vunpack.c.l.b16 %v2158
        %v2318 = vunpack.c.h.b16 %v2158
        %v2319 = vunpack.c.l.b16 %v2159
        %v2320 = vunpack.c.h.b16 %v2159
        %v2321 = vunpack.c.l.b16 %v2160
        %v2322 = vunpack.c.h.b16 %v2160
        %v2323 = vunpack.c.l.b16 %v2161
        %v2324 = vunpack.c.h.b16 %v2161
        %v2325 = vunpack.c.l.b16 %v2162
        %v2326 = vunpack.c.h.b16 %v2162
        %v2327 = vunpack.c.l.b16 %v2163
        %v2328 = vunpack.c.h.b16 %v2163
        %v2329 = vunpack.c.l.b16 %v2164
        %v2330 = vunpack.c.h.b16 %v2164
        %v2331 = vunpack.c.l.b16 %v2165
        %v2332 = vunpack.c.h.b16 %v2165
        %v2333 = vunpack.c.l.b16 %v2166
        %v2334 = vunpack.c.h.b16 %v2166
        %v2335 = vunpack.c.l.b16 %v2167
        %v2336 = vunpack.c.h.b16 %v2167
        %v2337 = vunpack.c.l.b16 %v2168
        %v2338 = vunpack.c.h.b16 %v2168
        %v2339 = vunpack.c.l.b16 %v2169
        %v2340 = vunpack.c.h.b16 %v2169
        %v2341 = vunpack.c.l.b16 %v2170
        %v2342 = vunpack.c.h.b16 %v2170
        %v2343 = vunpack.c.l.b16 %v2171
        %v2344 = vunpack.c.h.b16 %v2171
        %v2345 = vunpack.c.l.b16 %v2172
        %v2346 = vunpack.c.h.b16 %v2172
        %v2347 = vunpack.c.l.b16 %v2173
        %v2348 = vunpack.c.h.b16 %v2173
        %v2349 = vunpack.c.l.b16 %v2174
        %v2350 = vunpack.c.h.b16 %v2174
        %v2351 = vunpack.c.l.b16 %v2175
        %v2352 = vunpack.c.h.b16 %v2175
        %v2353 = vunpack.c.l.b16 %v2176
        %v2354 = vunpack.c.h.b16 %v2176
        %v2355 = vunpack.c.l.b16 %v2177
        %v2356 = vunpack.c.h.b16 %v2177
        %v2357 = vunpack.c.l.b16 %v2178
        %v2358 = vunpack.c.h.b16 %v2178
        %v2359 = vunpack.c.l.b16 %v2179
        %v2360 = vunpack.c.h.b16 %v2179
        %v2361 = vunpack.c.l.b16 %v2180
        %v2362 = vunpack.c.h.b16 %v2180
        %v2363 = vunpack.c.l.b16 %v2181
        %v2364 = vunpack.c.h.b16 %v2181
        %v2365 = vunpack.c.l.b16 %v2182
        %v2366 = vunpack.c.h.b16 %v2182
        %v2367 = vunpack.c.l.b16 %v2183
        %v2368 = vunpack.c.h.b16 %v2183
        %v2369 = vunpack.c.l.b16 %v2184
        %v2370 = vunpack.c.h.b16 %v2184
        %v2371 = vunpack.c.l.b16 %v2185
        %v2372 = vunpack.c.h.b16 %v2185
        %v2373 = vunpack.c.l.b16 %v2186
        %v2374 = vunpack.c.h.b16 %v2186
        %v2375 = vunpack.c.l.b16 %v2187
        %v2376 = vunpack.c.h.b16 %v2187
        %v2377 = vunpack.c.l.b16 %v2188
        %v2378 = vunpack.c.h.b16 %v2188
        %v2379 = vunpack.c.l.b16 %v2189
        %v2380 = vunpack.c.h.b16 %v2189
        %v2381 = vunpack.c.l.b16 %v2190
        %v2382 = vunpack.c.h.b16 %v2190
        %v2383 = vpack.c.b16 %v2257, %v2255
        %v2384 = vpack.c.b16 %v2258, %v2256
        %v2385 = vpack.c.b16 %v2261, %v2259
        %v2386 = vpack.c.b16 %v2262, %v2260
        %v2387 = vpack.c.b16 %v2265, %v2263
        %v2388 = vpack.c.b16 %v2266, %v2264
        %v2389 = vpack.c.b16 %v2269, %v2267
        %v2390 = vpack.c.b16 %v2270, %v2268
        %v2391 = vpack.c.b16 %v2273, %v2271
        %v2392 = vpack.c.b16 %v2274, %v2272
        %v2393 = vpack.c.b16 %v2277, %v2275
        %v2394 = vpack.c.b16 %v2278, %v2276
        %v2395 = vpack.c.b16 %v2281, %v2279
        %v2396 = vpack.c.b16 %v2282, %v2280
        %v2397 = vpack.c.b16 %v2285, %v2283
        %v2398 = vpack.c.b16 %v2286, %v2284
        %v2399 = vpack.c.b16 %v2289, %v2287
        %v2400 = vpack.c.b16 %v2290, %v2288
        %v2401 = vpack.c.b16 %v2293, %v2291
        %v2402 = vpack.c.b16 %v2294, %v2292
        %v2403 = vpack.c.b16 %v2297, %v2295
        %v2404 = vpack.c.b16 %v2298, %v2296
        %v2405 = vpack.c.b16 %v2301, %v2299
        %v2406 = vpack.c.b16 %v2302, %v2300
        %v2407 = vpack.c.b16 %v2305, %v2303
        %v2408 = vpack.c.b16 %v2306, %v2304
        %v2409 = vpack.c.b16 %v2309, %v2307
        %v2410 = vpack.c.b16 %v2310, %v2308
        %v2411 = vpack.c.b16 %v2313, %v2311
        %v2412 = vpack.c.b16 %v2314, %v2312
        %v2413 = vpack.c.b16 %v2317, %v2315
        %v2414 = vpack.c.b16 %v2318, %v2316
        %v2415 = vpack.c.b16 %v2321, %v2319
        %v2416 = vpack.c.b16 %v2322, %v2320
        %v2417 = vpack.c.b16 %v2325, %v2323
        %v2418 = vpack.c.b16 %v2326, %v2324
        %v2419 = vpack.c.b16 %v2329, %v2327
        %v2420 = vpack.c.b16 %v2330, %v2328
        %v2421 = vpack.c.b16 %v2333, %v2331
        %v2422 = vpack.c.b16 %v2334, %v2332
        %v2423 = vpack.c.b16 %v2337, %v2335
        %v2424 = vpack.c.b16 %v2338, %v2336
        %v2425 = vpack.c.b16 %v2341, %v2339
        %v2426 = vpack.c.b16 %v2342, %v2340
        %v2427 = vpack.c.b16 %v2345, %v2343
        %v2428 = vpack.c.b16 %v2346, %v2344
        %v2429 = vpack.c.b16 %v2349, %v2347
        %v2430 = vpack.c.b16 %v2350, %v2348
        %v2431 = vpack.c.b16 %v2353, %v2351
        %v2432 = vpack.c.b16 %v2354, %v2352
        %v2433 = vpack.c.b16 %v2357, %v2355
        %v2434 = vpack.c.b16 %v2358, %v2356
        %v2435 = vpack.c.b16 %v2361, %v2359
        %v2436 = vpack.c.b16 %v2362, %v2360
        %v2437 = vpack.c.b16 %v2365, %v2363
        %v2438 = vpack.c.b16 %v2366, %v2364
        %v2439 = vpack.c.b16 %v2369, %v2367
        %v2440 = vpack.c.b16 %v2370, %v2368
        %v2441 = vpack.c.b16 %v2373, %v2371
        %v2442 = vpack.c.b16 %v2374, %v2372
        %v2443 = vpack.c.b16 %v2377, %v2375
        %v2444 = vpack.c.b16 %v2378, %v2376
        %v2445 = vpack.c.b16 %v2381, %v2379
        %v2446 = vpack.c.b16 %v2382, %v2380
        %2511 = vmatprep.subr.bf16.mxu0 %v2384
        %2512 = vmatpush1.bf16.msra.mxu0 %v2383
        %2513 = vmatprep.subr.bf16.mxu0 %v2386
        %2514 = vmatpush1.bf16.msra.mxu0 %v2385
        %2515 = vmatprep.subr.bf16.mxu0 %v2388
        %2516 = vmatpush1.bf16.msra.mxu0 %v2387
        %2517 = vmatprep.subr.bf16.mxu0 %v2390
        %2518 = vmatpush1.bf16.msra.mxu0 %v2389
        %2519 = vmatprep.subr.bf16.mxu0 %v2392
        %2520 = vmatpush1.bf16.msra.mxu0 %v2391
        %2521 = vmatprep.subr.bf16.mxu0 %v2394
        %2522 = vmatpush1.bf16.msra.mxu0 %v2393
        %2523 = vmatprep.subr.bf16.mxu0 %v2396
        %2524 = vmatpush1.bf16.msra.mxu0 %v2395
        %2525 = vmatprep.subr.bf16.mxu0 %v2398
        %2526 = vmatpush1.bf16.msra.mxu0 %v2397
        %2527 = vmatprep.subr.bf16.mxu0 %v2400
        %2528 = vmatpush1.bf16.msra.mxu0 %v2399
        %2529 = vmatprep.subr.bf16.mxu0 %v2402
        %2530 = vmatpush1.bf16.msra.mxu0 %v2401
        %2531 = vmatprep.subr.bf16.mxu0 %v2404
        %2532 = vmatpush1.bf16.msra.mxu0 %v2403
        %2533 = vmatprep.subr.bf16.mxu0 %v2406
        %2534 = vmatpush1.bf16.msra.mxu0 %v2405
        %2535 = vmatprep.subr.bf16.mxu0 %v2408
        %2536 = vmatpush1.bf16.msra.mxu0 %v2407
        %2537 = vmatprep.subr.bf16.mxu0 %v2410
        %2538 = vmatpush1.bf16.msra.mxu0 %v2409
        %2539 = vmatprep.subr.bf16.mxu0 %v2412
        %2540 = vmatpush1.bf16.msra.mxu0 %v2411
        %2541 = vmatprep.subr.bf16.mxu0 %v2414
        %2542 = vmatpush1.bf16.msra.mxu0 %v2413
        %2543 = vmatprep.mubr.bf16.mxu0 %v2112
        %2544 = vmatmul.mubr.bf16.gmra.mrb[0].mxu0 %v2111
        %v2545 = vpop.f32.mrb[0].mxu0
        %v2546 = vadd.f32 0.0, %v2545
        %v2547 = vpop.f32.mrb[0].mxu0
        %v2548 = vadd.f32 0.0, %v2547
        %v2549 = vpop.f32.mrb[0].mxu0
        %v2550 = vadd.f32 0.0, %v2549
        %v2551 = vpop.f32.mrb[0].mxu0
        %v2552 = vadd.f32 0.0, %v2551
        %2553 = vmatprep.mubr.bf16.mxu0 %v2116
        %2554 = vmatmul.mubr.bf16.gmra.mrb[0].mxu0 %v2115
        %v2555 = vpop.f32.mrb[0].mxu0
        %v2556 = vadd.f32 0.0, %v2555
        %v2557 = vpop.f32.mrb[0].mxu0
        %v2558 = vadd.f32 0.0, %v2557
        %v2559 = vpop.f32.mrb[0].mxu0
        %v2560 = vadd.f32 0.0, %v2559
        %v2561 = vpop.f32.mrb[0].mxu0
        %v2562 = vadd.f32 0.0, %v2561
        %2563 = vmatprep.mubr.bf16.mxu0 %v2120
        %2564 = vmatmul.mubr.bf16.gmra.mrb[0].mxu0 %v2119
        %v2565 = vpop.f32.mrb[0].mxu0
        %v2566 = vadd.f32 0.0, %v2565
        %v2567 = vpop.f32.mrb[0].mxu0
        %v2568 = vadd.f32 0.0, %v2567
        %v2569 = vpop.f32.mrb[0].mxu0
        %v2570 = vadd.f32 0.0, %v2569
        %v2571 = vpop.f32.mrb[0].mxu0
        %v2572 = vadd.f32 0.0, %v2571
        %2573 = vmatprep.mubr.bf16.mxu0 %v2124
        %2574 = vmatmul.mubr.bf16.gmra.mrb[0].mxu0 %v2123
        %v2575 = vpop.f32.mrb[0].mxu0
        %v2576 = vadd.f32 0.0, %v2575
        %v2577 = vpop.f32.mrb[0].mxu0
        %v2578 = vadd.f32 0.0, %v2577
        %v2579 = vpop.f32.mrb[0].mxu0
        %v2580 = vadd.f32 0.0, %v2579
        %v2581 = vpop.f32.mrb[0].mxu0
        %v2582 = vadd.f32 0.0, %v2581
        %2583 = vdwg.mxu0
        %2584 = vmatprep.subr.bf16.mxu0 %v2416
        %2585 = vmatpush1.bf16.msra.mxu0 %v2415
        %2586 = vmatprep.subr.bf16.mxu0 %v2418
        %2587 = vmatpush1.bf16.msra.mxu0 %v2417
        %2588 = vmatprep.subr.bf16.mxu0 %v2420
        %2589 = vmatpush1.bf16.msra.mxu0 %v2419
        %2590 = vmatprep.subr.bf16.mxu0 %v2422
        %2591 = vmatpush1.bf16.msra.mxu0 %v2421
        %2592 = vmatprep.subr.bf16.mxu0 %v2424
        %2593 = vmatpush1.bf16.msra.mxu0 %v2423
        %2594 = vmatprep.subr.bf16.mxu0 %v2426
        %2595 = vmatpush1.bf16.msra.mxu0 %v2425
        %2596 = vmatprep.subr.bf16.mxu0 %v2428
        %2597 = vmatpush1.bf16.msra.mxu0 %v2427
        %2598 = vmatprep.subr.bf16.mxu0 %v2430
        %2599 = vmatpush1.bf16.msra.mxu0 %v2429
        %2600 = vmatprep.subr.bf16.mxu0 %v2432
        %2601 = vmatpush1.bf16.msra.mxu0 %v2431
        %2602 = vmatprep.subr.bf16.mxu0 %v2434
        %2603 = vmatpush1.bf16.msra.mxu0 %v2433
        %2604 = vmatprep.subr.bf16.mxu0 %v2436
        %2605 = vmatpush1.bf16.msra.mxu0 %v2435
        %2606 = vmatprep.subr.bf16.mxu0 %v2438
        %2607 = vmatpush1.bf16.msra.mxu0 %v2437
        %2608 = vmatprep.subr.bf16.mxu0 %v2440
        %2609 = vmatpush1.bf16.msra.mxu0 %v2439
        %2610 = vmatprep.subr.bf16.mxu0 %v2442
        %2611 = vmatpush1.bf16.msra.mxu0 %v2441
        %2612 = vmatprep.subr.bf16.mxu0 %v2444
        %2613 = vmatpush1.bf16.msra.mxu0 %v2443
        %2614 = vmatprep.subr.bf16.mxu0 %v2446
        %2615 = vmatpush1.bf16.msra.mxu0 %v2445
        %2616 = vmatprep.mubr.bf16.mxu0 %v2114
        %2617 = vmatmul.mubr.bf16.gmra.mrb[0].mxu0 %v2113
        %v2618 = vpop.f32.mrb[0].mxu0
        %v2619 = vadd.f32 %v2546, %v2618
        %v2620 = vpop.f32.mrb[0].mxu0
        %v2621 = vadd.f32 %v2548, %v2620
        %v2622 = vpop.f32.mrb[0].mxu0
        %v2623 = vadd.f32 %v2550, %v2622
        %v2624 = vpop.f32.mrb[0].mxu0
        %v2625 = vadd.f32 %v2552, %v2624
        %2626 = vmatprep.mubr.bf16.mxu0 %v2118
        %2627 = vmatmul.mubr.bf16.gmra.mrb[0].mxu0 %v2117
        %v2628 = vpop.f32.mrb[0].mxu0
        %v2629 = vadd.f32 %v2556, %v2628
        %v2630 = vpop.f32.mrb[0].mxu0
        %v2631 = vadd.f32 %v2558, %v2630
        %v2632 = vpop.f32.mrb[0].mxu0
        %v2633 = vadd.f32 %v2560, %v2632
        %v2634 = vpop.f32.mrb[0].mxu0
        %v2635 = vadd.f32 %v2562, %v2634
        %2636 = vmatprep.mubr.bf16.mxu0 %v2122
        %2637 = vmatmul.mubr.bf16.gmra.mrb[0].mxu0 %v2121
        %v2638 = vpop.f32.mrb[0].mxu0
        %v2639 = vadd.f32 %v2566, %v2638
        %v2640 = vpop.f32.mrb[0].mxu0
        %v2641 = vadd.f32 %v2568, %v2640
        %v2642 = vpop.f32.mrb[0].mxu0
        %v2643 = vadd.f32 %v2570, %v2642
        %v2644 = vpop.f32.mrb[0].mxu0
        %v2645 = vadd.f32 %v2572, %v2644
        %2646 = vmatprep.mubr.bf16.mxu0 %v2126
        %2647 = vmatmul.mubr.bf16.gmra.mrb[0].mxu0 %v2125
        %v2648 = vpop.f32.mrb[0].mxu0
        %v2649 = vadd.f32 %v2576, %v2648
        %v2650 = vpop.f32.mrb[0].mxu0
        %v2651 = vadd.f32 %v2578, %v2650
        %v2652 = vpop.f32.mrb[0].mxu0
        %v2653 = vadd.f32 %v2580, %v2652
        %v2654 = vpop.f32.mrb[0].mxu0
        %v2655 = vadd.f32 %v2582, %v2654
        %2656 = vdwg.mxu0
        %v2721 = vunpack.c.l.b16 %v1790
        %v2722 = vunpack.c.h.b16 %v1790
        %v2723 = vunpack.c.l.b16 %v1791
        %v2724 = vunpack.c.h.b16 %v1791
        %v2725 = vunpack.c.l.b16 %v1792
        %v2726 = vunpack.c.h.b16 %v1792
        %v2727 = vunpack.c.l.b16 %v1793
        %v2728 = vunpack.c.h.b16 %v1793
        %v2729 = vunpack.c.l.b16 %v1794
        %v2730 = vunpack.c.h.b16 %v1794
        %v2731 = vunpack.c.l.b16 %v1795
        %v2732 = vunpack.c.h.b16 %v1795
        %v2733 = vunpack.c.l.b16 %v1796
        %v2734 = vunpack.c.h.b16 %v1796
        %v2735 = vunpack.c.l.b16 %v1797
        %v2736 = vunpack.c.h.b16 %v1797
        %v2737 = vunpack.c.l.b16 %v1798
        %v2738 = vunpack.c.h.b16 %v1798
        %v2739 = vunpack.c.l.b16 %v1799
        %v2740 = vunpack.c.h.b16 %v1799
        %v2741 = vunpack.c.l.b16 %v1800
        %v2742 = vunpack.c.h.b16 %v1800
        %v2743 = vunpack.c.l.b16 %v1801
        %v2744 = vunpack.c.h.b16 %v1801
        %v2745 = vunpack.c.l.b16 %v1802
        %v2746 = vunpack.c.h.b16 %v1802
        %v2747 = vunpack.c.l.b16 %v1803
        %v2748 = vunpack.c.h.b16 %v1803
        %v2749 = vunpack.c.l.b16 %v1804
        %v2750 = vunpack.c.h.b16 %v1804
        %v2751 = vunpack.c.l.b16 %v1805
        %v2752 = vunpack.c.h.b16 %v1805
        %v2753 = vunpack.c.l.b16 %v1806
        %v2754 = vunpack.c.h.b16 %v1806
        %v2755 = vunpack.c.l.b16 %v1807
        %v2756 = vunpack.c.h.b16 %v1807
        %v2757 = vunpack.c.l.b16 %v1808
        %v2758 = vunpack.c.h.b16 %v1808
        %v2759 = vunpack.c.l.b16 %v1809
        %v2760 = vunpack.c.h.b16 %v1809
        %v2761 = vunpack.c.l.b16 %v1810
        %v2762 = vunpack.c.h.b16 %v1810
        %v2763 = vunpack.c.l.b16 %v1811
        %v2764 = vunpack.c.h.b16 %v1811
        %v2765 = vunpack.c.l.b16 %v1812
        %v2766 = vunpack.c.h.b16 %v1812
        %v2767 = vunpack.c.l.b16 %v1813
        %v2768 = vunpack.c.h.b16 %v1813
        %v2769 = vunpack.c.l.b16 %v1814
        %v2770 = vunpack.c.h.b16 %v1814
        %v2771 = vunpack.c.l.b16 %v1815
        %v2772 = vunpack.c.h.b16 %v1815
        %v2773 = vunpack.c.l.b16 %v1816
        %v2774 = vunpack.c.h.b16 %v1816
        %v2775 = vunpack.c.l.b16 %v1817
        %v2776 = vunpack.c.h.b16 %v1817
        %v2777 = vunpack.c.l.b16 %v1818
        %v2778 = vunpack.c.h.b16 %v1818
        %v2779 = vunpack.c.l.b16 %v1819
        %v2780 = vunpack.c.h.b16 %v1819
        %v2781 = vunpack.c.l.b16 %v1820
        %v2782 = vunpack.c.h.b16 %v1820
        %v2783 = vunpack.c.l.b16 %v1821
        %v2784 = vunpack.c.h.b16 %v1821
        %v2785 = vunpack.c.l.b16 %v1822
        %v2786 = vunpack.c.h.b16 %v1822
        %v2787 = vunpack.c.l.b16 %v1823
        %v2788 = vunpack.c.h.b16 %v1823
        %v2789 = vunpack.c.l.b16 %v1824
        %v2790 = vunpack.c.h.b16 %v1824
        %v2791 = vunpack.c.l.b16 %v1825
        %v2792 = vunpack.c.h.b16 %v1825
        %v2793 = vunpack.c.l.b16 %v1826
        %v2794 = vunpack.c.h.b16 %v1826
        %v2795 = vunpack.c.l.b16 %v1827
        %v2796 = vunpack.c.h.b16 %v1827
        %v2797 = vunpack.c.l.b16 %v1828
        %v2798 = vunpack.c.h.b16 %v1828
        %v2799 = vunpack.c.l.b16 %v1829
        %v2800 = vunpack.c.h.b16 %v1829
        %v2801 = vunpack.c.l.b16 %v1830
        %v2802 = vunpack.c.h.b16 %v1830
        %v2803 = vunpack.c.l.b16 %v1831
        %v2804 = vunpack.c.h.b16 %v1831
        %v2805 = vunpack.c.l.b16 %v1832
        %v2806 = vunpack.c.h.b16 %v1832
        %v2807 = vunpack.c.l.b16 %v1833
        %v2808 = vunpack.c.h.b16 %v1833
        %v2809 = vunpack.c.l.b16 %v1834
        %v2810 = vunpack.c.h.b16 %v1834
        %v2811 = vunpack.c.l.b16 %v1835
        %v2812 = vunpack.c.h.b16 %v1835
        %v2813 = vunpack.c.l.b16 %v1836
        %v2814 = vunpack.c.h.b16 %v1836
        %v2815 = vunpack.c.l.b16 %v1837
        %v2816 = vunpack.c.h.b16 %v1837
        %v2817 = vunpack.c.l.b16 %v1838
        %v2818 = vunpack.c.h.b16 %v1838
        %v2819 = vunpack.c.l.b16 %v1839
        %v2820 = vunpack.c.h.b16 %v1839
        %v2821 = vunpack.c.l.b16 %v1840
        %v2822 = vunpack.c.h.b16 %v1840
        %v2823 = vunpack.c.l.b16 %v1841
        %v2824 = vunpack.c.h.b16 %v1841
        %v2825 = vunpack.c.l.b16 %v1842
        %v2826 = vunpack.c.h.b16 %v1842
        %v2827 = vunpack.c.l.b16 %v1843
        %v2828 = vunpack.c.h.b16 %v1843
        %v2829 = vunpack.c.l.b16 %v1844
        %v2830 = vunpack.c.h.b16 %v1844
        %v2831 = vunpack.c.l.b16 %v1845
        %v2832 = vunpack.c.h.b16 %v1845
        %v2833 = vunpack.c.l.b16 %v1846
        %v2834 = vunpack.c.h.b16 %v1846
        %v2835 = vunpack.c.l.b16 %v1847
        %v2836 = vunpack.c.h.b16 %v1847
        %v2837 = vunpack.c.l.b16 %v1848
        %v2838 = vunpack.c.h.b16 %v1848
        %v2839 = vunpack.c.l.b16 %v1849
        %v2840 = vunpack.c.h.b16 %v1849
        %v2841 = vunpack.c.l.b16 %v1850
        %v2842 = vunpack.c.h.b16 %v1850
        %v2843 = vunpack.c.l.b16 %v1851
        %v2844 = vunpack.c.h.b16 %v1851
        %v2845 = vunpack.c.l.b16 %v1852
        %v2846 = vunpack.c.h.b16 %v1852
        %v2847 = vunpack.c.l.b16 %v1853
        %v2848 = vunpack.c.h.b16 %v1853
        %v2849 = vpack.c.b16 %v2723, %v2721
        %v2850 = vpack.c.b16 %v2724, %v2722
        %v2851 = vpack.c.b16 %v2727, %v2725
        %v2852 = vpack.c.b16 %v2728, %v2726
        %v2853 = vpack.c.b16 %v2731, %v2729
        %v2854 = vpack.c.b16 %v2732, %v2730
        %v2855 = vpack.c.b16 %v2735, %v2733
        %v2856 = vpack.c.b16 %v2736, %v2734
        %v2857 = vpack.c.b16 %v2739, %v2737
        %v2858 = vpack.c.b16 %v2740, %v2738
        %v2859 = vpack.c.b16 %v2743, %v2741
        %v2860 = vpack.c.b16 %v2744, %v2742
        %v2861 = vpack.c.b16 %v2747, %v2745
        %v2862 = vpack.c.b16 %v2748, %v2746
        %v2863 = vpack.c.b16 %v2751, %v2749
        %v2864 = vpack.c.b16 %v2752, %v2750
        %v2865 = vpack.c.b16 %v2755, %v2753
        %v2866 = vpack.c.b16 %v2756, %v2754
        %v2867 = vpack.c.b16 %v2759, %v2757
        %v2868 = vpack.c.b16 %v2760, %v2758
        %v2869 = vpack.c.b16 %v2763, %v2761
        %v2870 = vpack.c.b16 %v2764, %v2762
        %v2871 = vpack.c.b16 %v2767, %v2765
        %v2872 = vpack.c.b16 %v2768, %v2766
        %v2873 = vpack.c.b16 %v2771, %v2769
        %v2874 = vpack.c.b16 %v2772, %v2770
        %v2875 = vpack.c.b16 %v2775, %v2773
        %v2876 = vpack.c.b16 %v2776, %v2774
        %v2877 = vpack.c.b16 %v2779, %v2777
        %v2878 = vpack.c.b16 %v2780, %v2778
        %v2879 = vpack.c.b16 %v2783, %v2781
        %v2880 = vpack.c.b16 %v2784, %v2782
        %v2881 = vpack.c.b16 %v2787, %v2785
        %v2882 = vpack.c.b16 %v2788, %v2786
        %v2883 = vpack.c.b16 %v2791, %v2789
        %v2884 = vpack.c.b16 %v2792, %v2790
        %v2885 = vpack.c.b16 %v2795, %v2793
        %v2886 = vpack.c.b16 %v2796, %v2794
        %v2887 = vpack.c.b16 %v2799, %v2797
        %v2888 = vpack.c.b16 %v2800, %v2798
        %v2889 = vpack.c.b16 %v2803, %v2801
        %v2890 = vpack.c.b16 %v2804, %v2802
        %v2891 = vpack.c.b16 %v2807, %v2805
        %v2892 = vpack.c.b16 %v2808, %v2806
        %v2893 = vpack.c.b16 %v2811, %v2809
        %v2894 = vpack.c.b16 %v2812, %v2810
        %v2895 = vpack.c.b16 %v2815, %v2813
        %v2896 = vpack.c.b16 %v2816, %v2814
        %v2897 = vpack.c.b16 %v2819, %v2817
        %v2898 = vpack.c.b16 %v2820, %v2818
        %v2899 = vpack.c.b16 %v2823, %v2821
        %v2900 = vpack.c.b16 %v2824, %v2822
        %v2901 = vpack.c.b16 %v2827, %v2825
        %v2902 = vpack.c.b16 %v2828, %v2826
        %v2903 = vpack.c.b16 %v2831, %v2829
        %v2904 = vpack.c.b16 %v2832, %v2830
        %v2905 = vpack.c.b16 %v2835, %v2833
        %v2906 = vpack.c.b16 %v2836, %v2834
        %v2907 = vpack.c.b16 %v2839, %v2837
        %v2908 = vpack.c.b16 %v2840, %v2838
        %v2909 = vpack.c.b16 %v2843, %v2841
        %v2910 = vpack.c.b16 %v2844, %v2842
        %v2911 = vpack.c.b16 %v2847, %v2845
        %v2912 = vpack.c.b16 %v2848, %v2846
        %2977 = vmatprep.subr.bf16.mxu0 %v2850
        %2978 = vmatpush1.bf16.msra.mxu0 %v2849
        %2979 = vmatprep.subr.bf16.mxu0 %v2852
        %2980 = vmatpush1.bf16.msra.mxu0 %v2851
        %2981 = vmatprep.subr.bf16.mxu0 %v2854
        %2982 = vmatpush1.bf16.msra.mxu0 %v2853
        %2983 = vmatprep.subr.bf16.mxu0 %v2856
        %2984 = vmatpush1.bf16.msra.mxu0 %v2855
        %2985 = vmatprep.subr.bf16.mxu0 %v2858
        %2986 = vmatpush1.bf16.msra.mxu0 %v2857
        %2987 = vmatprep.subr.bf16.mxu0 %v2860
        %2988 = vmatpush1.bf16.msra.mxu0 %v2859
        %2989 = vmatprep.subr.bf16.mxu0 %v2862
        %2990 = vmatpush1.bf16.msra.mxu0 %v2861
        %2991 = vmatprep.subr.bf16.mxu0 %v2864
        %2992 = vmatpush1.bf16.msra.mxu0 %v2863
        %2993 = vmatprep.subr.bf16.mxu0 %v2866
        %2994 = vmatpush1.bf16.msra.mxu0 %v2865
        %2995 = vmatprep.subr.bf16.mxu0 %v2868
        %2996 = vmatpush1.bf16.msra.mxu0 %v2867
        %2997 = vmatprep.subr.bf16.mxu0 %v2870
        %2998 = vmatpush1.bf16.msra.mxu0 %v2869
        %2999 = vmatprep.subr.bf16.mxu0 %v2872
        %3000 = vmatpush1.bf16.msra.mxu0 %v2871
        %3001 = vmatprep.subr.bf16.mxu0 %v2874
        %3002 = vmatpush1.bf16.msra.mxu0 %v2873
        %3003 = vmatprep.subr.bf16.mxu0 %v2876
        %3004 = vmatpush1.bf16.msra.mxu0 %v2875
        %3005 = vmatprep.subr.bf16.mxu0 %v2878
        %3006 = vmatpush1.bf16.msra.mxu0 %v2877
        %3007 = vmatprep.subr.bf16.mxu0 %v2880
        %3008 = vmatpush1.bf16.msra.mxu0 %v2879
        %3009 = vmatprep.mubr.bf16.mxu0 %v1775
        %3010 = vmatmul.mubr.bf16.gmra.mrb[0].mxu0 %v1774
        %v3011 = vpop.f32.mrb[0].mxu0
        %v3012 = vadd.f32 %v2619, %v3011
        %v3013 = vpop.f32.mrb[0].mxu0
        %v3014 = vadd.f32 %v2621, %v3013
        %v3015 = vpop.f32.mrb[0].mxu0
        %v3016 = vadd.f32 %v2623, %v3015
        %v3017 = vpop.f32.mrb[0].mxu0
        %v3018 = vadd.f32 %v2625, %v3017
        %3019 = vmatprep.mubr.bf16.mxu0 %v1779
        %3020 = vmatmul.mubr.bf16.gmra.mrb[0].mxu0 %v1778
        %v3021 = vpop.f32.mrb[0].mxu0
        %v3022 = vadd.f32 %v2629, %v3021
        %v3023 = vpop.f32.mrb[0].mxu0
        %v3024 = vadd.f32 %v2631, %v3023
        %v3025 = vpop.f32.mrb[0].mxu0
        %v3026 = vadd.f32 %v2633, %v3025
        %v3027 = vpop.f32.mrb[0].mxu0
        %v3028 = vadd.f32 %v2635, %v3027
        %3029 = vmatprep.mubr.bf16.mxu0 %v1783
        %3030 = vmatmul.mubr.bf16.gmra.mrb[0].mxu0 %v1782
        %v3031 = vpop.f32.mrb[0].mxu0
        %v3032 = vadd.f32 %v2639, %v3031
        %v3033 = vpop.f32.mrb[0].mxu0
        %v3034 = vadd.f32 %v2641, %v3033
        %v3035 = vpop.f32.mrb[0].mxu0
        %v3036 = vadd.f32 %v2643, %v3035
        %v3037 = vpop.f32.mrb[0].mxu0
        %v3038 = vadd.f32 %v2645, %v3037
        %3039 = vmatprep.mubr.bf16.mxu0 %v1787
        %3040 = vmatmul.mubr.bf16.gmra.mrb[0].mxu0 %v1786
        %v3041 = vpop.f32.mrb[0].mxu0
        %v3042 = vadd.f32 %v2649, %v3041
        %v3043 = vpop.f32.mrb[0].mxu0
        %v3044 = vadd.f32 %v2651, %v3043
        %v3045 = vpop.f32.mrb[0].mxu0
        %v3046 = vadd.f32 %v2653, %v3045
        %v3047 = vpop.f32.mrb[0].mxu0
        %v3048 = vadd.f32 %v2655, %v3047
        %3049 = vdwg.mxu0
        %3050 = vmatprep.subr.bf16.mxu0 %v2882
        %3051 = vmatpush1.bf16.msra.mxu0 %v2881
        %3052 = vmatprep.subr.bf16.mxu0 %v2884
        %3053 = vmatpush1.bf16.msra.mxu0 %v2883
        %3054 = vmatprep.subr.bf16.mxu0 %v2886
        %3055 = vmatpush1.bf16.msra.mxu0 %v2885
        %3056 = vmatprep.subr.bf16.mxu0 %v2888
        %3057 = vmatpush1.bf16.msra.mxu0 %v2887
        %3058 = vmatprep.subr.bf16.mxu0 %v2890
        %3059 = vmatpush1.bf16.msra.mxu0 %v2889
        %3060 = vmatprep.subr.bf16.mxu0 %v2892
        %3061 = vmatpush1.bf16.msra.mxu0 %v2891
        %3062 = vmatprep.subr.bf16.mxu0 %v2894
        %3063 = vmatpush1.bf16.msra.mxu0 %v2893
        %3064 = vmatprep.subr.bf16.mxu0 %v2896
        %3065 = vmatpush1.bf16.msra.mxu0 %v2895
        %3066 = vmatprep.subr.bf16.mxu0 %v2898
        %3067 = vmatpush1.bf16.msra.mxu0 %v2897
        %3068 = vmatprep.subr.bf16.mxu0 %v2900
        %3069 = vmatpush1.bf16.msra.mxu0 %v2899
        %3070 = vmatprep.subr.bf16.mxu0 %v2902
        %3071 = vmatpush1.bf16.msra.mxu0 %v2901
        %3072 = vmatprep.subr.bf16.mxu0 %v2904
        %3073 = vmatpush1.bf16.msra.mxu0 %v2903
        %3074 = vmatprep.subr.bf16.mxu0 %v2906
        %3075 = vmatpush1.bf16.msra.mxu0 %v2905
        %3076 = vmatprep.subr.bf16.mxu0 %v2908
        %3077 = vmatpush1.bf16.msra.mxu0 %v2907
        %3078 = vmatprep.subr.bf16.mxu0 %v2910
        %3079 = vmatpush1.bf16.msra.mxu0 %v2909
        %3080 = vmatprep.subr.bf16.mxu0 %v2912
        %3081 = vmatpush1.bf16.msra.mxu0 %v2911
        %3082 = vmatprep.mubr.bf16.mxu0 %v1777
        %3083 = vmatmul.mubr.bf16.gmra.mrb[0].mxu0 %v1776
        %v3084 = vpop.f32.mrb[0].mxu0
        %v3085 = vadd.f32 %v3012, %v3084
        %v3086 = vpop.f32.mrb[0].mxu0
        %v3087 = vadd.f32 %v3014, %v3086
        %v3088 = vpop.f32.mrb[0].mxu0
        %v3089 = vadd.f32 %v3016, %v3088
        %v3090 = vpop.f32.mrb[0].mxu0
        %v3091 = vadd.f32 %v3018, %v3090
        %3092 = vmatprep.mubr.bf16.mxu0 %v1781
        %3093 = vmatmul.mubr.bf16.gmra.mrb[0].mxu0 %v1780
        %v3094 = vpop.f32.mrb[0].mxu0
        %v3095 = vadd.f32 %v3022, %v3094
        %v3096 = vpop.f32.mrb[0].mxu0
        %v3097 = vadd.f32 %v3024, %v3096
        %v3098 = vpop.f32.mrb[0].mxu0
        %v3099 = vadd.f32 %v3026, %v3098
        %v3100 = vpop.f32.mrb[0].mxu0
        %v3101 = vadd.f32 %v3028, %v3100
        %3102 = vmatprep.mubr.bf16.mxu0 %v1785
        %3103 = vmatmul.mubr.bf16.gmra.mrb[0].mxu0 %v1784
        %v3104 = vpop.f32.mrb[0].mxu0
        %v3105 = vadd.f32 %v3032, %v3104
        %v3106 = vpop.f32.mrb[0].mxu0
        %v3107 = vadd.f32 %v3034, %v3106
        %v3108 = vpop.f32.mrb[0].mxu0
        %v3109 = vadd.f32 %v3036, %v3108
        %v3110 = vpop.f32.mrb[0].mxu0
        %v3111 = vadd.f32 %v3038, %v3110
        %3112 = vmatprep.mubr.bf16.mxu0 %v1789
        %3113 = vmatmul.mubr.bf16.gmra.mrb[0].mxu0 %v1788
        %v3114 = vpop.f32.mrb[0].mxu0
        %v3115 = vadd.f32 %v3042, %v3114
        %v3116 = vpop.f32.mrb[0].mxu0
        %v3117 = vadd.f32 %v3044, %v3116
        %v3118 = vpop.f32.mrb[0].mxu0
        %v3119 = vadd.f32 %v3046, %v3118
        %v3120 = vpop.f32.mrb[0].mxu0
        %v3121 = vadd.f32 %v3048, %v3120
        %3122 = vdwg.mxu0
        %v3123 = vld [vmem:[%s1677] sm:$0xff]
        %v3124 = vld [vmem:[%s1677 + $0x8] sm:$0xff]
        %v3125 = vld [vmem:[%s1677 + $0x10] sm:$0xff]
        %v3126 = vld [vmem:[%s1677 + $0x18] sm:$0xff]
        %v3127 = vld [vmem:[%s1677 + $0x40] sm:$0xff]
        %v3128 = vld [vmem:[%s1677 + $0x48] sm:$0xff]
        %v3129 = vld [vmem:[%s1677 + $0x50] sm:$0xff]
        %v3130 = vld [vmem:[%s1677 + $0x58] sm:$0xff]
        %v3131 = vld [vmem:[%s1677 + $0x80] sm:$0xff]
        %v3132 = vld [vmem:[%s1677 + $0x88] sm:$0xff]
        %v3133 = vld [vmem:[%s1677 + $0x90] sm:$0xff]
        %v3134 = vld [vmem:[%s1677 + $0x98] sm:$0xff]
        %v3135 = vld [vmem:[%s1677 + $0xc0] sm:$0xff]
        %v3136 = vld [vmem:[%s1677 + $0xc8] sm:$0xff]
        %v3137 = vld [vmem:[%s1677 + $0xd0] sm:$0xff]
        %v3138 = vld [vmem:[%s1677 + $0xd8] sm:$0xff]
        %v3139 = vld [vmem:[%s1677 + $0x100] sm:$0xff]
        %v3140 = vld [vmem:[%s1677 + $0x108] sm:$0xff]
        %v3141 = vld [vmem:[%s1677 + $0x110] sm:$0xff]
        %v3142 = vld [vmem:[%s1677 + $0x118] sm:$0xff]
        %v3143 = vld [vmem:[%s1677 + $0x140] sm:$0xff]
        %v3144 = vld [vmem:[%s1677 + $0x148] sm:$0xff]
        %v3145 = vld [vmem:[%s1677 + $0x150] sm:$0xff]
        %v3146 = vld [vmem:[%s1677 + $0x158] sm:$0xff]
        %v3147 = vld [vmem:[%s1677 + $0x180] sm:$0xff]
        %v3148 = vld [vmem:[%s1677 + $0x188] sm:$0xff]
        %v3149 = vld [vmem:[%s1677 + $0x190] sm:$0xff]
        %v3150 = vld [vmem:[%s1677 + $0x198] sm:$0xff]
        %v3151 = vld [vmem:[%s1677 + $0x1c0] sm:$0xff]
        %v3152 = vld [vmem:[%s1677 + $0x1c8] sm:$0xff]
        %v3153 = vld [vmem:[%s1677 + $0x1d0] sm:$0xff]
        %v3154 = vld [vmem:[%s1677 + $0x1d8] sm:$0xff]
        %v3155 = vpack.c.bf16 %v3127, %v3123
        %v3156 = vpack.c.bf16 %v3128, %v3124
        %v3157 = vpack.c.bf16 %v3129, %v3125
        %v3158 = vpack.c.bf16 %v3130, %v3126
        %v3159 = vpack.c.bf16 %v3135, %v3131
        %v3160 = vpack.c.bf16 %v3136, %v3132
        %v3161 = vpack.c.bf16 %v3137, %v3133
        %v3162 = vpack.c.bf16 %v3138, %v3134
        %v3163 = vpack.c.bf16 %v3143, %v3139
        %v3164 = vpack.c.bf16 %v3144, %v3140
        %v3165 = vpack.c.bf16 %v3145, %v3141
        %v3166 = vpack.c.bf16 %v3146, %v3142
        %v3167 = vpack.c.bf16 %v3151, %v3147
        %v3168 = vpack.c.bf16 %v3152, %v3148
        %v3169 = vpack.c.bf16 %v3153, %v3149
        %v3170 = vpack.c.bf16 %v3154, %v3150
        %v3171 = vld [vmem:[%s3 + $0x400] sm:$0xff]
        %v3172 = vld [vmem:[%s3 + $0x408] sm:$0xff]
        %v3173 = vld [vmem:[%s3 + $0x410] sm:$0xff]
        %v3174 = vld [vmem:[%s3 + $0x418] sm:$0xff]
        %v3175 = vld [vmem:[%s3 + $0x420] sm:$0xff]
        %v3176 = vld [vmem:[%s3 + $0x428] sm:$0xff]
        %v3177 = vld [vmem:[%s3 + $0x430] sm:$0xff]
        %v3178 = vld [vmem:[%s3 + $0x438] sm:$0xff]
        %v3179 = vld [vmem:[%s3 + $0x440] sm:$0xff]
        %v3180 = vld [vmem:[%s3 + $0x448] sm:$0xff]
        %v3181 = vld [vmem:[%s3 + $0x450] sm:$0xff]
        %v3182 = vld [vmem:[%s3 + $0x458] sm:$0xff]
        %v3183 = vld [vmem:[%s3 + $0x460] sm:$0xff]
        %v3184 = vld [vmem:[%s3 + $0x468] sm:$0xff]
        %v3185 = vld [vmem:[%s3 + $0x470] sm:$0xff]
        %v3186 = vld [vmem:[%s3 + $0x478] sm:$0xff]
        %v3187 = vld [vmem:[%s3 + $0x480] sm:$0xff]
        %v3188 = vld [vmem:[%s3 + $0x488] sm:$0xff]
        %v3189 = vld [vmem:[%s3 + $0x490] sm:$0xff]
        %v3190 = vld [vmem:[%s3 + $0x498] sm:$0xff]
        %v3191 = vld [vmem:[%s3 + $0x4a0] sm:$0xff]
        %v3192 = vld [vmem:[%s3 + $0x4a8] sm:$0xff]
        %v3193 = vld [vmem:[%s3 + $0x4b0] sm:$0xff]
        %v3194 = vld [vmem:[%s3 + $0x4b8] sm:$0xff]
        %v3195 = vld [vmem:[%s3 + $0x4c0] sm:$0xff]
        %v3196 = vld [vmem:[%s3 + $0x4c8] sm:$0xff]
        %v3197 = vld [vmem:[%s3 + $0x4d0] sm:$0xff]
        %v3198 = vld [vmem:[%s3 + $0x4d8] sm:$0xff]
        %v3199 = vld [vmem:[%s3 + $0x4e0] sm:$0xff]
        %v3200 = vld [vmem:[%s3 + $0x4e8] sm:$0xff]
        %v3201 = vld [vmem:[%s3 + $0x4f0] sm:$0xff]
        %v3202 = vld [vmem:[%s3 + $0x4f8] sm:$0xff]
        %v3203 = vld [vmem:[%s3 + $0x500] sm:$0xff]
        %v3204 = vld [vmem:[%s3 + $0x508] sm:$0xff]
        %v3205 = vld [vmem:[%s3 + $0x510] sm:$0xff]
        %v3206 = vld [vmem:[%s3 + $0x518] sm:$0xff]
        %v3207 = vld [vmem:[%s3 + $0x520] sm:$0xff]
        %v3208 = vld [vmem:[%s3 + $0x528] sm:$0xff]
        %v3209 = vld [vmem:[%s3 + $0x530] sm:$0xff]
        %v3210 = vld [vmem:[%s3 + $0x538] sm:$0xff]
        %v3211 = vld [vmem:[%s3 + $0x540] sm:$0xff]
        %v3212 = vld [vmem:[%s3 + $0x548] sm:$0xff]
        %v3213 = vld [vmem:[%s3 + $0x550] sm:$0xff]
        %v3214 = vld [vmem:[%s3 + $0x558] sm:$0xff]
        %v3215 = vld [vmem:[%s3 + $0x560] sm:$0xff]
        %v3216 = vld [vmem:[%s3 + $0x568] sm:$0xff]
        %v3217 = vld [vmem:[%s3 + $0x570] sm:$0xff]
        %v3218 = vld [vmem:[%s3 + $0x578] sm:$0xff]
        %v3219 = vld [vmem:[%s3 + $0x580] sm:$0xff]
        %v3220 = vld [vmem:[%s3 + $0x588] sm:$0xff]
        %v3221 = vld [vmem:[%s3 + $0x590] sm:$0xff]
        %v3222 = vld [vmem:[%s3 + $0x598] sm:$0xff]
        %v3223 = vld [vmem:[%s3 + $0x5a0] sm:$0xff]
        %v3224 = vld [vmem:[%s3 + $0x5a8] sm:$0xff]
        %v3225 = vld [vmem:[%s3 + $0x5b0] sm:$0xff]
        %v3226 = vld [vmem:[%s3 + $0x5b8] sm:$0xff]
        %v3227 = vld [vmem:[%s3 + $0x5c0] sm:$0xff]
        %v3228 = vld [vmem:[%s3 + $0x5c8] sm:$0xff]
        %v3229 = vld [vmem:[%s3 + $0x5d0] sm:$0xff]
        %v3230 = vld [vmem:[%s3 + $0x5d8] sm:$0xff]
        %v3231 = vld [vmem:[%s3 + $0x5e0] sm:$0xff]
        %v3232 = vld [vmem:[%s3 + $0x5e8] sm:$0xff]
        %v3233 = vld [vmem:[%s3 + $0x5f0] sm:$0xff]
        %v3234 = vld [vmem:[%s3 + $0x5f8] sm:$0xff]
        %v3299 = vunpack.c.l.b16 %v3171
        %v3300 = vunpack.c.h.b16 %v3171
        %v3301 = vunpack.c.l.b16 %v3172
        %v3302 = vunpack.c.h.b16 %v3172
        %v3303 = vunpack.c.l.b16 %v3173
        %v3304 = vunpack.c.h.b16 %v3173
        %v3305 = vunpack.c.l.b16 %v3174
        %v3306 = vunpack.c.h.b16 %v3174
        %v3307 = vunpack.c.l.b16 %v3175
        %v3308 = vunpack.c.h.b16 %v3175
        %v3309 = vunpack.c.l.b16 %v3176
        %v3310 = vunpack.c.h.b16 %v3176
        %v3311 = vunpack.c.l.b16 %v3177
        %v3312 = vunpack.c.h.b16 %v3177
        %v3313 = vunpack.c.l.b16 %v3178
        %v3314 = vunpack.c.h.b16 %v3178
        %v3315 = vunpack.c.l.b16 %v3179
        %v3316 = vunpack.c.h.b16 %v3179
        %v3317 = vunpack.c.l.b16 %v3180
        %v3318 = vunpack.c.h.b16 %v3180
        %v3319 = vunpack.c.l.b16 %v3181
        %v3320 = vunpack.c.h.b16 %v3181
        %v3321 = vunpack.c.l.b16 %v3182
        %v3322 = vunpack.c.h.b16 %v3182
        %v3323 = vunpack.c.l.b16 %v3183
        %v3324 = vunpack.c.h.b16 %v3183
        %v3325 = vunpack.c.l.b16 %v3184
        %v3326 = vunpack.c.h.b16 %v3184
        %v3327 = vunpack.c.l.b16 %v3185
        %v3328 = vunpack.c.h.b16 %v3185
        %v3329 = vunpack.c.l.b16 %v3186
        %v3330 = vunpack.c.h.b16 %v3186
        %v3331 = vunpack.c.l.b16 %v3187
        %v3332 = vunpack.c.h.b16 %v3187
        %v3333 = vunpack.c.l.b16 %v3188
        %v3334 = vunpack.c.h.b16 %v3188
        %v3335 = vunpack.c.l.b16 %v3189
        %v3336 = vunpack.c.h.b16 %v3189
        %v3337 = vunpack.c.l.b16 %v3190
        %v3338 = vunpack.c.h.b16 %v3190
        %v3339 = vunpack.c.l.b16 %v3191
        %v3340 = vunpack.c.h.b16 %v3191
        %v3341 = vunpack.c.l.b16 %v3192
        %v3342 = vunpack.c.h.b16 %v3192
        %v3343 = vunpack.c.l.b16 %v3193
        %v3344 = vunpack.c.h.b16 %v3193
        %v3345 = vunpack.c.l.b16 %v3194
        %v3346 = vunpack.c.h.b16 %v3194
        %v3347 = vunpack.c.l.b16 %v3195
        %v3348 = vunpack.c.h.b16 %v3195
        %v3349 = vunpack.c.l.b16 %v3196
        %v3350 = vunpack.c.h.b16 %v3196
        %v3351 = vunpack.c.l.b16 %v3197
        %v3352 = vunpack.c.h.b16 %v3197
        %v3353 = vunpack.c.l.b16 %v3198
        %v3354 = vunpack.c.h.b16 %v3198
        %v3355 = vunpack.c.l.b16 %v3199
        %v3356 = vunpack.c.h.b16 %v3199
        %v3357 = vunpack.c.l.b16 %v3200
        %v3358 = vunpack.c.h.b16 %v3200
        %v3359 = vunpack.c.l.b16 %v3201
        %v3360 = vunpack.c.h.b16 %v3201
        %v3361 = vunpack.c.l.b16 %v3202
        %v3362 = vunpack.c.h.b16 %v3202
        %v3363 = vunpack.c.l.b16 %v3203
        %v3364 = vunpack.c.h.b16 %v3203
        %v3365 = vunpack.c.l.b16 %v3204
        %v3366 = vunpack.c.h.b16 %v3204
        %v3367 = vunpack.c.l.b16 %v3205
        %v3368 = vunpack.c.h.b16 %v3205
        %v3369 = vunpack.c.l.b16 %v3206
        %v3370 = vunpack.c.h.b16 %v3206
        %v3371 = vunpack.c.l.b16 %v3207
        %v3372 = vunpack.c.h.b16 %v3207
        %v3373 = vunpack.c.l.b16 %v3208
        %v3374 = vunpack.c.h.b16 %v3208
        %v3375 = vunpack.c.l.b16 %v3209
        %v3376 = vunpack.c.h.b16 %v3209
        %v3377 = vunpack.c.l.b16 %v3210
        %v3378 = vunpack.c.h.b16 %v3210
        %v3379 = vunpack.c.l.b16 %v3211
        %v3380 = vunpack.c.h.b16 %v3211
        %v3381 = vunpack.c.l.b16 %v3212
        %v3382 = vunpack.c.h.b16 %v3212
        %v3383 = vunpack.c.l.b16 %v3213
        %v3384 = vunpack.c.h.b16 %v3213
        %v3385 = vunpack.c.l.b16 %v3214
        %v3386 = vunpack.c.h.b16 %v3214
        %v3387 = vunpack.c.l.b16 %v3215
        %v3388 = vunpack.c.h.b16 %v3215
        %v3389 = vunpack.c.l.b16 %v3216
        %v3390 = vunpack.c.h.b16 %v3216
        %v3391 = vunpack.c.l.b16 %v3217
        %v3392 = vunpack.c.h.b16 %v3217
        %v3393 = vunpack.c.l.b16 %v3218
        %v3394 = vunpack.c.h.b16 %v3218
        %v3395 = vunpack.c.l.b16 %v3219
        %v3396 = vunpack.c.h.b16 %v3219
        %v3397 = vunpack.c.l.b16 %v3220
        %v3398 = vunpack.c.h.b16 %v3220
        %v3399 = vunpack.c.l.b16 %v3221
        %v3400 = vunpack.c.h.b16 %v3221
        %v3401 = vunpack.c.l.b16 %v3222
        %v3402 = vunpack.c.h.b16 %v3222
        %v3403 = vunpack.c.l.b16 %v3223
        %v3404 = vunpack.c.h.b16 %v3223
        %v3405 = vunpack.c.l.b16 %v3224
        %v3406 = vunpack.c.h.b16 %v3224
        %v3407 = vunpack.c.l.b16 %v3225
        %v3408 = vunpack.c.h.b16 %v3225
        %v3409 = vunpack.c.l.b16 %v3226
        %v3410 = vunpack.c.h.b16 %v3226
        %v3411 = vunpack.c.l.b16 %v3227
        %v3412 = vunpack.c.h.b16 %v3227
        %v3413 = vunpack.c.l.b16 %v3228
        %v3414 = vunpack.c.h.b16 %v3228
        %v3415 = vunpack.c.l.b16 %v3229
        %v3416 = vunpack.c.h.b16 %v3229
        %v3417 = vunpack.c.l.b16 %v3230
        %v3418 = vunpack.c.h.b16 %v3230
        %v3419 = vunpack.c.l.b16 %v3231
        %v3420 = vunpack.c.h.b16 %v3231
        %v3421 = vunpack.c.l.b16 %v3232
        %v3422 = vunpack.c.h.b16 %v3232
        %v3423 = vunpack.c.l.b16 %v3233
        %v3424 = vunpack.c.h.b16 %v3233
        %v3425 = vunpack.c.l.b16 %v3234
        %v3426 = vunpack.c.h.b16 %v3234
        %v3427 = vpack.c.b16 %v3301, %v3299
        %v3428 = vpack.c.b16 %v3302, %v3300
        %v3429 = vpack.c.b16 %v3305, %v3303
        %v3430 = vpack.c.b16 %v3306, %v3304
        %v3431 = vpack.c.b16 %v3309, %v3307
        %v3432 = vpack.c.b16 %v3310, %v3308
        %v3433 = vpack.c.b16 %v3313, %v3311
        %v3434 = vpack.c.b16 %v3314, %v3312
        %v3435 = vpack.c.b16 %v3317, %v3315
        %v3436 = vpack.c.b16 %v3318, %v3316
        %v3437 = vpack.c.b16 %v3321, %v3319
        %v3438 = vpack.c.b16 %v3322, %v3320
        %v3439 = vpack.c.b16 %v3325, %v3323
        %v3440 = vpack.c.b16 %v3326, %v3324
        %v3441 = vpack.c.b16 %v3329, %v3327
        %v3442 = vpack.c.b16 %v3330, %v3328
        %v3443 = vpack.c.b16 %v3333, %v3331
        %v3444 = vpack.c.b16 %v3334, %v3332
        %v3445 = vpack.c.b16 %v3337, %v3335
        %v3446 = vpack.c.b16 %v3338, %v3336
        %v3447 = vpack.c.b16 %v3341, %v3339
        %v3448 = vpack.c.b16 %v3342, %v3340
        %v3449 = vpack.c.b16 %v3345, %v3343
        %v3450 = vpack.c.b16 %v3346, %v3344
        %v3451 = vpack.c.b16 %v3349, %v3347
        %v3452 = vpack.c.b16 %v3350, %v3348
        %v3453 = vpack.c.b16 %v3353, %v3351
        %v3454 = vpack.c.b16 %v3354, %v3352
        %v3455 = vpack.c.b16 %v3357, %v3355
        %v3456 = vpack.c.b16 %v3358, %v3356
        %v3457 = vpack.c.b16 %v3361, %v3359
        %v3458 = vpack.c.b16 %v3362, %v3360
        %v3459 = vpack.c.b16 %v3365, %v3363
        %v3460 = vpack.c.b16 %v3366, %v3364
        %v3461 = vpack.c.b16 %v3369, %v3367
        %v3462 = vpack.c.b16 %v3370, %v3368
        %v3463 = vpack.c.b16 %v3373, %v3371
        %v3464 = vpack.c.b16 %v3374, %v3372
        %v3465 = vpack.c.b16 %v3377, %v3375
        %v3466 = vpack.c.b16 %v3378, %v3376
        %v3467 = vpack.c.b16 %v3381, %v3379
        %v3468 = vpack.c.b16 %v3382, %v3380
        %v3469 = vpack.c.b16 %v3385, %v3383
        %v3470 = vpack.c.b16 %v3386, %v3384
        %v3471 = vpack.c.b16 %v3389, %v3387
        %v3472 = vpack.c.b16 %v3390, %v3388
        %v3473 = vpack.c.b16 %v3393, %v3391
        %v3474 = vpack.c.b16 %v3394, %v3392
        %v3475 = vpack.c.b16 %v3397, %v3395
        %v3476 = vpack.c.b16 %v3398, %v3396
        %v3477 = vpack.c.b16 %v3401, %v3399
        %v3478 = vpack.c.b16 %v3402, %v3400
        %v3479 = vpack.c.b16 %v3405, %v3403
        %v3480 = vpack.c.b16 %v3406, %v3404
        %v3481 = vpack.c.b16 %v3409, %v3407
        %v3482 = vpack.c.b16 %v3410, %v3408
        %v3483 = vpack.c.b16 %v3413, %v3411
        %v3484 = vpack.c.b16 %v3414, %v3412
        %v3485 = vpack.c.b16 %v3417, %v3415
        %v3486 = vpack.c.b16 %v3418, %v3416
        %v3487 = vpack.c.b16 %v3421, %v3419
        %v3488 = vpack.c.b16 %v3422, %v3420
        %v3489 = vpack.c.b16 %v3425, %v3423
        %v3490 = vpack.c.b16 %v3426, %v3424
        %3555 = vmatprep.subr.bf16.mxu0 %v3428
        %3556 = vmatpush1.bf16.msra.mxu0 %v3427
        %3557 = vmatprep.subr.bf16.mxu0 %v3430
        %3558 = vmatpush1.bf16.msra.mxu0 %v3429
        %3559 = vmatprep.subr.bf16.mxu0 %v3432
        %3560 = vmatpush1.bf16.msra.mxu0 %v3431
        %3561 = vmatprep.subr.bf16.mxu0 %v3434
        %3562 = vmatpush1.bf16.msra.mxu0 %v3433
        %3563 = vmatprep.subr.bf16.mxu0 %v3436
        %3564 = vmatpush1.bf16.msra.mxu0 %v3435
        %3565 = vmatprep.subr.bf16.mxu0 %v3438
        %3566 = vmatpush1.bf16.msra.mxu0 %v3437
        %3567 = vmatprep.subr.bf16.mxu0 %v3440
        %3568 = vmatpush1.bf16.msra.mxu0 %v3439
        %3569 = vmatprep.subr.bf16.mxu0 %v3442
        %3570 = vmatpush1.bf16.msra.mxu0 %v3441
        %3571 = vmatprep.subr.bf16.mxu0 %v3444
        %3572 = vmatpush1.bf16.msra.mxu0 %v3443
        %3573 = vmatprep.subr.bf16.mxu0 %v3446
        %3574 = vmatpush1.bf16.msra.mxu0 %v3445
        %3575 = vmatprep.subr.bf16.mxu0 %v3448
        %3576 = vmatpush1.bf16.msra.mxu0 %v3447
        %3577 = vmatprep.subr.bf16.mxu0 %v3450
        %3578 = vmatpush1.bf16.msra.mxu0 %v3449
        %3579 = vmatprep.subr.bf16.mxu0 %v3452
        %3580 = vmatpush1.bf16.msra.mxu0 %v3451
        %3581 = vmatprep.subr.bf16.mxu0 %v3454
        %3582 = vmatpush1.bf16.msra.mxu0 %v3453
        %3583 = vmatprep.subr.bf16.mxu0 %v3456
        %3584 = vmatpush1.bf16.msra.mxu0 %v3455
        %3585 = vmatprep.subr.bf16.mxu0 %v3458
        %3586 = vmatpush1.bf16.msra.mxu0 %v3457
        %3587 = vmatprep.mubr.bf16.mxu0 %v3156
        %3588 = vmatmul.mubr.bf16.gmra.mrb[0].mxu0 %v3155
        %v3589 = vpop.f32.mrb[0].mxu0
        %v3590 = vadd.f32 0.0, %v3589
        %v3591 = vpop.f32.mrb[0].mxu0
        %v3592 = vadd.f32 0.0, %v3591
        %v3593 = vpop.f32.mrb[0].mxu0
        %v3594 = vadd.f32 0.0, %v3593
        %v3595 = vpop.f32.mrb[0].mxu0
        %v3596 = vadd.f32 0.0, %v3595
        %3597 = vmatprep.mubr.bf16.mxu0 %v3160
        %3598 = vmatmul.mubr.bf16.gmra.mrb[0].mxu0 %v3159
        %v3599 = vpop.f32.mrb[0].mxu0
        %v3600 = vadd.f32 0.0, %v3599
        %v3601 = vpop.f32.mrb[0].mxu0
        %v3602 = vadd.f32 0.0, %v3601
        %v3603 = vpop.f32.mrb[0].mxu0
        %v3604 = vadd.f32 0.0, %v3603
        %v3605 = vpop.f32.mrb[0].mxu0
        %v3606 = vadd.f32 0.0, %v3605
        %3607 = vmatprep.mubr.bf16.mxu0 %v3164
        %3608 = vmatmul.mubr.bf16.gmra.mrb[0].mxu0 %v3163
        %v3609 = vpop.f32.mrb[0].mxu0
        %v3610 = vadd.f32 0.0, %v3609
        %v3611 = vpop.f32.mrb[0].mxu0
        %v3612 = vadd.f32 0.0, %v3611
        %v3613 = vpop.f32.mrb[0].mxu0
        %v3614 = vadd.f32 0.0, %v3613
        %v3615 = vpop.f32.mrb[0].mxu0
        %v3616 = vadd.f32 0.0, %v3615
        %3617 = vmatprep.mubr.bf16.mxu0 %v3168
        %3618 = vmatmul.mubr.bf16.gmra.mrb[0].mxu0 %v3167
        %v3619 = vpop.f32.mrb[0].mxu0
        %v3620 = vadd.f32 0.0, %v3619
        %v3621 = vpop.f32.mrb[0].mxu0
        %v3622 = vadd.f32 0.0, %v3621
        %v3623 = vpop.f32.mrb[0].mxu0
        %v3624 = vadd.f32 0.0, %v3623
        %v3625 = vpop.f32.mrb[0].mxu0
        %v3626 = vadd.f32 0.0, %v3625
        %3627 = vdwg.mxu0
        %3628 = vmatprep.subr.bf16.mxu0 %v3460
        %3629 = vmatpush1.bf16.msra.mxu0 %v3459
        %3630 = vmatprep.subr.bf16.mxu0 %v3462
        %3631 = vmatpush1.bf16.msra.mxu0 %v3461
        %3632 = vmatprep.subr.bf16.mxu0 %v3464
        %3633 = vmatpush1.bf16.msra.mxu0 %v3463
        %3634 = vmatprep.subr.bf16.mxu0 %v3466
        %3635 = vmatpush1.bf16.msra.mxu0 %v3465
        %3636 = vmatprep.subr.bf16.mxu0 %v3468
        %3637 = vmatpush1.bf16.msra.mxu0 %v3467
        %3638 = vmatprep.subr.bf16.mxu0 %v3470
        %3639 = vmatpush1.bf16.msra.mxu0 %v3469
        %3640 = vmatprep.subr.bf16.mxu0 %v3472
        %3641 = vmatpush1.bf16.msra.mxu0 %v3471
        %3642 = vmatprep.subr.bf16.mxu0 %v3474
        %3643 = vmatpush1.bf16.msra.mxu0 %v3473
        %3644 = vmatprep.subr.bf16.mxu0 %v3476
        %3645 = vmatpush1.bf16.msra.mxu0 %v3475
        %3646 = vmatprep.subr.bf16.mxu0 %v3478
        %3647 = vmatpush1.bf16.msra.mxu0 %v3477
        %3648 = vmatprep.subr.bf16.mxu0 %v3480
        %3649 = vmatpush1.bf16.msra.mxu0 %v3479
        %3650 = vmatprep.subr.bf16.mxu0 %v3482
        %3651 = vmatpush1.bf16.msra.mxu0 %v3481
        %3652 = vmatprep.subr.bf16.mxu0 %v3484
        %3653 = vmatpush1.bf16.msra.mxu0 %v3483
        %3654 = vmatprep.subr.bf16.mxu0 %v3486
        %3655 = vmatpush1.bf16.msra.mxu0 %v3485
        %3656 = vmatprep.subr.bf16.mxu0 %v3488
        %3657 = vmatpush1.bf16.msra.mxu0 %v3487
        %3658 = vmatprep.subr.bf16.mxu0 %v3490
        %3659 = vmatpush1.bf16.msra.mxu0 %v3489
        %3660 = vmatprep.mubr.bf16.mxu0 %v3158
        %3661 = vmatmul.mubr.bf16.gmra.mrb[0].mxu0 %v3157
        %v3662 = vpop.f32.mrb[0].mxu0
        %v3663 = vadd.f32 %v3590, %v3662
        %v3664 = vpop.f32.mrb[0].mxu0
        %v3665 = vadd.f32 %v3592, %v3664
        %v3666 = vpop.f32.mrb[0].mxu0
        %v3667 = vadd.f32 %v3594, %v3666
        %v3668 = vpop.f32.mrb[0].mxu0
        %v3669 = vadd.f32 %v3596, %v3668
        %3670 = vmatprep.mubr.bf16.mxu0 %v3162
        %3671 = vmatmul.mubr.bf16.gmra.mrb[0].mxu0 %v3161
        %v3672 = vpop.f32.mrb[0].mxu0
        %v3673 = vadd.f32 %v3600, %v3672
        %v3674 = vpop.f32.mrb[0].mxu0
        %v3675 = vadd.f32 %v3602, %v3674
        %v3676 = vpop.f32.mrb[0].mxu0
        %v3677 = vadd.f32 %v3604, %v3676
        %v3678 = vpop.f32.mrb[0].mxu0
        %v3679 = vadd.f32 %v3606, %v3678
        %3680 = vmatprep.mubr.bf16.mxu0 %v3166
        %3681 = vmatmul.mubr.bf16.gmra.mrb[0].mxu0 %v3165
        %v3682 = vpop.f32.mrb[0].mxu0
        %v3683 = vadd.f32 %v3610, %v3682
        %v3684 = vpop.f32.mrb[0].mxu0
        %v3685 = vadd.f32 %v3612, %v3684
        %v3686 = vpop.f32.mrb[0].mxu0
        %v3687 = vadd.f32 %v3614, %v3686
        %v3688 = vpop.f32.mrb[0].mxu0
        %v3689 = vadd.f32 %v3616, %v3688
        %3690 = vmatprep.mubr.bf16.mxu0 %v3170
        %3691 = vmatmul.mubr.bf16.gmra.mrb[0].mxu0 %v3169
        %v3692 = vpop.f32.mrb[0].mxu0
        %v3693 = vadd.f32 %v3620, %v3692
        %v3694 = vpop.f32.mrb[0].mxu0
        %v3695 = vadd.f32 %v3622, %v3694
        %v3696 = vpop.f32.mrb[0].mxu0
        %v3697 = vadd.f32 %v3624, %v3696
        %v3698 = vpop.f32.mrb[0].mxu0
        %v3699 = vadd.f32 %v3626, %v3698
        %3700 = vdwg.mxu0
        %v3701 = vadd.f32 %v3085, %v3663
        %v3702 = vadd.f32 %v3087, %v3665
        %v3703 = vadd.f32 %v3089, %v3667
        %v3704 = vadd.f32 %v3091, %v3669
        %v3705 = vadd.f32 %v3095, %v3673
        %v3706 = vadd.f32 %v3097, %v3675
        %v3707 = vadd.f32 %v3099, %v3677
        %v3708 = vadd.f32 %v3101, %v3679
        %v3709 = vadd.f32 %v3105, %v3683
        %v3710 = vadd.f32 %v3107, %v3685
        %v3711 = vadd.f32 %v3109, %v3687
        %v3712 = vadd.f32 %v3111, %v3689
        %v3713 = vadd.f32 %v3115, %v3693
        %v3714 = vadd.f32 %v3117, %v3695
        %v3715 = vadd.f32 %v3119, %v3697
        %v3716 = vadd.f32 %v3121, %v3699
        %v3717 = vld [vmem:[%s1677] sm:$0xfe]
        %v3718 = vld [vmem:[%s1677 + $0x8] sm:$0xfe]
        %v3719 = vld [vmem:[%s1677 + $0x10] sm:$0xfe]
        %v3720 = vld [vmem:[%s1677 + $0x18] sm:$0xfe]
        %v3721 = vld [vmem:[%s1677 + $0x20] sm:$0x1]
        %v3722 = vld [vmem:[%s1677 + $0x28] sm:$0x1]
        %v3723 = vld [vmem:[%s1677 + $0x30] sm:$0x1]
        %v3724 = vld [vmem:[%s1677 + $0x38] sm:$0x1]
        %v3725 = vld [vmem:[%s1677 + $0x40] sm:$0xfe]
        %v3726 = vld [vmem:[%s1677 + $0x48] sm:$0xfe]
        %v3727 = vld [vmem:[%s1677 + $0x50] sm:$0xfe]
        %v3728 = vld [vmem:[%s1677 + $0x58] sm:$0xfe]
        %v3729 = vld [vmem:[%s1677 + $0x60] sm:$0x1]
        %v3730 = vld [vmem:[%s1677 + $0x68] sm:$0x1]
        %v3731 = vld [vmem:[%s1677 + $0x70] sm:$0x1]
        %v3732 = vld [vmem:[%s1677 + $0x78] sm:$0x1]
        %v3733 = vld [vmem:[%s1677 + $0x80] sm:$0xfe]
        %v3734 = vld [vmem:[%s1677 + $0x88] sm:$0xfe]
        %v3735 = vld [vmem:[%s1677 + $0x90] sm:$0xfe]
        %v3736 = vld [vmem:[%s1677 + $0x98] sm:$0xfe]
        %v3737 = vld [vmem:[%s1677 + $0xa0] sm:$0x1]
        %v3738 = vld [vmem:[%s1677 + $0xa8] sm:$0x1]
        %v3739 = vld [vmem:[%s1677 + $0xb0] sm:$0x1]
        %v3740 = vld [vmem:[%s1677 + $0xb8] sm:$0x1]
        %v3741 = vld [vmem:[%s1677 + $0xc0] sm:$0xfe]
        %v3742 = vld [vmem:[%s1677 + $0xc8] sm:$0xfe]
        %v3743 = vld [vmem:[%s1677 + $0xd0] sm:$0xfe]
        %v3744 = vld [vmem:[%s1677 + $0xd8] sm:$0xfe]
        %v3745 = vld [vmem:[%s1677 + $0xe0] sm:$0x1]
        %v3746 = vld [vmem:[%s1677 + $0xe8] sm:$0x1]
        %v3747 = vld [vmem:[%s1677 + $0xf0] sm:$0x1]
        %v3748 = vld [vmem:[%s1677 + $0xf8] sm:$0x1]
        %v3749 = vld [vmem:[%s1677 + $0x100] sm:$0xfe]
        %v3750 = vld [vmem:[%s1677 + $0x108] sm:$0xfe]
        %v3751 = vld [vmem:[%s1677 + $0x110] sm:$0xfe]
        %v3752 = vld [vmem:[%s1677 + $0x118] sm:$0xfe]
        %v3753 = vld [vmem:[%s1677 + $0x120] sm:$0x1]
        %v3754 = vld [vmem:[%s1677 + $0x128] sm:$0x1]
        %v3755 = vld [vmem:[%s1677 + $0x130] sm:$0x1]
        %v3756 = vld [vmem:[%s1677 + $0x138] sm:$0x1]
        %v3757 = vld [vmem:[%s1677 + $0x140] sm:$0xfe]
        %v3758 = vld [vmem:[%s1677 + $0x148] sm:$0xfe]
        %v3759 = vld [vmem:[%s1677 + $0x150] sm:$0xfe]
        %v3760 = vld [vmem:[%s1677 + $0x158] sm:$0xfe]
        %v3761 = vld [vmem:[%s1677 + $0x160] sm:$0x1]
        %v3762 = vld [vmem:[%s1677 + $0x168] sm:$0x1]
        %v3763 = vld [vmem:[%s1677 + $0x170] sm:$0x1]
        %v3764 = vld [vmem:[%s1677 + $0x178] sm:$0x1]
        %v3765 = vld [vmem:[%s1677 + $0x180] sm:$0xfe]
        %v3766 = vld [vmem:[%s1677 + $0x188] sm:$0xfe]
        %v3767 = vld [vmem:[%s1677 + $0x190] sm:$0xfe]
        %v3768 = vld [vmem:[%s1677 + $0x198] sm:$0xfe]
        %v3769 = vld [vmem:[%s1677 + $0x1a0] sm:$0x1]
        %v3770 = vld [vmem:[%s1677 + $0x1a8] sm:$0x1]
        %v3771 = vld [vmem:[%s1677 + $0x1b0] sm:$0x1]
        %v3772 = vld [vmem:[%s1677 + $0x1b8] sm:$0x1]
        %v3773 = vld [vmem:[%s1677 + $0x1c0] sm:$0xfe]
        %v3774 = vld [vmem:[%s1677 + $0x1c8] sm:$0xfe]
        %v3775 = vld [vmem:[%s1677 + $0x1d0] sm:$0xfe]
        %v3776 = vld [vmem:[%s1677 + $0x1d8] sm:$0xfe]
        %v3777 = vld [vmem:[%s1677 + $0x1e0] sm:$0x1]
        %v3778 = vld [vmem:[%s1677 + $0x1e8] sm:$0x1]
        %v3779 = vld [vmem:[%s1677 + $0x1f0] sm:$0x1]
        %v3780 = vld [vmem:[%s1677 + $0x1f8] sm:$0x1]
        %v3845 = vrot.slane %v3717, 1
        %v3846 = vrot.slane %v3721, 1
        %v3847 = vsel %vm1982, %v3845, %v3846
        %v3848 = vrot.slane %v3718, 1
        %v3849 = vrot.slane %v3722, 1
        %v3850 = vsel %vm1982, %v3848, %v3849
        %v3851 = vrot.slane %v3719, 1
        %v3852 = vrot.slane %v3723, 1
        %v3853 = vsel %vm1982, %v3851, %v3852
        %v3854 = vrot.slane %v3720, 1
        %v3855 = vrot.slane %v3724, 1
        %v3856 = vsel %vm1982, %v3854, %v3855
        %v3857 = vrot.slane %v3725, 1
        %v3858 = vrot.slane %v3729, 1
        %v3859 = vsel %vm1982, %v3857, %v3858
        %v3860 = vrot.slane %v3726, 1
        %v3861 = vrot.slane %v3730, 1
        %v3862 = vsel %vm1982, %v3860, %v3861
        %v3863 = vrot.slane %v3727, 1
        %v3864 = vrot.slane %v3731, 1
        %v3865 = vsel %vm1982, %v3863, %v3864
        %v3866 = vrot.slane %v3728, 1
        %v3867 = vrot.slane %v3732, 1
        %v3868 = vsel %vm1982, %v3866, %v3867
        %v3869 = vrot.slane %v3733, 1
        %v3870 = vrot.slane %v3737, 1
        %v3871 = vsel %vm1982, %v3869, %v3870
        %v3872 = vrot.slane %v3734, 1
        %v3873 = vrot.slane %v3738, 1
        %v3874 = vsel %vm1982, %v3872, %v3873
        %v3875 = vrot.slane %v3735, 1
        %v3876 = vrot.slane %v3739, 1
        %v3877 = vsel %vm1982, %v3875, %v3876
        %v3878 = vrot.slane %v3736, 1
        %v3879 = vrot.slane %v3740, 1
        %v3880 = vsel %vm1982, %v3878, %v3879
        %v3881 = vrot.slane %v3741, 1
        %v3882 = vrot.slane %v3745, 1
        %v3883 = vsel %vm1982, %v3881, %v3882
        %v3884 = vrot.slane %v3742, 1
        %v3885 = vrot.slane %v3746, 1
        %v3886 = vsel %vm1982, %v3884, %v3885
        %v3887 = vrot.slane %v3743, 1
        %v3888 = vrot.slane %v3747, 1
        %v3889 = vsel %vm1982, %v3887, %v3888
        %v3890 = vrot.slane %v3744, 1
        %v3891 = vrot.slane %v3748, 1
        %v3892 = vsel %vm1982, %v3890, %v3891
        %v3893 = vrot.slane %v3749, 1
        %v3894 = vrot.slane %v3753, 1
        %v3895 = vsel %vm1982, %v3893, %v3894
        %v3896 = vrot.slane %v3750, 1
        %v3897 = vrot.slane %v3754, 1
        %v3898 = vsel %vm1982, %v3896, %v3897
        %v3899 = vrot.slane %v3751, 1
        %v3900 = vrot.slane %v3755, 1
        %v3901 = vsel %vm1982, %v3899, %v3900
        %v3902 = vrot.slane %v3752, 1
        %v3903 = vrot.slane %v3756, 1
        %v3904 = vsel %vm1982, %v3902, %v3903
        %v3905 = vrot.slane %v3757, 1
        %v3906 = vrot.slane %v3761, 1
        %v3907 = vsel %vm1982, %v3905, %v3906
        %v3908 = vrot.slane %v3758, 1
        %v3909 = vrot.slane %v3762, 1
        %v3910 = vsel %vm1982, %v3908, %v3909
        %v3911 = vrot.slane %v3759, 1
        %v3912 = vrot.slane %v3763, 1
        %v3913 = vsel %vm1982, %v3911, %v3912
        %v3914 = vrot.slane %v3760, 1
        %v3915 = vrot.slane %v3764, 1
        %v3916 = vsel %vm1982, %v3914, %v3915
        %v3917 = vrot.slane %v3765, 1
        %v3918 = vrot.slane %v3769, 1
        %v3919 = vsel %vm1982, %v3917, %v3918
        %v3920 = vrot.slane %v3766, 1
        %v3921 = vrot.slane %v3770, 1
        %v3922 = vsel %vm1982, %v3920, %v3921
        %v3923 = vrot.slane %v3767, 1
        %v3924 = vrot.slane %v3771, 1
        %v3925 = vsel %vm1982, %v3923, %v3924
        %v3926 = vrot.slane %v3768, 1
        %v3927 = vrot.slane %v3772, 1
        %v3928 = vsel %vm1982, %v3926, %v3927
        %v3929 = vrot.slane %v3773, 1
        %v3930 = vrot.slane %v3777, 1
        %v3931 = vsel %vm1982, %v3929, %v3930
        %v3932 = vrot.slane %v3774, 1
        %v3933 = vrot.slane %v3778, 1
        %v3934 = vsel %vm1982, %v3932, %v3933
        %v3935 = vrot.slane %v3775, 1
        %v3936 = vrot.slane %v3779, 1
        %v3937 = vsel %vm1982, %v3935, %v3936
        %v3938 = vrot.slane %v3776, 1
        %v3939 = vrot.slane %v3780, 1
        %v3940 = vsel %vm1982, %v3938, %v3939
        %v3973 = vpack.c.bf16 %v3859, %v3847
        %v3974 = vpack.c.bf16 %v3862, %v3850
        %v3975 = vpack.c.bf16 %v3865, %v3853
        %v3976 = vpack.c.bf16 %v3868, %v3856
        %v3977 = vpack.c.bf16 %v3883, %v3871
        %v3978 = vpack.c.bf16 %v3886, %v3874
        %v3979 = vpack.c.bf16 %v3889, %v3877
        %v3980 = vpack.c.bf16 %v3892, %v3880
        %v3981 = vpack.c.bf16 %v3907, %v3895
        %v3982 = vpack.c.bf16 %v3910, %v3898
        %v3983 = vpack.c.bf16 %v3913, %v3901
        %v3984 = vpack.c.bf16 %v3916, %v3904
        %v3985 = vpack.c.bf16 %v3931, %v3919
        %v3986 = vpack.c.bf16 %v3934, %v3922
        %v3987 = vpack.c.bf16 %v3937, %v3925
        %v3988 = vpack.c.bf16 %v3940, %v3928
        %v3989 = vld [vmem:[%s3 + $0x600] sm:$0xff]
        %v3990 = vld [vmem:[%s3 + $0x608] sm:$0xff]
        %v3991 = vld [vmem:[%s3 + $0x610] sm:$0xff]
        %v3992 = vld [vmem:[%s3 + $0x618] sm:$0xff]
        %v3993 = vld [vmem:[%s3 + $0x620] sm:$0xff]
        %v3994 = vld [vmem:[%s3 + $0x628] sm:$0xff]
        %v3995 = vld [vmem:[%s3 + $0x630] sm:$0xff]
        %v3996 = vld [vmem:[%s3 + $0x638] sm:$0xff]
        %v3997 = vld [vmem:[%s3 + $0x640] sm:$0xff]
        %v3998 = vld [vmem:[%s3 + $0x648] sm:$0xff]
        %v3999 = vld [vmem:[%s3 + $0x650] sm:$0xff]
        %v4000 = vld [vmem:[%s3 + $0x658] sm:$0xff]
        %v4001 = vld [vmem:[%s3 + $0x660] sm:$0xff]
        %v4002 = vld [vmem:[%s3 + $0x668] sm:$0xff]
        %v4003 = vld [vmem:[%s3 + $0x670] sm:$0xff]
        %v4004 = vld [vmem:[%s3 + $0x678] sm:$0xff]
        %v4005 = vld [vmem:[%s3 + $0x680] sm:$0xff]
        %v4006 = vld [vmem:[%s3 + $0x688] sm:$0xff]
        %v4007 = vld [vmem:[%s3 + $0x690] sm:$0xff]
        %v4008 = vld [vmem:[%s3 + $0x698] sm:$0xff]
        %v4009 = vld [vmem:[%s3 + $0x6a0] sm:$0xff]
        %v4010 = vld [vmem:[%s3 + $0x6a8] sm:$0xff]
        %v4011 = vld [vmem:[%s3 + $0x6b0] sm:$0xff]
        %v4012 = vld [vmem:[%s3 + $0x6b8] sm:$0xff]
        %v4013 = vld [vmem:[%s3 + $0x6c0] sm:$0xff]
        %v4014 = vld [vmem:[%s3 + $0x6c8] sm:$0xff]
        %v4015 = vld [vmem:[%s3 + $0x6d0] sm:$0xff]
        %v4016 = vld [vmem:[%s3 + $0x6d8] sm:$0xff]
        %v4017 = vld [vmem:[%s3 + $0x6e0] sm:$0xff]
        %v4018 = vld [vmem:[%s3 + $0x6e8] sm:$0xff]
        %v4019 = vld [vmem:[%s3 + $0x6f0] sm:$0xff]
        %v4020 = vld [vmem:[%s3 + $0x6f8] sm:$0xff]
        %v4021 = vld [vmem:[%s3 + $0x700] sm:$0xff]
        %v4022 = vld [vmem:[%s3 + $0x708] sm:$0xff]
        %v4023 = vld [vmem:[%s3 + $0x710] sm:$0xff]
        %v4024 = vld [vmem:[%s3 + $0x718] sm:$0xff]
        %v4025 = vld [vmem:[%s3 + $0x720] sm:$0xff]
        %v4026 = vld [vmem:[%s3 + $0x728] sm:$0xff]
        %v4027 = vld [vmem:[%s3 + $0x730] sm:$0xff]
        %v4028 = vld [vmem:[%s3 + $0x738] sm:$0xff]
        %v4029 = vld [vmem:[%s3 + $0x740] sm:$0xff]
        %v4030 = vld [vmem:[%s3 + $0x748] sm:$0xff]
        %v4031 = vld [vmem:[%s3 + $0x750] sm:$0xff]
        %v4032 = vld [vmem:[%s3 + $0x758] sm:$0xff]
        %v4033 = vld [vmem:[%s3 + $0x760] sm:$0xff]
        %v4034 = vld [vmem:[%s3 + $0x768] sm:$0xff]
        %v4035 = vld [vmem:[%s3 + $0x770] sm:$0xff]
        %v4036 = vld [vmem:[%s3 + $0x778] sm:$0xff]
        %v4037 = vld [vmem:[%s3 + $0x780] sm:$0xff]
        %v4038 = vld [vmem:[%s3 + $0x788] sm:$0xff]
        %v4039 = vld [vmem:[%s3 + $0x790] sm:$0xff]
        %v4040 = vld [vmem:[%s3 + $0x798] sm:$0xff]
        %v4041 = vld [vmem:[%s3 + $0x7a0] sm:$0xff]
        %v4042 = vld [vmem:[%s3 + $0x7a8] sm:$0xff]
        %v4043 = vld [vmem:[%s3 + $0x7b0] sm:$0xff]
        %v4044 = vld [vmem:[%s3 + $0x7b8] sm:$0xff]
        %v4045 = vld [vmem:[%s3 + $0x7c0] sm:$0xff]
        %v4046 = vld [vmem:[%s3 + $0x7c8] sm:$0xff]
        %v4047 = vld [vmem:[%s3 + $0x7d0] sm:$0xff]
        %v4048 = vld [vmem:[%s3 + $0x7d8] sm:$0xff]
        %v4049 = vld [vmem:[%s3 + $0x7e0] sm:$0xff]
        %v4050 = vld [vmem:[%s3 + $0x7e8] sm:$0xff]
        %v4051 = vld [vmem:[%s3 + $0x7f0] sm:$0xff]
        %v4052 = vld [vmem:[%s3 + $0x7f8] sm:$0xff]
        %v4117 = vunpack.c.l.b16 %v3989
        %v4118 = vunpack.c.h.b16 %v3989
        %v4119 = vunpack.c.l.b16 %v3990
        %v4120 = vunpack.c.h.b16 %v3990
        %v4121 = vunpack.c.l.b16 %v3991
        %v4122 = vunpack.c.h.b16 %v3991
        %v4123 = vunpack.c.l.b16 %v3992
        %v4124 = vunpack.c.h.b16 %v3992
        %v4125 = vunpack.c.l.b16 %v3993
        %v4126 = vunpack.c.h.b16 %v3993
        %v4127 = vunpack.c.l.b16 %v3994
        %v4128 = vunpack.c.h.b16 %v3994
        %v4129 = vunpack.c.l.b16 %v3995
        %v4130 = vunpack.c.h.b16 %v3995
        %v4131 = vunpack.c.l.b16 %v3996
        %v4132 = vunpack.c.h.b16 %v3996
        %v4133 = vunpack.c.l.b16 %v3997
        %v4134 = vunpack.c.h.b16 %v3997
        %v4135 = vunpack.c.l.b16 %v3998
        %v4136 = vunpack.c.h.b16 %v3998
        %v4137 = vunpack.c.l.b16 %v3999
        %v4138 = vunpack.c.h.b16 %v3999
        %v4139 = vunpack.c.l.b16 %v4000
        %v4140 = vunpack.c.h.b16 %v4000
        %v4141 = vunpack.c.l.b16 %v4001
        %v4142 = vunpack.c.h.b16 %v4001
        %v4143 = vunpack.c.l.b16 %v4002
        %v4144 = vunpack.c.h.b16 %v4002
        %v4145 = vunpack.c.l.b16 %v4003
        %v4146 = vunpack.c.h.b16 %v4003
        %v4147 = vunpack.c.l.b16 %v4004
        %v4148 = vunpack.c.h.b16 %v4004
        %v4149 = vunpack.c.l.b16 %v4005
        %v4150 = vunpack.c.h.b16 %v4005
        %v4151 = vunpack.c.l.b16 %v4006
        %v4152 = vunpack.c.h.b16 %v4006
        %v4153 = vunpack.c.l.b16 %v4007
        %v4154 = vunpack.c.h.b16 %v4007
        %v4155 = vunpack.c.l.b16 %v4008
        %v4156 = vunpack.c.h.b16 %v4008
        %v4157 = vunpack.c.l.b16 %v4009
        %v4158 = vunpack.c.h.b16 %v4009
        %v4159 = vunpack.c.l.b16 %v4010
        %v4160 = vunpack.c.h.b16 %v4010
        %v4161 = vunpack.c.l.b16 %v4011
        %v4162 = vunpack.c.h.b16 %v4011
        %v4163 = vunpack.c.l.b16 %v4012
        %v4164 = vunpack.c.h.b16 %v4012
        %v4165 = vunpack.c.l.b16 %v4013
        %v4166 = vunpack.c.h.b16 %v4013
        %v4167 = vunpack.c.l.b16 %v4014
        %v4168 = vunpack.c.h.b16 %v4014
        %v4169 = vunpack.c.l.b16 %v4015
        %v4170 = vunpack.c.h.b16 %v4015
        %v4171 = vunpack.c.l.b16 %v4016
        %v4172 = vunpack.c.h.b16 %v4016
        %v4173 = vunpack.c.l.b16 %v4017
        %v4174 = vunpack.c.h.b16 %v4017
        %v4175 = vunpack.c.l.b16 %v4018
        %v4176 = vunpack.c.h.b16 %v4018
        %v4177 = vunpack.c.l.b16 %v4019
        %v4178 = vunpack.c.h.b16 %v4019
        %v4179 = vunpack.c.l.b16 %v4020
        %v4180 = vunpack.c.h.b16 %v4020
        %v4181 = vunpack.c.l.b16 %v4021
        %v4182 = vunpack.c.h.b16 %v4021
        %v4183 = vunpack.c.l.b16 %v4022
        %v4184 = vunpack.c.h.b16 %v4022
        %v4185 = vunpack.c.l.b16 %v4023
        %v4186 = vunpack.c.h.b16 %v4023
        %v4187 = vunpack.c.l.b16 %v4024
        %v4188 = vunpack.c.h.b16 %v4024
        %v4189 = vunpack.c.l.b16 %v4025
        %v4190 = vunpack.c.h.b16 %v4025
        %v4191 = vunpack.c.l.b16 %v4026
        %v4192 = vunpack.c.h.b16 %v4026
        %v4193 = vunpack.c.l.b16 %v4027
        %v4194 = vunpack.c.h.b16 %v4027
        %v4195 = vunpack.c.l.b16 %v4028
        %v4196 = vunpack.c.h.b16 %v4028
        %v4197 = vunpack.c.l.b16 %v4029
        %v4198 = vunpack.c.h.b16 %v4029
        %v4199 = vunpack.c.l.b16 %v4030
        %v4200 = vunpack.c.h.b16 %v4030
        %v4201 = vunpack.c.l.b16 %v4031
        %v4202 = vunpack.c.h.b16 %v4031
        %v4203 = vunpack.c.l.b16 %v4032
        %v4204 = vunpack.c.h.b16 %v4032
        %v4205 = vunpack.c.l.b16 %v4033
        %v4206 = vunpack.c.h.b16 %v4033
        %v4207 = vunpack.c.l.b16 %v4034
        %v4208 = vunpack.c.h.b16 %v4034
        %v4209 = vunpack.c.l.b16 %v4035
        %v4210 = vunpack.c.h.b16 %v4035
        %v4211 = vunpack.c.l.b16 %v4036
        %v4212 = vunpack.c.h.b16 %v4036
        %v4213 = vunpack.c.l.b16 %v4037
        %v4214 = vunpack.c.h.b16 %v4037
        %v4215 = vunpack.c.l.b16 %v4038
        %v4216 = vunpack.c.h.b16 %v4038
        %v4217 = vunpack.c.l.b16 %v4039
        %v4218 = vunpack.c.h.b16 %v4039
        %v4219 = vunpack.c.l.b16 %v4040
        %v4220 = vunpack.c.h.b16 %v4040
        %v4221 = vunpack.c.l.b16 %v4041
        %v4222 = vunpack.c.h.b16 %v4041
        %v4223 = vunpack.c.l.b16 %v4042
        %v4224 = vunpack.c.h.b16 %v4042
        %v4225 = vunpack.c.l.b16 %v4043
        %v4226 = vunpack.c.h.b16 %v4043
        %v4227 = vunpack.c.l.b16 %v4044
        %v4228 = vunpack.c.h.b16 %v4044
        %v4229 = vunpack.c.l.b16 %v4045
        %v4230 = vunpack.c.h.b16 %v4045
        %v4231 = vunpack.c.l.b16 %v4046
        %v4232 = vunpack.c.h.b16 %v4046
        %v4233 = vunpack.c.l.b16 %v4047
        %v4234 = vunpack.c.h.b16 %v4047
        %v4235 = vunpack.c.l.b16 %v4048
        %v4236 = vunpack.c.h.b16 %v4048
        %v4237 = vunpack.c.l.b16 %v4049
        %v4238 = vunpack.c.h.b16 %v4049
        %v4239 = vunpack.c.l.b16 %v4050
        %v4240 = vunpack.c.h.b16 %v4050
        %v4241 = vunpack.c.l.b16 %v4051
        %v4242 = vunpack.c.h.b16 %v4051
        %v4243 = vunpack.c.l.b16 %v4052
        %v4244 = vunpack.c.h.b16 %v4052
        %v4245 = vpack.c.b16 %v4119, %v4117
        %v4246 = vpack.c.b16 %v4120, %v4118
        %v4247 = vpack.c.b16 %v4123, %v4121
        %v4248 = vpack.c.b16 %v4124, %v4122
        %v4249 = vpack.c.b16 %v4127, %v4125
        %v4250 = vpack.c.b16 %v4128, %v4126
        %v4251 = vpack.c.b16 %v4131, %v4129
        %v4252 = vpack.c.b16 %v4132, %v4130
        %v4253 = vpack.c.b16 %v4135, %v4133
        %v4254 = vpack.c.b16 %v4136, %v4134
        %v4255 = vpack.c.b16 %v4139, %v4137
        %v4256 = vpack.c.b16 %v4140, %v4138
        %v4257 = vpack.c.b16 %v4143, %v4141
        %v4258 = vpack.c.b16 %v4144, %v4142
        %v4259 = vpack.c.b16 %v4147, %v4145
        %v4260 = vpack.c.b16 %v4148, %v4146
        %v4261 = vpack.c.b16 %v4151, %v4149
        %v4262 = vpack.c.b16 %v4152, %v4150
        %v4263 = vpack.c.b16 %v4155, %v4153
        %v4264 = vpack.c.b16 %v4156, %v4154
        %v4265 = vpack.c.b16 %v4159, %v4157
        %v4266 = vpack.c.b16 %v4160, %v4158
        %v4267 = vpack.c.b16 %v4163, %v4161
        %v4268 = vpack.c.b16 %v4164, %v4162
        %v4269 = vpack.c.b16 %v4167, %v4165
        %v4270 = vpack.c.b16 %v4168, %v4166
        %v4271 = vpack.c.b16 %v4171, %v4169
        %v4272 = vpack.c.b16 %v4172, %v4170
        %v4273 = vpack.c.b16 %v4175, %v4173
        %v4274 = vpack.c.b16 %v4176, %v4174
        %v4275 = vpack.c.b16 %v4179, %v4177
        %v4276 = vpack.c.b16 %v4180, %v4178
        %v4277 = vpack.c.b16 %v4183, %v4181
        %v4278 = vpack.c.b16 %v4184, %v4182
        %v4279 = vpack.c.b16 %v4187, %v4185
        %v4280 = vpack.c.b16 %v4188, %v4186
        %v4281 = vpack.c.b16 %v4191, %v4189
        %v4282 = vpack.c.b16 %v4192, %v4190
        %v4283 = vpack.c.b16 %v4195, %v4193
        %v4284 = vpack.c.b16 %v4196, %v4194
        %v4285 = vpack.c.b16 %v4199, %v4197
        %v4286 = vpack.c.b16 %v4200, %v4198
        %v4287 = vpack.c.b16 %v4203, %v4201
        %v4288 = vpack.c.b16 %v4204, %v4202
        %v4289 = vpack.c.b16 %v4207, %v4205
        %v4290 = vpack.c.b16 %v4208, %v4206
        %v4291 = vpack.c.b16 %v4211, %v4209
        %v4292 = vpack.c.b16 %v4212, %v4210
        %v4293 = vpack.c.b16 %v4215, %v4213
        %v4294 = vpack.c.b16 %v4216, %v4214
        %v4295 = vpack.c.b16 %v4219, %v4217
        %v4296 = vpack.c.b16 %v4220, %v4218
        %v4297 = vpack.c.b16 %v4223, %v4221
        %v4298 = vpack.c.b16 %v4224, %v4222
        %v4299 = vpack.c.b16 %v4227, %v4225
        %v4300 = vpack.c.b16 %v4228, %v4226
        %v4301 = vpack.c.b16 %v4231, %v4229
        %v4302 = vpack.c.b16 %v4232, %v4230
        %v4303 = vpack.c.b16 %v4235, %v4233
        %v4304 = vpack.c.b16 %v4236, %v4234
        %v4305 = vpack.c.b16 %v4239, %v4237
        %v4306 = vpack.c.b16 %v4240, %v4238
        %v4307 = vpack.c.b16 %v4243, %v4241
        %v4308 = vpack.c.b16 %v4244, %v4242
        %4373 = vmatprep.subr.bf16.mxu0 %v4246
        %4374 = vmatpush1.bf16.msra.mxu0 %v4245
        %4375 = vmatprep.subr.bf16.mxu0 %v4248
        %4376 = vmatpush1.bf16.msra.mxu0 %v4247
        %4377 = vmatprep.subr.bf16.mxu0 %v4250
        %4378 = vmatpush1.bf16.msra.mxu0 %v4249
        %4379 = vmatprep.subr.bf16.mxu0 %v4252
        %4380 = vmatpush1.bf16.msra.mxu0 %v4251
        %4381 = vmatprep.subr.bf16.mxu0 %v4254
        %4382 = vmatpush1.bf16.msra.mxu0 %v4253
        %4383 = vmatprep.subr.bf16.mxu0 %v4256
        %4384 = vmatpush1.bf16.msra.mxu0 %v4255
        %4385 = vmatprep.subr.bf16.mxu0 %v4258
        %4386 = vmatpush1.bf16.msra.mxu0 %v4257
        %4387 = vmatprep.subr.bf16.mxu0 %v4260
        %4388 = vmatpush1.bf16.msra.mxu0 %v4259
        %4389 = vmatprep.subr.bf16.mxu0 %v4262
        %4390 = vmatpush1.bf16.msra.mxu0 %v4261
        %4391 = vmatprep.subr.bf16.mxu0 %v4264
        %4392 = vmatpush1.bf16.msra.mxu0 %v4263
        %4393 = vmatprep.subr.bf16.mxu0 %v4266
        %4394 = vmatpush1.bf16.msra.mxu0 %v4265
        %4395 = vmatprep.subr.bf16.mxu0 %v4268
        %4396 = vmatpush1.bf16.msra.mxu0 %v4267
        %4397 = vmatprep.subr.bf16.mxu0 %v4270
        %4398 = vmatpush1.bf16.msra.mxu0 %v4269
        %4399 = vmatprep.subr.bf16.mxu0 %v4272
        %4400 = vmatpush1.bf16.msra.mxu0 %v4271
        %4401 = vmatprep.subr.bf16.mxu0 %v4274
        %4402 = vmatpush1.bf16.msra.mxu0 %v4273
        %4403 = vmatprep.subr.bf16.mxu0 %v4276
        %4404 = vmatpush1.bf16.msra.mxu0 %v4275
        %4405 = vmatprep.mubr.bf16.mxu0 %v3974
        %4406 = vmatmul.mubr.bf16.gmra.mrb[0].mxu0 %v3973
        %v4407 = vpop.f32.mrb[0].mxu0
        %v4408 = vadd.f32 0.0, %v4407
        %v4409 = vpop.f32.mrb[0].mxu0
        %v4410 = vadd.f32 0.0, %v4409
        %v4411 = vpop.f32.mrb[0].mxu0
        %v4412 = vadd.f32 0.0, %v4411
        %v4413 = vpop.f32.mrb[0].mxu0
        %v4414 = vadd.f32 0.0, %v4413
        %4415 = vmatprep.mubr.bf16.mxu0 %v3978
        %4416 = vmatmul.mubr.bf16.gmra.mrb[0].mxu0 %v3977
        %v4417 = vpop.f32.mrb[0].mxu0
        %v4418 = vadd.f32 0.0, %v4417
        %v4419 = vpop.f32.mrb[0].mxu0
        %v4420 = vadd.f32 0.0, %v4419
        %v4421 = vpop.f32.mrb[0].mxu0
        %v4422 = vadd.f32 0.0, %v4421
        %v4423 = vpop.f32.mrb[0].mxu0
        %v4424 = vadd.f32 0.0, %v4423
        %4425 = vmatprep.mubr.bf16.mxu0 %v3982
        %4426 = vmatmul.mubr.bf16.gmra.mrb[0].mxu0 %v3981
        %v4427 = vpop.f32.mrb[0].mxu0
        %v4428 = vadd.f32 0.0, %v4427
        %v4429 = vpop.f32.mrb[0].mxu0
        %v4430 = vadd.f32 0.0, %v4429
        %v4431 = vpop.f32.mrb[0].mxu0
        %v4432 = vadd.f32 0.0, %v4431
        %v4433 = vpop.f32.mrb[0].mxu0
        %v4434 = vadd.f32 0.0, %v4433
        %4435 = vmatprep.mubr.bf16.mxu0 %v3986
        %4436 = vmatmul.mubr.bf16.gmra.mrb[0].mxu0 %v3985
        %v4437 = vpop.f32.mrb[0].mxu0
        %v4438 = vadd.f32 0.0, %v4437
        %v4439 = vpop.f32.mrb[0].mxu0
        %v4440 = vadd.f32 0.0, %v4439
        %v4441 = vpop.f32.mrb[0].mxu0
        %v4442 = vadd.f32 0.0, %v4441
        %v4443 = vpop.f32.mrb[0].mxu0
        %v4444 = vadd.f32 0.0, %v4443
        %4445 = vdwg.mxu0
        %4446 = vmatprep.subr.bf16.mxu0 %v4278
        %4447 = vmatpush1.bf16.msra.mxu0 %v4277
        %4448 = vmatprep.subr.bf16.mxu0 %v4280
        %4449 = vmatpush1.bf16.msra.mxu0 %v4279
        %4450 = vmatprep.subr.bf16.mxu0 %v4282
        %4451 = vmatpush1.bf16.msra.mxu0 %v4281
        %4452 = vmatprep.subr.bf16.mxu0 %v4284
        %4453 = vmatpush1.bf16.msra.mxu0 %v4283
        %4454 = vmatprep.subr.bf16.mxu0 %v4286
        %4455 = vmatpush1.bf16.msra.mxu0 %v4285
        %4456 = vmatprep.subr.bf16.mxu0 %v4288
        %4457 = vmatpush1.bf16.msra.mxu0 %v4287
        %4458 = vmatprep.subr.bf16.mxu0 %v4290
        %4459 = vmatpush1.bf16.msra.mxu0 %v4289
        %4460 = vmatprep.subr.bf16.mxu0 %v4292
        %4461 = vmatpush1.bf16.msra.mxu0 %v4291
        %4462 = vmatprep.subr.bf16.mxu0 %v4294
        %4463 = vmatpush1.bf16.msra.mxu0 %v4293
        %4464 = vmatprep.subr.bf16.mxu0 %v4296
        %4465 = vmatpush1.bf16.msra.mxu0 %v4295
        %4466 = vmatprep.subr.bf16.mxu0 %v4298
        %4467 = vmatpush1.bf16.msra.mxu0 %v4297
        %4468 = vmatprep.subr.bf16.mxu0 %v4300
        %4469 = vmatpush1.bf16.msra.mxu0 %v4299
        %4470 = vmatprep.subr.bf16.mxu0 %v4302
        %4471 = vmatpush1.bf16.msra.mxu0 %v4301
        %4472 = vmatprep.subr.bf16.mxu0 %v4304
        %4473 = vmatpush1.bf16.msra.mxu0 %v4303
        %4474 = vmatprep.subr.bf16.mxu0 %v4306
        %4475 = vmatpush1.bf16.msra.mxu0 %v4305
        %4476 = vmatprep.subr.bf16.mxu0 %v4308
        %4477 = vmatpush1.bf16.msra.mxu0 %v4307
        %4478 = vmatprep.mubr.bf16.mxu0 %v3976
        %4479 = vmatmul.mubr.bf16.gmra.mrb[0].mxu0 %v3975
        %v4480 = vpop.f32.mrb[0].mxu0
        %v4481 = vadd.f32 %v4408, %v4480
        %v4482 = vpop.f32.mrb[0].mxu0
        %v4483 = vadd.f32 %v4410, %v4482
        %v4484 = vpop.f32.mrb[0].mxu0
        %v4485 = vadd.f32 %v4412, %v4484
        %v4486 = vpop.f32.mrb[0].mxu0
        %v4487 = vadd.f32 %v4414, %v4486
        %4488 = vmatprep.mubr.bf16.mxu0 %v3980
        %4489 = vmatmul.mubr.bf16.gmra.mrb[0].mxu0 %v3979
        %v4490 = vpop.f32.mrb[0].mxu0
        %v4491 = vadd.f32 %v4418, %v4490
        %v4492 = vpop.f32.mrb[0].mxu0
        %v4493 = vadd.f32 %v4420, %v4492
        %v4494 = vpop.f32.mrb[0].mxu0
        %v4495 = vadd.f32 %v4422, %v4494
        %v4496 = vpop.f32.mrb[0].mxu0
        %v4497 = vadd.f32 %v4424, %v4496
        %4498 = vmatprep.mubr.bf16.mxu0 %v3984
        %4499 = vmatmul.mubr.bf16.gmra.mrb[0].mxu0 %v3983
        %v4500 = vpop.f32.mrb[0].mxu0
        %v4501 = vadd.f32 %v4428, %v4500
        %v4502 = vpop.f32.mrb[0].mxu0
        %v4503 = vadd.f32 %v4430, %v4502
        %v4504 = vpop.f32.mrb[0].mxu0
        %v4505 = vadd.f32 %v4432, %v4504
        %v4506 = vpop.f32.mrb[0].mxu0
        %v4507 = vadd.f32 %v4434, %v4506
        %4508 = vmatprep.mubr.bf16.mxu0 %v3988
        %4509 = vmatmul.mubr.bf16.gmra.mrb[0].mxu0 %v3987
        %v4510 = vpop.f32.mrb[0].mxu0
        %v4511 = vadd.f32 %v4438, %v4510
        %v4512 = vpop.f32.mrb[0].mxu0
        %v4513 = vadd.f32 %v4440, %v4512
        %v4514 = vpop.f32.mrb[0].mxu0
        %v4515 = vadd.f32 %v4442, %v4514
        %v4516 = vpop.f32.mrb[0].mxu0
        %v4517 = vadd.f32 %v4444, %v4516
        %4518 = vdwg.mxu0
        %v4519 = vadd.f32 %v3701, %v4481
        %v4520 = vadd.f32 %v3702, %v4483
        %v4521 = vadd.f32 %v3703, %v4485
        %v4522 = vadd.f32 %v3704, %v4487
        %v4523 = vadd.f32 %v3705, %v4491
        %v4524 = vadd.f32 %v3706, %v4493
        %v4525 = vadd.f32 %v3707, %v4495
        %v4526 = vadd.f32 %v3708, %v4497
        %v4527 = vadd.f32 %v3709, %v4501
        %v4528 = vadd.f32 %v3710, %v4503
        %v4529 = vadd.f32 %v3711, %v4505
        %v4530 = vadd.f32 %v3712, %v4507
        %v4531 = vadd.f32 %v3713, %v4511
        %v4532 = vadd.f32 %v3714, %v4513
        %v4533 = vadd.f32 %v3715, %v4515
        %v4534 = vadd.f32 %v3716, %v4517
        %v4535 = vld [vmem:[%s4] sm:$0x3]
        %v4537 = vlaneseq
        %v4538 = vshrl.u32 %v4537, 7
        %v4539 = vsub.s32 0, %v4538
        %v4540 = vrot.slane %v4535, %v4539
        %v4541 = vlaneseq
        %v4542 = vshrl.u32 %v4541, 7
        %v4543 = vsub.s32 1, %v4542
        %v4544 = vrot.slane %v4535, %v4543
        %v4547 = vadd.f32 %v4519, %v4540
        %v4548 = vadd.f32 %v4520, %v4544
        %v4549 = vadd.f32 %v4521, %v4540
        %v4550 = vadd.f32 %v4522, %v4544
        %v4551 = vadd.f32 %v4523, %v4540
        %v4552 = vadd.f32 %v4524, %v4544
        %v4553 = vadd.f32 %v4525, %v4540
        %v4554 = vadd.f32 %v4526, %v4544
        %v4555 = vadd.f32 %v4527, %v4540
        %v4556 = vadd.f32 %v4528, %v4544
        %v4557 = vadd.f32 %v4529, %v4540
        %v4558 = vadd.f32 %v4530, %v4544
        %v4559 = vadd.f32 %v4531, %v4540
        %v4560 = vadd.f32 %v4532, %v4544
        %v4561 = vadd.f32 %v4533, %v4540
        %v4562 = vadd.f32 %v4534, %v4544
        %v4563 = vmax.f32 %v4547, 0.0
        %v4564 = vmax.f32 %v4548, 0.0
        %v4565 = vmax.f32 %v4549, 0.0
        %v4566 = vmax.f32 %v4550, 0.0
        %v4567 = vmax.f32 %v4551, 0.0
        %v4568 = vmax.f32 %v4552, 0.0
        %v4569 = vmax.f32 %v4553, 0.0
        %v4570 = vmax.f32 %v4554, 0.0
        %v4571 = vmax.f32 %v4555, 0.0
        %v4572 = vmax.f32 %v4556, 0.0
        %v4573 = vmax.f32 %v4557, 0.0
        %v4574 = vmax.f32 %v4558, 0.0
        %v4575 = vmax.f32 %v4559, 0.0
        %v4576 = vmax.f32 %v4560, 0.0
        %v4577 = vmax.f32 %v4561, 0.0
        %v4578 = vmax.f32 %v4562, 0.0
        %4579 = vst [vmem:[#allocation3] sm:$0xff] 0.0
        %4580 = vst [vmem:[#allocation3 + $0x8] sm:$0xff] 0.0
        %4581 = vst [vmem:[#allocation3 + $0x10] sm:$0x1] 0.0
        %4582 = vst [vmem:[#allocation3 + $0x18] sm:$0x1] 0.0
        %4583 = vst [vmem:[#allocation3 + $0x20] sm:$0xff] 0.0
        %4584 = vst [vmem:[#allocation3 + $0x28] sm:$0xff] 0.0
        %4585 = vst [vmem:[#allocation3 + $0x30] sm:$0x1] 0.0
        %4586 = vst [vmem:[#allocation3 + $0x38] sm:$0x1] 0.0
        %4587 = vst [vmem:[#allocation3 + $0x40] sm:$0xff] 0.0
        %4588 = vst [vmem:[#allocation3 + $0x48] sm:$0xff] 0.0
        %4589 = vst [vmem:[#allocation3 + $0x50] sm:$0x1] 0.0
        %4590 = vst [vmem:[#allocation3 + $0x58] sm:$0x1] 0.0
        %4591 = vst [vmem:[#allocation3 + $0x60] sm:$0xff] 0.0
        %4592 = vst [vmem:[#allocation3 + $0x68] sm:$0xff] 0.0
        %4593 = vst [vmem:[#allocation3 + $0x70] sm:$0x1] 0.0
        %4594 = vst [vmem:[#allocation3 + $0x78] sm:$0x1] 0.0
        %4595 = vst [vmem:[#allocation3 + $0x80] sm:$0xff] 0.0
        %4596 = vst [vmem:[#allocation3 + $0x88] sm:$0xff] 0.0
        %4597 = vst [vmem:[#allocation3 + $0x90] sm:$0x1] 0.0
        %4598 = vst [vmem:[#allocation3 + $0x98] sm:$0x1] 0.0
        %4599 = vst [vmem:[#allocation3 + $0xa0] sm:$0xff] 0.0
        %4600 = vst [vmem:[#allocation3 + $0xa8] sm:$0xff] 0.0
        %4601 = vst [vmem:[#allocation3 + $0xb0] sm:$0x1] 0.0
        %4602 = vst [vmem:[#allocation3 + $0xb8] sm:$0x1] 0.0
        %4603 = vst [vmem:[#allocation3 + $0xc0] sm:$0xff] 0.0
        %4604 = vst [vmem:[#allocation3 + $0xc8] sm:$0xff] 0.0
        %4605 = vst [vmem:[#allocation3 + $0xd0] sm:$0x1] 0.0
        %4606 = vst [vmem:[#allocation3 + $0xd8] sm:$0x1] 0.0
        %4607 = vst [vmem:[#allocation3 + $0xe0] sm:$0xff] 0.0
        %4608 = vst [vmem:[#allocation3 + $0xe8] sm:$0xff] 0.0
        %4609 = vst [vmem:[#allocation3 + $0xf0] sm:$0x1] 0.0
        %4610 = vst [vmem:[#allocation3 + $0xf8] sm:$0x1] 0.0
        %4611 = vst [vmem:[#allocation3 + $0x100] sm:$0xff] 0.0
        %4612 = vst [vmem:[#allocation3 + $0x108] sm:$0xff] 0.0
        %4613 = vst [vmem:[#allocation3 + $0x110] sm:$0x1] 0.0
        %4614 = vst [vmem:[#allocation3 + $0x118] sm:$0x1] 0.0
        %v4631 = vrot.slane %v4563, 7
        %v4632 = vrot.slane %v4564, 7
        %v4633 = vrot.slane %v4565, 7
        %v4634 = vrot.slane %v4566, 7
        %v4635 = vrot.slane %v4567, 7
        %v4636 = vrot.slane %v4568, 7
        %v4637 = vrot.slane %v4569, 7
        %v4638 = vrot.slane %v4570, 7
        %v4639 = vrot.slane %v4571, 7
        %v4640 = vrot.slane %v4572, 7
        %v4641 = vrot.slane %v4573, 7
        %v4642 = vrot.slane %v4574, 7
        %v4643 = vrot.slane %v4575, 7
        %v4644 = vrot.slane %v4576, 7
        %v4645 = vrot.slane %v4577, 7
        %v4646 = vrot.slane %v4578, 7
        %s4663 = scalar_lea.vmem [#allocation3], 32
        %4664 = vst [vmem:[%s4663] sm:$0xfe] %v4631
        %4665 = vst [vmem:[%s4663 + $0x8] sm:$0xfe] %v4632
        %4666 = vst [vmem:[%s4663 + $0x10] sm:$0x1] %v4631
        %4667 = vst [vmem:[%s4663 + $0x18] sm:$0x1] %v4632
        %4668 = vst [vmem:[%s4663 + $0x20] sm:$0xfe] %v4633
        %4669 = vst [vmem:[%s4663 + $0x28] sm:$0xfe] %v4634
        %4670 = vst [vmem:[%s4663 + $0x30] sm:$0x1] %v4633
        %4671 = vst [vmem:[%s4663 + $0x38] sm:$0x1] %v4634
        %4672 = vst [vmem:[%s4663 + $0x40] sm:$0xfe] %v4635
        %4673 = vst [vmem:[%s4663 + $0x48] sm:$0xfe] %v4636
        %4674 = vst [vmem:[%s4663 + $0x50] sm:$0x1] %v4635
        %4675 = vst [vmem:[%s4663 + $0x58] sm:$0x1] %v4636
        %4676 = vst [vmem:[%s4663 + $0x60] sm:$0xfe] %v4637
        %4677 = vst [vmem:[%s4663 + $0x68] sm:$0xfe] %v4638
        %4678 = vst [vmem:[%s4663 + $0x70] sm:$0x1] %v4637
        %4679 = vst [vmem:[%s4663 + $0x78] sm:$0x1] %v4638
        %4680 = vst [vmem:[%s4663 + $0x80] sm:$0xfe] %v4639
        %4681 = vst [vmem:[%s4663 + $0x88] sm:$0xfe] %v4640
        %4682 = vst [vmem:[%s4663 + $0x90] sm:$0x1] %v4639
        %4683 = vst [vmem:[%s4663 + $0x98] sm:$0x1] %v4640
        %4684 = vst [vmem:[%s4663 + $0xa0] sm:$0xfe] %v4641
        %4685 = vst [vmem:[%s4663 + $0xa8] sm:$0xfe] %v4642
        %4686 = vst [vmem:[%s4663 + $0xb0] sm:$0x1] %v4641
        %4687 = vst [vmem:[%s4663 + $0xb8] sm:$0x1] %v4642
        %4688 = vst [vmem:[%s4663 + $0xc0] sm:$0xfe] %v4643
        %4689 = vst [vmem:[%s4663 + $0xc8] sm:$0xfe] %v4644
        %4690 = vst [vmem:[%s4663 + $0xd0] sm:$0x1] %v4643
        %4691 = vst [vmem:[%s4663 + $0xd8] sm:$0x1] %v4644
        %4692 = vst [vmem:[%s4663 + $0xe0] sm:$0xfe] %v4645
        %4693 = vst [vmem:[%s4663 + $0xe8] sm:$0xfe] %v4646
        %4694 = vst [vmem:[%s4663 + $0xf0] sm:$0x1] %v4645
        %4695 = vst [vmem:[%s4663 + $0xf8] sm:$0x1] %v4646
        %v4696 = vld [vmem:[#allocation3] sm:$0xff]
        %v4697 = vld [vmem:[#allocation3 + $0x8] sm:$0xff]
        %v4698 = vld [vmem:[#allocation3 + $0x20] sm:$0xff]
        %v4699 = vld [vmem:[#allocation3 + $0x28] sm:$0xff]
        %v4700 = vld [vmem:[#allocation3 + $0x40] sm:$0xff]
        %v4701 = vld [vmem:[#allocation3 + $0x48] sm:$0xff]
        %v4702 = vld [vmem:[#allocation3 + $0x60] sm:$0xff]
        %v4703 = vld [vmem:[#allocation3 + $0x68] sm:$0xff]
        %v4704 = vld [vmem:[#allocation3 + $0x80] sm:$0xff]
        %v4705 = vld [vmem:[#allocation3 + $0x88] sm:$0xff]
        %v4706 = vld [vmem:[#allocation3 + $0xa0] sm:$0xff]
        %v4707 = vld [vmem:[#allocation3 + $0xa8] sm:$0xff]
        %v4708 = vld [vmem:[#allocation3 + $0xc0] sm:$0xff]
        %v4709 = vld [vmem:[#allocation3 + $0xc8] sm:$0xff]
        %v4710 = vld [vmem:[#allocation3 + $0xe0] sm:$0xff]
        %v4711 = vld [vmem:[#allocation3 + $0xe8] sm:$0xff]
        %v4712 = vpack.c.bf16 %v4698, %v4696
        %v4713 = vpack.c.bf16 %v4699, %v4697
        %v4714 = vpack.c.bf16 %v4702, %v4700
        %v4715 = vpack.c.bf16 %v4703, %v4701
        %v4716 = vpack.c.bf16 %v4706, %v4704
        %v4717 = vpack.c.bf16 %v4707, %v4705
        %v4718 = vpack.c.bf16 %v4710, %v4708
        %v4719 = vpack.c.bf16 %v4711, %v4709
        %v4720 = vld [vmem:[%s5] sm:$0xf]
        %v4721 = vld [vmem:[%s5 + $0x4] sm:$0xf]
        %v4722 = vld [vmem:[%s5 + $0x8] sm:$0xf]
        %v4723 = vld [vmem:[%s5 + $0xc] sm:$0xf]
        %v4724 = vld [vmem:[%s5 + $0x10] sm:$0xf]
        %v4725 = vld [vmem:[%s5 + $0x14] sm:$0xf]
        %v4726 = vld [vmem:[%s5 + $0x18] sm:$0xf]
        %v4727 = vld [vmem:[%s5 + $0x1c] sm:$0xf]
        %v4728 = vld [vmem:[%s5 + $0x20] sm:$0xf]
        %v4729 = vld [vmem:[%s5 + $0x24] sm:$0xf]
        %v4730 = vld [vmem:[%s5 + $0x28] sm:$0xf]
        %v4731 = vld [vmem:[%s5 + $0x2c] sm:$0xf]
        %v4732 = vld [vmem:[%s5 + $0x30] sm:$0xf]
        %v4733 = vld [vmem:[%s5 + $0x34] sm:$0xf]
        %v4734 = vld [vmem:[%s5 + $0x38] sm:$0xf]
        %v4735 = vld [vmem:[%s5 + $0x3c] sm:$0xf]
        %v4736 = vld [vmem:[%s5 + $0x40] sm:$0xf]
        %v4737 = vld [vmem:[%s5 + $0x44] sm:$0xf]
        %v4738 = vld [vmem:[%s5 + $0x48] sm:$0xf]
        %v4739 = vld [vmem:[%s5 + $0x4c] sm:$0xf]
        %v4740 = vld [vmem:[%s5 + $0x50] sm:$0xf]
        %v4741 = vld [vmem:[%s5 + $0x54] sm:$0xf]
        %v4742 = vld [vmem:[%s5 + $0x58] sm:$0xf]
        %v4743 = vld [vmem:[%s5 + $0x5c] sm:$0xf]
        %v4744 = vld [vmem:[%s5 + $0x60] sm:$0xf]
        %v4745 = vld [vmem:[%s5 + $0x64] sm:$0xf]
        %v4746 = vld [vmem:[%s5 + $0x68] sm:$0xf]
        %v4747 = vld [vmem:[%s5 + $0x6c] sm:$0xf]
        %v4748 = vld [vmem:[%s5 + $0x70] sm:$0xf]
        %v4749 = vld [vmem:[%s5 + $0x74] sm:$0xf]
        %v4750 = vld [vmem:[%s5 + $0x78] sm:$0xf]
        %v4751 = vld [vmem:[%s5 + $0x7c] sm:$0xf]
        %v4752 = vld [vmem:[#allocation3] sm:$0xfe]
        %v4753 = vld [vmem:[#allocation3 + $0x8] sm:$0xfe]
        %v4754 = vld [vmem:[#allocation3 + $0x10] sm:$0x1]
        %v4755 = vld [vmem:[#allocation3 + $0x18] sm:$0x1]
        %v4756 = vld [vmem:[#allocation3 + $0x20] sm:$0xfe]
        %v4757 = vld [vmem:[#allocation3 + $0x28] sm:$0xfe]
        %v4758 = vld [vmem:[#allocation3 + $0x30] sm:$0x1]
        %v4759 = vld [vmem:[#allocation3 + $0x38] sm:$0x1]
        %v4760 = vld [vmem:[#allocation3 + $0x40] sm:$0xfe]
        %v4761 = vld [vmem:[#allocation3 + $0x48] sm:$0xfe]
        %v4762 = vld [vmem:[#allocation3 + $0x50] sm:$0x1]
        %v4763 = vld [vmem:[#allocation3 + $0x58] sm:$0x1]
        %v4764 = vld [vmem:[#allocation3 + $0x60] sm:$0xfe]
        %v4765 = vld [vmem:[#allocation3 + $0x68] sm:$0xfe]
        %v4766 = vld [vmem:[#allocation3 + $0x70] sm:$0x1]
        %v4767 = vld [vmem:[#allocation3 + $0x78] sm:$0x1]
        %v4768 = vld [vmem:[#allocation3 + $0x80] sm:$0xfe]
        %v4769 = vld [vmem:[#allocation3 + $0x88] sm:$0xfe]
        %v4770 = vld [vmem:[#allocation3 + $0x90] sm:$0x1]
        %v4771 = vld [vmem:[#allocation3 + $0x98] sm:$0x1]
        %v4772 = vld [vmem:[#allocation3 + $0xa0] sm:$0xfe]
        %v4773 = vld [vmem:[#allocation3 + $0xa8] sm:$0xfe]
        %v4774 = vld [vmem:[#allocation3 + $0xb0] sm:$0x1]
        %v4775 = vld [vmem:[#allocation3 + $0xb8] sm:$0x1]
        %v4776 = vld [vmem:[#allocation3 + $0xc0] sm:$0xfe]
        %v4777 = vld [vmem:[#allocation3 + $0xc8] sm:$0xfe]
        %v4778 = vld [vmem:[#allocation3 + $0xd0] sm:$0x1]
        %v4779 = vld [vmem:[#allocation3 + $0xd8] sm:$0x1]
        %v4780 = vld [vmem:[#allocation3 + $0xe0] sm:$0xfe]
        %v4781 = vld [vmem:[#allocation3 + $0xe8] sm:$0xfe]
        %v4782 = vld [vmem:[#allocation3 + $0xf0] sm:$0x1]
        %v4783 = vld [vmem:[#allocation3 + $0xf8] sm:$0x1]
        %v4816 = vrot.slane %v4752, 1
        %v4817 = vrot.slane %v4754, 1
        %v4818 = vsel %vm1982, %v4816, %v4817
        %v4819 = vrot.slane %v4753, 1
        %v4820 = vrot.slane %v4755, 1
        %v4821 = vsel %vm1982, %v4819, %v4820
        %v4822 = vrot.slane %v4756, 1
        %v4823 = vrot.slane %v4758, 1
        %v4824 = vsel %vm1982, %v4822, %v4823
        %v4825 = vrot.slane %v4757, 1
        %v4826 = vrot.slane %v4759, 1
        %v4827 = vsel %vm1982, %v4825, %v4826
        %v4828 = vrot.slane %v4760, 1
        %v4829 = vrot.slane %v4762, 1
        %v4830 = vsel %vm1982, %v4828, %v4829
        %v4831 = vrot.slane %v4761, 1
        %v4832 = vrot.slane %v4763, 1
        %v4833 = vsel %vm1982, %v4831, %v4832
        %v4834 = vrot.slane %v4764, 1
        %v4835 = vrot.slane %v4766, 1
        %v4836 = vsel %vm1982, %v4834, %v4835
        %v4837 = vrot.slane %v4765, 1
        %v4838 = vrot.slane %v4767, 1
        %v4839 = vsel %vm1982, %v4837, %v4838
        %v4840 = vrot.slane %v4768, 1
        %v4841 = vrot.slane %v4770, 1
        %v4842 = vsel %vm1982, %v4840, %v4841
        %v4843 = vrot.slane %v4769, 1
        %v4844 = vrot.slane %v4771, 1
        %v4845 = vsel %vm1982, %v4843, %v4844
        %v4846 = vrot.slane %v4772, 1
        %v4847 = vrot.slane %v4774, 1
        %v4848 = vsel %vm1982, %v4846, %v4847
        %v4849 = vrot.slane %v4773, 1
        %v4850 = vrot.slane %v4775, 1
        %v4851 = vsel %vm1982, %v4849, %v4850
        %v4852 = vrot.slane %v4776, 1
        %v4853 = vrot.slane %v4778, 1
        %v4854 = vsel %vm1982, %v4852, %v4853
        %v4855 = vrot.slane %v4777, 1
        %v4856 = vrot.slane %v4779, 1
        %v4857 = vsel %vm1982, %v4855, %v4856
        %v4858 = vrot.slane %v4780, 1
        %v4859 = vrot.slane %v4782, 1
        %v4860 = vsel %vm1982, %v4858, %v4859
        %v4861 = vrot.slane %v4781, 1
        %v4862 = vrot.slane %v4783, 1
        %v4863 = vsel %vm1982, %v4861, %v4862
        %v4880 = vpack.c.bf16 %v4824, %v4818
        %v4881 = vpack.c.bf16 %v4827, %v4821
        %v4882 = vpack.c.bf16 %v4836, %v4830
        %v4883 = vpack.c.bf16 %v4839, %v4833
        %v4884 = vpack.c.bf16 %v4848, %v4842
        %v4885 = vpack.c.bf16 %v4851, %v4845
        %v4886 = vpack.c.bf16 %v4860, %v4854
        %v4887 = vpack.c.bf16 %v4863, %v4857
        %v4888 = vld [vmem:[%s5 + $0x80] sm:$0xf]
        %v4889 = vld [vmem:[%s5 + $0x84] sm:$0xf]
        %v4890 = vld [vmem:[%s5 + $0x88] sm:$0xf]
        %v4891 = vld [vmem:[%s5 + $0x8c] sm:$0xf]
        %v4892 = vld [vmem:[%s5 + $0x90] sm:$0xf]
        %v4893 = vld [vmem:[%s5 + $0x94] sm:$0xf]
        %v4894 = vld [vmem:[%s5 + $0x98] sm:$0xf]
        %v4895 = vld [vmem:[%s5 + $0x9c] sm:$0xf]
        %v4896 = vld [vmem:[%s5 + $0xa0] sm:$0xf]
        %v4897 = vld [vmem:[%s5 + $0xa4] sm:$0xf]
        %v4898 = vld [vmem:[%s5 + $0xa8] sm:$0xf]
        %v4899 = vld [vmem:[%s5 + $0xac] sm:$0xf]
        %v4900 = vld [vmem:[%s5 + $0xb0] sm:$0xf]
        %v4901 = vld [vmem:[%s5 + $0xb4] sm:$0xf]
        %v4902 = vld [vmem:[%s5 + $0xb8] sm:$0xf]
        %v4903 = vld [vmem:[%s5 + $0xbc] sm:$0xf]
        %v4904 = vld [vmem:[%s5 + $0xc0] sm:$0xf]
        %v4905 = vld [vmem:[%s5 + $0xc4] sm:$0xf]
        %v4906 = vld [vmem:[%s5 + $0xc8] sm:$0xf]
        %v4907 = vld [vmem:[%s5 + $0xcc] sm:$0xf]
        %v4908 = vld [vmem:[%s5 + $0xd0] sm:$0xf]
        %v4909 = vld [vmem:[%s5 + $0xd4] sm:$0xf]
        %v4910 = vld [vmem:[%s5 + $0xd8] sm:$0xf]
        %v4911 = vld [vmem:[%s5 + $0xdc] sm:$0xf]
        %v4912 = vld [vmem:[%s5 + $0xe0] sm:$0xf]
        %v4913 = vld [vmem:[%s5 + $0xe4] sm:$0xf]
        %v4914 = vld [vmem:[%s5 + $0xe8] sm:$0xf]
        %v4915 = vld [vmem:[%s5 + $0xec] sm:$0xf]
        %v4916 = vld [vmem:[%s5 + $0xf0] sm:$0xf]
        %v4917 = vld [vmem:[%s5 + $0xf4] sm:$0xf]
        %v4918 = vld [vmem:[%s5 + $0xf8] sm:$0xf]
        %v4919 = vld [vmem:[%s5 + $0xfc] sm:$0xf]
        %v4952 = vunpack.c.l.b16 %v4888
        %v4953 = vunpack.c.l.b16 %v4889
        %v4954 = vunpack.c.l.b16 %v4890
        %v4955 = vunpack.c.l.b16 %v4891
        %v4956 = vunpack.c.l.b16 %v4892
        %v4957 = vunpack.c.l.b16 %v4893
        %v4958 = vunpack.c.l.b16 %v4894
        %v4959 = vunpack.c.l.b16 %v4895
        %v4960 = vunpack.c.l.b16 %v4896
        %v4961 = vunpack.c.l.b16 %v4897
        %v4962 = vunpack.c.l.b16 %v4898
        %v4963 = vunpack.c.l.b16 %v4899
        %v4964 = vunpack.c.l.b16 %v4900
        %v4965 = vunpack.c.l.b16 %v4901
        %v4966 = vunpack.c.l.b16 %v4902
        %v4967 = vunpack.c.l.b16 %v4903
        %v4968 = vunpack.c.l.b16 %v4904
        %v4969 = vunpack.c.l.b16 %v4905
        %v4970 = vunpack.c.l.b16 %v4906
        %v4971 = vunpack.c.l.b16 %v4907
        %v4972 = vunpack.c.l.b16 %v4908
        %v4973 = vunpack.c.l.b16 %v4909
        %v4974 = vunpack.c.l.b16 %v4910
        %v4975 = vunpack.c.l.b16 %v4911
        %v4976 = vunpack.c.l.b16 %v4912
        %v4977 = vunpack.c.l.b16 %v4913
        %v4978 = vunpack.c.l.b16 %v4914
        %v4979 = vunpack.c.l.b16 %v4915
        %v4980 = vunpack.c.l.b16 %v4916
        %v4981 = vunpack.c.l.b16 %v4917
        %v4982 = vunpack.c.l.b16 %v4918
        %v4983 = vunpack.c.l.b16 %v4919
        %v4984 = vpack.c.b16 %v4953, %v4952
        %v4985 = vpack.c.b16 %v4955, %v4954
        %v4986 = vpack.c.b16 %v4957, %v4956
        %v4987 = vpack.c.b16 %v4959, %v4958
        %v4988 = vpack.c.b16 %v4961, %v4960
        %v4989 = vpack.c.b16 %v4963, %v4962
        %v4990 = vpack.c.b16 %v4965, %v4964
        %v4991 = vpack.c.b16 %v4967, %v4966
        %v4992 = vpack.c.b16 %v4969, %v4968
        %v4993 = vpack.c.b16 %v4971, %v4970
        %v4994 = vpack.c.b16 %v4973, %v4972
        %v4995 = vpack.c.b16 %v4975, %v4974
        %v4996 = vpack.c.b16 %v4977, %v4976
        %v4997 = vpack.c.b16 %v4979, %v4978
        %v4998 = vpack.c.b16 %v4981, %v4980
        %v4999 = vpack.c.b16 %v4983, %v4982
        %5016 = vmatprep.subr.bf16.mxu0 0
        %5017 = vmatpush1.bf16.msra.mxu0 %v4984
        %5018 = vmatprep.subr.bf16.mxu0 0
        %5019 = vmatpush1.bf16.msra.mxu0 %v4985
        %5020 = vmatprep.subr.bf16.mxu0 0
        %5021 = vmatpush1.bf16.msra.mxu0 %v4986
        %5022 = vmatprep.subr.bf16.mxu0 0
        %5023 = vmatpush1.bf16.msra.mxu0 %v4987
        %5024 = vmatprep.subr.bf16.mxu0 0
        %5025 = vmatpush1.bf16.msra.mxu0 %v4988
        %5026 = vmatprep.subr.bf16.mxu0 0
        %5027 = vmatpush1.bf16.msra.mxu0 %v4989
        %5028 = vmatprep.subr.bf16.mxu0 0
        %5029 = vmatpush1.bf16.msra.mxu0 %v4990
        %5030 = vmatprep.subr.bf16.mxu0 0
        %5031 = vmatpush1.bf16.msra.mxu0 %v4991
        %5032 = vmatprep.subr.bf16.mxu0 0
        %5033 = vmatpush1.bf16.msra.mxu0 %v4992
        %5034 = vmatprep.subr.bf16.mxu0 0
        %5035 = vmatpush1.bf16.msra.mxu0 %v4993
        %5036 = vmatprep.subr.bf16.mxu0 0
        %5037 = vmatpush1.bf16.msra.mxu0 %v4994
        %5038 = vmatprep.subr.bf16.mxu0 0
        %5039 = vmatpush1.bf16.msra.mxu0 %v4995
        %5040 = vmatprep.subr.bf16.mxu0 0
        %5041 = vmatpush1.bf16.msra.mxu0 %v4996
        %5042 = vmatprep.subr.bf16.mxu0 0
        %5043 = vmatpush1.bf16.msra.mxu0 %v4997
        %5044 = vmatprep.subr.bf16.mxu0 0
        %5045 = vmatpush1.bf16.msra.mxu0 %v4998
        %5046 = vmatprep.subr.bf16.mxu0 0
        %5047 = vmatpush1.bf16.msra.mxu0 %v4999
        %5048 = vmatprep.mubr.bf16.mxu0 %v4881
        %5049 = vmatmul.mubr.bf16.gmra.mrb[0].mxu0 %v4880
        %v5050 = vpop.f32.mrb[0].mxu0
        %v5051 = vadd.f32 0.0, %v5050
        %v5052 = vpop.f32.mrb[0].mxu0
        %v5053 = vpop.f32.mrb[0].mxu0
        %v5054 = vadd.f32 0.0, %v5053
        %v5055 = vpop.f32.mrb[0].mxu0
        %5056 = vmatprep.mubr.bf16.mxu0 %v4883
        %5057 = vmatmul.mubr.bf16.gmra.mrb[0].mxu0 %v4882
        %v5058 = vpop.f32.mrb[0].mxu0
        %v5059 = vadd.f32 0.0, %v5058
        %v5060 = vpop.f32.mrb[0].mxu0
        %v5061 = vpop.f32.mrb[0].mxu0
        %v5062 = vadd.f32 0.0, %v5061
        %v5063 = vpop.f32.mrb[0].mxu0
        %5064 = vmatprep.mubr.bf16.mxu0 %v4885
        %5065 = vmatmul.mubr.bf16.gmra.mrb[0].mxu0 %v4884
        %v5066 = vpop.f32.mrb[0].mxu0
        %v5067 = vadd.f32 0.0, %v5066
        %v5068 = vpop.f32.mrb[0].mxu0
        %v5069 = vpop.f32.mrb[0].mxu0
        %v5070 = vadd.f32 0.0, %v5069
        %v5071 = vpop.f32.mrb[0].mxu0
        %5072 = vmatprep.mubr.bf16.mxu0 %v4887
        %5073 = vmatmul.mubr.bf16.gmra.mrb[0].mxu0 %v4886
        %v5074 = vpop.f32.mrb[0].mxu0
        %v5075 = vadd.f32 0.0, %v5074
        %v5076 = vpop.f32.mrb[0].mxu0
        %v5077 = vpop.f32.mrb[0].mxu0
        %v5078 = vadd.f32 0.0, %v5077
        %v5079 = vpop.f32.mrb[0].mxu0
        %5080 = vdwg.mxu0
        %v5113 = vunpack.c.l.b16 %v4720
        %v5114 = vunpack.c.l.b16 %v4721
        %v5115 = vunpack.c.l.b16 %v4722
        %v5116 = vunpack.c.l.b16 %v4723
        %v5117 = vunpack.c.l.b16 %v4724
        %v5118 = vunpack.c.l.b16 %v4725
        %v5119 = vunpack.c.l.b16 %v4726
        %v5120 = vunpack.c.l.b16 %v4727
        %v5121 = vunpack.c.l.b16 %v4728
        %v5122 = vunpack.c.l.b16 %v4729
        %v5123 = vunpack.c.l.b16 %v4730
        %v5124 = vunpack.c.l.b16 %v4731
        %v5125 = vunpack.c.l.b16 %v4732
        %v5126 = vunpack.c.l.b16 %v4733
        %v5127 = vunpack.c.l.b16 %v4734
        %v5128 = vunpack.c.l.b16 %v4735
        %v5129 = vunpack.c.l.b16 %v4736
        %v5130 = vunpack.c.l.b16 %v4737
        %v5131 = vunpack.c.l.b16 %v4738
        %v5132 = vunpack.c.l.b16 %v4739
        %v5133 = vunpack.c.l.b16 %v4740
        %v5134 = vunpack.c.l.b16 %v4741
        %v5135 = vunpack.c.l.b16 %v4742
        %v5136 = vunpack.c.l.b16 %v4743
        %v5137 = vunpack.c.l.b16 %v4744
        %v5138 = vunpack.c.l.b16 %v4745
        %v5139 = vunpack.c.l.b16 %v4746
        %v5140 = vunpack.c.l.b16 %v4747
        %v5141 = vunpack.c.l.b16 %v4748
        %v5142 = vunpack.c.l.b16 %v4749
        %v5143 = vunpack.c.l.b16 %v4750
        %v5144 = vunpack.c.l.b16 %v4751
        %v5145 = vpack.c.b16 %v5114, %v5113
        %v5146 = vpack.c.b16 %v5116, %v5115
        %v5147 = vpack.c.b16 %v5118, %v5117
        %v5148 = vpack.c.b16 %v5120, %v5119
        %v5149 = vpack.c.b16 %v5122, %v5121
        %v5150 = vpack.c.b16 %v5124, %v5123
        %v5151 = vpack.c.b16 %v5126, %v5125
        %v5152 = vpack.c.b16 %v5128, %v5127
        %v5153 = vpack.c.b16 %v5130, %v5129
        %v5154 = vpack.c.b16 %v5132, %v5131
        %v5155 = vpack.c.b16 %v5134, %v5133
        %v5156 = vpack.c.b16 %v5136, %v5135
        %v5157 = vpack.c.b16 %v5138, %v5137
        %v5158 = vpack.c.b16 %v5140, %v5139
        %v5159 = vpack.c.b16 %v5142, %v5141
        %v5160 = vpack.c.b16 %v5144, %v5143
        %5177 = vmatprep.subr.bf16.mxu0 0
        %5178 = vmatpush1.bf16.msra.mxu0 %v5145
        %5179 = vmatprep.subr.bf16.mxu0 0
        %5180 = vmatpush1.bf16.msra.mxu0 %v5146
        %5181 = vmatprep.subr.bf16.mxu0 0
        %5182 = vmatpush1.bf16.msra.mxu0 %v5147
        %5183 = vmatprep.subr.bf16.mxu0 0
        %5184 = vmatpush1.bf16.msra.mxu0 %v5148
        %5185 = vmatprep.subr.bf16.mxu0 0
        %5186 = vmatpush1.bf16.msra.mxu0 %v5149
        %5187 = vmatprep.subr.bf16.mxu0 0
        %5188 = vmatpush1.bf16.msra.mxu0 %v5150
        %5189 = vmatprep.subr.bf16.mxu0 0
        %5190 = vmatpush1.bf16.msra.mxu0 %v5151
        %5191 = vmatprep.subr.bf16.mxu0 0
        %5192 = vmatpush1.bf16.msra.mxu0 %v5152
        %5193 = vmatprep.subr.bf16.mxu0 0
        %5194 = vmatpush1.bf16.msra.mxu0 %v5153
        %5195 = vmatprep.subr.bf16.mxu0 0
        %5196 = vmatpush1.bf16.msra.mxu0 %v5154
        %5197 = vmatprep.subr.bf16.mxu0 0
        %5198 = vmatpush1.bf16.msra.mxu0 %v5155
        %5199 = vmatprep.subr.bf16.mxu0 0
        %5200 = vmatpush1.bf16.msra.mxu0 %v5156
        %5201 = vmatprep.subr.bf16.mxu0 0
        %5202 = vmatpush1.bf16.msra.mxu0 %v5157
        %5203 = vmatprep.subr.bf16.mxu0 0
        %5204 = vmatpush1.bf16.msra.mxu0 %v5158
        %5205 = vmatprep.subr.bf16.mxu0 0
        %5206 = vmatpush1.bf16.msra.mxu0 %v5159
        %5207 = vmatprep.subr.bf16.mxu0 0
        %5208 = vmatpush1.bf16.msra.mxu0 %v5160
        %5209 = vmatprep.mubr.bf16.mxu0 %v4713
        %5210 = vmatmul.mubr.bf16.gmra.mrb[0].mxu0 %v4712
        %v5211 = vpop.f32.mrb[0].mxu0
        %v5212 = vadd.f32 %v5051, %v5211
        %v5213 = vpop.f32.mrb[0].mxu0
        %v5214 = vpop.f32.mrb[0].mxu0
        %v5215 = vadd.f32 %v5054, %v5214
        %v5216 = vpop.f32.mrb[0].mxu0
        %5217 = vmatprep.mubr.bf16.mxu0 %v4715
        %5218 = vmatmul.mubr.bf16.gmra.mrb[0].mxu0 %v4714
        %v5219 = vpop.f32.mrb[0].mxu0
        %v5220 = vadd.f32 %v5059, %v5219
        %v5221 = vpop.f32.mrb[0].mxu0
        %v5222 = vpop.f32.mrb[0].mxu0
        %v5223 = vadd.f32 %v5062, %v5222
        %v5224 = vpop.f32.mrb[0].mxu0
        %5225 = vmatprep.mubr.bf16.mxu0 %v4717
        %5226 = vmatmul.mubr.bf16.gmra.mrb[0].mxu0 %v4716
        %v5227 = vpop.f32.mrb[0].mxu0
        %v5228 = vadd.f32 %v5067, %v5227
        %v5229 = vpop.f32.mrb[0].mxu0
        %v5230 = vpop.f32.mrb[0].mxu0
        %v5231 = vadd.f32 %v5070, %v5230
        %v5232 = vpop.f32.mrb[0].mxu0
        %5233 = vmatprep.mubr.bf16.mxu0 %v4719
        %5234 = vmatmul.mubr.bf16.gmra.mrb[0].mxu0 %v4718
        %v5235 = vpop.f32.mrb[0].mxu0
        %v5236 = vadd.f32 %v5075, %v5235
        %v5237 = vpop.f32.mrb[0].mxu0
        %v5238 = vpop.f32.mrb[0].mxu0
        %v5239 = vadd.f32 %v5078, %v5238
        %v5240 = vpop.f32.mrb[0].mxu0
        %5241 = vdwg.mxu0
        %v5242 = vld [vmem:[%s4663] sm:$0xff]
        %v5243 = vld [vmem:[%s4663 + $0x8] sm:$0xff]
        %v5244 = vld [vmem:[%s4663 + $0x20] sm:$0xff]
        %v5245 = vld [vmem:[%s4663 + $0x28] sm:$0xff]
        %v5246 = vld [vmem:[%s4663 + $0x40] sm:$0xff]
        %v5247 = vld [vmem:[%s4663 + $0x48] sm:$0xff]
        %v5248 = vld [vmem:[%s4663 + $0x60] sm:$0xff]
        %v5249 = vld [vmem:[%s4663 + $0x68] sm:$0xff]
        %v5250 = vld [vmem:[%s4663 + $0x80] sm:$0xff]
        %v5251 = vld [vmem:[%s4663 + $0x88] sm:$0xff]
        %v5252 = vld [vmem:[%s4663 + $0xa0] sm:$0xff]
        %v5253 = vld [vmem:[%s4663 + $0xa8] sm:$0xff]
        %v5254 = vld [vmem:[%s4663 + $0xc0] sm:$0xff]
        %v5255 = vld [vmem:[%s4663 + $0xc8] sm:$0xff]
        %v5256 = vld [vmem:[%s4663 + $0xe0] sm:$0xff]
        %v5257 = vld [vmem:[%s4663 + $0xe8] sm:$0xff]
        %v5258 = vpack.c.bf16 %v5244, %v5242
        %v5259 = vpack.c.bf16 %v5245, %v5243
        %v5260 = vpack.c.bf16 %v5248, %v5246
        %v5261 = vpack.c.bf16 %v5249, %v5247
        %v5262 = vpack.c.bf16 %v5252, %v5250
        %v5263 = vpack.c.bf16 %v5253, %v5251
        %v5264 = vpack.c.bf16 %v5256, %v5254
        %v5265 = vpack.c.bf16 %v5257, %v5255
        %v5266 = vld [vmem:[%s5 + $0x100] sm:$0xf]
        %v5267 = vld [vmem:[%s5 + $0x104] sm:$0xf]
        %v5268 = vld [vmem:[%s5 + $0x108] sm:$0xf]
        %v5269 = vld [vmem:[%s5 + $0x10c] sm:$0xf]
        %v5270 = vld [vmem:[%s5 + $0x110] sm:$0xf]
        %v5271 = vld [vmem:[%s5 + $0x114] sm:$0xf]
        %v5272 = vld [vmem:[%s5 + $0x118] sm:$0xf]
        %v5273 = vld [vmem:[%s5 + $0x11c] sm:$0xf]
        %v5274 = vld [vmem:[%s5 + $0x120] sm:$0xf]
        %v5275 = vld [vmem:[%s5 + $0x124] sm:$0xf]
        %v5276 = vld [vmem:[%s5 + $0x128] sm:$0xf]
        %v5277 = vld [vmem:[%s5 + $0x12c] sm:$0xf]
        %v5278 = vld [vmem:[%s5 + $0x130] sm:$0xf]
        %v5279 = vld [vmem:[%s5 + $0x134] sm:$0xf]
        %v5280 = vld [vmem:[%s5 + $0x138] sm:$0xf]
        %v5281 = vld [vmem:[%s5 + $0x13c] sm:$0xf]
        %v5282 = vld [vmem:[%s5 + $0x140] sm:$0xf]
        %v5283 = vld [vmem:[%s5 + $0x144] sm:$0xf]
        %v5284 = vld [vmem:[%s5 + $0x148] sm:$0xf]
        %v5285 = vld [vmem:[%s5 + $0x14c] sm:$0xf]
        %v5286 = vld [vmem:[%s5 + $0x150] sm:$0xf]
        %v5287 = vld [vmem:[%s5 + $0x154] sm:$0xf]
        %v5288 = vld [vmem:[%s5 + $0x158] sm:$0xf]
        %v5289 = vld [vmem:[%s5 + $0x15c] sm:$0xf]
        %v5290 = vld [vmem:[%s5 + $0x160] sm:$0xf]
        %v5291 = vld [vmem:[%s5 + $0x164] sm:$0xf]
        %v5292 = vld [vmem:[%s5 + $0x168] sm:$0xf]
        %v5293 = vld [vmem:[%s5 + $0x16c] sm:$0xf]
        %v5294 = vld [vmem:[%s5 + $0x170] sm:$0xf]
        %v5295 = vld [vmem:[%s5 + $0x174] sm:$0xf]
        %v5296 = vld [vmem:[%s5 + $0x178] sm:$0xf]
        %v5297 = vld [vmem:[%s5 + $0x17c] sm:$0xf]
        %v5330 = vunpack.c.l.b16 %v5266
        %v5331 = vunpack.c.l.b16 %v5267
        %v5332 = vunpack.c.l.b16 %v5268
        %v5333 = vunpack.c.l.b16 %v5269
        %v5334 = vunpack.c.l.b16 %v5270
        %v5335 = vunpack.c.l.b16 %v5271
        %v5336 = vunpack.c.l.b16 %v5272
        %v5337 = vunpack.c.l.b16 %v5273
        %v5338 = vunpack.c.l.b16 %v5274
        %v5339 = vunpack.c.l.b16 %v5275
        %v5340 = vunpack.c.l.b16 %v5276
        %v5341 = vunpack.c.l.b16 %v5277
        %v5342 = vunpack.c.l.b16 %v5278
        %v5343 = vunpack.c.l.b16 %v5279
        %v5344 = vunpack.c.l.b16 %v5280
        %v5345 = vunpack.c.l.b16 %v5281
        %v5346 = vunpack.c.l.b16 %v5282
        %v5347 = vunpack.c.l.b16 %v5283
        %v5348 = vunpack.c.l.b16 %v5284
        %v5349 = vunpack.c.l.b16 %v5285
        %v5350 = vunpack.c.l.b16 %v5286
        %v5351 = vunpack.c.l.b16 %v5287
        %v5352 = vunpack.c.l.b16 %v5288
        %v5353 = vunpack.c.l.b16 %v5289
        %v5354 = vunpack.c.l.b16 %v5290
        %v5355 = vunpack.c.l.b16 %v5291
        %v5356 = vunpack.c.l.b16 %v5292
        %v5357 = vunpack.c.l.b16 %v5293
        %v5358 = vunpack.c.l.b16 %v5294
        %v5359 = vunpack.c.l.b16 %v5295
        %v5360 = vunpack.c.l.b16 %v5296
        %v5361 = vunpack.c.l.b16 %v5297
        %v5362 = vpack.c.b16 %v5331, %v5330
        %v5363 = vpack.c.b16 %v5333, %v5332
        %v5364 = vpack.c.b16 %v5335, %v5334
        %v5365 = vpack.c.b16 %v5337, %v5336
        %v5366 = vpack.c.b16 %v5339, %v5338
        %v5367 = vpack.c.b16 %v5341, %v5340
        %v5368 = vpack.c.b16 %v5343, %v5342
        %v5369 = vpack.c.b16 %v5345, %v5344
        %v5370 = vpack.c.b16 %v5347, %v5346
        %v5371 = vpack.c.b16 %v5349, %v5348
        %v5372 = vpack.c.b16 %v5351, %v5350
        %v5373 = vpack.c.b16 %v5353, %v5352
        %v5374 = vpack.c.b16 %v5355, %v5354
        %v5375 = vpack.c.b16 %v5357, %v5356
        %v5376 = vpack.c.b16 %v5359, %v5358
        %v5377 = vpack.c.b16 %v5361, %v5360
        %5394 = vmatprep.subr.bf16.mxu0 0
        %5395 = vmatpush1.bf16.msra.mxu0 %v5362
        %5396 = vmatprep.subr.bf16.mxu0 0
        %5397 = vmatpush1.bf16.msra.mxu0 %v5363
        %5398 = vmatprep.subr.bf16.mxu0 0
        %5399 = vmatpush1.bf16.msra.mxu0 %v5364
        %5400 = vmatprep.subr.bf16.mxu0 0
        %5401 = vmatpush1.bf16.msra.mxu0 %v5365
        %5402 = vmatprep.subr.bf16.mxu0 0
        %5403 = vmatpush1.bf16.msra.mxu0 %v5366
        %5404 = vmatprep.subr.bf16.mxu0 0
        %5405 = vmatpush1.bf16.msra.mxu0 %v5367
        %5406 = vmatprep.subr.bf16.mxu0 0
        %5407 = vmatpush1.bf16.msra.mxu0 %v5368
        %5408 = vmatprep.subr.bf16.mxu0 0
        %5409 = vmatpush1.bf16.msra.mxu0 %v5369
        %5410 = vmatprep.subr.bf16.mxu0 0
        %5411 = vmatpush1.bf16.msra.mxu0 %v5370
        %5412 = vmatprep.subr.bf16.mxu0 0
        %5413 = vmatpush1.bf16.msra.mxu0 %v5371
        %5414 = vmatprep.subr.bf16.mxu0 0
        %5415 = vmatpush1.bf16.msra.mxu0 %v5372
        %5416 = vmatprep.subr.bf16.mxu0 0
        %5417 = vmatpush1.bf16.msra.mxu0 %v5373
        %5418 = vmatprep.subr.bf16.mxu0 0
        %5419 = vmatpush1.bf16.msra.mxu0 %v5374
        %5420 = vmatprep.subr.bf16.mxu0 0
        %5421 = vmatpush1.bf16.msra.mxu0 %v5375
        %5422 = vmatprep.subr.bf16.mxu0 0
        %5423 = vmatpush1.bf16.msra.mxu0 %v5376
        %5424 = vmatprep.subr.bf16.mxu0 0
        %5425 = vmatpush1.bf16.msra.mxu0 %v5377
        %5426 = vmatprep.mubr.bf16.mxu0 %v5259
        %5427 = vmatmul.mubr.bf16.gmra.mrb[0].mxu0 %v5258
        %v5428 = vpop.f32.mrb[0].mxu0
        %v5429 = vadd.f32 0.0, %v5428
        %v5430 = vpop.f32.mrb[0].mxu0
        %v5431 = vpop.f32.mrb[0].mxu0
        %v5432 = vadd.f32 0.0, %v5431
        %v5433 = vpop.f32.mrb[0].mxu0
        %5434 = vmatprep.mubr.bf16.mxu0 %v5261
        %5435 = vmatmul.mubr.bf16.gmra.mrb[0].mxu0 %v5260
        %v5436 = vpop.f32.mrb[0].mxu0
        %v5437 = vadd.f32 0.0, %v5436
        %v5438 = vpop.f32.mrb[0].mxu0
        %v5439 = vpop.f32.mrb[0].mxu0
        %v5440 = vadd.f32 0.0, %v5439
        %v5441 = vpop.f32.mrb[0].mxu0
        %5442 = vmatprep.mubr.bf16.mxu0 %v5263
        %5443 = vmatmul.mubr.bf16.gmra.mrb[0].mxu0 %v5262
        %v5444 = vpop.f32.mrb[0].mxu0
        %v5445 = vadd.f32 0.0, %v5444
        %v5446 = vpop.f32.mrb[0].mxu0
        %v5447 = vpop.f32.mrb[0].mxu0
        %v5448 = vadd.f32 0.0, %v5447
        %v5449 = vpop.f32.mrb[0].mxu0
        %5450 = vmatprep.mubr.bf16.mxu0 %v5265
        %5451 = vmatmul.mubr.bf16.gmra.mrb[0].mxu0 %v5264
        %v5452 = vpop.f32.mrb[0].mxu0
        %v5453 = vadd.f32 0.0, %v5452
        %v5454 = vpop.f32.mrb[0].mxu0
        %v5455 = vpop.f32.mrb[0].mxu0
        %v5456 = vadd.f32 0.0, %v5455
        %v5457 = vpop.f32.mrb[0].mxu0
        %5458 = vdwg.mxu0
        %v5459 = vadd.f32 %v5212, %v5429
        %v5460 = vadd.f32 %v5215, %v5432
        %v5461 = vadd.f32 %v5220, %v5437
        %v5462 = vadd.f32 %v5223, %v5440
        %v5463 = vadd.f32 %v5228, %v5445
        %v5464 = vadd.f32 %v5231, %v5448
        %v5465 = vadd.f32 %v5236, %v5453
        %v5466 = vadd.f32 %v5239, %v5456
        %v5467 = vld [vmem:[%s4663] sm:$0xfe]
        %v5468 = vld [vmem:[%s4663 + $0x8] sm:$0xfe]
        %v5469 = vld [vmem:[%s4663 + $0x10] sm:$0x1]
        %v5470 = vld [vmem:[%s4663 + $0x18] sm:$0x1]
        %v5471 = vld [vmem:[%s4663 + $0x20] sm:$0xfe]
        %v5472 = vld [vmem:[%s4663 + $0x28] sm:$0xfe]
        %v5473 = vld [vmem:[%s4663 + $0x30] sm:$0x1]
        %v5474 = vld [vmem:[%s4663 + $0x38] sm:$0x1]
        %v5475 = vld [vmem:[%s4663 + $0x40] sm:$0xfe]
        %v5476 = vld [vmem:[%s4663 + $0x48] sm:$0xfe]
        %v5477 = vld [vmem:[%s4663 + $0x50] sm:$0x1]
        %v5478 = vld [vmem:[%s4663 + $0x58] sm:$0x1]
        %v5479 = vld [vmem:[%s4663 + $0x60] sm:$0xfe]
        %v5480 = vld [vmem:[%s4663 + $0x68] sm:$0xfe]
        %v5481 = vld [vmem:[%s4663 + $0x70] sm:$0x1]
        %v5482 = vld [vmem:[%s4663 + $0x78] sm:$0x1]
        %v5483 = vld [vmem:[%s4663 + $0x80] sm:$0xfe]
        %v5484 = vld [vmem:[%s4663 + $0x88] sm:$0xfe]
        %v5485 = vld [vmem:[%s4663 + $0x90] sm:$0x1]
        %v5486 = vld [vmem:[%s4663 + $0x98] sm:$0x1]
        %v5487 = vld [vmem:[%s4663 + $0xa0] sm:$0xfe]
        %v5488 = vld [vmem:[%s4663 + $0xa8] sm:$0xfe]
        %v5489 = vld [vmem:[%s4663 + $0xb0] sm:$0x1]
        %v5490 = vld [vmem:[%s4663 + $0xb8] sm:$0x1]
        %v5491 = vld [vmem:[%s4663 + $0xc0] sm:$0xfe]
        %v5492 = vld [vmem:[%s4663 + $0xc8] sm:$0xfe]
        %v5493 = vld [vmem:[%s4663 + $0xd0] sm:$0x1]
        %v5494 = vld [vmem:[%s4663 + $0xd8] sm:$0x1]
        %v5495 = vld [vmem:[%s4663 + $0xe0] sm:$0xfe]
        %v5496 = vld [vmem:[%s4663 + $0xe8] sm:$0xfe]
        %v5497 = vld [vmem:[%s4663 + $0xf0] sm:$0x1]
        %v5498 = vld [vmem:[%s4663 + $0xf8] sm:$0x1]
        %v5531 = vrot.slane %v5467, 1
        %v5532 = vrot.slane %v5469, 1
        %v5533 = vsel %vm1982, %v5531, %v5532
        %v5534 = vrot.slane %v5468, 1
        %v5535 = vrot.slane %v5470, 1
        %v5536 = vsel %vm1982, %v5534, %v5535
        %v5537 = vrot.slane %v5471, 1
        %v5538 = vrot.slane %v5473, 1
        %v5539 = vsel %vm1982, %v5537, %v5538
        %v5540 = vrot.slane %v5472, 1
        %v5541 = vrot.slane %v5474, 1
        %v5542 = vsel %vm1982, %v5540, %v5541
        %v5543 = vrot.slane %v5475, 1
        %v5544 = vrot.slane %v5477, 1
        %v5545 = vsel %vm1982, %v5543, %v5544
        %v5546 = vrot.slane %v5476, 1
        %v5547 = vrot.slane %v5478, 1
        %v5548 = vsel %vm1982, %v5546, %v5547
        %v5549 = vrot.slane %v5479, 1
        %v5550 = vrot.slane %v5481, 1
        %v5551 = vsel %vm1982, %v5549, %v5550
        %v5552 = vrot.slane %v5480, 1
        %v5553 = vrot.slane %v5482, 1
        %v5554 = vsel %vm1982, %v5552, %v5553
        %v5555 = vrot.slane %v5483, 1
        %v5556 = vrot.slane %v5485, 1
        %v5557 = vsel %vm1982, %v5555, %v5556
        %v5558 = vrot.slane %v5484, 1
        %v5559 = vrot.slane %v5486, 1
        %v5560 = vsel %vm1982, %v5558, %v5559
        %v5561 = vrot.slane %v5487, 1
        %v5562 = vrot.slane %v5489, 1
        %v5563 = vsel %vm1982, %v5561, %v5562
        %v5564 = vrot.slane %v5488, 1
        %v5565 = vrot.slane %v5490, 1
        %v5566 = vsel %vm1982, %v5564, %v5565
        %v5567 = vrot.slane %v5491, 1
        %v5568 = vrot.slane %v5493, 1
        %v5569 = vsel %vm1982, %v5567, %v5568
        %v5570 = vrot.slane %v5492, 1
        %v5571 = vrot.slane %v5494, 1
        %v5572 = vsel %vm1982, %v5570, %v5571
        %v5573 = vrot.slane %v5495, 1
        %v5574 = vrot.slane %v5497, 1
        %v5575 = vsel %vm1982, %v5573, %v5574
        %v5576 = vrot.slane %v5496, 1
        %v5577 = vrot.slane %v5498, 1
        %v5578 = vsel %vm1982, %v5576, %v5577
        %v5595 = vpack.c.bf16 %v5539, %v5533
        %v5596 = vpack.c.bf16 %v5542, %v5536
        %v5597 = vpack.c.bf16 %v5551, %v5545
        %v5598 = vpack.c.bf16 %v5554, %v5548
        %v5599 = vpack.c.bf16 %v5563, %v5557
        %v5600 = vpack.c.bf16 %v5566, %v5560
        %v5601 = vpack.c.bf16 %v5575, %v5569
        %v5602 = vpack.c.bf16 %v5578, %v5572
        %v5603 = vld [vmem:[%s5 + $0x180] sm:$0xf]
        %v5604 = vld [vmem:[%s5 + $0x184] sm:$0xf]
        %v5605 = vld [vmem:[%s5 + $0x188] sm:$0xf]
        %v5606 = vld [vmem:[%s5 + $0x18c] sm:$0xf]
        %v5607 = vld [vmem:[%s5 + $0x190] sm:$0xf]
        %v5608 = vld [vmem:[%s5 + $0x194] sm:$0xf]
        %v5609 = vld [vmem:[%s5 + $0x198] sm:$0xf]
        %v5610 = vld [vmem:[%s5 + $0x19c] sm:$0xf]
        %v5611 = vld [vmem:[%s5 + $0x1a0] sm:$0xf]
        %v5612 = vld [vmem:[%s5 + $0x1a4] sm:$0xf]
        %v5613 = vld [vmem:[%s5 + $0x1a8] sm:$0xf]
        %v5614 = vld [vmem:[%s5 + $0x1ac] sm:$0xf]
        %v5615 = vld [vmem:[%s5 + $0x1b0] sm:$0xf]
        %v5616 = vld [vmem:[%s5 + $0x1b4] sm:$0xf]
        %v5617 = vld [vmem:[%s5 + $0x1b8] sm:$0xf]
        %v5618 = vld [vmem:[%s5 + $0x1bc] sm:$0xf]
        %v5619 = vld [vmem:[%s5 + $0x1c0] sm:$0xf]
        %v5620 = vld [vmem:[%s5 + $0x1c4] sm:$0xf]
        %v5621 = vld [vmem:[%s5 + $0x1c8] sm:$0xf]
        %v5622 = vld [vmem:[%s5 + $0x1cc] sm:$0xf]
        %v5623 = vld [vmem:[%s5 + $0x1d0] sm:$0xf]
        %v5624 = vld [vmem:[%s5 + $0x1d4] sm:$0xf]
        %v5625 = vld [vmem:[%s5 + $0x1d8] sm:$0xf]
        %v5626 = vld [vmem:[%s5 + $0x1dc] sm:$0xf]
        %v5627 = vld [vmem:[%s5 + $0x1e0] sm:$0xf]
        %v5628 = vld [vmem:[%s5 + $0x1e4] sm:$0xf]
        %v5629 = vld [vmem:[%s5 + $0x1e8] sm:$0xf]
        %v5630 = vld [vmem:[%s5 + $0x1ec] sm:$0xf]
        %v5631 = vld [vmem:[%s5 + $0x1f0] sm:$0xf]
        %v5632 = vld [vmem:[%s5 + $0x1f4] sm:$0xf]
        %v5633 = vld [vmem:[%s5 + $0x1f8] sm:$0xf]
        %v5634 = vld [vmem:[%s5 + $0x1fc] sm:$0xf]
        %v5667 = vunpack.c.l.b16 %v5603
        %v5668 = vunpack.c.l.b16 %v5604
        %v5669 = vunpack.c.l.b16 %v5605
        %v5670 = vunpack.c.l.b16 %v5606
        %v5671 = vunpack.c.l.b16 %v5607
        %v5672 = vunpack.c.l.b16 %v5608
        %v5673 = vunpack.c.l.b16 %v5609
        %v5674 = vunpack.c.l.b16 %v5610
        %v5675 = vunpack.c.l.b16 %v5611
        %v5676 = vunpack.c.l.b16 %v5612
        %v5677 = vunpack.c.l.b16 %v5613
        %v5678 = vunpack.c.l.b16 %v5614
        %v5679 = vunpack.c.l.b16 %v5615
        %v5680 = vunpack.c.l.b16 %v5616
        %v5681 = vunpack.c.l.b16 %v5617
        %v5682 = vunpack.c.l.b16 %v5618
        %v5683 = vunpack.c.l.b16 %v5619
        %v5684 = vunpack.c.l.b16 %v5620
        %v5685 = vunpack.c.l.b16 %v5621
        %v5686 = vunpack.c.l.b16 %v5622
        %v5687 = vunpack.c.l.b16 %v5623
        %v5688 = vunpack.c.l.b16 %v5624
        %v5689 = vunpack.c.l.b16 %v5625
        %v5690 = vunpack.c.l.b16 %v5626
        %v5691 = vunpack.c.l.b16 %v5627
        %v5692 = vunpack.c.l.b16 %v5628
        %v5693 = vunpack.c.l.b16 %v5629
        %v5694 = vunpack.c.l.b16 %v5630
        %v5695 = vunpack.c.l.b16 %v5631
        %v5696 = vunpack.c.l.b16 %v5632
        %v5697 = vunpack.c.l.b16 %v5633
        %v5698 = vunpack.c.l.b16 %v5634
        %v5699 = vpack.c.b16 %v5668, %v5667
        %v5700 = vpack.c.b16 %v5670, %v5669
        %v5701 = vpack.c.b16 %v5672, %v5671
        %v5702 = vpack.c.b16 %v5674, %v5673
        %v5703 = vpack.c.b16 %v5676, %v5675
        %v5704 = vpack.c.b16 %v5678, %v5677
        %v5705 = vpack.c.b16 %v5680, %v5679
        %v5706 = vpack.c.b16 %v5682, %v5681
        %v5707 = vpack.c.b16 %v5684, %v5683
        %v5708 = vpack.c.b16 %v5686, %v5685
        %v5709 = vpack.c.b16 %v5688, %v5687
        %v5710 = vpack.c.b16 %v5690, %v5689
        %v5711 = vpack.c.b16 %v5692, %v5691
        %v5712 = vpack.c.b16 %v5694, %v5693
        %v5713 = vpack.c.b16 %v5696, %v5695
        %v5714 = vpack.c.b16 %v5698, %v5697
        %5731 = vmatprep.subr.bf16.mxu0 0
        %5732 = vmatpush1.bf16.msra.mxu0 %v5699
        %5733 = vmatprep.subr.bf16.mxu0 0
        %5734 = vmatpush1.bf16.msra.mxu0 %v5700
        %5735 = vmatprep.subr.bf16.mxu0 0
        %5736 = vmatpush1.bf16.msra.mxu0 %v5701
        %5737 = vmatprep.subr.bf16.mxu0 0
        %5738 = vmatpush1.bf16.msra.mxu0 %v5702
        %5739 = vmatprep.subr.bf16.mxu0 0
        %5740 = vmatpush1.bf16.msra.mxu0 %v5703
        %5741 = vmatprep.subr.bf16.mxu0 0
        %5742 = vmatpush1.bf16.msra.mxu0 %v5704
        %5743 = vmatprep.subr.bf16.mxu0 0
        %5744 = vmatpush1.bf16.msra.mxu0 %v5705
        %5745 = vmatprep.subr.bf16.mxu0 0
        %5746 = vmatpush1.bf16.msra.mxu0 %v5706
        %5747 = vmatprep.subr.bf16.mxu0 0
        %5748 = vmatpush1.bf16.msra.mxu0 %v5707
        %5749 = vmatprep.subr.bf16.mxu0 0
        %5750 = vmatpush1.bf16.msra.mxu0 %v5708
        %5751 = vmatprep.subr.bf16.mxu0 0
        %5752 = vmatpush1.bf16.msra.mxu0 %v5709
        %5753 = vmatprep.subr.bf16.mxu0 0
        %5754 = vmatpush1.bf16.msra.mxu0 %v5710
        %5755 = vmatprep.subr.bf16.mxu0 0
        %5756 = vmatpush1.bf16.msra.mxu0 %v5711
        %5757 = vmatprep.subr.bf16.mxu0 0
        %5758 = vmatpush1.bf16.msra.mxu0 %v5712
        %5759 = vmatprep.subr.bf16.mxu0 0
        %5760 = vmatpush1.bf16.msra.mxu0 %v5713
        %5761 = vmatprep.subr.bf16.mxu0 0
        %5762 = vmatpush1.bf16.msra.mxu0 %v5714
        %5763 = vmatprep.mubr.bf16.mxu0 %v5596
        %5764 = vmatmul.mubr.bf16.gmra.mrb[0].mxu0 %v5595
        %v5765 = vpop.f32.mrb[0].mxu0
        %v5766 = vadd.f32 0.0, %v5765
        %v5767 = vpop.f32.mrb[0].mxu0
        %v5768 = vpop.f32.mrb[0].mxu0
        %v5769 = vadd.f32 0.0, %v5768
        %v5770 = vpop.f32.mrb[0].mxu0
        %5771 = vmatprep.mubr.bf16.mxu0 %v5598
        %5772 = vmatmul.mubr.bf16.gmra.mrb[0].mxu0 %v5597
        %v5773 = vpop.f32.mrb[0].mxu0
        %v5774 = vadd.f32 0.0, %v5773
        %v5775 = vpop.f32.mrb[0].mxu0
        %v5776 = vpop.f32.mrb[0].mxu0
        %v5777 = vadd.f32 0.0, %v5776
        %v5778 = vpop.f32.mrb[0].mxu0
        %5779 = vmatprep.mubr.bf16.mxu0 %v5600
        %5780 = vmatmul.mubr.bf16.gmra.mrb[0].mxu0 %v5599
        %v5781 = vpop.f32.mrb[0].mxu0
        %v5782 = vadd.f32 0.0, %v5781
        %v5783 = vpop.f32.mrb[0].mxu0
        %v5784 = vpop.f32.mrb[0].mxu0
        %v5785 = vadd.f32 0.0, %v5784
        %v5786 = vpop.f32.mrb[0].mxu0
        %5787 = vmatprep.mubr.bf16.mxu0 %v5602
        %5788 = vmatmul.mubr.bf16.gmra.mrb[0].mxu0 %v5601
        %v5789 = vpop.f32.mrb[0].mxu0
        %v5790 = vadd.f32 0.0, %v5789
        %v5791 = vpop.f32.mrb[0].mxu0
        %v5792 = vpop.f32.mrb[0].mxu0
        %v5793 = vadd.f32 0.0, %v5792
        %v5794 = vpop.f32.mrb[0].mxu0
        %5795 = vdwg.mxu0
        %v5796 = vadd.f32 %v5459, %v5766
        %v5797 = vadd.f32 %v5460, %v5769
        %v5798 = vadd.f32 %v5461, %v5774
        %v5799 = vadd.f32 %v5462, %v5777
        %v5800 = vadd.f32 %v5463, %v5782
        %v5801 = vadd.f32 %v5464, %v5785
        %v5802 = vadd.f32 %v5465, %v5790
        %v5803 = vadd.f32 %v5466, %v5793
        %v5804 = vld [vmem:[%s6] sm:$0x1]
        %v5806 = vlaneseq
        %v5807 = vshrl.u32 %v5806, 7
        %v5808 = vsub.s32 0, %v5807
        %v5809 = vrot.slane %v5804, %v5808
        %v5811 = vadd.f32 %v5796, %v5809
        %v5812 = vadd.f32 %v5797, %v5809
        %v5813 = vadd.f32 %v5798, %v5809
        %v5814 = vadd.f32 %v5799, %v5809
        %v5815 = vadd.f32 %v5800, %v5809
        %v5816 = vadd.f32 %v5801, %v5809
        %v5817 = vadd.f32 %v5802, %v5809
        %v5818 = vadd.f32 %v5803, %v5809
        %v5819 = vmax.f32 %v5811, 0.0
        %v5820 = vmax.f32 %v5812, 0.0
        %v5821 = vmax.f32 %v5813, 0.0
        %v5822 = vmax.f32 %v5814, 0.0
        %v5823 = vmax.f32 %v5815, 0.0
        %v5824 = vmax.f32 %v5816, 0.0
        %v5825 = vmax.f32 %v5817, 0.0
        %v5826 = vmax.f32 %v5818, 0.0
        %5827 = vst [vmem:[%s291] sm:$0xff] %v5819
        %5828 = vst [vmem:[%s291 + $0x8] sm:$0xff] %v5820
        %5829 = vst [vmem:[%s291 + $0x10] sm:$0xff] %v5821
        %5830 = vst [vmem:[%s291 + $0x18] sm:$0xff] %v5822
        %5831 = vst [vmem:[%s291 + $0x20] sm:$0xff] %v5823
        %5832 = vst [vmem:[%s291 + $0x28] sm:$0xff] %v5824
        %5833 = vst [vmem:[%s291 + $0x30] sm:$0xff] %v5825
        %5834 = vst [vmem:[%s291 + $0x38] sm:$0xff] %v5826
        %p5835 = scmp.lt.s32.totalorder %s19, 1
        %s5836 = scalar_select %p5835, %s19, 1
        %s5837 = smul.addr %s5836, 8
        %s5838 = smul.addr %s5837, 8
        %s5839 = scalar_lea.vmem %s7, %s5838
        // Predicated region
        $region53: #{encoder_forward.2} parent=47 // pred_check
          %p5840 = pneg %p189
        $region54: #{encoder_forward.2} parent=47 // pred_check_branch
          %5842 = sbr.rel (%p5840) target = $region56
        $region55: #{encoder_forward.2} parent=47 // pred_region
          _
        $region56: #{encoder_forward.2} parent=47 // pred_fallthru
          _
      $region48: #{encoder_forward.2} parent=5 // pred_fallthru
        _
      %p5843 = scmp.le.s32.totalorder 2, %s14
      // Predicated region
      $region57: #{encoder_forward.2} parent=5 // pred_check
        %p5844 = pneg %p5843
      $region58: #{encoder_forward.2} parent=5 // pred_check_branch
        %5846 = sbr.rel (%p5844) target = $region60
      $region59: #{encoder_forward.2} parent=5 // pred_region
        %s5847 = ssub.s32 %s14, 2
        // Predicated region
        $region61: #{encoder_forward.2} parent=59 // pred_check
          %p5848 = pneg %p195
        $region62: #{encoder_forward.2} parent=59 // pred_check_branch
          %5850 = sbr.rel (%p5848) target = $region64
        $region63: #{encoder_forward.2} parent=59 // pred_region
          %p5851 = scmp.lt.s32.totalorder %s20, 1
          %s5852 = scalar_select %p5851, %s20, 1
          %s5853 = smul.addr %s5852, 8
          %s5854 = smul.addr %s5853, 8
          %s5855 = scalar_lea.vmem %s7, %s5854
        $region64: #{encoder_forward.2} parent=59 // pred_fallthru
          _
      $region60: #{encoder_forward.2} parent=5 // pred_fallthru
        _
    $region6: #{encoder_forward.2} parent=1 // loop_footer
      %s18 = sadd.s32 1, %s14
    $region7: #{encoder_forward.2} parent=1 // loop_footer_branch
      %13 = sbr.rel target = $region3
    $region8: #{encoder_forward.2} parent=1 // loop_exit
      _
    %5856 = vsyncpa [#allocation5], 1
    %s5857 = scalar_lea.sflag [#allocation5], 1
    %5858 = vsyncpa %s5857, 1

// kernel: encoder_forward.3
$region0: #{encoder_forward.3}
  #allocation0 [shape = 'u32[]', space=smem, size = 0x4, offset = 0x4, fixed_abs, tag = 'smem constant byte address 0x4 - core index']
  #allocation1 [shape = 'u32[144,128]{1,0:T(1,128)}', space=vmem, size = 0x12000, scoped, tag = 'internal scratch']
  %s0 = inlined_call_operand.vmem [shape: f32[2,8192], index: 0, kind: input, shape index: {}]
  %s1 = inlined_call_operand.vmem [shape: bf16[8192,128], index: 1, kind: input, shape index: {}]
  %s2 = inlined_call_operand.vmem [shape: f32[1,128], index: 2, kind: input, shape index: {}]
  %s3 = inlined_call_operand.vmem [shape: f32[2,128], index: 3, kind: output, shape index: {}]
  %s4 = sld [smem:[#allocation0]]
  $region22: #{encoder_forward.3} parent=0
    _
  %s6 = ssub.s32 1, %s4
  %s7 = scalar_select 0, %s6, %s4
  // Predicated region
  $region2: #{encoder_forward.3} parent=0 // pred_check
    _
  $region3: #{encoder_forward.3} parent=0 // pred_check_branch
    %9 = sbr.rel (0) target = $region5
  $region4: #{encoder_forward.3} parent=0 // pred_region
    _
  $region5: #{encoder_forward.3} parent=0 // pred_fallthru
    _
  // Predicated region
  $region6: #{encoder_forward.3} parent=0 // pred_check
    _
  $region7: #{encoder_forward.3} parent=0 // pred_check_branch
    %11 = sbr.rel (0) target = $region9
  $region8: #{encoder_forward.3} parent=0 // pred_region
    _
  $region9: #{encoder_forward.3} parent=0 // pred_fallthru
    _
  // Predicated region
  $region10: #{encoder_forward.3} parent=0 // pred_check
    _
  $region11: #{encoder_forward.3} parent=0 // pred_check_branch
    %13 = sbr.rel (0) target = $region13
  $region12: #{encoder_forward.3} parent=0 // pred_region
    _
  $region13: #{encoder_forward.3} parent=0 // pred_fallthru
    _
  %v15 = vld [vmem:[%s0] sm:$0xff]
  %v16 = vld [vmem:[%s0 + $0x8] sm:$0xff]
  %v17 = vld [vmem:[%s0 + $0x10] sm:$0xff]
  %v18 = vld [vmem:[%s0 + $0x18] sm:$0xff]
  %v19 = vld [vmem:[%s0 + $0x20] sm:$0xff]
  %v20 = vld [vmem:[%s0 + $0x28] sm:$0xff]
  %v21 = vld [vmem:[%s0 + $0x30] sm:$0xff]
  %v22 = vld [vmem:[%s0 + $0x38] sm:$0xff]
  %v23 = vld [vmem:[%s0 + $0x40] sm:$0xff]
  %v24 = vld [vmem:[%s0 + $0x48] sm:$0xff]
  %v25 = vld [vmem:[%s0 + $0x50] sm:$0xff]
  %v26 = vld [vmem:[%s0 + $0x58] sm:$0xff]
  %v27 = vld [vmem:[%s0 + $0x60] sm:$0xff]
  %v28 = vld [vmem:[%s0 + $0x68] sm:$0xff]
  %v29 = vld [vmem:[%s0 + $0x70] sm:$0xff]
  %v30 = vld [vmem:[%s0 + $0x78] sm:$0xff]
  %v47 = vcombine.high %v15, %v15
  %v49 = vunpack.c.l.s4 1983009808
  %v50 = vunpack.c.0.s8 %v49
  %v51 = vlaneseq
  %v52 = vshrl.u32 %v51, 7
  %v53 = vsub.s32 %v50, %v52
  %v54 = vrot.slane %v15, %v53
  %v56 = vunpack.c.l.s4 1983009808
  %v57 = vunpack.c.0.s8 %v56
  %v58 = vlaneseq
  %v59 = vshrl.u32 %v58, 7
  %v60 = vsub.s32 %v57, %v59
  %v61 = vrot.slane %v47, %v60
  %v62 = vcombine.high %v54, %v54
  %v63 = vcombine.high %v61, %v61
  %v64 = vcombine.high %v16, %v16
  %v66 = vunpack.c.l.s4 1983009808
  %v67 = vunpack.c.0.s8 %v66
  %v68 = vlaneseq
  %v69 = vshrl.u32 %v68, 7
  %v70 = vsub.s32 %v67, %v69
  %v71 = vrot.slane %v16, %v70
  %v73 = vunpack.c.l.s4 1983009808
  %v74 = vunpack.c.0.s8 %v73
  %v75 = vlaneseq
  %v76 = vshrl.u32 %v75, 7
  %v77 = vsub.s32 %v74, %v76
  %v78 = vrot.slane %v64, %v77
  %v79 = vcombine.high %v71, %v71
  %v80 = vcombine.high %v78, %v78
  %v81 = vcombine.high %v17, %v17
  %v83 = vunpack.c.l.s4 1983009808
  %v84 = vunpack.c.0.s8 %v83
  %v85 = vlaneseq
  %v86 = vshrl.u32 %v85, 7
  %v87 = vsub.s32 %v84, %v86
  %v88 = vrot.slane %v17, %v87
  %v90 = vunpack.c.l.s4 1983009808
  %v91 = vunpack.c.0.s8 %v90
  %v92 = vlaneseq
  %v93 = vshrl.u32 %v92, 7
  %v94 = vsub.s32 %v91, %v93
  %v95 = vrot.slane %v81, %v94
  %v96 = vcombine.high %v88, %v88
  %v97 = vcombine.high %v95, %v95
  %v98 = vcombine.high %v18, %v18
  %v100 = vunpack.c.l.s4 1983009808
  %v101 = vunpack.c.0.s8 %v100
  %v102 = vlaneseq
  %v103 = vshrl.u32 %v102, 7
  %v104 = vsub.s32 %v101, %v103
  %v105 = vrot.slane %v18, %v104
  %v107 = vunpack.c.l.s4 1983009808
  %v108 = vunpack.c.0.s8 %v107
  %v109 = vlaneseq
  %v110 = vshrl.u32 %v109, 7
  %v111 = vsub.s32 %v108, %v110
  %v112 = vrot.slane %v98, %v111
  %v113 = vcombine.high %v105, %v105
  %v114 = vcombine.high %v112, %v112
  %v115 = vcombine.high %v19, %v19
  %v117 = vunpack.c.l.s4 1983009808
  %v118 = vunpack.c.0.s8 %v117
  %v119 = vlaneseq
  %v120 = vshrl.u32 %v119, 7
  %v121 = vsub.s32 %v118, %v120
  %v122 = vrot.slane %v19, %v121
  %v124 = vunpack.c.l.s4 1983009808
  %v125 = vunpack.c.0.s8 %v124
  %v126 = vlaneseq
  %v127 = vshrl.u32 %v126, 7
  %v128 = vsub.s32 %v125, %v127
  %v129 = vrot.slane %v115, %v128
  %v130 = vcombine.high %v122, %v122
  %v131 = vcombine.high %v129, %v129
  %v132 = vcombine.high %v20, %v20
  %v134 = vunpack.c.l.s4 1983009808
  %v135 = vunpack.c.0.s8 %v134
  %v136 = vlaneseq
  %v137 = vshrl.u32 %v136, 7
  %v138 = vsub.s32 %v135, %v137
  %v139 = vrot.slane %v20, %v138
  %v141 = vunpack.c.l.s4 1983009808
  %v142 = vunpack.c.0.s8 %v141
  %v143 = vlaneseq
  %v144 = vshrl.u32 %v143, 7
  %v145 = vsub.s32 %v142, %v144
  %v146 = vrot.slane %v132, %v145
  %v147 = vcombine.high %v139, %v139
  %v148 = vcombine.high %v146, %v146
  %v149 = vcombine.high %v21, %v21
  %v151 = vunpack.c.l.s4 1983009808
  %v152 = vunpack.c.0.s8 %v151
  %v153 = vlaneseq
  %v154 = vshrl.u32 %v153, 7
  %v155 = vsub.s32 %v152, %v154
  %v156 = vrot.slane %v21, %v155
  %v158 = vunpack.c.l.s4 1983009808
  %v159 = vunpack.c.0.s8 %v158
  %v160 = vlaneseq
  %v161 = vshrl.u32 %v160, 7
  %v162 = vsub.s32 %v159, %v161
  %v163 = vrot.slane %v149, %v162
  %v164 = vcombine.high %v156, %v156
  %v165 = vcombine.high %v163, %v163
  %v166 = vcombine.high %v22, %v22
  %v168 = vunpack.c.l.s4 1983009808
  %v169 = vunpack.c.0.s8 %v168
  %v170 = vlaneseq
  %v171 = vshrl.u32 %v170, 7
  %v172 = vsub.s32 %v169, %v171
  %v173 = vrot.slane %v22, %v172
  %v175 = vunpack.c.l.s4 1983009808
  %v176 = vunpack.c.0.s8 %v175
  %v177 = vlaneseq
  %v178 = vshrl.u32 %v177, 7
  %v179 = vsub.s32 %v176, %v178
  %v180 = vrot.slane %v166, %v179
  %v181 = vcombine.high %v173, %v173
  %v182 = vcombine.high %v180, %v180
  %v183 = vcombine.high %v23, %v23
  %v185 = vunpack.c.l.s4 1983009808
  %v186 = vunpack.c.0.s8 %v185
  %v187 = vlaneseq
  %v188 = vshrl.u32 %v187, 7
  %v189 = vsub.s32 %v186, %v188
  %v190 = vrot.slane %v23, %v189
  %v192 = vunpack.c.l.s4 1983009808
  %v193 = vunpack.c.0.s8 %v192
  %v194 = vlaneseq
  %v195 = vshrl.u32 %v194, 7
  %v196 = vsub.s32 %v193, %v195
  %v197 = vrot.slane %v183, %v196
  %v198 = vcombine.high %v190, %v190
  %v199 = vcombine.high %v197, %v197
  %v200 = vcombine.high %v24, %v24
  %v202 = vunpack.c.l.s4 1983009808
  %v203 = vunpack.c.0.s8 %v202
  %v204 = vlaneseq
  %v205 = vshrl.u32 %v204, 7
  %v206 = vsub.s32 %v203, %v205
  %v207 = vrot.slane %v24, %v206
  %v209 = vunpack.c.l.s4 1983009808
  %v210 = vunpack.c.0.s8 %v209
  %v211 = vlaneseq
  %v212 = vshrl.u32 %v211, 7
  %v213 = vsub.s32 %v210, %v212
  %v214 = vrot.slane %v200, %v213
  %v215 = vcombine.high %v207, %v207
  %v216 = vcombine.high %v214, %v214
  %v217 = vcombine.high %v25, %v25
  %v219 = vunpack.c.l.s4 1983009808
  %v220 = vunpack.c.0.s8 %v219
  %v221 = vlaneseq
  %v222 = vshrl.u32 %v221, 7
  %v223 = vsub.s32 %v220, %v222
  %v224 = vrot.slane %v25, %v223
  %v226 = vunpack.c.l.s4 1983009808
  %v227 = vunpack.c.0.s8 %v226
  %v228 = vlaneseq
  %v229 = vshrl.u32 %v228, 7
  %v230 = vsub.s32 %v227, %v229
  %v231 = vrot.slane %v217, %v230
  %v232 = vcombine.high %v224, %v224
  %v233 = vcombine.high %v231, %v231
  %v234 = vcombine.high %v26, %v26
  %v236 = vunpack.c.l.s4 1983009808
  %v237 = vunpack.c.0.s8 %v236
  %v238 = vlaneseq
  %v239 = vshrl.u32 %v238, 7
  %v240 = vsub.s32 %v237, %v239
  %v241 = vrot.slane %v26, %v240
  %v243 = vunpack.c.l.s4 1983009808
  %v244 = vunpack.c.0.s8 %v243
  %v245 = vlaneseq
  %v246 = vshrl.u32 %v245, 7
  %v247 = vsub.s32 %v244, %v246
  %v248 = vrot.slane %v234, %v247
  %v249 = vcombine.high %v241, %v241
  %v250 = vcombine.high %v248, %v248
  %v251 = vcombine.high %v27, %v27
  %v253 = vunpack.c.l.s4 1983009808
  %v254 = vunpack.c.0.s8 %v253
  %v255 = vlaneseq
  %v256 = vshrl.u32 %v255, 7
  %v257 = vsub.s32 %v254, %v256
  %v258 = vrot.slane %v27, %v257
  %v260 = vunpack.c.l.s4 1983009808
  %v261 = vunpack.c.0.s8 %v260
  %v262 = vlaneseq
  %v263 = vshrl.u32 %v262, 7
  %v264 = vsub.s32 %v261, %v263
  %v265 = vrot.slane %v251, %v264
  %v266 = vcombine.high %v258, %v258
  %v267 = vcombine.high %v265, %v265
  %v268 = vcombine.high %v28, %v28
  %v270 = vunpack.c.l.s4 1983009808
  %v271 = vunpack.c.0.s8 %v270
  %v272 = vlaneseq
  %v273 = vshrl.u32 %v272, 7
  %v274 = vsub.s32 %v271, %v273
  %v275 = vrot.slane %v28, %v274
  %v277 = vunpack.c.l.s4 1983009808
  %v278 = vunpack.c.0.s8 %v277
  %v279 = vlaneseq
  %v280 = vshrl.u32 %v279, 7
  %v281 = vsub.s32 %v278, %v280
  %v282 = vrot.slane %v268, %v281
  %v283 = vcombine.high %v275, %v275
  %v284 = vcombine.high %v282, %v282
  %v285 = vcombine.high %v29, %v29
  %v287 = vunpack.c.l.s4 1983009808
  %v288 = vunpack.c.0.s8 %v287
  %v289 = vlaneseq
  %v290 = vshrl.u32 %v289, 7
  %v291 = vsub.s32 %v288, %v290
  %v292 = vrot.slane %v29, %v291
  %v294 = vunpack.c.l.s4 1983009808
  %v295 = vunpack.c.0.s8 %v294
  %v296 = vlaneseq
  %v297 = vshrl.u32 %v296, 7
  %v298 = vsub.s32 %v295, %v297
  %v299 = vrot.slane %v285, %v298
  %v300 = vcombine.high %v292, %v292
  %v301 = vcombine.high %v299, %v299
  %v302 = vcombine.high %v30, %v30
  %v304 = vunpack.c.l.s4 1983009808
  %v305 = vunpack.c.0.s8 %v304
  %v306 = vlaneseq
  %v307 = vshrl.u32 %v306, 7
  %v308 = vsub.s32 %v305, %v307
  %v309 = vrot.slane %v30, %v308
  %v311 = vunpack.c.l.s4 1983009808
  %v312 = vunpack.c.0.s8 %v311
  %v313 = vlaneseq
  %v314 = vshrl.u32 %v313, 7
  %v315 = vsub.s32 %v312, %v314
  %v316 = vrot.slane %v302, %v315
  %v317 = vcombine.high %v309, %v309
  %v318 = vcombine.high %v316, %v316
  %v383 = vpack.c.bf16 %v54, %v54
  %v384 = vpack.c.bf16 %v62, %v62
  %v385 = vpack.c.bf16 %v61, %v61
  %v386 = vpack.c.bf16 %v63, %v63
  %v387 = vpack.c.bf16 %v71, %v71
  %v388 = vpack.c.bf16 %v79, %v79
  %v389 = vpack.c.bf16 %v78, %v78
  %v390 = vpack.c.bf16 %v80, %v80
  %v391 = vpack.c.bf16 %v88, %v88
  %v392 = vpack.c.bf16 %v96, %v96
  %v393 = vpack.c.bf16 %v95, %v95
  %v394 = vpack.c.bf16 %v97, %v97
  %v395 = vpack.c.bf16 %v105, %v105
  %v396 = vpack.c.bf16 %v113, %v113
  %v397 = vpack.c.bf16 %v112, %v112
  %v398 = vpack.c.bf16 %v114, %v114
  %v399 = vpack.c.bf16 %v122, %v122
  %v400 = vpack.c.bf16 %v130, %v130
  %v401 = vpack.c.bf16 %v129, %v129
  %v402 = vpack.c.bf16 %v131, %v131
  %v403 = vpack.c.bf16 %v139, %v139
  %v404 = vpack.c.bf16 %v147, %v147
  %v405 = vpack.c.bf16 %v146, %v146
  %v406 = vpack.c.bf16 %v148, %v148
  %v407 = vpack.c.bf16 %v156, %v156
  %v408 = vpack.c.bf16 %v164, %v164
  %v409 = vpack.c.bf16 %v163, %v163
  %v410 = vpack.c.bf16 %v165, %v165
  %v411 = vpack.c.bf16 %v173, %v173
  %v412 = vpack.c.bf16 %v181, %v181
  %v413 = vpack.c.bf16 %v180, %v180
  %v414 = vpack.c.bf16 %v182, %v182
  %v415 = vpack.c.bf16 %v190, %v190
  %v416 = vpack.c.bf16 %v198, %v198
  %v417 = vpack.c.bf16 %v197, %v197
  %v418 = vpack.c.bf16 %v199, %v199
  %v419 = vpack.c.bf16 %v207, %v207
  %v420 = vpack.c.bf16 %v215, %v215
  %v421 = vpack.c.bf16 %v214, %v214
  %v422 = vpack.c.bf16 %v216, %v216
  %v423 = vpack.c.bf16 %v224, %v224
  %v424 = vpack.c.bf16 %v232, %v232
  %v425 = vpack.c.bf16 %v231, %v231
  %v426 = vpack.c.bf16 %v233, %v233
  %v427 = vpack.c.bf16 %v241, %v241
  %v428 = vpack.c.bf16 %v249, %v249
  %v429 = vpack.c.bf16 %v248, %v248
  %v430 = vpack.c.bf16 %v250, %v250
  %v431 = vpack.c.bf16 %v258, %v258
  %v432 = vpack.c.bf16 %v266, %v266
  %v433 = vpack.c.bf16 %v265, %v265
  %v434 = vpack.c.bf16 %v267, %v267
  %v435 = vpack.c.bf16 %v275, %v275
  %v436 = vpack.c.bf16 %v283, %v283
  %v437 = vpack.c.bf16 %v282, %v282
  %v438 = vpack.c.bf16 %v284, %v284
  %v439 = vpack.c.bf16 %v292, %v292
  %v440 = vpack.c.bf16 %v300, %v300
  %v441 = vpack.c.bf16 %v299, %v299
  %v442 = vpack.c.bf16 %v301, %v301
  %v443 = vpack.c.bf16 %v309, %v309
  %v444 = vpack.c.bf16 %v317, %v317
  %v445 = vpack.c.bf16 %v316, %v316
  %v446 = vpack.c.bf16 %v318, %v318
  %v447 = vld [vmem:[%s1] sm:$0xf]
  %v448 = vld [vmem:[%s1 + $0x4] sm:$0xf]
  %v449 = vld [vmem:[%s1 + $0x8] sm:$0xf]
  %v450 = vld [vmem:[%s1 + $0xc] sm:$0xf]
  %v451 = vld [vmem:[%s1 + $0x10] sm:$0xf]
  %v452 = vld [vmem:[%s1 + $0x14] sm:$0xf]
  %v453 = vld [vmem:[%s1 + $0x18] sm:$0xf]
  %v454 = vld [vmem:[%s1 + $0x1c] sm:$0xf]
  %v455 = vld [vmem:[%s1 + $0x20] sm:$0xf]
  %v456 = vld [vmem:[%s1 + $0x24] sm:$0xf]
  %v457 = vld [vmem:[%s1 + $0x28] sm:$0xf]
  %v458 = vld [vmem:[%s1 + $0x2c] sm:$0xf]
  %v459 = vld [vmem:[%s1 + $0x30] sm:$0xf]
  %v460 = vld [vmem:[%s1 + $0x34] sm:$0xf]
  %v461 = vld [vmem:[%s1 + $0x38] sm:$0xf]
  %v462 = vld [vmem:[%s1 + $0x3c] sm:$0xf]
  %v463 = vld [vmem:[%s1 + $0x40] sm:$0xf]
  %v464 = vld [vmem:[%s1 + $0x44] sm:$0xf]
  %v465 = vld [vmem:[%s1 + $0x48] sm:$0xf]
  %v466 = vld [vmem:[%s1 + $0x4c] sm:$0xf]
  %v467 = vld [vmem:[%s1 + $0x50] sm:$0xf]
  %v468 = vld [vmem:[%s1 + $0x54] sm:$0xf]
  %v469 = vld [vmem:[%s1 + $0x58] sm:$0xf]
  %v470 = vld [vmem:[%s1 + $0x5c] sm:$0xf]
  %v471 = vld [vmem:[%s1 + $0x60] sm:$0xf]
  %v472 = vld [vmem:[%s1 + $0x64] sm:$0xf]
  %v473 = vld [vmem:[%s1 + $0x68] sm:$0xf]
  %v474 = vld [vmem:[%s1 + $0x6c] sm:$0xf]
  %v475 = vld [vmem:[%s1 + $0x70] sm:$0xf]
  %v476 = vld [vmem:[%s1 + $0x74] sm:$0xf]
  %v477 = vld [vmem:[%s1 + $0x78] sm:$0xf]
  %v478 = vld [vmem:[%s1 + $0x7c] sm:$0xf]
  %v479 = vld [vmem:[%s1 + $0x80] sm:$0xf]
  %v480 = vld [vmem:[%s1 + $0x84] sm:$0xf]
  %v481 = vld [vmem:[%s1 + $0x88] sm:$0xf]
  %v482 = vld [vmem:[%s1 + $0x8c] sm:$0xf]
  %v483 = vld [vmem:[%s1 + $0x90] sm:$0xf]
  %v484 = vld [vmem:[%s1 + $0x94] sm:$0xf]
  %v485 = vld [vmem:[%s1 + $0x98] sm:$0xf]
  %v486 = vld [vmem:[%s1 + $0x9c] sm:$0xf]
  %v487 = vld [vmem:[%s1 + $0xa0] sm:$0xf]
  %v488 = vld [vmem:[%s1 + $0xa4] sm:$0xf]
  %v489 = vld [vmem:[%s1 + $0xa8] sm:$0xf]
  %v490 = vld [vmem:[%s1 + $0xac] sm:$0xf]
  %v491 = vld [vmem:[%s1 + $0xb0] sm:$0xf]
  %v492 = vld [vmem:[%s1 + $0xb4] sm:$0xf]
  %v493 = vld [vmem:[%s1 + $0xb8] sm:$0xf]
  %v494 = vld [vmem:[%s1 + $0xbc] sm:$0xf]
  %v495 = vld [vmem:[%s1 + $0xc0] sm:$0xf]
  %v496 = vld [vmem:[%s1 + $0xc4] sm:$0xf]
  %v497 = vld [vmem:[%s1 + $0xc8] sm:$0xf]
  %v498 = vld [vmem:[%s1 + $0xcc] sm:$0xf]
  %v499 = vld [vmem:[%s1 + $0xd0] sm:$0xf]
  %v500 = vld [vmem:[%s1 + $0xd4] sm:$0xf]
  %v501 = vld [vmem:[%s1 + $0xd8] sm:$0xf]
  %v502 = vld [vmem:[%s1 + $0xdc] sm:$0xf]
  %v503 = vld [vmem:[%s1 + $0xe0] sm:$0xf]
  %v504 = vld [vmem:[%s1 + $0xe4] sm:$0xf]
  %v505 = vld [vmem:[%s1 + $0xe8] sm:$0xf]
  %v506 = vld [vmem:[%s1 + $0xec] sm:$0xf]
  %v507 = vld [vmem:[%s1 + $0xf0] sm:$0xf]
  %v508 = vld [vmem:[%s1 + $0xf4] sm:$0xf]
  %v509 = vld [vmem:[%s1 + $0xf8] sm:$0xf]
  %v510 = vld [vmem:[%s1 + $0xfc] sm:$0xf]
  %v511 = vld [vmem:[%s1 + $0x100] sm:$0xf]
  %v512 = vld [vmem:[%s1 + $0x104] sm:$0xf]
  %v513 = vld [vmem:[%s1 + $0x108] sm:$0xf]
  %v514 = vld [vmem:[%s1 + $0x10c] sm:$0xf]
  %v515 = vld [vmem:[%s1 + $0x110] sm:$0xf]
  %v516 = vld [vmem:[%s1 + $0x114] sm:$0xf]
  %v517 = vld [vmem:[%s1 + $0x118] sm:$0xf]
  %v518 = vld [vmem:[%s1 + $0x11c] sm:$0xf]
  %v519 = vld [vmem:[%s1 + $0x120] sm:$0xf]
  %v520 = vld [vmem:[%s1 + $0x124] sm:$0xf]
  %v521 = vld [vmem:[%s1 + $0x128] sm:$0xf]
  %v522 = vld [vmem:[%s1 + $0x12c] sm:$0xf]
  %v523 = vld [vmem:[%s1 + $0x130] sm:$0xf]
  %v524 = vld [vmem:[%s1 + $0x134] sm:$0xf]
  %v525 = vld [vmem:[%s1 + $0x138] sm:$0xf]
  %v526 = vld [vmem:[%s1 + $0x13c] sm:$0xf]
  %v527 = vld [vmem:[%s1 + $0x140] sm:$0xf]
  %v528 = vld [vmem:[%s1 + $0x144] sm:$0xf]
  %v529 = vld [vmem:[%s1 + $0x148] sm:$0xf]
  %v530 = vld [vmem:[%s1 + $0x14c] sm:$0xf]
  %v531 = vld [vmem:[%s1 + $0x150] sm:$0xf]
  %v532 = vld [vmem:[%s1 + $0x154] sm:$0xf]
  %v533 = vld [vmem:[%s1 + $0x158] sm:$0xf]
  %v534 = vld [vmem:[%s1 + $0x15c] sm:$0xf]
  %v535 = vld [vmem:[%s1 + $0x160] sm:$0xf]
  %v536 = vld [vmem:[%s1 + $0x164] sm:$0xf]
  %v537 = vld [vmem:[%s1 + $0x168] sm:$0xf]
  %v538 = vld [vmem:[%s1 + $0x16c] sm:$0xf]
  %v539 = vld [vmem:[%s1 + $0x170] sm:$0xf]
  %v540 = vld [vmem:[%s1 + $0x174] sm:$0xf]
  %v541 = vld [vmem:[%s1 + $0x178] sm:$0xf]
  %v542 = vld [vmem:[%s1 + $0x17c] sm:$0xf]
  %v543 = vld [vmem:[%s1 + $0x180] sm:$0xf]
  %v544 = vld [vmem:[%s1 + $0x184] sm:$0xf]
  %v545 = vld [vmem:[%s1 + $0x188] sm:$0xf]
  %v546 = vld [vmem:[%s1 + $0x18c] sm:$0xf]
  %v547 = vld [vmem:[%s1 + $0x190] sm:$0xf]
  %v548 = vld [vmem:[%s1 + $0x194] sm:$0xf]
  %v549 = vld [vmem:[%s1 + $0x198] sm:$0xf]
  %v550 = vld [vmem:[%s1 + $0x19c] sm:$0xf]
  %v551 = vld [vmem:[%s1 + $0x1a0] sm:$0xf]
  %v552 = vld [vmem:[%s1 + $0x1a4] sm:$0xf]
  %v553 = vld [vmem:[%s1 + $0x1a8] sm:$0xf]
  %v554 = vld [vmem:[%s1 + $0x1ac] sm:$0xf]
  %v555 = vld [vmem:[%s1 + $0x1b0] sm:$0xf]
  %v556 = vld [vmem:[%s1 + $0x1b4] sm:$0xf]
  %v557 = vld [vmem:[%s1 + $0x1b8] sm:$0xf]
  %v558 = vld [vmem:[%s1 + $0x1bc] sm:$0xf]
  %v559 = vld [vmem:[%s1 + $0x1c0] sm:$0xf]
  %v560 = vld [vmem:[%s1 + $0x1c4] sm:$0xf]
  %v561 = vld [vmem:[%s1 + $0x1c8] sm:$0xf]
  %v562 = vld [vmem:[%s1 + $0x1cc] sm:$0xf]
  %v563 = vld [vmem:[%s1 + $0x1d0] sm:$0xf]
  %v564 = vld [vmem:[%s1 + $0x1d4] sm:$0xf]
  %v565 = vld [vmem:[%s1 + $0x1d8] sm:$0xf]
  %v566 = vld [vmem:[%s1 + $0x1dc] sm:$0xf]
  %v567 = vld [vmem:[%s1 + $0x1e0] sm:$0xf]
  %v568 = vld [vmem:[%s1 + $0x1e4] sm:$0xf]
  %v569 = vld [vmem:[%s1 + $0x1e8] sm:$0xf]
  %v570 = vld [vmem:[%s1 + $0x1ec] sm:$0xf]
  %v571 = vld [vmem:[%s1 + $0x1f0] sm:$0xf]
  %v572 = vld [vmem:[%s1 + $0x1f4] sm:$0xf]
  %v573 = vld [vmem:[%s1 + $0x1f8] sm:$0xf]
  %v574 = vld [vmem:[%s1 + $0x1fc] sm:$0xf]
  %v575 = vld [vmem:[%s1 + $0x200] sm:$0xf]
  %v576 = vld [vmem:[%s1 + $0x204] sm:$0xf]
  %v577 = vld [vmem:[%s1 + $0x208] sm:$0xf]
  %v578 = vld [vmem:[%s1 + $0x20c] sm:$0xf]
  %v579 = vld [vmem:[%s1 + $0x210] sm:$0xf]
  %v580 = vld [vmem:[%s1 + $0x214] sm:$0xf]
  %v581 = vld [vmem:[%s1 + $0x218] sm:$0xf]
  %v582 = vld [vmem:[%s1 + $0x21c] sm:$0xf]
  %v583 = vld [vmem:[%s1 + $0x220] sm:$0xf]
  %v584 = vld [vmem:[%s1 + $0x224] sm:$0xf]
  %v585 = vld [vmem:[%s1 + $0x228] sm:$0xf]
  %v586 = vld [vmem:[%s1 + $0x22c] sm:$0xf]
  %v587 = vld [vmem:[%s1 + $0x230] sm:$0xf]
  %v588 = vld [vmem:[%s1 + $0x234] sm:$0xf]
  %v589 = vld [vmem:[%s1 + $0x238] sm:$0xf]
  %v590 = vld [vmem:[%s1 + $0x23c] sm:$0xf]
  %v591 = vld [vmem:[%s1 + $0x240] sm:$0xf]
  %v592 = vld [vmem:[%s1 + $0x244] sm:$0xf]
  %v593 = vld [vmem:[%s1 + $0x248] sm:$0xf]
  %v594 = vld [vmem:[%s1 + $0x24c] sm:$0xf]
  %v595 = vld [vmem:[%s1 + $0x250] sm:$0xf]
  %v596 = vld [vmem:[%s1 + $0x254] sm:$0xf]
  %v597 = vld [vmem:[%s1 + $0x258] sm:$0xf]
  %v598 = vld [vmem:[%s1 + $0x25c] sm:$0xf]
  %v599 = vld [vmem:[%s1 + $0x260] sm:$0xf]
  %v600 = vld [vmem:[%s1 + $0x264] sm:$0xf]
  %v601 = vld [vmem:[%s1 + $0x268] sm:$0xf]
  %v602 = vld [vmem:[%s1 + $0x26c] sm:$0xf]
  %v603 = vld [vmem:[%s1 + $0x270] sm:$0xf]
  %v604 = vld [vmem:[%s1 + $0x274] sm:$0xf]
  %v605 = vld [vmem:[%s1 + $0x278] sm:$0xf]
  %v606 = vld [vmem:[%s1 + $0x27c] sm:$0xf]
  %v607 = vld [vmem:[%s1 + $0x280] sm:$0xf]
  %v608 = vld [vmem:[%s1 + $0x284] sm:$0xf]
  %v609 = vld [vmem:[%s1 + $0x288] sm:$0xf]
  %v610 = vld [vmem:[%s1 + $0x28c] sm:$0xf]
  %v611 = vld [vmem:[%s1 + $0x290] sm:$0xf]
  %v612 = vld [vmem:[%s1 + $0x294] sm:$0xf]
  %v613 = vld [vmem:[%s1 + $0x298] sm:$0xf]
  %v614 = vld [vmem:[%s1 + $0x29c] sm:$0xf]
  %v615 = vld [vmem:[%s1 + $0x2a0] sm:$0xf]
  %v616 = vld [vmem:[%s1 + $0x2a4] sm:$0xf]
  %v617 = vld [vmem:[%s1 + $0x2a8] sm:$0xf]
  %v618 = vld [vmem:[%s1 + $0x2ac] sm:$0xf]
  %v619 = vld [vmem:[%s1 + $0x2b0] sm:$0xf]
  %v620 = vld [vmem:[%s1 + $0x2b4] sm:$0xf]
  %v621 = vld [vmem:[%s1 + $0x2b8] sm:$0xf]
  %v622 = vld [vmem:[%s1 + $0x2bc] sm:$0xf]
  %v623 = vld [vmem:[%s1 + $0x2c0] sm:$0xf]
  %v624 = vld [vmem:[%s1 + $0x2c4] sm:$0xf]
  %v625 = vld [vmem:[%s1 + $0x2c8] sm:$0xf]
  %v626 = vld [vmem:[%s1 + $0x2cc] sm:$0xf]
  %v627 = vld [vmem:[%s1 + $0x2d0] sm:$0xf]
  %v628 = vld [vmem:[%s1 + $0x2d4] sm:$0xf]
  %v629 = vld [vmem:[%s1 + $0x2d8] sm:$0xf]
  %v630 = vld [vmem:[%s1 + $0x2dc] sm:$0xf]
  %v631 = vld [vmem:[%s1 + $0x2e0] sm:$0xf]
  %v632 = vld [vmem:[%s1 + $0x2e4] sm:$0xf]
  %v633 = vld [vmem:[%s1 + $0x2e8] sm:$0xf]
  %v634 = vld [vmem:[%s1 + $0x2ec] sm:$0xf]
  %v635 = vld [vmem:[%s1 + $0x2f0] sm:$0xf]
  %v636 = vld [vmem:[%s1 + $0x2f4] sm:$0xf]
  %v637 = vld [vmem:[%s1 + $0x2f8] sm:$0xf]
  %v638 = vld [vmem:[%s1 + $0x2fc] sm:$0xf]
  %v639 = vld [vmem:[%s1 + $0x300] sm:$0xf]
  %v640 = vld [vmem:[%s1 + $0x304] sm:$0xf]
  %v641 = vld [vmem:[%s1 + $0x308] sm:$0xf]
  %v642 = vld [vmem:[%s1 + $0x30c] sm:$0xf]
  %v643 = vld [vmem:[%s1 + $0x310] sm:$0xf]
  %v644 = vld [vmem:[%s1 + $0x314] sm:$0xf]
  %v645 = vld [vmem:[%s1 + $0x318] sm:$0xf]
  %v646 = vld [vmem:[%s1 + $0x31c] sm:$0xf]
  %v647 = vld [vmem:[%s1 + $0x320] sm:$0xf]
  %v648 = vld [vmem:[%s1 + $0x324] sm:$0xf]
  %v649 = vld [vmem:[%s1 + $0x328] sm:$0xf]
  %v650 = vld [vmem:[%s1 + $0x32c] sm:$0xf]
  %v651 = vld [vmem:[%s1 + $0x330] sm:$0xf]
  %v652 = vld [vmem:[%s1 + $0x334] sm:$0xf]
  %v653 = vld [vmem:[%s1 + $0x338] sm:$0xf]
  %v654 = vld [vmem:[%s1 + $0x33c] sm:$0xf]
  %v655 = vld [vmem:[%s1 + $0x340] sm:$0xf]
  %v656 = vld [vmem:[%s1 + $0x344] sm:$0xf]
  %v657 = vld [vmem:[%s1 + $0x348] sm:$0xf]
  %v658 = vld [vmem:[%s1 + $0x34c] sm:$0xf]
  %v659 = vld [vmem:[%s1 + $0x350] sm:$0xf]
  %v660 = vld [vmem:[%s1 + $0x354] sm:$0xf]
  %v661 = vld [vmem:[%s1 + $0x358] sm:$0xf]
  %v662 = vld [vmem:[%s1 + $0x35c] sm:$0xf]
  %v663 = vld [vmem:[%s1 + $0x360] sm:$0xf]
  %v664 = vld [vmem:[%s1 + $0x364] sm:$0xf]
  %v665 = vld [vmem:[%s1 + $0x368] sm:$0xf]
  %v666 = vld [vmem:[%s1 + $0x36c] sm:$0xf]
  %v667 = vld [vmem:[%s1 + $0x370] sm:$0xf]
  %v668 = vld [vmem:[%s1 + $0x374] sm:$0xf]
  %v669 = vld [vmem:[%s1 + $0x378] sm:$0xf]
  %v670 = vld [vmem:[%s1 + $0x37c] sm:$0xf]
  %v671 = vld [vmem:[%s1 + $0x380] sm:$0xf]
  %v672 = vld [vmem:[%s1 + $0x384] sm:$0xf]
  %v673 = vld [vmem:[%s1 + $0x388] sm:$0xf]
  %v674 = vld [vmem:[%s1 + $0x38c] sm:$0xf]
  %v675 = vld [vmem:[%s1 + $0x390] sm:$0xf]
  %v676 = vld [vmem:[%s1 + $0x394] sm:$0xf]
  %v677 = vld [vmem:[%s1 + $0x398] sm:$0xf]
  %v678 = vld [vmem:[%s1 + $0x39c] sm:$0xf]
  %v679 = vld [vmem:[%s1 + $0x3a0] sm:$0xf]
  %v680 = vld [vmem:[%s1 + $0x3a4] sm:$0xf]
  %v681 = vld [vmem:[%s1 + $0x3a8] sm:$0xf]
  %v682 = vld [vmem:[%s1 + $0x3ac] sm:$0xf]
  %v683 = vld [vmem:[%s1 + $0x3b0] sm:$0xf]
  %v684 = vld [vmem:[%s1 + $0x3b4] sm:$0xf]
  %v685 = vld [vmem:[%s1 + $0x3b8] sm:$0xf]
  %v686 = vld [vmem:[%s1 + $0x3bc] sm:$0xf]
  %v687 = vld [vmem:[%s1 + $0x3c0] sm:$0xf]
  %v688 = vld [vmem:[%s1 + $0x3c4] sm:$0xf]
  %v689 = vld [vmem:[%s1 + $0x3c8] sm:$0xf]
  %v690 = vld [vmem:[%s1 + $0x3cc] sm:$0xf]
  %v691 = vld [vmem:[%s1 + $0x3d0] sm:$0xf]
  %v692 = vld [vmem:[%s1 + $0x3d4] sm:$0xf]
  %v693 = vld [vmem:[%s1 + $0x3d8] sm:$0xf]
  %v694 = vld [vmem:[%s1 + $0x3dc] sm:$0xf]
  %v695 = vld [vmem:[%s1 + $0x3e0] sm:$0xf]
  %v696 = vld [vmem:[%s1 + $0x3e4] sm:$0xf]
  %v697 = vld [vmem:[%s1 + $0x3e8] sm:$0xf]
  %v698 = vld [vmem:[%s1 + $0x3ec] sm:$0xf]
  %v699 = vld [vmem:[%s1 + $0x3f0] sm:$0xf]
  %v700 = vld [vmem:[%s1 + $0x3f4] sm:$0xf]
  %v701 = vld [vmem:[%s1 + $0x3f8] sm:$0xf]
  %v702 = vld [vmem:[%s1 + $0x3fc] sm:$0xf]
  %v703 = vld [vmem:[%s1 + $0x400] sm:$0xf]
  %v704 = vld [vmem:[%s1 + $0x404] sm:$0xf]
  %v705 = vld [vmem:[%s1 + $0x408] sm:$0xf]
  %v706 = vld [vmem:[%s1 + $0x40c] sm:$0xf]
  %v707 = vld [vmem:[%s1 + $0x410] sm:$0xf]
  %v708 = vld [vmem:[%s1 + $0x414] sm:$0xf]
  %v709 = vld [vmem:[%s1 + $0x418] sm:$0xf]
  %v710 = vld [vmem:[%s1 + $0x41c] sm:$0xf]
  %v711 = vld [vmem:[%s1 + $0x420] sm:$0xf]
  %v712 = vld [vmem:[%s1 + $0x424] sm:$0xf]
  %v713 = vld [vmem:[%s1 + $0x428] sm:$0xf]
  %v714 = vld [vmem:[%s1 + $0x42c] sm:$0xf]
  %v715 = vld [vmem:[%s1 + $0x430] sm:$0xf]
  %v716 = vld [vmem:[%s1 + $0x434] sm:$0xf]
  %v717 = vld [vmem:[%s1 + $0x438] sm:$0xf]
  %v718 = vld [vmem:[%s1 + $0x43c] sm:$0xf]
  %v719 = vld [vmem:[%s1 + $0x440] sm:$0xf]
  %v720 = vld [vmem:[%s1 + $0x444] sm:$0xf]
  %v721 = vld [vmem:[%s1 + $0x448] sm:$0xf]
  %v722 = vld [vmem:[%s1 + $0x44c] sm:$0xf]
  %v723 = vld [vmem:[%s1 + $0x450] sm:$0xf]
  %v724 = vld [vmem:[%s1 + $0x454] sm:$0xf]
  %v725 = vld [vmem:[%s1 + $0x458] sm:$0xf]
  %v726 = vld [vmem:[%s1 + $0x45c] sm:$0xf]
  %v727 = vld [vmem:[%s1 + $0x460] sm:$0xf]
  %v728 = vld [vmem:[%s1 + $0x464] sm:$0xf]
  %v729 = vld [vmem:[%s1 + $0x468] sm:$0xf]
  %v730 = vld [vmem:[%s1 + $0x46c] sm:$0xf]
  %v731 = vld [vmem:[%s1 + $0x470] sm:$0xf]
  %v732 = vld [vmem:[%s1 + $0x474] sm:$0xf]
  %v733 = vld [vmem:[%s1 + $0x478] sm:$0xf]
  %v734 = vld [vmem:[%s1 + $0x47c] sm:$0xf]
  %v735 = vld [vmem:[%s1 + $0x480] sm:$0xf]
  %v736 = vld [vmem:[%s1 + $0x484] sm:$0xf]
  %v737 = vld [vmem:[%s1 + $0x488] sm:$0xf]
  %v738 = vld [vmem:[%s1 + $0x48c] sm:$0xf]
  %v739 = vld [vmem:[%s1 + $0x490] sm:$0xf]
  %v740 = vld [vmem:[%s1 + $0x494] sm:$0xf]
  %v741 = vld [vmem:[%s1 + $0x498] sm:$0xf]
  %v742 = vld [vmem:[%s1 + $0x49c] sm:$0xf]
  %v743 = vld [vmem:[%s1 + $0x4a0] sm:$0xf]
  %v744 = vld [vmem:[%s1 + $0x4a4] sm:$0xf]
  %v745 = vld [vmem:[%s1 + $0x4a8] sm:$0xf]
  %v746 = vld [vmem:[%s1 + $0x4ac] sm:$0xf]
  %v747 = vld [vmem:[%s1 + $0x4b0] sm:$0xf]
  %v748 = vld [vmem:[%s1 + $0x4b4] sm:$0xf]
  %v749 = vld [vmem:[%s1 + $0x4b8] sm:$0xf]
  %v750 = vld [vmem:[%s1 + $0x4bc] sm:$0xf]
  %v751 = vld [vmem:[%s1 + $0x4c0] sm:$0xf]
  %v752 = vld [vmem:[%s1 + $0x4c4] sm:$0xf]
  %v753 = vld [vmem:[%s1 + $0x4c8] sm:$0xf]
  %v754 = vld [vmem:[%s1 + $0x4cc] sm:$0xf]
  %v755 = vld [vmem:[%s1 + $0x4d0] sm:$0xf]
  %v756 = vld [vmem:[%s1 + $0x4d4] sm:$0xf]
  %v757 = vld [vmem:[%s1 + $0x4d8] sm:$0xf]
  %v758 = vld [vmem:[%s1 + $0x4dc] sm:$0xf]
  %v759 = vld [vmem:[%s1 + $0x4e0] sm:$0xf]
  %v760 = vld [vmem:[%s1 + $0x4e4] sm:$0xf]
  %v761 = vld [vmem:[%s1 + $0x4e8] sm:$0xf]
  %v762 = vld [vmem:[%s1 + $0x4ec] sm:$0xf]
  %v763 = vld [vmem:[%s1 + $0x4f0] sm:$0xf]
  %v764 = vld [vmem:[%s1 + $0x4f4] sm:$0xf]
  %v765 = vld [vmem:[%s1 + $0x4f8] sm:$0xf]
  %v766 = vld [vmem:[%s1 + $0x4fc] sm:$0xf]
  %v767 = vld [vmem:[%s1 + $0x500] sm:$0xf]
  %v768 = vld [vmem:[%s1 + $0x504] sm:$0xf]
  %v769 = vld [vmem:[%s1 + $0x508] sm:$0xf]
  %v770 = vld [vmem:[%s1 + $0x50c] sm:$0xf]
  %v771 = vld [vmem:[%s1 + $0x510] sm:$0xf]
  %v772 = vld [vmem:[%s1 + $0x514] sm:$0xf]
  %v773 = vld [vmem:[%s1 + $0x518] sm:$0xf]
  %v774 = vld [vmem:[%s1 + $0x51c] sm:$0xf]
  %v775 = vld [vmem:[%s1 + $0x520] sm:$0xf]
  %v776 = vld [vmem:[%s1 + $0x524] sm:$0xf]
  %v777 = vld [vmem:[%s1 + $0x528] sm:$0xf]
  %v778 = vld [vmem:[%s1 + $0x52c] sm:$0xf]
  %v779 = vld [vmem:[%s1 + $0x530] sm:$0xf]
  %v780 = vld [vmem:[%s1 + $0x534] sm:$0xf]
  %v781 = vld [vmem:[%s1 + $0x538] sm:$0xf]
  %v782 = vld [vmem:[%s1 + $0x53c] sm:$0xf]
  %v783 = vld [vmem:[%s1 + $0x540] sm:$0xf]
  %v784 = vld [vmem:[%s1 + $0x544] sm:$0xf]
  %v785 = vld [vmem:[%s1 + $0x548] sm:$0xf]
  %v786 = vld [vmem:[%s1 + $0x54c] sm:$0xf]
  %v787 = vld [vmem:[%s1 + $0x550] sm:$0xf]
  %v788 = vld [vmem:[%s1 + $0x554] sm:$0xf]
  %v789 = vld [vmem:[%s1 + $0x558] sm:$0xf]
  %v790 = vld [vmem:[%s1 + $0x55c] sm:$0xf]
  %v791 = vld [vmem:[%s1 + $0x560] sm:$0xf]
  %v792 = vld [vmem:[%s1 + $0x564] sm:$0xf]
  %v793 = vld [vmem:[%s1 + $0x568] sm:$0xf]
  %v794 = vld [vmem:[%s1 + $0x56c] sm:$0xf]
  %v795 = vld [vmem:[%s1 + $0x570] sm:$0xf]
  %v796 = vld [vmem:[%s1 + $0x574] sm:$0xf]
  %v797 = vld [vmem:[%s1 + $0x578] sm:$0xf]
  %v798 = vld [vmem:[%s1 + $0x57c] sm:$0xf]
  %v799 = vld [vmem:[%s1 + $0x580] sm:$0xf]
  %v800 = vld [vmem:[%s1 + $0x584] sm:$0xf]
  %v801 = vld [vmem:[%s1 + $0x588] sm:$0xf]
  %v802 = vld [vmem:[%s1 + $0x58c] sm:$0xf]
  %v803 = vld [vmem:[%s1 + $0x590] sm:$0xf]
  %v804 = vld [vmem:[%s1 + $0x594] sm:$0xf]
  %v805 = vld [vmem:[%s1 + $0x598] sm:$0xf]
  %v806 = vld [vmem:[%s1 + $0x59c] sm:$0xf]
  %v807 = vld [vmem:[%s1 + $0x5a0] sm:$0xf]
  %v808 = vld [vmem:[%s1 + $0x5a4] sm:$0xf]
  %v809 = vld [vmem:[%s1 + $0x5a8] sm:$0xf]
  %v810 = vld [vmem:[%s1 + $0x5ac] sm:$0xf]
  %v811 = vld [vmem:[%s1 + $0x5b0] sm:$0xf]
  %v812 = vld [vmem:[%s1 + $0x5b4] sm:$0xf]
  %v813 = vld [vmem:[%s1 + $0x5b8] sm:$0xf]
  %v814 = vld [vmem:[%s1 + $0x5bc] sm:$0xf]
  %v815 = vld [vmem:[%s1 + $0x5c0] sm:$0xf]
  %v816 = vld [vmem:[%s1 + $0x5c4] sm:$0xf]
  %v817 = vld [vmem:[%s1 + $0x5c8] sm:$0xf]
  %v818 = vld [vmem:[%s1 + $0x5cc] sm:$0xf]
  %v819 = vld [vmem:[%s1 + $0x5d0] sm:$0xf]
  %v820 = vld [vmem:[%s1 + $0x5d4] sm:$0xf]
  %v821 = vld [vmem:[%s1 + $0x5d8] sm:$0xf]
  %v822 = vld [vmem:[%s1 + $0x5dc] sm:$0xf]
  %v823 = vld [vmem:[%s1 + $0x5e0] sm:$0xf]
  %v824 = vld [vmem:[%s1 + $0x5e4] sm:$0xf]
  %v825 = vld [vmem:[%s1 + $0x5e8] sm:$0xf]
  %v826 = vld [vmem:[%s1 + $0x5ec] sm:$0xf]
  %v827 = vld [vmem:[%s1 + $0x5f0] sm:$0xf]
  %v828 = vld [vmem:[%s1 + $0x5f4] sm:$0xf]
  %v829 = vld [vmem:[%s1 + $0x5f8] sm:$0xf]
  %v830 = vld [vmem:[%s1 + $0x5fc] sm:$0xf]
  %v831 = vld [vmem:[%s1 + $0x600] sm:$0xf]
  %v832 = vld [vmem:[%s1 + $0x604] sm:$0xf]
  %v833 = vld [vmem:[%s1 + $0x608] sm:$0xf]
  %v834 = vld [vmem:[%s1 + $0x60c] sm:$0xf]
  %v835 = vld [vmem:[%s1 + $0x610] sm:$0xf]
  %v836 = vld [vmem:[%s1 + $0x614] sm:$0xf]
  %v837 = vld [vmem:[%s1 + $0x618] sm:$0xf]
  %v838 = vld [vmem:[%s1 + $0x61c] sm:$0xf]
  %v839 = vld [vmem:[%s1 + $0x620] sm:$0xf]
  %v840 = vld [vmem:[%s1 + $0x624] sm:$0xf]
  %v841 = vld [vmem:[%s1 + $0x628] sm:$0xf]
  %v842 = vld [vmem:[%s1 + $0x62c] sm:$0xf]
  %v843 = vld [vmem:[%s1 + $0x630] sm:$0xf]
  %v844 = vld [vmem:[%s1 + $0x634] sm:$0xf]
  %v845 = vld [vmem:[%s1 + $0x638] sm:$0xf]
  %v846 = vld [vmem:[%s1 + $0x63c] sm:$0xf]
  %v847 = vld [vmem:[%s1 + $0x640] sm:$0xf]
  %v848 = vld [vmem:[%s1 + $0x644] sm:$0xf]
  %v849 = vld [vmem:[%s1 + $0x648] sm:$0xf]
  %v850 = vld [vmem:[%s1 + $0x64c] sm:$0xf]
  %v851 = vld [vmem:[%s1 + $0x650] sm:$0xf]
  %v852 = vld [vmem:[%s1 + $0x654] sm:$0xf]
  %v853 = vld [vmem:[%s1 + $0x658] sm:$0xf]
  %v854 = vld [vmem:[%s1 + $0x65c] sm:$0xf]
  %v855 = vld [vmem:[%s1 + $0x660] sm:$0xf]
  %v856 = vld [vmem:[%s1 + $0x664] sm:$0xf]
  %v857 = vld [vmem:[%s1 + $0x668] sm:$0xf]
  %v858 = vld [vmem:[%s1 + $0x66c] sm:$0xf]
  %v859 = vld [vmem:[%s1 + $0x670] sm:$0xf]
  %v860 = vld [vmem:[%s1 + $0x674] sm:$0xf]
  %v861 = vld [vmem:[%s1 + $0x678] sm:$0xf]
  %v862 = vld [vmem:[%s1 + $0x67c] sm:$0xf]
  %v863 = vld [vmem:[%s1 + $0x680] sm:$0xf]
  %v864 = vld [vmem:[%s1 + $0x684] sm:$0xf]
  %v865 = vld [vmem:[%s1 + $0x688] sm:$0xf]
  %v866 = vld [vmem:[%s1 + $0x68c] sm:$0xf]
  %v867 = vld [vmem:[%s1 + $0x690] sm:$0xf]
  %v868 = vld [vmem:[%s1 + $0x694] sm:$0xf]
  %v869 = vld [vmem:[%s1 + $0x698] sm:$0xf]
  %v870 = vld [vmem:[%s1 + $0x69c] sm:$0xf]
  %v871 = vld [vmem:[%s1 + $0x6a0] sm:$0xf]
  %v872 = vld [vmem:[%s1 + $0x6a4] sm:$0xf]
  %v873 = vld [vmem:[%s1 + $0x6a8] sm:$0xf]
  %v874 = vld [vmem:[%s1 + $0x6ac] sm:$0xf]
  %v875 = vld [vmem:[%s1 + $0x6b0] sm:$0xf]
  %v876 = vld [vmem:[%s1 + $0x6b4] sm:$0xf]
  %v877 = vld [vmem:[%s1 + $0x6b8] sm:$0xf]
  %v878 = vld [vmem:[%s1 + $0x6bc] sm:$0xf]
  %v879 = vld [vmem:[%s1 + $0x6c0] sm:$0xf]
  %v880 = vld [vmem:[%s1 + $0x6c4] sm:$0xf]
  %v881 = vld [vmem:[%s1 + $0x6c8] sm:$0xf]
  %v882 = vld [vmem:[%s1 + $0x6cc] sm:$0xf]
  %v883 = vld [vmem:[%s1 + $0x6d0] sm:$0xf]
  %v884 = vld [vmem:[%s1 + $0x6d4] sm:$0xf]
  %v885 = vld [vmem:[%s1 + $0x6d8] sm:$0xf]
  %v886 = vld [vmem:[%s1 + $0x6dc] sm:$0xf]
  %v887 = vld [vmem:[%s1 + $0x6e0] sm:$0xf]
  %v888 = vld [vmem:[%s1 + $0x6e4] sm:$0xf]
  %v889 = vld [vmem:[%s1 + $0x6e8] sm:$0xf]
  %v890 = vld [vmem:[%s1 + $0x6ec] sm:$0xf]
  %v891 = vld [vmem:[%s1 + $0x6f0] sm:$0xf]
  %v892 = vld [vmem:[%s1 + $0x6f4] sm:$0xf]
  %v893 = vld [vmem:[%s1 + $0x6f8] sm:$0xf]
  %v894 = vld [vmem:[%s1 + $0x6fc] sm:$0xf]
  %v895 = vld [vmem:[%s1 + $0x700] sm:$0xf]
  %v896 = vld [vmem:[%s1 + $0x704] sm:$0xf]
  %v897 = vld [vmem:[%s1 + $0x708] sm:$0xf]
  %v898 = vld [vmem:[%s1 + $0x70c] sm:$0xf]
  %v899 = vld [vmem:[%s1 + $0x710] sm:$0xf]
  %v900 = vld [vmem:[%s1 + $0x714] sm:$0xf]
  %v901 = vld [vmem:[%s1 + $0x718] sm:$0xf]
  %v902 = vld [vmem:[%s1 + $0x71c] sm:$0xf]
  %v903 = vld [vmem:[%s1 + $0x720] sm:$0xf]
  %v904 = vld [vmem:[%s1 + $0x724] sm:$0xf]
  %v905 = vld [vmem:[%s1 + $0x728] sm:$0xf]
  %v906 = vld [vmem:[%s1 + $0x72c] sm:$0xf]
  %v907 = vld [vmem:[%s1 + $0x730] sm:$0xf]
  %v908 = vld [vmem:[%s1 + $0x734] sm:$0xf]
  %v909 = vld [vmem:[%s1 + $0x738] sm:$0xf]
  %v910 = vld [vmem:[%s1 + $0x73c] sm:$0xf]
  %v911 = vld [vmem:[%s1 + $0x740] sm:$0xf]
  %v912 = vld [vmem:[%s1 + $0x744] sm:$0xf]
  %v913 = vld [vmem:[%s1 + $0x748] sm:$0xf]
  %v914 = vld [vmem:[%s1 + $0x74c] sm:$0xf]
  %v915 = vld [vmem:[%s1 + $0x750] sm:$0xf]
  %v916 = vld [vmem:[%s1 + $0x754] sm:$0xf]
  %v917 = vld [vmem:[%s1 + $0x758] sm:$0xf]
  %v918 = vld [vmem:[%s1 + $0x75c] sm:$0xf]
  %v919 = vld [vmem:[%s1 + $0x760] sm:$0xf]
  %v920 = vld [vmem:[%s1 + $0x764] sm:$0xf]
  %v921 = vld [vmem:[%s1 + $0x768] sm:$0xf]
  %v922 = vld [vmem:[%s1 + $0x76c] sm:$0xf]
  %v923 = vld [vmem:[%s1 + $0x770] sm:$0xf]
  %v924 = vld [vmem:[%s1 + $0x774] sm:$0xf]
  %v925 = vld [vmem:[%s1 + $0x778] sm:$0xf]
  %v926 = vld [vmem:[%s1 + $0x77c] sm:$0xf]
  %v927 = vld [vmem:[%s1 + $0x780] sm:$0xf]
  %v928 = vld [vmem:[%s1 + $0x784] sm:$0xf]
  %v929 = vld [vmem:[%s1 + $0x788] sm:$0xf]
  %v930 = vld [vmem:[%s1 + $0x78c] sm:$0xf]
  %v931 = vld [vmem:[%s1 + $0x790] sm:$0xf]
  %v932 = vld [vmem:[%s1 + $0x794] sm:$0xf]
  %v933 = vld [vmem:[%s1 + $0x798] sm:$0xf]
  %v934 = vld [vmem:[%s1 + $0x79c] sm:$0xf]
  %v935 = vld [vmem:[%s1 + $0x7a0] sm:$0xf]
  %v936 = vld [vmem:[%s1 + $0x7a4] sm:$0xf]
  %v937 = vld [vmem:[%s1 + $0x7a8] sm:$0xf]
  %v938 = vld [vmem:[%s1 + $0x7ac] sm:$0xf]
  %v939 = vld [vmem:[%s1 + $0x7b0] sm:$0xf]
  %v940 = vld [vmem:[%s1 + $0x7b4] sm:$0xf]
  %v941 = vld [vmem:[%s1 + $0x7b8] sm:$0xf]
  %v942 = vld [vmem:[%s1 + $0x7bc] sm:$0xf]
  %v943 = vld [vmem:[%s1 + $0x7c0] sm:$0xf]
  %v944 = vld [vmem:[%s1 + $0x7c4] sm:$0xf]
  %v945 = vld [vmem:[%s1 + $0x7c8] sm:$0xf]
  %v946 = vld [vmem:[%s1 + $0x7cc] sm:$0xf]
  %v947 = vld [vmem:[%s1 + $0x7d0] sm:$0xf]
  %v948 = vld [vmem:[%s1 + $0x7d4] sm:$0xf]
  %v949 = vld [vmem:[%s1 + $0x7d8] sm:$0xf]
  %v950 = vld [vmem:[%s1 + $0x7dc] sm:$0xf]
  %v951 = vld [vmem:[%s1 + $0x7e0] sm:$0xf]
  %v952 = vld [vmem:[%s1 + $0x7e4] sm:$0xf]
  %v953 = vld [vmem:[%s1 + $0x7e8] sm:$0xf]
  %v954 = vld [vmem:[%s1 + $0x7ec] sm:$0xf]
  %v955 = vld [vmem:[%s1 + $0x7f0] sm:$0xf]
  %v956 = vld [vmem:[%s1 + $0x7f4] sm:$0xf]
  %v957 = vld [vmem:[%s1 + $0x7f8] sm:$0xf]
  %v958 = vld [vmem:[%s1 + $0x7fc] sm:$0xf]
  %v959 = vld [vmem:[%s1 + $0x800] sm:$0xf]
  %v960 = vld [vmem:[%s1 + $0x804] sm:$0xf]
  %v961 = vld [vmem:[%s1 + $0x808] sm:$0xf]
  %v962 = vld [vmem:[%s1 + $0x80c] sm:$0xf]
  %v963 = vld [vmem:[%s1 + $0x810] sm:$0xf]
  %v964 = vld [vmem:[%s1 + $0x814] sm:$0xf]
  %v965 = vld [vmem:[%s1 + $0x818] sm:$0xf]
  %v966 = vld [vmem:[%s1 + $0x81c] sm:$0xf]
  %v967 = vld [vmem:[%s1 + $0x820] sm:$0xf]
  %v968 = vld [vmem:[%s1 + $0x824] sm:$0xf]
  %v969 = vld [vmem:[%s1 + $0x828] sm:$0xf]
  %v970 = vld [vmem:[%s1 + $0x82c] sm:$0xf]
  %v971 = vld [vmem:[%s1 + $0x830] sm:$0xf]
  %v972 = vld [vmem:[%s1 + $0x834] sm:$0xf]
  %v973 = vld [vmem:[%s1 + $0x838] sm:$0xf]
  %v974 = vld [vmem:[%s1 + $0x83c] sm:$0xf]
  %v975 = vld [vmem:[%s1 + $0x840] sm:$0xf]
  %v976 = vld [vmem:[%s1 + $0x844] sm:$0xf]
  %v977 = vld [vmem:[%s1 + $0x848] sm:$0xf]
  %v978 = vld [vmem:[%s1 + $0x84c] sm:$0xf]
  %v979 = vld [vmem:[%s1 + $0x850] sm:$0xf]
  %v980 = vld [vmem:[%s1 + $0x854] sm:$0xf]
  %v981 = vld [vmem:[%s1 + $0x858] sm:$0xf]
  %v982 = vld [vmem:[%s1 + $0x85c] sm:$0xf]
  %v983 = vld [vmem:[%s1 + $0x860] sm:$0xf]
  %v984 = vld [vmem:[%s1 + $0x864] sm:$0xf]
  %v985 = vld [vmem:[%s1 + $0x868] sm:$0xf]
  %v986 = vld [vmem:[%s1 + $0x86c] sm:$0xf]
  %v987 = vld [vmem:[%s1 + $0x870] sm:$0xf]
  %v988 = vld [vmem:[%s1 + $0x874] sm:$0xf]
  %v989 = vld [vmem:[%s1 + $0x878] sm:$0xf]
  %v990 = vld [vmem:[%s1 + $0x87c] sm:$0xf]
  %v991 = vld [vmem:[%s1 + $0x880] sm:$0xf]
  %v992 = vld [vmem:[%s1 + $0x884] sm:$0xf]
  %v993 = vld [vmem:[%s1 + $0x888] sm:$0xf]
  %v994 = vld [vmem:[%s1 + $0x88c] sm:$0xf]
  %v995 = vld [vmem:[%s1 + $0x890] sm:$0xf]
  %v996 = vld [vmem:[%s1 + $0x894] sm:$0xf]
  %v997 = vld [vmem:[%s1 + $0x898] sm:$0xf]
  %v998 = vld [vmem:[%s1 + $0x89c] sm:$0xf]
  %v999 = vld [vmem:[%s1 + $0x8a0] sm:$0xf]
  %v1000 = vld [vmem:[%s1 + $0x8a4] sm:$0xf]
  %v1001 = vld [vmem:[%s1 + $0x8a8] sm:$0xf]
  %v1002 = vld [vmem:[%s1 + $0x8ac] sm:$0xf]
  %v1003 = vld [vmem:[%s1 + $0x8b0] sm:$0xf]
  %v1004 = vld [vmem:[%s1 + $0x8b4] sm:$0xf]
  %v1005 = vld [vmem:[%s1 + $0x8b8] sm:$0xf]
  %v1006 = vld [vmem:[%s1 + $0x8bc] sm:$0xf]
  %v1007 = vld [vmem:[%s1 + $0x8c0] sm:$0xf]
  %v1008 = vld [vmem:[%s1 + $0x8c4] sm:$0xf]
  %v1009 = vld [vmem:[%s1 + $0x8c8] sm:$0xf]
  %v1010 = vld [vmem:[%s1 + $0x8cc] sm:$0xf]
  %v1011 = vld [vmem:[%s1 + $0x8d0] sm:$0xf]
  %v1012 = vld [vmem:[%s1 + $0x8d4] sm:$0xf]
  %v1013 = vld [vmem:[%s1 + $0x8d8] sm:$0xf]
  %v1014 = vld [vmem:[%s1 + $0x8dc] sm:$0xf]
  %v1015 = vld [vmem:[%s1 + $0x8e0] sm:$0xf]
  %v1016 = vld [vmem:[%s1 + $0x8e4] sm:$0xf]
  %v1017 = vld [vmem:[%s1 + $0x8e8] sm:$0xf]
  %v1018 = vld [vmem:[%s1 + $0x8ec] sm:$0xf]
  %v1019 = vld [vmem:[%s1 + $0x8f0] sm:$0xf]
  %v1020 = vld [vmem:[%s1 + $0x8f4] sm:$0xf]
  %v1021 = vld [vmem:[%s1 + $0x8f8] sm:$0xf]
  %v1022 = vld [vmem:[%s1 + $0x8fc] sm:$0xf]
  %v1023 = vld [vmem:[%s1 + $0x900] sm:$0xf]
  %v1024 = vld [vmem:[%s1 + $0x904] sm:$0xf]
  %v1025 = vld [vmem:[%s1 + $0x908] sm:$0xf]
  %v1026 = vld [vmem:[%s1 + $0x90c] sm:$0xf]
  %v1027 = vld [vmem:[%s1 + $0x910] sm:$0xf]
  %v1028 = vld [vmem:[%s1 + $0x914] sm:$0xf]
  %v1029 = vld [vmem:[%s1 + $0x918] sm:$0xf]
  %v1030 = vld [vmem:[%s1 + $0x91c] sm:$0xf]
  %v1031 = vld [vmem:[%s1 + $0x920] sm:$0xf]
  %v1032 = vld [vmem:[%s1 + $0x924] sm:$0xf]
  %v1033 = vld [vmem:[%s1 + $0x928] sm:$0xf]
  %v1034 = vld [vmem:[%s1 + $0x92c] sm:$0xf]
  %v1035 = vld [vmem:[%s1 + $0x930] sm:$0xf]
  %v1036 = vld [vmem:[%s1 + $0x934] sm:$0xf]
  %v1037 = vld [vmem:[%s1 + $0x938] sm:$0xf]
  %v1038 = vld [vmem:[%s1 + $0x93c] sm:$0xf]
  %v1039 = vld [vmem:[%s1 + $0x940] sm:$0xf]
  %v1040 = vld [vmem:[%s1 + $0x944] sm:$0xf]
  %v1041 = vld [vmem:[%s1 + $0x948] sm:$0xf]
  %v1042 = vld [vmem:[%s1 + $0x94c] sm:$0xf]
  %v1043 = vld [vmem:[%s1 + $0x950] sm:$0xf]
  %v1044 = vld [vmem:[%s1 + $0x954] sm:$0xf]
  %v1045 = vld [vmem:[%s1 + $0x958] sm:$0xf]
  %v1046 = vld [vmem:[%s1 + $0x95c] sm:$0xf]
  %v1047 = vld [vmem:[%s1 + $0x960] sm:$0xf]
  %v1048 = vld [vmem:[%s1 + $0x964] sm:$0xf]
  %v1049 = vld [vmem:[%s1 + $0x968] sm:$0xf]
  %v1050 = vld [vmem:[%s1 + $0x96c] sm:$0xf]
  %v1051 = vld [vmem:[%s1 + $0x970] sm:$0xf]
  %v1052 = vld [vmem:[%s1 + $0x974] sm:$0xf]
  %v1053 = vld [vmem:[%s1 + $0x978] sm:$0xf]
  %v1054 = vld [vmem:[%s1 + $0x97c] sm:$0xf]
  %v1055 = vld [vmem:[%s1 + $0x980] sm:$0xf]
  %v1056 = vld [vmem:[%s1 + $0x984] sm:$0xf]
  %v1057 = vld [vmem:[%s1 + $0x988] sm:$0xf]
  %v1058 = vld [vmem:[%s1 + $0x98c] sm:$0xf]
  %v1059 = vld [vmem:[%s1 + $0x990] sm:$0xf]
  %v1060 = vld [vmem:[%s1 + $0x994] sm:$0xf]
  %v1061 = vld [vmem:[%s1 + $0x998] sm:$0xf]
  %v1062 = vld [vmem:[%s1 + $0x99c] sm:$0xf]
  %v1063 = vld [vmem:[%s1 + $0x9a0] sm:$0xf]
  %v1064 = vld [vmem:[%s1 + $0x9a4] sm:$0xf]
  %v1065 = vld [vmem:[%s1 + $0x9a8] sm:$0xf]
  %v1066 = vld [vmem:[%s1 + $0x9ac] sm:$0xf]
  %v1067 = vld [vmem:[%s1 + $0x9b0] sm:$0xf]
  %v1068 = vld [vmem:[%s1 + $0x9b4] sm:$0xf]
  %v1069 = vld [vmem:[%s1 + $0x9b8] sm:$0xf]
  %v1070 = vld [vmem:[%s1 + $0x9bc] sm:$0xf]
  %v1071 = vld [vmem:[%s1 + $0x9c0] sm:$0xf]
  %v1072 = vld [vmem:[%s1 + $0x9c4] sm:$0xf]
  %v1073 = vld [vmem:[%s1 + $0x9c8] sm:$0xf]
  %v1074 = vld [vmem:[%s1 + $0x9cc] sm:$0xf]
  %v1075 = vld [vmem:[%s1 + $0x9d0] sm:$0xf]
  %v1076 = vld [vmem:[%s1 + $0x9d4] sm:$0xf]
  %v1077 = vld [vmem:[%s1 + $0x9d8] sm:$0xf]
  %v1078 = vld [vmem:[%s1 + $0x9dc] sm:$0xf]
  %v1079 = vld [vmem:[%s1 + $0x9e0] sm:$0xf]
  %v1080 = vld [vmem:[%s1 + $0x9e4] sm:$0xf]
  %v1081 = vld [vmem:[%s1 + $0x9e8] sm:$0xf]
  %v1082 = vld [vmem:[%s1 + $0x9ec] sm:$0xf]
  %v1083 = vld [vmem:[%s1 + $0x9f0] sm:$0xf]
  %v1084 = vld [vmem:[%s1 + $0x9f4] sm:$0xf]
  %v1085 = vld [vmem:[%s1 + $0x9f8] sm:$0xf]
  %v1086 = vld [vmem:[%s1 + $0x9fc] sm:$0xf]
  %v1087 = vld [vmem:[%s1 + $0xa00] sm:$0xf]
  %v1088 = vld [vmem:[%s1 + $0xa04] sm:$0xf]
  %v1089 = vld [vmem:[%s1 + $0xa08] sm:$0xf]
  %v1090 = vld [vmem:[%s1 + $0xa0c] sm:$0xf]
  %v1091 = vld [vmem:[%s1 + $0xa10] sm:$0xf]
  %v1092 = vld [vmem:[%s1 + $0xa14] sm:$0xf]
  %v1093 = vld [vmem:[%s1 + $0xa18] sm:$0xf]
  %v1094 = vld [vmem:[%s1 + $0xa1c] sm:$0xf]
  %v1095 = vld [vmem:[%s1 + $0xa20] sm:$0xf]
  %v1096 = vld [vmem:[%s1 + $0xa24] sm:$0xf]
  %v1097 = vld [vmem:[%s1 + $0xa28] sm:$0xf]
  %v1098 = vld [vmem:[%s1 + $0xa2c] sm:$0xf]
  %v1099 = vld [vmem:[%s1 + $0xa30] sm:$0xf]
  %v1100 = vld [vmem:[%s1 + $0xa34] sm:$0xf]
  %v1101 = vld [vmem:[%s1 + $0xa38] sm:$0xf]
  %v1102 = vld [vmem:[%s1 + $0xa3c] sm:$0xf]
  %v1103 = vld [vmem:[%s1 + $0xa40] sm:$0xf]
  %v1104 = vld [vmem:[%s1 + $0xa44] sm:$0xf]
  %v1105 = vld [vmem:[%s1 + $0xa48] sm:$0xf]
  %v1106 = vld [vmem:[%s1 + $0xa4c] sm:$0xf]
  %v1107 = vld [vmem:[%s1 + $0xa50] sm:$0xf]
  %v1108 = vld [vmem:[%s1 + $0xa54] sm:$0xf]
  %v1109 = vld [vmem:[%s1 + $0xa58] sm:$0xf]
  %v1110 = vld [vmem:[%s1 + $0xa5c] sm:$0xf]
  %v1111 = vld [vmem:[%s1 + $0xa60] sm:$0xf]
  %v1112 = vld [vmem:[%s1 + $0xa64] sm:$0xf]
  %v1113 = vld [vmem:[%s1 + $0xa68] sm:$0xf]
  %v1114 = vld [vmem:[%s1 + $0xa6c] sm:$0xf]
  %v1115 = vld [vmem:[%s1 + $0xa70] sm:$0xf]
  %v1116 = vld [vmem:[%s1 + $0xa74] sm:$0xf]
  %v1117 = vld [vmem:[%s1 + $0xa78] sm:$0xf]
  %v1118 = vld [vmem:[%s1 + $0xa7c] sm:$0xf]
  %v1119 = vld [vmem:[%s1 + $0xa80] sm:$0xf]
  %v1120 = vld [vmem:[%s1 + $0xa84] sm:$0xf]
  %v1121 = vld [vmem:[%s1 + $0xa88] sm:$0xf]
  %v1122 = vld [vmem:[%s1 + $0xa8c] sm:$0xf]
  %v1123 = vld [vmem:[%s1 + $0xa90] sm:$0xf]
  %v1124 = vld [vmem:[%s1 + $0xa94] sm:$0xf]
  %v1125 = vld [vmem:[%s1 + $0xa98] sm:$0xf]
  %v1126 = vld [vmem:[%s1 + $0xa9c] sm:$0xf]
  %v1127 = vld [vmem:[%s1 + $0xaa0] sm:$0xf]
  %v1128 = vld [vmem:[%s1 + $0xaa4] sm:$0xf]
  %v1129 = vld [vmem:[%s1 + $0xaa8] sm:$0xf]
  %v1130 = vld [vmem:[%s1 + $0xaac] sm:$0xf]
  %v1131 = vld [vmem:[%s1 + $0xab0] sm:$0xf]
  %v1132 = vld [vmem:[%s1 + $0xab4] sm:$0xf]
  %v1133 = vld [vmem:[%s1 + $0xab8] sm:$0xf]
  %v1134 = vld [vmem:[%s1 + $0xabc] sm:$0xf]
  %v1135 = vld [vmem:[%s1 + $0xac0] sm:$0xf]
  %v1136 = vld [vmem:[%s1 + $0xac4] sm:$0xf]
  %v1137 = vld [vmem:[%s1 + $0xac8] sm:$0xf]
  %v1138 = vld [vmem:[%s1 + $0xacc] sm:$0xf]
  %v1139 = vld [vmem:[%s1 + $0xad0] sm:$0xf]
  %v1140 = vld [vmem:[%s1 + $0xad4] sm:$0xf]
  %v1141 = vld [vmem:[%s1 + $0xad8] sm:$0xf]
  %v1142 = vld [vmem:[%s1 + $0xadc] sm:$0xf]
  %v1143 = vld [vmem:[%s1 + $0xae0] sm:$0xf]
  %v1144 = vld [vmem:[%s1 + $0xae4] sm:$0xf]
  %v1145 = vld [vmem:[%s1 + $0xae8] sm:$0xf]
  %v1146 = vld [vmem:[%s1 + $0xaec] sm:$0xf]
  %v1147 = vld [vmem:[%s1 + $0xaf0] sm:$0xf]
  %v1148 = vld [vmem:[%s1 + $0xaf4] sm:$0xf]
  %v1149 = vld [vmem:[%s1 + $0xaf8] sm:$0xf]
  %v1150 = vld [vmem:[%s1 + $0xafc] sm:$0xf]
  %v1151 = vld [vmem:[%s1 + $0xb00] sm:$0xf]
  %v1152 = vld [vmem:[%s1 + $0xb04] sm:$0xf]
  %v1153 = vld [vmem:[%s1 + $0xb08] sm:$0xf]
  %v1154 = vld [vmem:[%s1 + $0xb0c] sm:$0xf]
  %v1155 = vld [vmem:[%s1 + $0xb10] sm:$0xf]
  %v1156 = vld [vmem:[%s1 + $0xb14] sm:$0xf]
  %v1157 = vld [vmem:[%s1 + $0xb18] sm:$0xf]
  %v1158 = vld [vmem:[%s1 + $0xb1c] sm:$0xf]
  %v1159 = vld [vmem:[%s1 + $0xb20] sm:$0xf]
  %v1160 = vld [vmem:[%s1 + $0xb24] sm:$0xf]
  %v1161 = vld [vmem:[%s1 + $0xb28] sm:$0xf]
  %v1162 = vld [vmem:[%s1 + $0xb2c] sm:$0xf]
  %v1163 = vld [vmem:[%s1 + $0xb30] sm:$0xf]
  %v1164 = vld [vmem:[%s1 + $0xb34] sm:$0xf]
  %v1165 = vld [vmem:[%s1 + $0xb38] sm:$0xf]
  %v1166 = vld [vmem:[%s1 + $0xb3c] sm:$0xf]
  %v1167 = vld [vmem:[%s1 + $0xb40] sm:$0xf]
  %v1168 = vld [vmem:[%s1 + $0xb44] sm:$0xf]
  %v1169 = vld [vmem:[%s1 + $0xb48] sm:$0xf]
  %v1170 = vld [vmem:[%s1 + $0xb4c] sm:$0xf]
  %v1171 = vld [vmem:[%s1 + $0xb50] sm:$0xf]
  %v1172 = vld [vmem:[%s1 + $0xb54] sm:$0xf]
  %v1173 = vld [vmem:[%s1 + $0xb58] sm:$0xf]
  %v1174 = vld [vmem:[%s1 + $0xb5c] sm:$0xf]
  %v1175 = vld [vmem:[%s1 + $0xb60] sm:$0xf]
  %v1176 = vld [vmem:[%s1 + $0xb64] sm:$0xf]
  %v1177 = vld [vmem:[%s1 + $0xb68] sm:$0xf]
  %v1178 = vld [vmem:[%s1 + $0xb6c] sm:$0xf]
  %v1179 = vld [vmem:[%s1 + $0xb70] sm:$0xf]
  %v1180 = vld [vmem:[%s1 + $0xb74] sm:$0xf]
  %v1181 = vld [vmem:[%s1 + $0xb78] sm:$0xf]
  %v1182 = vld [vmem:[%s1 + $0xb7c] sm:$0xf]
  %v1183 = vld [vmem:[%s1 + $0xb80] sm:$0xf]
  %v1184 = vld [vmem:[%s1 + $0xb84] sm:$0xf]
  %v1185 = vld [vmem:[%s1 + $0xb88] sm:$0xf]
  %v1186 = vld [vmem:[%s1 + $0xb8c] sm:$0xf]
  %v1187 = vld [vmem:[%s1 + $0xb90] sm:$0xf]
  %v1188 = vld [vmem:[%s1 + $0xb94] sm:$0xf]
  %v1189 = vld [vmem:[%s1 + $0xb98] sm:$0xf]
  %v1190 = vld [vmem:[%s1 + $0xb9c] sm:$0xf]
  %v1191 = vld [vmem:[%s1 + $0xba0] sm:$0xf]
  %v1192 = vld [vmem:[%s1 + $0xba4] sm:$0xf]
  %v1193 = vld [vmem:[%s1 + $0xba8] sm:$0xf]
  %v1194 = vld [vmem:[%s1 + $0xbac] sm:$0xf]
  %v1195 = vld [vmem:[%s1 + $0xbb0] sm:$0xf]
  %v1196 = vld [vmem:[%s1 + $0xbb4] sm:$0xf]
  %v1197 = vld [vmem:[%s1 + $0xbb8] sm:$0xf]
  %v1198 = vld [vmem:[%s1 + $0xbbc] sm:$0xf]
  %v1199 = vld [vmem:[%s1 + $0xbc0] sm:$0xf]
  %v1200 = vld [vmem:[%s1 + $0xbc4] sm:$0xf]
  %v1201 = vld [vmem:[%s1 + $0xbc8] sm:$0xf]
  %v1202 = vld [vmem:[%s1 + $0xbcc] sm:$0xf]
  %v1203 = vld [vmem:[%s1 + $0xbd0] sm:$0xf]
  %v1204 = vld [vmem:[%s1 + $0xbd4] sm:$0xf]
  %v1205 = vld [vmem:[%s1 + $0xbd8] sm:$0xf]
  %v1206 = vld [vmem:[%s1 + $0xbdc] sm:$0xf]
  %v1207 = vld [vmem:[%s1 + $0xbe0] sm:$0xf]
  %v1208 = vld [vmem:[%s1 + $0xbe4] sm:$0xf]
  %v1209 = vld [vmem:[%s1 + $0xbe8] sm:$0xf]
  %v1210 = vld [vmem:[%s1 + $0xbec] sm:$0xf]
  %v1211 = vld [vmem:[%s1 + $0xbf0] sm:$0xf]
  %v1212 = vld [vmem:[%s1 + $0xbf4] sm:$0xf]
  %v1213 = vld [vmem:[%s1 + $0xbf8] sm:$0xf]
  %v1214 = vld [vmem:[%s1 + $0xbfc] sm:$0xf]
  %v1215 = vld [vmem:[%s1 + $0xc00] sm:$0xf]
  %v1216 = vld [vmem:[%s1 + $0xc04] sm:$0xf]
  %v1217 = vld [vmem:[%s1 + $0xc08] sm:$0xf]
  %v1218 = vld [vmem:[%s1 + $0xc0c] sm:$0xf]
  %v1219 = vld [vmem:[%s1 + $0xc10] sm:$0xf]
  %v1220 = vld [vmem:[%s1 + $0xc14] sm:$0xf]
  %v1221 = vld [vmem:[%s1 + $0xc18] sm:$0xf]
  %v1222 = vld [vmem:[%s1 + $0xc1c] sm:$0xf]
  %v1223 = vld [vmem:[%s1 + $0xc20] sm:$0xf]
  %v1224 = vld [vmem:[%s1 + $0xc24] sm:$0xf]
  %v1225 = vld [vmem:[%s1 + $0xc28] sm:$0xf]
  %v1226 = vld [vmem:[%s1 + $0xc2c] sm:$0xf]
  %v1227 = vld [vmem:[%s1 + $0xc30] sm:$0xf]
  %v1228 = vld [vmem:[%s1 + $0xc34] sm:$0xf]
  %v1229 = vld [vmem:[%s1 + $0xc38] sm:$0xf]
  %v1230 = vld [vmem:[%s1 + $0xc3c] sm:$0xf]
  %v1231 = vld [vmem:[%s1 + $0xc40] sm:$0xf]
  %v1232 = vld [vmem:[%s1 + $0xc44] sm:$0xf]
  %v1233 = vld [vmem:[%s1 + $0xc48] sm:$0xf]
  %v1234 = vld [vmem:[%s1 + $0xc4c] sm:$0xf]
  %v1235 = vld [vmem:[%s1 + $0xc50] sm:$0xf]
  %v1236 = vld [vmem:[%s1 + $0xc54] sm:$0xf]
  %v1237 = vld [vmem:[%s1 + $0xc58] sm:$0xf]
  %v1238 = vld [vmem:[%s1 + $0xc5c] sm:$0xf]
  %v1239 = vld [vmem:[%s1 + $0xc60] sm:$0xf]
  %v1240 = vld [vmem:[%s1 + $0xc64] sm:$0xf]
  %v1241 = vld [vmem:[%s1 + $0xc68] sm:$0xf]
  %v1242 = vld [vmem:[%s1 + $0xc6c] sm:$0xf]
  %v1243 = vld [vmem:[%s1 + $0xc70] sm:$0xf]
  %v1244 = vld [vmem:[%s1 + $0xc74] sm:$0xf]
  %v1245 = vld [vmem:[%s1 + $0xc78] sm:$0xf]
  %v1246 = vld [vmem:[%s1 + $0xc7c] sm:$0xf]
  %v1247 = vld [vmem:[%s1 + $0xc80] sm:$0xf]
  %v1248 = vld [vmem:[%s1 + $0xc84] sm:$0xf]
  %v1249 = vld [vmem:[%s1 + $0xc88] sm:$0xf]
  %v1250 = vld [vmem:[%s1 + $0xc8c] sm:$0xf]
  %v1251 = vld [vmem:[%s1 + $0xc90] sm:$0xf]
  %v1252 = vld [vmem:[%s1 + $0xc94] sm:$0xf]
  %v1253 = vld [vmem:[%s1 + $0xc98] sm:$0xf]
  %v1254 = vld [vmem:[%s1 + $0xc9c] sm:$0xf]
  %v1255 = vld [vmem:[%s1 + $0xca0] sm:$0xf]
  %v1256 = vld [vmem:[%s1 + $0xca4] sm:$0xf]
  %v1257 = vld [vmem:[%s1 + $0xca8] sm:$0xf]
  %v1258 = vld [vmem:[%s1 + $0xcac] sm:$0xf]
  %v1259 = vld [vmem:[%s1 + $0xcb0] sm:$0xf]
  %v1260 = vld [vmem:[%s1 + $0xcb4] sm:$0xf]
  %v1261 = vld [vmem:[%s1 + $0xcb8] sm:$0xf]
  %v1262 = vld [vmem:[%s1 + $0xcbc] sm:$0xf]
  %v1263 = vld [vmem:[%s1 + $0xcc0] sm:$0xf]
  %v1264 = vld [vmem:[%s1 + $0xcc4] sm:$0xf]
  %v1265 = vld [vmem:[%s1 + $0xcc8] sm:$0xf]
  %v1266 = vld [vmem:[%s1 + $0xccc] sm:$0xf]
  %v1267 = vld [vmem:[%s1 + $0xcd0] sm:$0xf]
  %v1268 = vld [vmem:[%s1 + $0xcd4] sm:$0xf]
  %v1269 = vld [vmem:[%s1 + $0xcd8] sm:$0xf]
  %v1270 = vld [vmem:[%s1 + $0xcdc] sm:$0xf]
  %v1271 = vld [vmem:[%s1 + $0xce0] sm:$0xf]
  %v1272 = vld [vmem:[%s1 + $0xce4] sm:$0xf]
  %v1273 = vld [vmem:[%s1 + $0xce8] sm:$0xf]
  %v1274 = vld [vmem:[%s1 + $0xcec] sm:$0xf]
  %v1275 = vld [vmem:[%s1 + $0xcf0] sm:$0xf]
  %v1276 = vld [vmem:[%s1 + $0xcf4] sm:$0xf]
  %v1277 = vld [vmem:[%s1 + $0xcf8] sm:$0xf]
  %v1278 = vld [vmem:[%s1 + $0xcfc] sm:$0xf]
  %v1279 = vld [vmem:[%s1 + $0xd00] sm:$0xf]
  %v1280 = vld [vmem:[%s1 + $0xd04] sm:$0xf]
  %v1281 = vld [vmem:[%s1 + $0xd08] sm:$0xf]
  %v1282 = vld [vmem:[%s1 + $0xd0c] sm:$0xf]
  %v1283 = vld [vmem:[%s1 + $0xd10] sm:$0xf]
  %v1284 = vld [vmem:[%s1 + $0xd14] sm:$0xf]
  %v1285 = vld [vmem:[%s1 + $0xd18] sm:$0xf]
  %v1286 = vld [vmem:[%s1 + $0xd1c] sm:$0xf]
  %v1287 = vld [vmem:[%s1 + $0xd20] sm:$0xf]
  %v1288 = vld [vmem:[%s1 + $0xd24] sm:$0xf]
  %v1289 = vld [vmem:[%s1 + $0xd28] sm:$0xf]
  %v1290 = vld [vmem:[%s1 + $0xd2c] sm:$0xf]
  %v1291 = vld [vmem:[%s1 + $0xd30] sm:$0xf]
  %v1292 = vld [vmem:[%s1 + $0xd34] sm:$0xf]
  %v1293 = vld [vmem:[%s1 + $0xd38] sm:$0xf]
  %v1294 = vld [vmem:[%s1 + $0xd3c] sm:$0xf]
  %v1295 = vld [vmem:[%s1 + $0xd40] sm:$0xf]
  %v1296 = vld [vmem:[%s1 + $0xd44] sm:$0xf]
  %v1297 = vld [vmem:[%s1 + $0xd48] sm:$0xf]
  %v1298 = vld [vmem:[%s1 + $0xd4c] sm:$0xf]
  %v1299 = vld [vmem:[%s1 + $0xd50] sm:$0xf]
  %v1300 = vld [vmem:[%s1 + $0xd54] sm:$0xf]
  %v1301 = vld [vmem:[%s1 + $0xd58] sm:$0xf]
  %v1302 = vld [vmem:[%s1 + $0xd5c] sm:$0xf]
  %v1303 = vld [vmem:[%s1 + $0xd60] sm:$0xf]
  %v1304 = vld [vmem:[%s1 + $0xd64] sm:$0xf]
  %v1305 = vld [vmem:[%s1 + $0xd68] sm:$0xf]
  %v1306 = vld [vmem:[%s1 + $0xd6c] sm:$0xf]
  %v1307 = vld [vmem:[%s1 + $0xd70] sm:$0xf]
  %v1308 = vld [vmem:[%s1 + $0xd74] sm:$0xf]
  %v1309 = vld [vmem:[%s1 + $0xd78] sm:$0xf]
  %v1310 = vld [vmem:[%s1 + $0xd7c] sm:$0xf]
  %v1311 = vld [vmem:[%s1 + $0xd80] sm:$0xf]
  %v1312 = vld [vmem:[%s1 + $0xd84] sm:$0xf]
  %v1313 = vld [vmem:[%s1 + $0xd88] sm:$0xf]
  %v1314 = vld [vmem:[%s1 + $0xd8c] sm:$0xf]
  %v1315 = vld [vmem:[%s1 + $0xd90] sm:$0xf]
  %v1316 = vld [vmem:[%s1 + $0xd94] sm:$0xf]
  %v1317 = vld [vmem:[%s1 + $0xd98] sm:$0xf]
  %v1318 = vld [vmem:[%s1 + $0xd9c] sm:$0xf]
  %v1319 = vld [vmem:[%s1 + $0xda0] sm:$0xf]
  %v1320 = vld [vmem:[%s1 + $0xda4] sm:$0xf]
  %v1321 = vld [vmem:[%s1 + $0xda8] sm:$0xf]
  %v1322 = vld [vmem:[%s1 + $0xdac] sm:$0xf]
  %v1323 = vld [vmem:[%s1 + $0xdb0] sm:$0xf]
  %v1324 = vld [vmem:[%s1 + $0xdb4] sm:$0xf]
  %v1325 = vld [vmem:[%s1 + $0xdb8] sm:$0xf]
  %v1326 = vld [vmem:[%s1 + $0xdbc] sm:$0xf]
  %v1327 = vld [vmem:[%s1 + $0xdc0] sm:$0xf]
  %v1328 = vld [vmem:[%s1 + $0xdc4] sm:$0xf]
  %v1329 = vld [vmem:[%s1 + $0xdc8] sm:$0xf]
  %v1330 = vld [vmem:[%s1 + $0xdcc] sm:$0xf]
  %v1331 = vld [vmem:[%s1 + $0xdd0] sm:$0xf]
  %v1332 = vld [vmem:[%s1 + $0xdd4] sm:$0xf]
  %v1333 = vld [vmem:[%s1 + $0xdd8] sm:$0xf]
  %v1334 = vld [vmem:[%s1 + $0xddc] sm:$0xf]
  %v1335 = vld [vmem:[%s1 + $0xde0] sm:$0xf]
  %v1336 = vld [vmem:[%s1 + $0xde4] sm:$0xf]
  %v1337 = vld [vmem:[%s1 + $0xde8] sm:$0xf]
  %v1338 = vld [vmem:[%s1 + $0xdec] sm:$0xf]
  %v1339 = vld [vmem:[%s1 + $0xdf0] sm:$0xf]
  %v1340 = vld [vmem:[%s1 + $0xdf4] sm:$0xf]
  %v1341 = vld [vmem:[%s1 + $0xdf8] sm:$0xf]
  %v1342 = vld [vmem:[%s1 + $0xdfc] sm:$0xf]
  %v1343 = vld [vmem:[%s1 + $0xe00] sm:$0xf]
  %v1344 = vld [vmem:[%s1 + $0xe04] sm:$0xf]
  %v1345 = vld [vmem:[%s1 + $0xe08] sm:$0xf]
  %v1346 = vld [vmem:[%s1 + $0xe0c] sm:$0xf]
  %v1347 = vld [vmem:[%s1 + $0xe10] sm:$0xf]
  %v1348 = vld [vmem:[%s1 + $0xe14] sm:$0xf]
  %v1349 = vld [vmem:[%s1 + $0xe18] sm:$0xf]
  %v1350 = vld [vmem:[%s1 + $0xe1c] sm:$0xf]
  %v1351 = vld [vmem:[%s1 + $0xe20] sm:$0xf]
  %v1352 = vld [vmem:[%s1 + $0xe24] sm:$0xf]
  %v1353 = vld [vmem:[%s1 + $0xe28] sm:$0xf]
  %v1354 = vld [vmem:[%s1 + $0xe2c] sm:$0xf]
  %v1355 = vld [vmem:[%s1 + $0xe30] sm:$0xf]
  %v1356 = vld [vmem:[%s1 + $0xe34] sm:$0xf]
  %v1357 = vld [vmem:[%s1 + $0xe38] sm:$0xf]
  %v1358 = vld [vmem:[%s1 + $0xe3c] sm:$0xf]
  %v1359 = vld [vmem:[%s1 + $0xe40] sm:$0xf]
  %v1360 = vld [vmem:[%s1 + $0xe44] sm:$0xf]
  %v1361 = vld [vmem:[%s1 + $0xe48] sm:$0xf]
  %v1362 = vld [vmem:[%s1 + $0xe4c] sm:$0xf]
  %v1363 = vld [vmem:[%s1 + $0xe50] sm:$0xf]
  %v1364 = vld [vmem:[%s1 + $0xe54] sm:$0xf]
  %v1365 = vld [vmem:[%s1 + $0xe58] sm:$0xf]
  %v1366 = vld [vmem:[%s1 + $0xe5c] sm:$0xf]
  %v1367 = vld [vmem:[%s1 + $0xe60] sm:$0xf]
  %v1368 = vld [vmem:[%s1 + $0xe64] sm:$0xf]
  %v1369 = vld [vmem:[%s1 + $0xe68] sm:$0xf]
  %v1370 = vld [vmem:[%s1 + $0xe6c] sm:$0xf]
  %v1371 = vld [vmem:[%s1 + $0xe70] sm:$0xf]
  %v1372 = vld [vmem:[%s1 + $0xe74] sm:$0xf]
  %v1373 = vld [vmem:[%s1 + $0xe78] sm:$0xf]
  %v1374 = vld [vmem:[%s1 + $0xe7c] sm:$0xf]
  %v1375 = vld [vmem:[%s1 + $0xe80] sm:$0xf]
  %v1376 = vld [vmem:[%s1 + $0xe84] sm:$0xf]
  %v1377 = vld [vmem:[%s1 + $0xe88] sm:$0xf]
  %v1378 = vld [vmem:[%s1 + $0xe8c] sm:$0xf]
  %v1379 = vld [vmem:[%s1 + $0xe90] sm:$0xf]
  %v1380 = vld [vmem:[%s1 + $0xe94] sm:$0xf]
  %v1381 = vld [vmem:[%s1 + $0xe98] sm:$0xf]
  %v1382 = vld [vmem:[%s1 + $0xe9c] sm:$0xf]
  %v1383 = vld [vmem:[%s1 + $0xea0] sm:$0xf]
  %v1384 = vld [vmem:[%s1 + $0xea4] sm:$0xf]
  %v1385 = vld [vmem:[%s1 + $0xea8] sm:$0xf]
  %v1386 = vld [vmem:[%s1 + $0xeac] sm:$0xf]
  %v1387 = vld [vmem:[%s1 + $0xeb0] sm:$0xf]
  %v1388 = vld [vmem:[%s1 + $0xeb4] sm:$0xf]
  %v1389 = vld [vmem:[%s1 + $0xeb8] sm:$0xf]
  %v1390 = vld [vmem:[%s1 + $0xebc] sm:$0xf]
  %v1391 = vld [vmem:[%s1 + $0xec0] sm:$0xf]
  %v1392 = vld [vmem:[%s1 + $0xec4] sm:$0xf]
  %v1393 = vld [vmem:[%s1 + $0xec8] sm:$0xf]
  %v1394 = vld [vmem:[%s1 + $0xecc] sm:$0xf]
  %v1395 = vld [vmem:[%s1 + $0xed0] sm:$0xf]
  %v1396 = vld [vmem:[%s1 + $0xed4] sm:$0xf]
  %v1397 = vld [vmem:[%s1 + $0xed8] sm:$0xf]
  %v1398 = vld [vmem:[%s1 + $0xedc] sm:$0xf]
  %v1399 = vld [vmem:[%s1 + $0xee0] sm:$0xf]
  %v1400 = vld [vmem:[%s1 + $0xee4] sm:$0xf]
  %v1401 = vld [vmem:[%s1 + $0xee8] sm:$0xf]
  %v1402 = vld [vmem:[%s1 + $0xeec] sm:$0xf]
  %v1403 = vld [vmem:[%s1 + $0xef0] sm:$0xf]
  %v1404 = vld [vmem:[%s1 + $0xef4] sm:$0xf]
  %v1405 = vld [vmem:[%s1 + $0xef8] sm:$0xf]
  %v1406 = vld [vmem:[%s1 + $0xefc] sm:$0xf]
  %v1407 = vld [vmem:[%s1 + $0xf00] sm:$0xf]
  %v1408 = vld [vmem:[%s1 + $0xf04] sm:$0xf]
  %v1409 = vld [vmem:[%s1 + $0xf08] sm:$0xf]
  %v1410 = vld [vmem:[%s1 + $0xf0c] sm:$0xf]
  %v1411 = vld [vmem:[%s1 + $0xf10] sm:$0xf]
  %v1412 = vld [vmem:[%s1 + $0xf14] sm:$0xf]
  %v1413 = vld [vmem:[%s1 + $0xf18] sm:$0xf]
  %v1414 = vld [vmem:[%s1 + $0xf1c] sm:$0xf]
  %v1415 = vld [vmem:[%s1 + $0xf20] sm:$0xf]
  %v1416 = vld [vmem:[%s1 + $0xf24] sm:$0xf]
  %v1417 = vld [vmem:[%s1 + $0xf28] sm:$0xf]
  %v1418 = vld [vmem:[%s1 + $0xf2c] sm:$0xf]
  %v1419 = vld [vmem:[%s1 + $0xf30] sm:$0xf]
  %v1420 = vld [vmem:[%s1 + $0xf34] sm:$0xf]
  %v1421 = vld [vmem:[%s1 + $0xf38] sm:$0xf]
  %v1422 = vld [vmem:[%s1 + $0xf3c] sm:$0xf]
  %v1423 = vld [vmem:[%s1 + $0xf40] sm:$0xf]
  %v1424 = vld [vmem:[%s1 + $0xf44] sm:$0xf]
  %v1425 = vld [vmem:[%s1 + $0xf48] sm:$0xf]
  %v1426 = vld [vmem:[%s1 + $0xf4c] sm:$0xf]
  %v1427 = vld [vmem:[%s1 + $0xf50] sm:$0xf]
  %v1428 = vld [vmem:[%s1 + $0xf54] sm:$0xf]
  %v1429 = vld [vmem:[%s1 + $0xf58] sm:$0xf]
  %v1430 = vld [vmem:[%s1 + $0xf5c] sm:$0xf]
  %v1431 = vld [vmem:[%s1 + $0xf60] sm:$0xf]
  %v1432 = vld [vmem:[%s1 + $0xf64] sm:$0xf]
  %v1433 = vld [vmem:[%s1 + $0xf68] sm:$0xf]
  %v1434 = vld [vmem:[%s1 + $0xf6c] sm:$0xf]
  %v1435 = vld [vmem:[%s1 + $0xf70] sm:$0xf]
  %v1436 = vld [vmem:[%s1 + $0xf74] sm:$0xf]
  %v1437 = vld [vmem:[%s1 + $0xf78] sm:$0xf]
  %v1438 = vld [vmem:[%s1 + $0xf7c] sm:$0xf]
  %v1439 = vld [vmem:[%s1 + $0xf80] sm:$0xf]
  %v1440 = vld [vmem:[%s1 + $0xf84] sm:$0xf]
  %v1441 = vld [vmem:[%s1 + $0xf88] sm:$0xf]
  %v1442 = vld [vmem:[%s1 + $0xf8c] sm:$0xf]
  %v1443 = vld [vmem:[%s1 + $0xf90] sm:$0xf]
  %v1444 = vld [vmem:[%s1 + $0xf94] sm:$0xf]
  %v1445 = vld [vmem:[%s1 + $0xf98] sm:$0xf]
  %v1446 = vld [vmem:[%s1 + $0xf9c] sm:$0xf]
  %v1447 = vld [vmem:[%s1 + $0xfa0] sm:$0xf]
  %v1448 = vld [vmem:[%s1 + $0xfa4] sm:$0xf]
  %v1449 = vld [vmem:[%s1 + $0xfa8] sm:$0xf]
  %v1450 = vld [vmem:[%s1 + $0xfac] sm:$0xf]
  %v1451 = vld [vmem:[%s1 + $0xfb0] sm:$0xf]
  %v1452 = vld [vmem:[%s1 + $0xfb4] sm:$0xf]
  %v1453 = vld [vmem:[%s1 + $0xfb8] sm:$0xf]
  %v1454 = vld [vmem:[%s1 + $0xfbc] sm:$0xf]
  %v1455 = vld [vmem:[%s1 + $0xfc0] sm:$0xf]
  %v1456 = vld [vmem:[%s1 + $0xfc4] sm:$0xf]
  %v1457 = vld [vmem:[%s1 + $0xfc8] sm:$0xf]
  %v1458 = vld [vmem:[%s1 + $0xfcc] sm:$0xf]
  %v1459 = vld [vmem:[%s1 + $0xfd0] sm:$0xf]
  %v1460 = vld [vmem:[%s1 + $0xfd4] sm:$0xf]
  %v1461 = vld [vmem:[%s1 + $0xfd8] sm:$0xf]
  %v1462 = vld [vmem:[%s1 + $0xfdc] sm:$0xf]
  %v1463 = vld [vmem:[%s1 + $0xfe0] sm:$0xf]
  %v1464 = vld [vmem:[%s1 + $0xfe4] sm:$0xf]
  %v1465 = vld [vmem:[%s1 + $0xfe8] sm:$0xf]
  %v1466 = vld [vmem:[%s1 + $0xfec] sm:$0xf]
  %v1467 = vld [vmem:[%s1 + $0xff0] sm:$0xf]
  %v1468 = vld [vmem:[%s1 + $0xff4] sm:$0xf]
  %v1469 = vld [vmem:[%s1 + $0xff8] sm:$0xf]
  %v1470 = vld [vmem:[%s1 + $0xffc] sm:$0xf]
  %v1471 = vld [vmem:[%s2] sm:$0x1]
  %v1473 = vlaneseq
  %v1474 = vshrl.u32 %v1473, 7
  %v1475 = vsub.s32 0, %v1474
  %v1476 = vrot.slane %v1471, %v1475
  %v2502 = vunpack.c.l.b16 %v447
  %v2503 = vunpack.c.l.b16 %v448
  %v2504 = vunpack.c.l.b16 %v449
  %v2505 = vunpack.c.l.b16 %v450
  %v2506 = vunpack.c.l.b16 %v451
  %v2507 = vunpack.c.l.b16 %v452
  %v2508 = vunpack.c.l.b16 %v453
  %v2509 = vunpack.c.l.b16 %v454
  %v2510 = vunpack.c.l.b16 %v455
  %v2511 = vunpack.c.l.b16 %v456
  %v2512 = vunpack.c.l.b16 %v457
  %v2513 = vunpack.c.l.b16 %v458
  %v2514 = vunpack.c.l.b16 %v459
  %v2515 = vunpack.c.l.b16 %v460
  %v2516 = vunpack.c.l.b16 %v461
  %v2517 = vunpack.c.l.b16 %v462
  %v2518 = vunpack.c.l.b16 %v463
  %v2519 = vunpack.c.l.b16 %v464
  %v2520 = vunpack.c.l.b16 %v465
  %v2521 = vunpack.c.l.b16 %v466
  %v2522 = vunpack.c.l.b16 %v467
  %v2523 = vunpack.c.l.b16 %v468
  %v2524 = vunpack.c.l.b16 %v469
  %v2525 = vunpack.c.l.b16 %v470
  %v2526 = vunpack.c.l.b16 %v471
  %v2527 = vunpack.c.l.b16 %v472
  %v2528 = vunpack.c.l.b16 %v473
  %v2529 = vunpack.c.l.b16 %v474
  %v2530 = vunpack.c.l.b16 %v475
  %v2531 = vunpack.c.l.b16 %v476
  %v2532 = vunpack.c.l.b16 %v477
  %v2533 = vunpack.c.l.b16 %v478
  %v2534 = vunpack.c.l.b16 %v479
  %v2535 = vunpack.c.l.b16 %v480
  %v2536 = vunpack.c.l.b16 %v481
  %v2537 = vunpack.c.l.b16 %v482
  %v2538 = vunpack.c.l.b16 %v483
  %v2539 = vunpack.c.l.b16 %v484
  %v2540 = vunpack.c.l.b16 %v485
  %v2541 = vunpack.c.l.b16 %v486
  %v2542 = vunpack.c.l.b16 %v487
  %v2543 = vunpack.c.l.b16 %v488
  %v2544 = vunpack.c.l.b16 %v489
  %v2545 = vunpack.c.l.b16 %v490
  %v2546 = vunpack.c.l.b16 %v491
  %v2547 = vunpack.c.l.b16 %v492
  %v2548 = vunpack.c.l.b16 %v493
  %v2549 = vunpack.c.l.b16 %v494
  %v2550 = vunpack.c.l.b16 %v495
  %v2551 = vunpack.c.l.b16 %v496
  %v2552 = vunpack.c.l.b16 %v497
  %v2553 = vunpack.c.l.b16 %v498
  %v2554 = vunpack.c.l.b16 %v499
  %v2555 = vunpack.c.l.b16 %v500
  %v2556 = vunpack.c.l.b16 %v501
  %v2557 = vunpack.c.l.b16 %v502
  %v2558 = vunpack.c.l.b16 %v503
  %v2559 = vunpack.c.l.b16 %v504
  %v2560 = vunpack.c.l.b16 %v505
  %v2561 = vunpack.c.l.b16 %v506
  %v2562 = vunpack.c.l.b16 %v507
  %v2563 = vunpack.c.l.b16 %v508
  %v2564 = vunpack.c.l.b16 %v509
  %v2565 = vunpack.c.l.b16 %v510
  %v2566 = vunpack.c.l.b16 %v511
  %v2567 = vunpack.c.l.b16 %v512
  %v2568 = vunpack.c.l.b16 %v513
  %v2569 = vunpack.c.l.b16 %v514
  %v2570 = vunpack.c.l.b16 %v515
  %v2571 = vunpack.c.l.b16 %v516
  %v2572 = vunpack.c.l.b16 %v517
  %v2573 = vunpack.c.l.b16 %v518
  %v2574 = vunpack.c.l.b16 %v519
  %v2575 = vunpack.c.l.b16 %v520
  %v2576 = vunpack.c.l.b16 %v521
  %v2577 = vunpack.c.l.b16 %v522
  %v2578 = vunpack.c.l.b16 %v523
  %v2579 = vunpack.c.l.b16 %v524
  %v2580 = vunpack.c.l.b16 %v525
  %v2581 = vunpack.c.l.b16 %v526
  %v2582 = vunpack.c.l.b16 %v527
  %v2583 = vunpack.c.l.b16 %v528
  %v2584 = vunpack.c.l.b16 %v529
  %v2585 = vunpack.c.l.b16 %v530
  %v2586 = vunpack.c.l.b16 %v531
  %v2587 = vunpack.c.l.b16 %v532
  %v2588 = vunpack.c.l.b16 %v533
  %v2589 = vunpack.c.l.b16 %v534
  %v2590 = vunpack.c.l.b16 %v535
  %v2591 = vunpack.c.l.b16 %v536
  %v2592 = vunpack.c.l.b16 %v537
  %v2593 = vunpack.c.l.b16 %v538
  %v2594 = vunpack.c.l.b16 %v539
  %v2595 = vunpack.c.l.b16 %v540
  %v2596 = vunpack.c.l.b16 %v541
  %v2597 = vunpack.c.l.b16 %v542
  %v2598 = vunpack.c.l.b16 %v543
  %v2599 = vunpack.c.l.b16 %v544
  %v2600 = vunpack.c.l.b16 %v545
  %v2601 = vunpack.c.l.b16 %v546
  %v2602 = vunpack.c.l.b16 %v547
  %v2603 = vunpack.c.l.b16 %v548
  %v2604 = vunpack.c.l.b16 %v549
  %v2605 = vunpack.c.l.b16 %v550
  %v2606 = vunpack.c.l.b16 %v551
  %v2607 = vunpack.c.l.b16 %v552
  %v2608 = vunpack.c.l.b16 %v553
  %v2609 = vunpack.c.l.b16 %v554
  %v2610 = vunpack.c.l.b16 %v555
  %v2611 = vunpack.c.l.b16 %v556
  %v2612 = vunpack.c.l.b16 %v557
  %v2613 = vunpack.c.l.b16 %v558
  %v2614 = vunpack.c.l.b16 %v559
  %v2615 = vunpack.c.l.b16 %v560
  %v2616 = vunpack.c.l.b16 %v561
  %v2617 = vunpack.c.l.b16 %v562
  %v2618 = vunpack.c.l.b16 %v563
  %v2619 = vunpack.c.l.b16 %v564
  %v2620 = vunpack.c.l.b16 %v565
  %v2621 = vunpack.c.l.b16 %v566
  %v2622 = vunpack.c.l.b16 %v567
  %v2623 = vunpack.c.l.b16 %v568
  %v2624 = vunpack.c.l.b16 %v569
  %v2625 = vunpack.c.l.b16 %v570
  %v2626 = vunpack.c.l.b16 %v571
  %v2627 = vunpack.c.l.b16 %v572
  %v2628 = vunpack.c.l.b16 %v573
  %v2629 = vunpack.c.l.b16 %v574
  %v2630 = vunpack.c.l.b16 %v575
  %v2631 = vunpack.c.l.b16 %v576
  %v2632 = vunpack.c.l.b16 %v577
  %v2633 = vunpack.c.l.b16 %v578
  %v2634 = vunpack.c.l.b16 %v579
  %v2635 = vunpack.c.l.b16 %v580
  %v2636 = vunpack.c.l.b16 %v581
  %v2637 = vunpack.c.l.b16 %v582
  %v2638 = vunpack.c.l.b16 %v583
  %v2639 = vunpack.c.l.b16 %v584
  %v2640 = vunpack.c.l.b16 %v585
  %v2641 = vunpack.c.l.b16 %v586
  %v2642 = vunpack.c.l.b16 %v587
  %v2643 = vunpack.c.l.b16 %v588
  %v2644 = vunpack.c.l.b16 %v589
  %v2645 = vunpack.c.l.b16 %v590
  %v2646 = vunpack.c.l.b16 %v591
  %v2647 = vunpack.c.l.b16 %v592
  %v2648 = vunpack.c.l.b16 %v593
  %v2649 = vunpack.c.l.b16 %v594
  %v2650 = vunpack.c.l.b16 %v595
  %v2651 = vunpack.c.l.b16 %v596
  %v2652 = vunpack.c.l.b16 %v597
  %v2653 = vunpack.c.l.b16 %v598
  %v2654 = vunpack.c.l.b16 %v599
  %v2655 = vunpack.c.l.b16 %v600
  %v2656 = vunpack.c.l.b16 %v601
  %v2657 = vunpack.c.l.b16 %v602
  %v2658 = vunpack.c.l.b16 %v603
  %v2659 = vunpack.c.l.b16 %v604
  %v2660 = vunpack.c.l.b16 %v605
  %v2661 = vunpack.c.l.b16 %v606
  %v2662 = vunpack.c.l.b16 %v607
  %v2663 = vunpack.c.l.b16 %v608
  %v2664 = vunpack.c.l.b16 %v609
  %v2665 = vunpack.c.l.b16 %v610
  %v2666 = vunpack.c.l.b16 %v611
  %v2667 = vunpack.c.l.b16 %v612
  %v2668 = vunpack.c.l.b16 %v613
  %v2669 = vunpack.c.l.b16 %v614
  %v2670 = vunpack.c.l.b16 %v615
  %v2671 = vunpack.c.l.b16 %v616
  %v2672 = vunpack.c.l.b16 %v617
  %v2673 = vunpack.c.l.b16 %v618
  %v2674 = vunpack.c.l.b16 %v619
  %v2675 = vunpack.c.l.b16 %v620
  %v2676 = vunpack.c.l.b16 %v621
  %v2677 = vunpack.c.l.b16 %v622
  %v2678 = vunpack.c.l.b16 %v623
  %v2679 = vunpack.c.l.b16 %v624
  %v2680 = vunpack.c.l.b16 %v625
  %v2681 = vunpack.c.l.b16 %v626
  %v2682 = vunpack.c.l.b16 %v627
  %v2683 = vunpack.c.l.b16 %v628
  %v2684 = vunpack.c.l.b16 %v629
  %v2685 = vunpack.c.l.b16 %v630
  %v2686 = vunpack.c.l.b16 %v631
  %v2687 = vunpack.c.l.b16 %v632
  %v2688 = vunpack.c.l.b16 %v633
  %v2689 = vunpack.c.l.b16 %v634
  %v2690 = vunpack.c.l.b16 %v635
  %v2691 = vunpack.c.l.b16 %v636
  %v2692 = vunpack.c.l.b16 %v637
  %v2693 = vunpack.c.l.b16 %v638
  %v2694 = vunpack.c.l.b16 %v639
  %v2695 = vunpack.c.l.b16 %v640
  %v2696 = vunpack.c.l.b16 %v641
  %v2697 = vunpack.c.l.b16 %v642
  %v2698 = vunpack.c.l.b16 %v643
  %v2699 = vunpack.c.l.b16 %v644
  %v2700 = vunpack.c.l.b16 %v645
  %v2701 = vunpack.c.l.b16 %v646
  %v2702 = vunpack.c.l.b16 %v647
  %v2703 = vunpack.c.l.b16 %v648
  %v2704 = vunpack.c.l.b16 %v649
  %v2705 = vunpack.c.l.b16 %v650
  %v2706 = vunpack.c.l.b16 %v651
  %v2707 = vunpack.c.l.b16 %v652
  %v2708 = vunpack.c.l.b16 %v653
  %v2709 = vunpack.c.l.b16 %v654
  %v2710 = vunpack.c.l.b16 %v655
  %v2711 = vunpack.c.l.b16 %v656
  %v2712 = vunpack.c.l.b16 %v657
  %v2713 = vunpack.c.l.b16 %v658
  %v2714 = vunpack.c.l.b16 %v659
  %v2715 = vunpack.c.l.b16 %v660
  %v2716 = vunpack.c.l.b16 %v661
  %v2717 = vunpack.c.l.b16 %v662
  %v2718 = vunpack.c.l.b16 %v663
  %v2719 = vunpack.c.l.b16 %v664
  %v2720 = vunpack.c.l.b16 %v665
  %v2721 = vunpack.c.l.b16 %v666
  %v2722 = vunpack.c.l.b16 %v667
  %v2723 = vunpack.c.l.b16 %v668
  %v2724 = vunpack.c.l.b16 %v669
  %v2725 = vunpack.c.l.b16 %v670
  %v2726 = vunpack.c.l.b16 %v671
  %v2727 = vunpack.c.l.b16 %v672
  %v2728 = vunpack.c.l.b16 %v673
  %v2729 = vunpack.c.l.b16 %v674
  %v2730 = vunpack.c.l.b16 %v675
  %v2731 = vunpack.c.l.b16 %v676
  %v2732 = vunpack.c.l.b16 %v677
  %v2733 = vunpack.c.l.b16 %v678
  %v2734 = vunpack.c.l.b16 %v679
  %v2735 = vunpack.c.l.b16 %v680
  %v2736 = vunpack.c.l.b16 %v681
  %v2737 = vunpack.c.l.b16 %v682
  %v2738 = vunpack.c.l.b16 %v683
  %v2739 = vunpack.c.l.b16 %v684
  %v2740 = vunpack.c.l.b16 %v685
  %v2741 = vunpack.c.l.b16 %v686
  %v2742 = vunpack.c.l.b16 %v687
  %v2743 = vunpack.c.l.b16 %v688
  %v2744 = vunpack.c.l.b16 %v689
  %v2745 = vunpack.c.l.b16 %v690
  %v2746 = vunpack.c.l.b16 %v691
  %v2747 = vunpack.c.l.b16 %v692
  %v2748 = vunpack.c.l.b16 %v693
  %v2749 = vunpack.c.l.b16 %v694
  %v2750 = vunpack.c.l.b16 %v695
  %v2751 = vunpack.c.l.b16 %v696
  %v2752 = vunpack.c.l.b16 %v697
  %v2753 = vunpack.c.l.b16 %v698
  %v2754 = vunpack.c.l.b16 %v699
  %v2755 = vunpack.c.l.b16 %v700
  %v2756 = vunpack.c.l.b16 %v701
  %v2757 = vunpack.c.l.b16 %v702
  %v2758 = vunpack.c.l.b16 %v703
  %v2759 = vunpack.c.l.b16 %v704
  %v2760 = vunpack.c.l.b16 %v705
  %v2761 = vunpack.c.l.b16 %v706
  %v2762 = vunpack.c.l.b16 %v707
  %v2763 = vunpack.c.l.b16 %v708
  %v2764 = vunpack.c.l.b16 %v709
  %v2765 = vunpack.c.l.b16 %v710
  %v2766 = vunpack.c.l.b16 %v711
  %v2767 = vunpack.c.l.b16 %v712
  %v2768 = vunpack.c.l.b16 %v713
  %v2769 = vunpack.c.l.b16 %v714
  %v2770 = vunpack.c.l.b16 %v715
  %v2771 = vunpack.c.l.b16 %v716
  %v2772 = vunpack.c.l.b16 %v717
  %v2773 = vunpack.c.l.b16 %v718
  %v2774 = vunpack.c.l.b16 %v719
  %v2775 = vunpack.c.l.b16 %v720
  %v2776 = vunpack.c.l.b16 %v721
  %v2777 = vunpack.c.l.b16 %v722
  %v2778 = vunpack.c.l.b16 %v723
  %v2779 = vunpack.c.l.b16 %v724
  %v2780 = vunpack.c.l.b16 %v725
  %v2781 = vunpack.c.l.b16 %v726
  %v2782 = vunpack.c.l.b16 %v727
  %v2783 = vunpack.c.l.b16 %v728
  %v2784 = vunpack.c.l.b16 %v729
  %v2785 = vunpack.c.l.b16 %v730
  %v2786 = vunpack.c.l.b16 %v731
  %v2787 = vunpack.c.l.b16 %v732
  %v2788 = vunpack.c.l.b16 %v733
  %v2789 = vunpack.c.l.b16 %v734
  %v2790 = vunpack.c.l.b16 %v735
  %v2791 = vunpack.c.l.b16 %v736
  %v2792 = vunpack.c.l.b16 %v737
  %v2793 = vunpack.c.l.b16 %v738
  %v2794 = vunpack.c.l.b16 %v739
  %v2795 = vunpack.c.l.b16 %v740
  %v2796 = vunpack.c.l.b16 %v741
  %v2797 = vunpack.c.l.b16 %v742
  %v2798 = vunpack.c.l.b16 %v743
  %v2799 = vunpack.c.l.b16 %v744
  %v2800 = vunpack.c.l.b16 %v745
  %v2801 = vunpack.c.l.b16 %v746
  %v2802 = vunpack.c.l.b16 %v747
  %v2803 = vunpack.c.l.b16 %v748
  %v2804 = vunpack.c.l.b16 %v749
  %v2805 = vunpack.c.l.b16 %v750
  %v2806 = vunpack.c.l.b16 %v751
  %v2807 = vunpack.c.l.b16 %v752
  %v2808 = vunpack.c.l.b16 %v753
  %v2809 = vunpack.c.l.b16 %v754
  %v2810 = vunpack.c.l.b16 %v755
  %v2811 = vunpack.c.l.b16 %v756
  %v2812 = vunpack.c.l.b16 %v757
  %v2813 = vunpack.c.l.b16 %v758
  %v2814 = vunpack.c.l.b16 %v759
  %v2815 = vunpack.c.l.b16 %v760
  %v2816 = vunpack.c.l.b16 %v761
  %v2817 = vunpack.c.l.b16 %v762
  %v2818 = vunpack.c.l.b16 %v763
  %v2819 = vunpack.c.l.b16 %v764
  %v2820 = vunpack.c.l.b16 %v765
  %v2821 = vunpack.c.l.b16 %v766
  %v2822 = vunpack.c.l.b16 %v767
  %v2823 = vunpack.c.l.b16 %v768
  %v2824 = vunpack.c.l.b16 %v769
  %v2825 = vunpack.c.l.b16 %v770
  %v2826 = vunpack.c.l.b16 %v771
  %v2827 = vunpack.c.l.b16 %v772
  %v2828 = vunpack.c.l.b16 %v773
  %v2829 = vunpack.c.l.b16 %v774
  %v2830 = vunpack.c.l.b16 %v775
  %v2831 = vunpack.c.l.b16 %v776
  %v2832 = vunpack.c.l.b16 %v777
  %v2833 = vunpack.c.l.b16 %v778
  %v2834 = vunpack.c.l.b16 %v779
  %v2835 = vunpack.c.l.b16 %v780
  %v2836 = vunpack.c.l.b16 %v781
  %v2837 = vunpack.c.l.b16 %v782
  %v2838 = vunpack.c.l.b16 %v783
  %v2839 = vunpack.c.l.b16 %v784
  %v2840 = vunpack.c.l.b16 %v785
  %v2841 = vunpack.c.l.b16 %v786
  %v2842 = vunpack.c.l.b16 %v787
  %v2843 = vunpack.c.l.b16 %v788
  %v2844 = vunpack.c.l.b16 %v789
  %v2845 = vunpack.c.l.b16 %v790
  %v2846 = vunpack.c.l.b16 %v791
  %v2847 = vunpack.c.l.b16 %v792
  %v2848 = vunpack.c.l.b16 %v793
  %v2849 = vunpack.c.l.b16 %v794
  %v2850 = vunpack.c.l.b16 %v795
  %v2851 = vunpack.c.l.b16 %v796
  %v2852 = vunpack.c.l.b16 %v797
  %v2853 = vunpack.c.l.b16 %v798
  %v2854 = vunpack.c.l.b16 %v799
  %v2855 = vunpack.c.l.b16 %v800
  %v2856 = vunpack.c.l.b16 %v801
  %v2857 = vunpack.c.l.b16 %v802
  %v2858 = vunpack.c.l.b16 %v803
  %v2859 = vunpack.c.l.b16 %v804
  %v2860 = vunpack.c.l.b16 %v805
  %v2861 = vunpack.c.l.b16 %v806
  %v2862 = vunpack.c.l.b16 %v807
  %v2863 = vunpack.c.l.b16 %v808
  %v2864 = vunpack.c.l.b16 %v809
  %v2865 = vunpack.c.l.b16 %v810
  %v2866 = vunpack.c.l.b16 %v811
  %v2867 = vunpack.c.l.b16 %v812
  %v2868 = vunpack.c.l.b16 %v813
  %v2869 = vunpack.c.l.b16 %v814
  %v2870 = vunpack.c.l.b16 %v815
  %v2871 = vunpack.c.l.b16 %v816
  %v2872 = vunpack.c.l.b16 %v817
  %v2873 = vunpack.c.l.b16 %v818
  %v2874 = vunpack.c.l.b16 %v819
  %v2875 = vunpack.c.l.b16 %v820
  %v2876 = vunpack.c.l.b16 %v821
  %v2877 = vunpack.c.l.b16 %v822
  %v2878 = vunpack.c.l.b16 %v823
  %v2879 = vunpack.c.l.b16 %v824
  %v2880 = vunpack.c.l.b16 %v825
  %v2881 = vunpack.c.l.b16 %v826
  %v2882 = vunpack.c.l.b16 %v827
  %v2883 = vunpack.c.l.b16 %v828
  %v2884 = vunpack.c.l.b16 %v829
  %v2885 = vunpack.c.l.b16 %v830
  %v2886 = vunpack.c.l.b16 %v831
  %v2887 = vunpack.c.l.b16 %v832
  %v2888 = vunpack.c.l.b16 %v833
  %v2889 = vunpack.c.l.b16 %v834
  %v2890 = vunpack.c.l.b16 %v835
  %v2891 = vunpack.c.l.b16 %v836
  %v2892 = vunpack.c.l.b16 %v837
  %v2893 = vunpack.c.l.b16 %v838
  %v2894 = vunpack.c.l.b16 %v839
  %v2895 = vunpack.c.l.b16 %v840
  %v2896 = vunpack.c.l.b16 %v841
  %v2897 = vunpack.c.l.b16 %v842
  %v2898 = vunpack.c.l.b16 %v843
  %v2899 = vunpack.c.l.b16 %v844
  %v2900 = vunpack.c.l.b16 %v845
  %v2901 = vunpack.c.l.b16 %v846
  %v2902 = vunpack.c.l.b16 %v847
  %v2903 = vunpack.c.l.b16 %v848
  %v2904 = vunpack.c.l.b16 %v849
  %v2905 = vunpack.c.l.b16 %v850
  %v2906 = vunpack.c.l.b16 %v851
  %v2907 = vunpack.c.l.b16 %v852
  %v2908 = vunpack.c.l.b16 %v853
  %v2909 = vunpack.c.l.b16 %v854
  %v2910 = vunpack.c.l.b16 %v855
  %v2911 = vunpack.c.l.b16 %v856
  %v2912 = vunpack.c.l.b16 %v857
  %v2913 = vunpack.c.l.b16 %v858
  %v2914 = vunpack.c.l.b16 %v859
  %v2915 = vunpack.c.l.b16 %v860
  %v2916 = vunpack.c.l.b16 %v861
  %v2917 = vunpack.c.l.b16 %v862
  %v2918 = vunpack.c.l.b16 %v863
  %v2919 = vunpack.c.l.b16 %v864
  %v2920 = vunpack.c.l.b16 %v865
  %v2921 = vunpack.c.l.b16 %v866
  %v2922 = vunpack.c.l.b16 %v867
  %v2923 = vunpack.c.l.b16 %v868
  %v2924 = vunpack.c.l.b16 %v869
  %v2925 = vunpack.c.l.b16 %v870
  %v2926 = vunpack.c.l.b16 %v871
  %v2927 = vunpack.c.l.b16 %v872
  %v2928 = vunpack.c.l.b16 %v873
  %v2929 = vunpack.c.l.b16 %v874
  %v2930 = vunpack.c.l.b16 %v875
  %v2931 = vunpack.c.l.b16 %v876
  %v2932 = vunpack.c.l.b16 %v877
  %v2933 = vunpack.c.l.b16 %v878
  %v2934 = vunpack.c.l.b16 %v879
  %v2935 = vunpack.c.l.b16 %v880
  %v2936 = vunpack.c.l.b16 %v881
  %v2937 = vunpack.c.l.b16 %v882
  %v2938 = vunpack.c.l.b16 %v883
  %v2939 = vunpack.c.l.b16 %v884
  %v2940 = vunpack.c.l.b16 %v885
  %v2941 = vunpack.c.l.b16 %v886
  %v2942 = vunpack.c.l.b16 %v887
  %v2943 = vunpack.c.l.b16 %v888
  %v2944 = vunpack.c.l.b16 %v889
  %v2945 = vunpack.c.l.b16 %v890
  %v2946 = vunpack.c.l.b16 %v891
  %v2947 = vunpack.c.l.b16 %v892
  %v2948 = vunpack.c.l.b16 %v893
  %v2949 = vunpack.c.l.b16 %v894
  %v2950 = vunpack.c.l.b16 %v895
  %v2951 = vunpack.c.l.b16 %v896
  %v2952 = vunpack.c.l.b16 %v897
  %v2953 = vunpack.c.l.b16 %v898
  %v2954 = vunpack.c.l.b16 %v899
  %v2955 = vunpack.c.l.b16 %v900
  %v2956 = vunpack.c.l.b16 %v901
  %v2957 = vunpack.c.l.b16 %v902
  %v2958 = vunpack.c.l.b16 %v903
  %v2959 = vunpack.c.l.b16 %v904
  %v2960 = vunpack.c.l.b16 %v905
  %v2961 = vunpack.c.l.b16 %v906
  %v2962 = vunpack.c.l.b16 %v907
  %v2963 = vunpack.c.l.b16 %v908
  %v2964 = vunpack.c.l.b16 %v909
  %v2965 = vunpack.c.l.b16 %v910
  %v2966 = vunpack.c.l.b16 %v911
  %v2967 = vunpack.c.l.b16 %v912
  %v2968 = vunpack.c.l.b16 %v913
  %v2969 = vunpack.c.l.b16 %v914
  %v2970 = vunpack.c.l.b16 %v915
  %v2971 = vunpack.c.l.b16 %v916
  %v2972 = vunpack.c.l.b16 %v917
  %v2973 = vunpack.c.l.b16 %v918
  %v2974 = vunpack.c.l.b16 %v919
  %v2975 = vunpack.c.l.b16 %v920
  %v2976 = vunpack.c.l.b16 %v921
  %v2977 = vunpack.c.l.b16 %v922
  %v2978 = vunpack.c.l.b16 %v923
  %v2979 = vunpack.c.l.b16 %v924
  %v2980 = vunpack.c.l.b16 %v925
  %v2981 = vunpack.c.l.b16 %v926
  %v2982 = vunpack.c.l.b16 %v927
  %v2983 = vunpack.c.l.b16 %v928
  %v2984 = vunpack.c.l.b16 %v929
  %v2985 = vunpack.c.l.b16 %v930
  %v2986 = vunpack.c.l.b16 %v931
  %v2987 = vunpack.c.l.b16 %v932
  %v2988 = vunpack.c.l.b16 %v933
  %v2989 = vunpack.c.l.b16 %v934
  %v2990 = vunpack.c.l.b16 %v935
  %v2991 = vunpack.c.l.b16 %v936
  %v2992 = vunpack.c.l.b16 %v937
  %v2993 = vunpack.c.l.b16 %v938
  %v2994 = vunpack.c.l.b16 %v939
  %v2995 = vunpack.c.l.b16 %v940
  %v2996 = vunpack.c.l.b16 %v941
  %v2997 = vunpack.c.l.b16 %v942
  %v2998 = vunpack.c.l.b16 %v943
  %v2999 = vunpack.c.l.b16 %v944
  %v3000 = vunpack.c.l.b16 %v945
  %v3001 = vunpack.c.l.b16 %v946
  %v3002 = vunpack.c.l.b16 %v947
  %v3003 = vunpack.c.l.b16 %v948
  %v3004 = vunpack.c.l.b16 %v949
  %v3005 = vunpack.c.l.b16 %v950
  %v3006 = vunpack.c.l.b16 %v951
  %v3007 = vunpack.c.l.b16 %v952
  %v3008 = vunpack.c.l.b16 %v953
  %v3009 = vunpack.c.l.b16 %v954
  %v3010 = vunpack.c.l.b16 %v955
  %v3011 = vunpack.c.l.b16 %v956
  %v3012 = vunpack.c.l.b16 %v957
  %v3013 = vunpack.c.l.b16 %v958
  %v3014 = vunpack.c.l.b16 %v959
  %v3015 = vunpack.c.l.b16 %v960
  %v3016 = vunpack.c.l.b16 %v961
  %v3017 = vunpack.c.l.b16 %v962
  %v3018 = vunpack.c.l.b16 %v963
  %v3019 = vunpack.c.l.b16 %v964
  %v3020 = vunpack.c.l.b16 %v965
  %v3021 = vunpack.c.l.b16 %v966
  %v3022 = vunpack.c.l.b16 %v967
  %v3023 = vunpack.c.l.b16 %v968
  %v3024 = vunpack.c.l.b16 %v969
  %v3025 = vunpack.c.l.b16 %v970
  %v3026 = vunpack.c.l.b16 %v971
  %v3027 = vunpack.c.l.b16 %v972
  %v3028 = vunpack.c.l.b16 %v973
  %v3029 = vunpack.c.l.b16 %v974
  %v3030 = vunpack.c.l.b16 %v975
  %v3031 = vunpack.c.l.b16 %v976
  %v3032 = vunpack.c.l.b16 %v977
  %v3033 = vunpack.c.l.b16 %v978
  %v3034 = vunpack.c.l.b16 %v979
  %v3035 = vunpack.c.l.b16 %v980
  %v3036 = vunpack.c.l.b16 %v981
  %v3037 = vunpack.c.l.b16 %v982
  %v3038 = vunpack.c.l.b16 %v983
  %v3039 = vunpack.c.l.b16 %v984
  %v3040 = vunpack.c.l.b16 %v985
  %v3041 = vunpack.c.l.b16 %v986
  %v3042 = vunpack.c.l.b16 %v987
  %v3043 = vunpack.c.l.b16 %v988
  %v3044 = vunpack.c.l.b16 %v989
  %v3045 = vunpack.c.l.b16 %v990
  %v3046 = vunpack.c.l.b16 %v991
  %v3047 = vunpack.c.l.b16 %v992
  %v3048 = vunpack.c.l.b16 %v993
  %v3049 = vunpack.c.l.b16 %v994
  %v3050 = vunpack.c.l.b16 %v995
  %v3051 = vunpack.c.l.b16 %v996
  %v3052 = vunpack.c.l.b16 %v997
  %v3053 = vunpack.c.l.b16 %v998
  %v3054 = vunpack.c.l.b16 %v999
  %v3055 = vunpack.c.l.b16 %v1000
  %v3056 = vunpack.c.l.b16 %v1001
  %v3057 = vunpack.c.l.b16 %v1002
  %v3058 = vunpack.c.l.b16 %v1003
  %v3059 = vunpack.c.l.b16 %v1004
  %v3060 = vunpack.c.l.b16 %v1005
  %v3061 = vunpack.c.l.b16 %v1006
  %v3062 = vunpack.c.l.b16 %v1007
  %v3063 = vunpack.c.l.b16 %v1008
  %v3064 = vunpack.c.l.b16 %v1009
  %v3065 = vunpack.c.l.b16 %v1010
  %v3066 = vunpack.c.l.b16 %v1011
  %v3067 = vunpack.c.l.b16 %v1012
  %v3068 = vunpack.c.l.b16 %v1013
  %v3069 = vunpack.c.l.b16 %v1014
  %v3070 = vunpack.c.l.b16 %v1015
  %v3071 = vunpack.c.l.b16 %v1016
  %v3072 = vunpack.c.l.b16 %v1017
  %v3073 = vunpack.c.l.b16 %v1018
  %v3074 = vunpack.c.l.b16 %v1019
  %v3075 = vunpack.c.l.b16 %v1020
  %v3076 = vunpack.c.l.b16 %v1021
  %v3077 = vunpack.c.l.b16 %v1022
  %v3078 = vunpack.c.l.b16 %v1023
  %v3079 = vunpack.c.l.b16 %v1024
  %v3080 = vunpack.c.l.b16 %v1025
  %v3081 = vunpack.c.l.b16 %v1026
  %v3082 = vunpack.c.l.b16 %v1027
  %v3083 = vunpack.c.l.b16 %v1028
  %v3084 = vunpack.c.l.b16 %v1029
  %v3085 = vunpack.c.l.b16 %v1030
  %v3086 = vunpack.c.l.b16 %v1031
  %v3087 = vunpack.c.l.b16 %v1032
  %v3088 = vunpack.c.l.b16 %v1033
  %v3089 = vunpack.c.l.b16 %v1034
  %v3090 = vunpack.c.l.b16 %v1035
  %v3091 = vunpack.c.l.b16 %v1036
  %v3092 = vunpack.c.l.b16 %v1037
  %v3093 = vunpack.c.l.b16 %v1038
  %v3094 = vunpack.c.l.b16 %v1039
  %v3095 = vunpack.c.l.b16 %v1040
  %v3096 = vunpack.c.l.b16 %v1041
  %v3097 = vunpack.c.l.b16 %v1042
  %v3098 = vunpack.c.l.b16 %v1043
  %v3099 = vunpack.c.l.b16 %v1044
  %v3100 = vunpack.c.l.b16 %v1045
  %v3101 = vunpack.c.l.b16 %v1046
  %v3102 = vunpack.c.l.b16 %v1047
  %v3103 = vunpack.c.l.b16 %v1048
  %v3104 = vunpack.c.l.b16 %v1049
  %v3105 = vunpack.c.l.b16 %v1050
  %v3106 = vunpack.c.l.b16 %v1051
  %v3107 = vunpack.c.l.b16 %v1052
  %v3108 = vunpack.c.l.b16 %v1053
  %v3109 = vunpack.c.l.b16 %v1054
  %v3110 = vunpack.c.l.b16 %v1055
  %v3111 = vunpack.c.l.b16 %v1056
  %v3112 = vunpack.c.l.b16 %v1057
  %v3113 = vunpack.c.l.b16 %v1058
  %v3114 = vunpack.c.l.b16 %v1059
  %v3115 = vunpack.c.l.b16 %v1060
  %v3116 = vunpack.c.l.b16 %v1061
  %v3117 = vunpack.c.l.b16 %v1062
  %v3118 = vunpack.c.l.b16 %v1063
  %v3119 = vunpack.c.l.b16 %v1064
  %v3120 = vunpack.c.l.b16 %v1065
  %v3121 = vunpack.c.l.b16 %v1066
  %v3122 = vunpack.c.l.b16 %v1067
  %v3123 = vunpack.c.l.b16 %v1068
  %v3124 = vunpack.c.l.b16 %v1069
  %v3125 = vunpack.c.l.b16 %v1070
  %v3126 = vunpack.c.l.b16 %v1071
  %v3127 = vunpack.c.l.b16 %v1072
  %v3128 = vunpack.c.l.b16 %v1073
  %v3129 = vunpack.c.l.b16 %v1074
  %v3130 = vunpack.c.l.b16 %v1075
  %v3131 = vunpack.c.l.b16 %v1076
  %v3132 = vunpack.c.l.b16 %v1077
  %v3133 = vunpack.c.l.b16 %v1078
  %v3134 = vunpack.c.l.b16 %v1079
  %v3135 = vunpack.c.l.b16 %v1080
  %v3136 = vunpack.c.l.b16 %v1081
  %v3137 = vunpack.c.l.b16 %v1082
  %v3138 = vunpack.c.l.b16 %v1083
  %v3139 = vunpack.c.l.b16 %v1084
  %v3140 = vunpack.c.l.b16 %v1085
  %v3141 = vunpack.c.l.b16 %v1086
  %v3142 = vunpack.c.l.b16 %v1087
  %v3143 = vunpack.c.l.b16 %v1088
  %v3144 = vunpack.c.l.b16 %v1089
  %v3145 = vunpack.c.l.b16 %v1090
  %v3146 = vunpack.c.l.b16 %v1091
  %v3147 = vunpack.c.l.b16 %v1092
  %v3148 = vunpack.c.l.b16 %v1093
  %v3149 = vunpack.c.l.b16 %v1094
  %v3150 = vunpack.c.l.b16 %v1095
  %v3151 = vunpack.c.l.b16 %v1096
  %v3152 = vunpack.c.l.b16 %v1097
  %v3153 = vunpack.c.l.b16 %v1098
  %v3154 = vunpack.c.l.b16 %v1099
  %v3155 = vunpack.c.l.b16 %v1100
  %v3156 = vunpack.c.l.b16 %v1101
  %v3157 = vunpack.c.l.b16 %v1102
  %v3158 = vunpack.c.l.b16 %v1103
  %v3159 = vunpack.c.l.b16 %v1104
  %v3160 = vunpack.c.l.b16 %v1105
  %v3161 = vunpack.c.l.b16 %v1106
  %v3162 = vunpack.c.l.b16 %v1107
  %v3163 = vunpack.c.l.b16 %v1108
  %v3164 = vunpack.c.l.b16 %v1109
  %v3165 = vunpack.c.l.b16 %v1110
  %v3166 = vunpack.c.l.b16 %v1111
  %v3167 = vunpack.c.l.b16 %v1112
  %v3168 = vunpack.c.l.b16 %v1113
  %v3169 = vunpack.c.l.b16 %v1114
  %v3170 = vunpack.c.l.b16 %v1115
  %v3171 = vunpack.c.l.b16 %v1116
  %v3172 = vunpack.c.l.b16 %v1117
  %v3173 = vunpack.c.l.b16 %v1118
  %v3174 = vunpack.c.l.b16 %v1119
  %v3175 = vunpack.c.l.b16 %v1120
  %v3176 = vunpack.c.l.b16 %v1121
  %v3177 = vunpack.c.l.b16 %v1122
  %v3178 = vunpack.c.l.b16 %v1123
  %v3179 = vunpack.c.l.b16 %v1124
  %v3180 = vunpack.c.l.b16 %v1125
  %v3181 = vunpack.c.l.b16 %v1126
  %v3182 = vunpack.c.l.b16 %v1127
  %v3183 = vunpack.c.l.b16 %v1128
  %v3184 = vunpack.c.l.b16 %v1129
  %v3185 = vunpack.c.l.b16 %v1130
  %v3186 = vunpack.c.l.b16 %v1131
  %v3187 = vunpack.c.l.b16 %v1132
  %v3188 = vunpack.c.l.b16 %v1133
  %v3189 = vunpack.c.l.b16 %v1134
  %v3190 = vunpack.c.l.b16 %v1135
  %v3191 = vunpack.c.l.b16 %v1136
  %v3192 = vunpack.c.l.b16 %v1137
  %v3193 = vunpack.c.l.b16 %v1138
  %v3194 = vunpack.c.l.b16 %v1139
  %v3195 = vunpack.c.l.b16 %v1140
  %v3196 = vunpack.c.l.b16 %v1141
  %v3197 = vunpack.c.l.b16 %v1142
  %v3198 = vunpack.c.l.b16 %v1143
  %v3199 = vunpack.c.l.b16 %v1144
  %v3200 = vunpack.c.l.b16 %v1145
  %v3201 = vunpack.c.l.b16 %v1146
  %v3202 = vunpack.c.l.b16 %v1147
  %v3203 = vunpack.c.l.b16 %v1148
  %v3204 = vunpack.c.l.b16 %v1149
  %v3205 = vunpack.c.l.b16 %v1150
  %v3206 = vunpack.c.l.b16 %v1151
  %v3207 = vunpack.c.l.b16 %v1152
  %v3208 = vunpack.c.l.b16 %v1153
  %v3209 = vunpack.c.l.b16 %v1154
  %v3210 = vunpack.c.l.b16 %v1155
  %v3211 = vunpack.c.l.b16 %v1156
  %v3212 = vunpack.c.l.b16 %v1157
  %v3213 = vunpack.c.l.b16 %v1158
  %v3214 = vunpack.c.l.b16 %v1159
  %v3215 = vunpack.c.l.b16 %v1160
  %v3216 = vunpack.c.l.b16 %v1161
  %v3217 = vunpack.c.l.b16 %v1162
  %v3218 = vunpack.c.l.b16 %v1163
  %v3219 = vunpack.c.l.b16 %v1164
  %v3220 = vunpack.c.l.b16 %v1165
  %v3221 = vunpack.c.l.b16 %v1166
  %v3222 = vunpack.c.l.b16 %v1167
  %v3223 = vunpack.c.l.b16 %v1168
  %v3224 = vunpack.c.l.b16 %v1169
  %v3225 = vunpack.c.l.b16 %v1170
  %v3226 = vunpack.c.l.b16 %v1171
  %v3227 = vunpack.c.l.b16 %v1172
  %v3228 = vunpack.c.l.b16 %v1173
  %v3229 = vunpack.c.l.b16 %v1174
  %v3230 = vunpack.c.l.b16 %v1175
  %v3231 = vunpack.c.l.b16 %v1176
  %v3232 = vunpack.c.l.b16 %v1177
  %v3233 = vunpack.c.l.b16 %v1178
  %v3234 = vunpack.c.l.b16 %v1179
  %v3235 = vunpack.c.l.b16 %v1180
  %v3236 = vunpack.c.l.b16 %v1181
  %v3237 = vunpack.c.l.b16 %v1182
  %v3238 = vunpack.c.l.b16 %v1183
  %v3239 = vunpack.c.l.b16 %v1184
  %v3240 = vunpack.c.l.b16 %v1185
  %v3241 = vunpack.c.l.b16 %v1186
  %v3242 = vunpack.c.l.b16 %v1187
  %v3243 = vunpack.c.l.b16 %v1188
  %v3244 = vunpack.c.l.b16 %v1189
  %v3245 = vunpack.c.l.b16 %v1190
  %v3246 = vunpack.c.l.b16 %v1191
  %v3247 = vunpack.c.l.b16 %v1192
  %v3248 = vunpack.c.l.b16 %v1193
  %v3249 = vunpack.c.l.b16 %v1194
  %v3250 = vunpack.c.l.b16 %v1195
  %v3251 = vunpack.c.l.b16 %v1196
  %v3252 = vunpack.c.l.b16 %v1197
  %v3253 = vunpack.c.l.b16 %v1198
  %v3254 = vunpack.c.l.b16 %v1199
  %v3255 = vunpack.c.l.b16 %v1200
  %v3256 = vunpack.c.l.b16 %v1201
  %v3257 = vunpack.c.l.b16 %v1202
  %v3258 = vunpack.c.l.b16 %v1203
  %v3259 = vunpack.c.l.b16 %v1204
  %v3260 = vunpack.c.l.b16 %v1205
  %v3261 = vunpack.c.l.b16 %v1206
  %v3262 = vunpack.c.l.b16 %v1207
  %v3263 = vunpack.c.l.b16 %v1208
  %v3264 = vunpack.c.l.b16 %v1209
  %v3265 = vunpack.c.l.b16 %v1210
  %v3266 = vunpack.c.l.b16 %v1211
  %v3267 = vunpack.c.l.b16 %v1212
  %v3268 = vunpack.c.l.b16 %v1213
  %v3269 = vunpack.c.l.b16 %v1214
  %v3270 = vunpack.c.l.b16 %v1215
  %v3271 = vunpack.c.l.b16 %v1216
  %v3272 = vunpack.c.l.b16 %v1217
  %v3273 = vunpack.c.l.b16 %v1218
  %v3274 = vunpack.c.l.b16 %v1219
  %v3275 = vunpack.c.l.b16 %v1220
  %v3276 = vunpack.c.l.b16 %v1221
  %v3277 = vunpack.c.l.b16 %v1222
  %v3278 = vunpack.c.l.b16 %v1223
  %v3279 = vunpack.c.l.b16 %v1224
  %v3280 = vunpack.c.l.b16 %v1225
  %v3281 = vunpack.c.l.b16 %v1226
  %v3282 = vunpack.c.l.b16 %v1227
  %v3283 = vunpack.c.l.b16 %v1228
  %v3284 = vunpack.c.l.b16 %v1229
  %v3285 = vunpack.c.l.b16 %v1230
  %v3286 = vunpack.c.l.b16 %v1231
  %v3287 = vunpack.c.l.b16 %v1232
  %v3288 = vunpack.c.l.b16 %v1233
  %v3289 = vunpack.c.l.b16 %v1234
  %v3290 = vunpack.c.l.b16 %v1235
  %v3291 = vunpack.c.l.b16 %v1236
  %v3292 = vunpack.c.l.b16 %v1237
  %v3293 = vunpack.c.l.b16 %v1238
  %v3294 = vunpack.c.l.b16 %v1239
  %v3295 = vunpack.c.l.b16 %v1240
  %v3296 = vunpack.c.l.b16 %v1241
  %v3297 = vunpack.c.l.b16 %v1242
  %v3298 = vunpack.c.l.b16 %v1243
  %v3299 = vunpack.c.l.b16 %v1244
  %v3300 = vunpack.c.l.b16 %v1245
  %v3301 = vunpack.c.l.b16 %v1246
  %v3302 = vunpack.c.l.b16 %v1247
  %v3303 = vunpack.c.l.b16 %v1248
  %v3304 = vunpack.c.l.b16 %v1249
  %v3305 = vunpack.c.l.b16 %v1250
  %v3306 = vunpack.c.l.b16 %v1251
  %v3307 = vunpack.c.l.b16 %v1252
  %v3308 = vunpack.c.l.b16 %v1253
  %v3309 = vunpack.c.l.b16 %v1254
  %v3310 = vunpack.c.l.b16 %v1255
  %v3311 = vunpack.c.l.b16 %v1256
  %v3312 = vunpack.c.l.b16 %v1257
  %v3313 = vunpack.c.l.b16 %v1258
  %v3314 = vunpack.c.l.b16 %v1259
  %v3315 = vunpack.c.l.b16 %v1260
  %v3316 = vunpack.c.l.b16 %v1261
  %v3317 = vunpack.c.l.b16 %v1262
  %v3318 = vunpack.c.l.b16 %v1263
  %v3319 = vunpack.c.l.b16 %v1264
  %v3320 = vunpack.c.l.b16 %v1265
  %v3321 = vunpack.c.l.b16 %v1266
  %v3322 = vunpack.c.l.b16 %v1267
  %v3323 = vunpack.c.l.b16 %v1268
  %v3324 = vunpack.c.l.b16 %v1269
  %v3325 = vunpack.c.l.b16 %v1270
  %v3326 = vunpack.c.l.b16 %v1271
  %v3327 = vunpack.c.l.b16 %v1272
  %v3328 = vunpack.c.l.b16 %v1273
  %v3329 = vunpack.c.l.b16 %v1274
  %v3330 = vunpack.c.l.b16 %v1275
  %v3331 = vunpack.c.l.b16 %v1276
  %v3332 = vunpack.c.l.b16 %v1277
  %v3333 = vunpack.c.l.b16 %v1278
  %v3334 = vunpack.c.l.b16 %v1279
  %v3335 = vunpack.c.l.b16 %v1280
  %v3336 = vunpack.c.l.b16 %v1281
  %v3337 = vunpack.c.l.b16 %v1282
  %v3338 = vunpack.c.l.b16 %v1283
  %v3339 = vunpack.c.l.b16 %v1284
  %v3340 = vunpack.c.l.b16 %v1285
  %v3341 = vunpack.c.l.b16 %v1286
  %v3342 = vunpack.c.l.b16 %v1287
  %v3343 = vunpack.c.l.b16 %v1288
  %v3344 = vunpack.c.l.b16 %v1289
  %v3345 = vunpack.c.l.b16 %v1290
  %v3346 = vunpack.c.l.b16 %v1291
  %v3347 = vunpack.c.l.b16 %v1292
  %v3348 = vunpack.c.l.b16 %v1293
  %v3349 = vunpack.c.l.b16 %v1294
  %v3350 = vunpack.c.l.b16 %v1295
  %v3351 = vunpack.c.l.b16 %v1296
  %v3352 = vunpack.c.l.b16 %v1297
  %v3353 = vunpack.c.l.b16 %v1298
  %v3354 = vunpack.c.l.b16 %v1299
  %v3355 = vunpack.c.l.b16 %v1300
  %v3356 = vunpack.c.l.b16 %v1301
  %v3357 = vunpack.c.l.b16 %v1302
  %v3358 = vunpack.c.l.b16 %v1303
  %v3359 = vunpack.c.l.b16 %v1304
  %v3360 = vunpack.c.l.b16 %v1305
  %v3361 = vunpack.c.l.b16 %v1306
  %v3362 = vunpack.c.l.b16 %v1307
  %v3363 = vunpack.c.l.b16 %v1308
  %v3364 = vunpack.c.l.b16 %v1309
  %v3365 = vunpack.c.l.b16 %v1310
  %v3366 = vunpack.c.l.b16 %v1311
  %v3367 = vunpack.c.l.b16 %v1312
  %v3368 = vunpack.c.l.b16 %v1313
  %v3369 = vunpack.c.l.b16 %v1314
  %v3370 = vunpack.c.l.b16 %v1315
  %v3371 = vunpack.c.l.b16 %v1316
  %v3372 = vunpack.c.l.b16 %v1317
  %v3373 = vunpack.c.l.b16 %v1318
  %v3374 = vunpack.c.l.b16 %v1319
  %v3375 = vunpack.c.l.b16 %v1320
  %v3376 = vunpack.c.l.b16 %v1321
  %v3377 = vunpack.c.l.b16 %v1322
  %v3378 = vunpack.c.l.b16 %v1323
  %v3379 = vunpack.c.l.b16 %v1324
  %v3380 = vunpack.c.l.b16 %v1325
  %v3381 = vunpack.c.l.b16 %v1326
  %v3382 = vunpack.c.l.b16 %v1327
  %v3383 = vunpack.c.l.b16 %v1328
  %v3384 = vunpack.c.l.b16 %v1329
  %v3385 = vunpack.c.l.b16 %v1330
  %v3386 = vunpack.c.l.b16 %v1331
  %v3387 = vunpack.c.l.b16 %v1332
  %v3388 = vunpack.c.l.b16 %v1333
  %v3389 = vunpack.c.l.b16 %v1334
  %v3390 = vunpack.c.l.b16 %v1335
  %v3391 = vunpack.c.l.b16 %v1336
  %v3392 = vunpack.c.l.b16 %v1337
  %v3393 = vunpack.c.l.b16 %v1338
  %v3394 = vunpack.c.l.b16 %v1339
  %v3395 = vunpack.c.l.b16 %v1340
  %v3396 = vunpack.c.l.b16 %v1341
  %v3397 = vunpack.c.l.b16 %v1342
  %v3398 = vunpack.c.l.b16 %v1343
  %v3399 = vunpack.c.l.b16 %v1344
  %v3400 = vunpack.c.l.b16 %v1345
  %v3401 = vunpack.c.l.b16 %v1346
  %v3402 = vunpack.c.l.b16 %v1347
  %v3403 = vunpack.c.l.b16 %v1348
  %v3404 = vunpack.c.l.b16 %v1349
  %v3405 = vunpack.c.l.b16 %v1350
  %v3406 = vunpack.c.l.b16 %v1351
  %v3407 = vunpack.c.l.b16 %v1352
  %v3408 = vunpack.c.l.b16 %v1353
  %v3409 = vunpack.c.l.b16 %v1354
  %v3410 = vunpack.c.l.b16 %v1355
  %v3411 = vunpack.c.l.b16 %v1356
  %v3412 = vunpack.c.l.b16 %v1357
  %v3413 = vunpack.c.l.b16 %v1358
  %v3414 = vunpack.c.l.b16 %v1359
  %v3415 = vunpack.c.l.b16 %v1360
  %v3416 = vunpack.c.l.b16 %v1361
  %v3417 = vunpack.c.l.b16 %v1362
  %v3418 = vunpack.c.l.b16 %v1363
  %v3419 = vunpack.c.l.b16 %v1364
  %v3420 = vunpack.c.l.b16 %v1365
  %v3421 = vunpack.c.l.b16 %v1366
  %v3422 = vunpack.c.l.b16 %v1367
  %v3423 = vunpack.c.l.b16 %v1368
  %v3424 = vunpack.c.l.b16 %v1369
  %v3425 = vunpack.c.l.b16 %v1370
  %v3426 = vunpack.c.l.b16 %v1371
  %v3427 = vunpack.c.l.b16 %v1372
  %v3428 = vunpack.c.l.b16 %v1373
  %v3429 = vunpack.c.l.b16 %v1374
  %v3430 = vunpack.c.l.b16 %v1375
  %v3431 = vunpack.c.l.b16 %v1376
  %v3432 = vunpack.c.l.b16 %v1377
  %v3433 = vunpack.c.l.b16 %v1378
  %v3434 = vunpack.c.l.b16 %v1379
  %v3435 = vunpack.c.l.b16 %v1380
  %v3436 = vunpack.c.l.b16 %v1381
  %v3437 = vunpack.c.l.b16 %v1382
  %v3438 = vunpack.c.l.b16 %v1383
  %v3439 = vunpack.c.l.b16 %v1384
  %v3440 = vunpack.c.l.b16 %v1385
  %v3441 = vunpack.c.l.b16 %v1386
  %v3442 = vunpack.c.l.b16 %v1387
  %v3443 = vunpack.c.l.b16 %v1388
  %v3444 = vunpack.c.l.b16 %v1389
  %v3445 = vunpack.c.l.b16 %v1390
  %v3446 = vunpack.c.l.b16 %v1391
  %v3447 = vunpack.c.l.b16 %v1392
  %v3448 = vunpack.c.l.b16 %v1393
  %v3449 = vunpack.c.l.b16 %v1394
  %v3450 = vunpack.c.l.b16 %v1395
  %v3451 = vunpack.c.l.b16 %v1396
  %v3452 = vunpack.c.l.b16 %v1397
  %v3453 = vunpack.c.l.b16 %v1398
  %v3454 = vunpack.c.l.b16 %v1399
  %v3455 = vunpack.c.l.b16 %v1400
  %v3456 = vunpack.c.l.b16 %v1401
  %v3457 = vunpack.c.l.b16 %v1402
  %v3458 = vunpack.c.l.b16 %v1403
  %v3459 = vunpack.c.l.b16 %v1404
  %v3460 = vunpack.c.l.b16 %v1405
  %v3461 = vunpack.c.l.b16 %v1406
  %v3462 = vunpack.c.l.b16 %v1407
  %v3463 = vunpack.c.l.b16 %v1408
  %v3464 = vunpack.c.l.b16 %v1409
  %v3465 = vunpack.c.l.b16 %v1410
  %v3466 = vunpack.c.l.b16 %v1411
  %v3467 = vunpack.c.l.b16 %v1412
  %v3468 = vunpack.c.l.b16 %v1413
  %v3469 = vunpack.c.l.b16 %v1414
  %v3470 = vunpack.c.l.b16 %v1415
  %v3471 = vunpack.c.l.b16 %v1416
  %v3472 = vunpack.c.l.b16 %v1417
  %v3473 = vunpack.c.l.b16 %v1418
  %v3474 = vunpack.c.l.b16 %v1419
  %v3475 = vunpack.c.l.b16 %v1420
  %v3476 = vunpack.c.l.b16 %v1421
  %v3477 = vunpack.c.l.b16 %v1422
  %v3478 = vunpack.c.l.b16 %v1423
  %v3479 = vunpack.c.l.b16 %v1424
  %v3480 = vunpack.c.l.b16 %v1425
  %v3481 = vunpack.c.l.b16 %v1426
  %v3482 = vunpack.c.l.b16 %v1427
  %v3483 = vunpack.c.l.b16 %v1428
  %v3484 = vunpack.c.l.b16 %v1429
  %v3485 = vunpack.c.l.b16 %v1430
  %v3486 = vunpack.c.l.b16 %v1431
  %v3487 = vunpack.c.l.b16 %v1432
  %v3488 = vunpack.c.l.b16 %v1433
  %v3489 = vunpack.c.l.b16 %v1434
  %v3490 = vunpack.c.l.b16 %v1435
  %v3491 = vunpack.c.l.b16 %v1436
  %v3492 = vunpack.c.l.b16 %v1437
  %v3493 = vunpack.c.l.b16 %v1438
  %v3494 = vunpack.c.l.b16 %v1439
  %v3495 = vunpack.c.l.b16 %v1440
  %v3496 = vunpack.c.l.b16 %v1441
  %v3497 = vunpack.c.l.b16 %v1442
  %v3498 = vunpack.c.l.b16 %v1443
  %v3499 = vunpack.c.l.b16 %v1444
  %v3500 = vunpack.c.l.b16 %v1445
  %v3501 = vunpack.c.l.b16 %v1446
  %v3502 = vunpack.c.l.b16 %v1447
  %v3503 = vunpack.c.l.b16 %v1448
  %v3504 = vunpack.c.l.b16 %v1449
  %v3505 = vunpack.c.l.b16 %v1450
  %v3506 = vunpack.c.l.b16 %v1451
  %v3507 = vunpack.c.l.b16 %v1452
  %v3508 = vunpack.c.l.b16 %v1453
  %v3509 = vunpack.c.l.b16 %v1454
  %v3510 = vunpack.c.l.b16 %v1455
  %v3511 = vunpack.c.l.b16 %v1456
  %v3512 = vunpack.c.l.b16 %v1457
  %v3513 = vunpack.c.l.b16 %v1458
  %v3514 = vunpack.c.l.b16 %v1459
  %v3515 = vunpack.c.l.b16 %v1460
  %v3516 = vunpack.c.l.b16 %v1461
  %v3517 = vunpack.c.l.b16 %v1462
  %v3518 = vunpack.c.l.b16 %v1463
  %v3519 = vunpack.c.l.b16 %v1464
  %v3520 = vunpack.c.l.b16 %v1465
  %v3521 = vunpack.c.l.b16 %v1466
  %v3522 = vunpack.c.l.b16 %v1467
  %v3523 = vunpack.c.l.b16 %v1468
  %v3524 = vunpack.c.l.b16 %v1469
  %v3525 = vunpack.c.l.b16 %v1470
  %v3526 = vpack.c.b16 %v2503, %v2502
  %v3527 = vpack.c.b16 %v2505, %v2504
  %v3528 = vpack.c.b16 %v2507, %v2506
  %v3529 = vpack.c.b16 %v2509, %v2508
  %v3530 = vpack.c.b16 %v2511, %v2510
  %v3531 = vpack.c.b16 %v2513, %v2512
  %v3532 = vpack.c.b16 %v2515, %v2514
  %v3533 = vpack.c.b16 %v2517, %v2516
  %v3534 = vpack.c.b16 %v2519, %v2518
  %v3535 = vpack.c.b16 %v2521, %v2520
  %v3536 = vpack.c.b16 %v2523, %v2522
  %v3537 = vpack.c.b16 %v2525, %v2524
  %v3538 = vpack.c.b16 %v2527, %v2526
  %v3539 = vpack.c.b16 %v2529, %v2528
  %v3540 = vpack.c.b16 %v2531, %v2530
  %v3541 = vpack.c.b16 %v2533, %v2532
  %v3542 = vpack.c.b16 %v2535, %v2534
  %v3543 = vpack.c.b16 %v2537, %v2536
  %v3544 = vpack.c.b16 %v2539, %v2538
  %v3545 = vpack.c.b16 %v2541, %v2540
  %v3546 = vpack.c.b16 %v2543, %v2542
  %v3547 = vpack.c.b16 %v2545, %v2544
  %v3548 = vpack.c.b16 %v2547, %v2546
  %v3549 = vpack.c.b16 %v2549, %v2548
  %v3550 = vpack.c.b16 %v2551, %v2550
  %v3551 = vpack.c.b16 %v2553, %v2552
  %v3552 = vpack.c.b16 %v2555, %v2554
  %v3553 = vpack.c.b16 %v2557, %v2556
  %v3554 = vpack.c.b16 %v2559, %v2558
  %v3555 = vpack.c.b16 %v2561, %v2560
  %v3556 = vpack.c.b16 %v2563, %v2562
  %v3557 = vpack.c.b16 %v2565, %v2564
  %v3558 = vpack.c.b16 %v2567, %v2566
  %v3559 = vpack.c.b16 %v2569, %v2568
  %v3560 = vpack.c.b16 %v2571, %v2570
  %v3561 = vpack.c.b16 %v2573, %v2572
  %v3562 = vpack.c.b16 %v2575, %v2574
  %v3563 = vpack.c.b16 %v2577, %v2576
  %v3564 = vpack.c.b16 %v2579, %v2578
  %v3565 = vpack.c.b16 %v2581, %v2580
  %v3566 = vpack.c.b16 %v2583, %v2582
  %v3567 = vpack.c.b16 %v2585, %v2584
  %v3568 = vpack.c.b16 %v2587, %v2586
  %v3569 = vpack.c.b16 %v2589, %v2588
  %v3570 = vpack.c.b16 %v2591, %v2590
  %v3571 = vpack.c.b16 %v2593, %v2592
  %v3572 = vpack.c.b16 %v2595, %v2594
  %v3573 = vpack.c.b16 %v2597, %v2596
  %v3574 = vpack.c.b16 %v2599, %v2598
  %v3575 = vpack.c.b16 %v2601, %v2600
  %v3576 = vpack.c.b16 %v2603, %v2602
  %v3577 = vpack.c.b16 %v2605, %v2604
  %v3578 = vpack.c.b16 %v2607, %v2606
  %v3579 = vpack.c.b16 %v2609, %v2608
  %v3580 = vpack.c.b16 %v2611, %v2610
  %v3581 = vpack.c.b16 %v2613, %v2612
  %v3582 = vpack.c.b16 %v2615, %v2614
  %v3583 = vpack.c.b16 %v2617, %v2616
  %v3584 = vpack.c.b16 %v2619, %v2618
  %v3585 = vpack.c.b16 %v2621, %v2620
  %v3586 = vpack.c.b16 %v2623, %v2622
  %v3587 = vpack.c.b16 %v2625, %v2624
  %v3588 = vpack.c.b16 %v2627, %v2626
  %v3589 = vpack.c.b16 %v2629, %v2628
  %v3590 = vpack.c.b16 %v2631, %v2630
  %v3591 = vpack.c.b16 %v2633, %v2632
  %v3592 = vpack.c.b16 %v2635, %v2634
  %v3593 = vpack.c.b16 %v2637, %v2636
  %v3594 = vpack.c.b16 %v2639, %v2638
  %v3595 = vpack.c.b16 %v2641, %v2640
  %v3596 = vpack.c.b16 %v2643, %v2642
  %v3597 = vpack.c.b16 %v2645, %v2644
  %v3598 = vpack.c.b16 %v2647, %v2646
  %v3599 = vpack.c.b16 %v2649, %v2648
  %v3600 = vpack.c.b16 %v2651, %v2650
  %v3601 = vpack.c.b16 %v2653, %v2652
  %v3602 = vpack.c.b16 %v2655, %v2654
  %v3603 = vpack.c.b16 %v2657, %v2656
  %v3604 = vpack.c.b16 %v2659, %v2658
  %v3605 = vpack.c.b16 %v2661, %v2660
  %v3606 = vpack.c.b16 %v2663, %v2662
  %v3607 = vpack.c.b16 %v2665, %v2664
  %v3608 = vpack.c.b16 %v2667, %v2666
  %v3609 = vpack.c.b16 %v2669, %v2668
  %v3610 = vpack.c.b16 %v2671, %v2670
  %v3611 = vpack.c.b16 %v2673, %v2672
  %v3612 = vpack.c.b16 %v2675, %v2674
  %v3613 = vpack.c.b16 %v2677, %v2676
  %v3614 = vpack.c.b16 %v2679, %v2678
  %v3615 = vpack.c.b16 %v2681, %v2680
  %v3616 = vpack.c.b16 %v2683, %v2682
  %v3617 = vpack.c.b16 %v2685, %v2684
  %v3618 = vpack.c.b16 %v2687, %v2686
  %v3619 = vpack.c.b16 %v2689, %v2688
  %v3620 = vpack.c.b16 %v2691, %v2690
  %v3621 = vpack.c.b16 %v2693, %v2692
  %v3622 = vpack.c.b16 %v2695, %v2694
  %v3623 = vpack.c.b16 %v2697, %v2696
  %v3624 = vpack.c.b16 %v2699, %v2698
  %v3625 = vpack.c.b16 %v2701, %v2700
  %v3626 = vpack.c.b16 %v2703, %v2702
  %v3627 = vpack.c.b16 %v2705, %v2704
  %v3628 = vpack.c.b16 %v2707, %v2706
  %v3629 = vpack.c.b16 %v2709, %v2708
  %v3630 = vpack.c.b16 %v2711, %v2710
  %v3631 = vpack.c.b16 %v2713, %v2712
  %v3632 = vpack.c.b16 %v2715, %v2714
  %v3633 = vpack.c.b16 %v2717, %v2716
  %v3634 = vpack.c.b16 %v2719, %v2718
  %v3635 = vpack.c.b16 %v2721, %v2720
  %v3636 = vpack.c.b16 %v2723, %v2722
  %v3637 = vpack.c.b16 %v2725, %v2724
  %v3638 = vpack.c.b16 %v2727, %v2726
  %v3639 = vpack.c.b16 %v2729, %v2728
  %v3640 = vpack.c.b16 %v2731, %v2730
  %v3641 = vpack.c.b16 %v2733, %v2732
  %v3642 = vpack.c.b16 %v2735, %v2734
  %v3643 = vpack.c.b16 %v2737, %v2736
  %v3644 = vpack.c.b16 %v2739, %v2738
  %v3645 = vpack.c.b16 %v2741, %v2740
  %v3646 = vpack.c.b16 %v2743, %v2742
  %v3647 = vpack.c.b16 %v2745, %v2744
  %v3648 = vpack.c.b16 %v2747, %v2746
  %v3649 = vpack.c.b16 %v2749, %v2748
  %v3650 = vpack.c.b16 %v2751, %v2750
  %v3651 = vpack.c.b16 %v2753, %v2752
  %v3652 = vpack.c.b16 %v2755, %v2754
  %v3653 = vpack.c.b16 %v2757, %v2756
  %v3654 = vpack.c.b16 %v2759, %v2758
  %v3655 = vpack.c.b16 %v2761, %v2760
  %v3656 = vpack.c.b16 %v2763, %v2762
  %v3657 = vpack.c.b16 %v2765, %v2764
  %v3658 = vpack.c.b16 %v2767, %v2766
  %v3659 = vpack.c.b16 %v2769, %v2768
  %v3660 = vpack.c.b16 %v2771, %v2770
  %v3661 = vpack.c.b16 %v2773, %v2772
  %v3662 = vpack.c.b16 %v2775, %v2774
  %v3663 = vpack.c.b16 %v2777, %v2776
  %v3664 = vpack.c.b16 %v2779, %v2778
  %v3665 = vpack.c.b16 %v2781, %v2780
  %v3666 = vpack.c.b16 %v2783, %v2782
  %v3667 = vpack.c.b16 %v2785, %v2784
  %v3668 = vpack.c.b16 %v2787, %v2786
  %v3669 = vpack.c.b16 %v2789, %v2788
  %v3670 = vpack.c.b16 %v2791, %v2790
  %v3671 = vpack.c.b16 %v2793, %v2792
  %v3672 = vpack.c.b16 %v2795, %v2794
  %v3673 = vpack.c.b16 %v2797, %v2796
  %v3674 = vpack.c.b16 %v2799, %v2798
  %v3675 = vpack.c.b16 %v2801, %v2800
  %v3676 = vpack.c.b16 %v2803, %v2802
  %v3677 = vpack.c.b16 %v2805, %v2804
  %v3678 = vpack.c.b16 %v2807, %v2806
  %v3679 = vpack.c.b16 %v2809, %v2808
  %v3680 = vpack.c.b16 %v2811, %v2810
  %v3681 = vpack.c.b16 %v2813, %v2812
  %v3682 = vpack.c.b16 %v2815, %v2814
  %v3683 = vpack.c.b16 %v2817, %v2816
  %v3684 = vpack.c.b16 %v2819, %v2818
  %v3685 = vpack.c.b16 %v2821, %v2820
  %v3686 = vpack.c.b16 %v2823, %v2822
  %v3687 = vpack.c.b16 %v2825, %v2824
  %v3688 = vpack.c.b16 %v2827, %v2826
  %v3689 = vpack.c.b16 %v2829, %v2828
  %v3690 = vpack.c.b16 %v2831, %v2830
  %v3691 = vpack.c.b16 %v2833, %v2832
  %v3692 = vpack.c.b16 %v2835, %v2834
  %v3693 = vpack.c.b16 %v2837, %v2836
  %v3694 = vpack.c.b16 %v2839, %v2838
  %v3695 = vpack.c.b16 %v2841, %v2840
  %v3696 = vpack.c.b16 %v2843, %v2842
  %v3697 = vpack.c.b16 %v2845, %v2844
  %v3698 = vpack.c.b16 %v2847, %v2846
  %v3699 = vpack.c.b16 %v2849, %v2848
  %v3700 = vpack.c.b16 %v2851, %v2850
  %v3701 = vpack.c.b16 %v2853, %v2852
  %v3702 = vpack.c.b16 %v2855, %v2854
  %v3703 = vpack.c.b16 %v2857, %v2856
  %v3704 = vpack.c.b16 %v2859, %v2858
  %v3705 = vpack.c.b16 %v2861, %v2860
  %v3706 = vpack.c.b16 %v2863, %v2862
  %v3707 = vpack.c.b16 %v2865, %v2864
  %v3708 = vpack.c.b16 %v2867, %v2866
  %v3709 = vpack.c.b16 %v2869, %v2868
  %v3710 = vpack.c.b16 %v2871, %v2870
  %v3711 = vpack.c.b16 %v2873, %v2872
  %v3712 = vpack.c.b16 %v2875, %v2874
  %v3713 = vpack.c.b16 %v2877, %v2876
  %v3714 = vpack.c.b16 %v2879, %v2878
  %v3715 = vpack.c.b16 %v2881, %v2880
  %v3716 = vpack.c.b16 %v2883, %v2882
  %v3717 = vpack.c.b16 %v2885, %v2884
  %v3718 = vpack.c.b16 %v2887, %v2886
  %v3719 = vpack.c.b16 %v2889, %v2888
  %v3720 = vpack.c.b16 %v2891, %v2890
  %v3721 = vpack.c.b16 %v2893, %v2892
  %v3722 = vpack.c.b16 %v2895, %v2894
  %v3723 = vpack.c.b16 %v2897, %v2896
  %v3724 = vpack.c.b16 %v2899, %v2898
  %v3725 = vpack.c.b16 %v2901, %v2900
  %v3726 = vpack.c.b16 %v2903, %v2902
  %v3727 = vpack.c.b16 %v2905, %v2904
  %v3728 = vpack.c.b16 %v2907, %v2906
  %v3729 = vpack.c.b16 %v2909, %v2908
  %v3730 = vpack.c.b16 %v2911, %v2910
  %v3731 = vpack.c.b16 %v2913, %v2912
  %v3732 = vpack.c.b16 %v2915, %v2914
  %v3733 = vpack.c.b16 %v2917, %v2916
  %v3734 = vpack.c.b16 %v2919, %v2918
  %v3735 = vpack.c.b16 %v2921, %v2920
  %v3736 = vpack.c.b16 %v2923, %v2922
  %v3737 = vpack.c.b16 %v2925, %v2924
  %v3738 = vpack.c.b16 %v2927, %v2926
  %v3739 = vpack.c.b16 %v2929, %v2928
  %v3740 = vpack.c.b16 %v2931, %v2930
  %v3741 = vpack.c.b16 %v2933, %v2932
  %v3742 = vpack.c.b16 %v2935, %v2934
  %v3743 = vpack.c.b16 %v2937, %v2936
  %v3744 = vpack.c.b16 %v2939, %v2938
  %v3745 = vpack.c.b16 %v2941, %v2940
  %v3746 = vpack.c.b16 %v2943, %v2942
  %v3747 = vpack.c.b16 %v2945, %v2944
  %v3748 = vpack.c.b16 %v2947, %v2946
  %v3749 = vpack.c.b16 %v2949, %v2948
  %v3750 = vpack.c.b16 %v2951, %v2950
  %v3751 = vpack.c.b16 %v2953, %v2952
  %v3752 = vpack.c.b16 %v2955, %v2954
  %v3753 = vpack.c.b16 %v2957, %v2956
  %v3754 = vpack.c.b16 %v2959, %v2958
  %v3755 = vpack.c.b16 %v2961, %v2960
  %v3756 = vpack.c.b16 %v2963, %v2962
  %v3757 = vpack.c.b16 %v2965, %v2964
  %v3758 = vpack.c.b16 %v2967, %v2966
  %v3759 = vpack.c.b16 %v2969, %v2968
  %v3760 = vpack.c.b16 %v2971, %v2970
  %v3761 = vpack.c.b16 %v2973, %v2972
  %v3762 = vpack.c.b16 %v2975, %v2974
  %v3763 = vpack.c.b16 %v2977, %v2976
  %v3764 = vpack.c.b16 %v2979, %v2978
  %v3765 = vpack.c.b16 %v2981, %v2980
  %v3766 = vpack.c.b16 %v2983, %v2982
  %v3767 = vpack.c.b16 %v2985, %v2984
  %v3768 = vpack.c.b16 %v2987, %v2986
  %v3769 = vpack.c.b16 %v2989, %v2988
  %v3770 = vpack.c.b16 %v2991, %v2990
  %v3771 = vpack.c.b16 %v2993, %v2992
  %v3772 = vpack.c.b16 %v2995, %v2994
  %v3773 = vpack.c.b16 %v2997, %v2996
  %v3774 = vpack.c.b16 %v2999, %v2998
  %v3775 = vpack.c.b16 %v3001, %v3000
  %v3776 = vpack.c.b16 %v3003, %v3002
  %v3777 = vpack.c.b16 %v3005, %v3004
  %v3778 = vpack.c.b16 %v3007, %v3006
  %v3779 = vpack.c.b16 %v3009, %v3008
  %v3780 = vpack.c.b16 %v3011, %v3010
  %v3781 = vpack.c.b16 %v3013, %v3012
  %v3782 = vpack.c.b16 %v3015, %v3014
  %v3783 = vpack.c.b16 %v3017, %v3016
  %v3784 = vpack.c.b16 %v3019, %v3018
  %v3785 = vpack.c.b16 %v3021, %v3020
  %v3786 = vpack.c.b16 %v3023, %v3022
  %v3787 = vpack.c.b16 %v3025, %v3024
  %v3788 = vpack.c.b16 %v3027, %v3026
  %v3789 = vpack.c.b16 %v3029, %v3028
  %v3790 = vpack.c.b16 %v3031, %v3030
  %v3791 = vpack.c.b16 %v3033, %v3032
  %v3792 = vpack.c.b16 %v3035, %v3034
  %v3793 = vpack.c.b16 %v3037, %v3036
  %v3794 = vpack.c.b16 %v3039, %v3038
  %v3795 = vpack.c.b16 %v3041, %v3040
  %v3796 = vpack.c.b16 %v3043, %v3042
  %v3797 = vpack.c.b16 %v3045, %v3044
  %v3798 = vpack.c.b16 %v3047, %v3046
  %v3799 = vpack.c.b16 %v3049, %v3048
  %v3800 = vpack.c.b16 %v3051, %v3050
  %v3801 = vpack.c.b16 %v3053, %v3052
  %v3802 = vpack.c.b16 %v3055, %v3054
  %v3803 = vpack.c.b16 %v3057, %v3056
  %v3804 = vpack.c.b16 %v3059, %v3058
  %v3805 = vpack.c.b16 %v3061, %v3060
  %v3806 = vpack.c.b16 %v3063, %v3062
  %v3807 = vpack.c.b16 %v3065, %v3064
  %v3808 = vpack.c.b16 %v3067, %v3066
  %v3809 = vpack.c.b16 %v3069, %v3068
  %v3810 = vpack.c.b16 %v3071, %v3070
  %v3811 = vpack.c.b16 %v3073, %v3072
  %v3812 = vpack.c.b16 %v3075, %v3074
  %v3813 = vpack.c.b16 %v3077, %v3076
  %v3814 = vpack.c.b16 %v3079, %v3078
  %v3815 = vpack.c.b16 %v3081, %v3080
  %v3816 = vpack.c.b16 %v3083, %v3082
  %v3817 = vpack.c.b16 %v3085, %v3084
  %v3818 = vpack.c.b16 %v3087, %v3086
  %v3819 = vpack.c.b16 %v3089, %v3088
  %v3820 = vpack.c.b16 %v3091, %v3090
  %v3821 = vpack.c.b16 %v3093, %v3092
  %v3822 = vpack.c.b16 %v3095, %v3094
  %v3823 = vpack.c.b16 %v3097, %v3096
  %v3824 = vpack.c.b16 %v3099, %v3098
  %v3825 = vpack.c.b16 %v3101, %v3100
  %v3826 = vpack.c.b16 %v3103, %v3102
  %v3827 = vpack.c.b16 %v3105, %v3104
  %v3828 = vpack.c.b16 %v3107, %v3106
  %v3829 = vpack.c.b16 %v3109, %v3108
  %v3830 = vpack.c.b16 %v3111, %v3110
  %v3831 = vpack.c.b16 %v3113, %v3112
  %v3832 = vpack.c.b16 %v3115, %v3114
  %v3833 = vpack.c.b16 %v3117, %v3116
  %v3834 = vpack.c.b16 %v3119, %v3118
  %v3835 = vpack.c.b16 %v3121, %v3120
  %v3836 = vpack.c.b16 %v3123, %v3122
  %v3837 = vpack.c.b16 %v3125, %v3124
  %v3838 = vpack.c.b16 %v3127, %v3126
  %v3839 = vpack.c.b16 %v3129, %v3128
  %v3840 = vpack.c.b16 %v3131, %v3130
  %v3841 = vpack.c.b16 %v3133, %v3132
  %v3842 = vpack.c.b16 %v3135, %v3134
  %v3843 = vpack.c.b16 %v3137, %v3136
  %v3844 = vpack.c.b16 %v3139, %v3138
  %v3845 = vpack.c.b16 %v3141, %v3140
  %v3846 = vpack.c.b16 %v3143, %v3142
  %v3847 = vpack.c.b16 %v3145, %v3144
  %v3848 = vpack.c.b16 %v3147, %v3146
  %v3849 = vpack.c.b16 %v3149, %v3148
  %v3850 = vpack.c.b16 %v3151, %v3150
  %v3851 = vpack.c.b16 %v3153, %v3152
  %v3852 = vpack.c.b16 %v3155, %v3154
  %v3853 = vpack.c.b16 %v3157, %v3156
  %v3854 = vpack.c.b16 %v3159, %v3158
  %v3855 = vpack.c.b16 %v3161, %v3160
  %v3856 = vpack.c.b16 %v3163, %v3162
  %v3857 = vpack.c.b16 %v3165, %v3164
  %v3858 = vpack.c.b16 %v3167, %v3166
  %v3859 = vpack.c.b16 %v3169, %v3168
  %v3860 = vpack.c.b16 %v3171, %v3170
  %v3861 = vpack.c.b16 %v3173, %v3172
  %v3862 = vpack.c.b16 %v3175, %v3174
  %v3863 = vpack.c.b16 %v3177, %v3176
  %v3864 = vpack.c.b16 %v3179, %v3178
  %v3865 = vpack.c.b16 %v3181, %v3180
  %v3866 = vpack.c.b16 %v3183, %v3182
  %v3867 = vpack.c.b16 %v3185, %v3184
  %v3868 = vpack.c.b16 %v3187, %v3186
  %v3869 = vpack.c.b16 %v3189, %v3188
  %v3870 = vpack.c.b16 %v3191, %v3190
  %v3871 = vpack.c.b16 %v3193, %v3192
  %v3872 = vpack.c.b16 %v3195, %v3194
  %v3873 = vpack.c.b16 %v3197, %v3196
  %v3874 = vpack.c.b16 %v3199, %v3198
  %v3875 = vpack.c.b16 %v3201, %v3200
  %v3876 = vpack.c.b16 %v3203, %v3202
  %v3877 = vpack.c.b16 %v3205, %v3204
  %v3878 = vpack.c.b16 %v3207, %v3206
  %v3879 = vpack.c.b16 %v3209, %v3208
  %v3880 = vpack.c.b16 %v3211, %v3210
  %v3881 = vpack.c.b16 %v3213, %v3212
  %v3882 = vpack.c.b16 %v3215, %v3214
  %v3883 = vpack.c.b16 %v3217, %v3216
  %v3884 = vpack.c.b16 %v3219, %v3218
  %v3885 = vpack.c.b16 %v3221, %v3220
  %v3886 = vpack.c.b16 %v3223, %v3222
  %v3887 = vpack.c.b16 %v3225, %v3224
  %v3888 = vpack.c.b16 %v3227, %v3226
  %v3889 = vpack.c.b16 %v3229, %v3228
  %v3890 = vpack.c.b16 %v3231, %v3230
  %v3891 = vpack.c.b16 %v3233, %v3232
  %v3892 = vpack.c.b16 %v3235, %v3234
  %v3893 = vpack.c.b16 %v3237, %v3236
  %v3894 = vpack.c.b16 %v3239, %v3238
  %v3895 = vpack.c.b16 %v3241, %v3240
  %v3896 = vpack.c.b16 %v3243, %v3242
  %v3897 = vpack.c.b16 %v3245, %v3244
  %v3898 = vpack.c.b16 %v3247, %v3246
  %v3899 = vpack.c.b16 %v3249, %v3248
  %v3900 = vpack.c.b16 %v3251, %v3250
  %v3901 = vpack.c.b16 %v3253, %v3252
  %v3902 = vpack.c.b16 %v3255, %v3254
  %v3903 = vpack.c.b16 %v3257, %v3256
  %v3904 = vpack.c.b16 %v3259, %v3258
  %v3905 = vpack.c.b16 %v3261, %v3260
  %v3906 = vpack.c.b16 %v3263, %v3262
  %v3907 = vpack.c.b16 %v3265, %v3264
  %v3908 = vpack.c.b16 %v3267, %v3266
  %v3909 = vpack.c.b16 %v3269, %v3268
  %v3910 = vpack.c.b16 %v3271, %v3270
  %v3911 = vpack.c.b16 %v3273, %v3272
  %v3912 = vpack.c.b16 %v3275, %v3274
  %v3913 = vpack.c.b16 %v3277, %v3276
  %v3914 = vpack.c.b16 %v3279, %v3278
  %v3915 = vpack.c.b16 %v3281, %v3280
  %v3916 = vpack.c.b16 %v3283, %v3282
  %v3917 = vpack.c.b16 %v3285, %v3284
  %v3918 = vpack.c.b16 %v3287, %v3286
  %v3919 = vpack.c.b16 %v3289, %v3288
  %v3920 = vpack.c.b16 %v3291, %v3290
  %v3921 = vpack.c.b16 %v3293, %v3292
  %v3922 = vpack.c.b16 %v3295, %v3294
  %v3923 = vpack.c.b16 %v3297, %v3296
  %v3924 = vpack.c.b16 %v3299, %v3298
  %v3925 = vpack.c.b16 %v3301, %v3300
  %v3926 = vpack.c.b16 %v3303, %v3302
  %v3927 = vpack.c.b16 %v3305, %v3304
  %v3928 = vpack.c.b16 %v3307, %v3306
  %v3929 = vpack.c.b16 %v3309, %v3308
  %v3930 = vpack.c.b16 %v3311, %v3310
  %v3931 = vpack.c.b16 %v3313, %v3312
  %v3932 = vpack.c.b16 %v3315, %v3314
  %v3933 = vpack.c.b16 %v3317, %v3316
  %v3934 = vpack.c.b16 %v3319, %v3318
  %v3935 = vpack.c.b16 %v3321, %v3320
  %v3936 = vpack.c.b16 %v3323, %v3322
  %v3937 = vpack.c.b16 %v3325, %v3324
  %v3938 = vpack.c.b16 %v3327, %v3326
  %v3939 = vpack.c.b16 %v3329, %v3328
  %v3940 = vpack.c.b16 %v3331, %v3330
  %v3941 = vpack.c.b16 %v3333, %v3332
  %v3942 = vpack.c.b16 %v3335, %v3334
  %v3943 = vpack.c.b16 %v3337, %v3336
  %v3944 = vpack.c.b16 %v3339, %v3338
  %v3945 = vpack.c.b16 %v3341, %v3340
  %v3946 = vpack.c.b16 %v3343, %v3342
  %v3947 = vpack.c.b16 %v3345, %v3344
  %v3948 = vpack.c.b16 %v3347, %v3346
  %v3949 = vpack.c.b16 %v3349, %v3348
  %v3950 = vpack.c.b16 %v3351, %v3350
  %v3951 = vpack.c.b16 %v3353, %v3352
  %v3952 = vpack.c.b16 %v3355, %v3354
  %v3953 = vpack.c.b16 %v3357, %v3356
  %v3954 = vpack.c.b16 %v3359, %v3358
  %v3955 = vpack.c.b16 %v3361, %v3360
  %v3956 = vpack.c.b16 %v3363, %v3362
  %v3957 = vpack.c.b16 %v3365, %v3364
  %v3958 = vpack.c.b16 %v3367, %v3366
  %v3959 = vpack.c.b16 %v3369, %v3368
  %v3960 = vpack.c.b16 %v3371, %v3370
  %v3961 = vpack.c.b16 %v3373, %v3372
  %v3962 = vpack.c.b16 %v3375, %v3374
  %v3963 = vpack.c.b16 %v3377, %v3376
  %v3964 = vpack.c.b16 %v3379, %v3378
  %v3965 = vpack.c.b16 %v3381, %v3380
  %v3966 = vpack.c.b16 %v3383, %v3382
  %v3967 = vpack.c.b16 %v3385, %v3384
  %v3968 = vpack.c.b16 %v3387, %v3386
  %v3969 = vpack.c.b16 %v3389, %v3388
  %v3970 = vpack.c.b16 %v3391, %v3390
  %v3971 = vpack.c.b16 %v3393, %v3392
  %v3972 = vpack.c.b16 %v3395, %v3394
  %v3973 = vpack.c.b16 %v3397, %v3396
  %v3974 = vpack.c.b16 %v3399, %v3398
  %v3975 = vpack.c.b16 %v3401, %v3400
  %v3976 = vpack.c.b16 %v3403, %v3402
  %v3977 = vpack.c.b16 %v3405, %v3404
  %v3978 = vpack.c.b16 %v3407, %v3406
  %v3979 = vpack.c.b16 %v3409, %v3408
  %v3980 = vpack.c.b16 %v3411, %v3410
  %v3981 = vpack.c.b16 %v3413, %v3412
  %v3982 = vpack.c.b16 %v3415, %v3414
  %v3983 = vpack.c.b16 %v3417, %v3416
  %v3984 = vpack.c.b16 %v3419, %v3418
  %v3985 = vpack.c.b16 %v3421, %v3420
  %v3986 = vpack.c.b16 %v3423, %v3422
  %v3987 = vpack.c.b16 %v3425, %v3424
  %v3988 = vpack.c.b16 %v3427, %v3426
  %v3989 = vpack.c.b16 %v3429, %v3428
  %v3990 = vpack.c.b16 %v3431, %v3430
  %v3991 = vpack.c.b16 %v3433, %v3432
  %v3992 = vpack.c.b16 %v3435, %v3434
  %v3993 = vpack.c.b16 %v3437, %v3436
  %v3994 = vpack.c.b16 %v3439, %v3438
  %v3995 = vpack.c.b16 %v3441, %v3440
  %v3996 = vpack.c.b16 %v3443, %v3442
  %v3997 = vpack.c.b16 %v3445, %v3444
  %v3998 = vpack.c.b16 %v3447, %v3446
  %v3999 = vpack.c.b16 %v3449, %v3448
  %v4000 = vpack.c.b16 %v3451, %v3450
  %v4001 = vpack.c.b16 %v3453, %v3452
  %v4002 = vpack.c.b16 %v3455, %v3454
  %v4003 = vpack.c.b16 %v3457, %v3456
  %v4004 = vpack.c.b16 %v3459, %v3458
  %v4005 = vpack.c.b16 %v3461, %v3460
  %v4006 = vpack.c.b16 %v3463, %v3462
  %v4007 = vpack.c.b16 %v3465, %v3464
  %v4008 = vpack.c.b16 %v3467, %v3466
  %v4009 = vpack.c.b16 %v3469, %v3468
  %v4010 = vpack.c.b16 %v3471, %v3470
  %v4011 = vpack.c.b16 %v3473, %v3472
  %v4012 = vpack.c.b16 %v3475, %v3474
  %v4013 = vpack.c.b16 %v3477, %v3476
  %v4014 = vpack.c.b16 %v3479, %v3478
  %v4015 = vpack.c.b16 %v3481, %v3480
  %v4016 = vpack.c.b16 %v3483, %v3482
  %v4017 = vpack.c.b16 %v3485, %v3484
  %v4018 = vpack.c.b16 %v3487, %v3486
  %v4019 = vpack.c.b16 %v3489, %v3488
  %v4020 = vpack.c.b16 %v3491, %v3490
  %v4021 = vpack.c.b16 %v3493, %v3492
  %v4022 = vpack.c.b16 %v3495, %v3494
  %v4023 = vpack.c.b16 %v3497, %v3496
  %v4024 = vpack.c.b16 %v3499, %v3498
  %v4025 = vpack.c.b16 %v3501, %v3500
  %v4026 = vpack.c.b16 %v3503, %v3502
  %v4027 = vpack.c.b16 %v3505, %v3504
  %v4028 = vpack.c.b16 %v3507, %v3506
  %v4029 = vpack.c.b16 %v3509, %v3508
  %v4030 = vpack.c.b16 %v3511, %v3510
  %v4031 = vpack.c.b16 %v3513, %v3512
  %v4032 = vpack.c.b16 %v3515, %v3514
  %v4033 = vpack.c.b16 %v3517, %v3516
  %v4034 = vpack.c.b16 %v3519, %v3518
  %v4035 = vpack.c.b16 %v3521, %v3520
  %v4036 = vpack.c.b16 %v3523, %v3522
  %v4037 = vpack.c.b16 %v3525, %v3524
  %4550 = vmatprep.subr.bf16.mxu0 0
  %4551 = vmatpush1.bf16.msra.mxu0 %v3526
  %4552 = vmatprep.subr.bf16.mxu0 0
  %4553 = vmatpush1.bf16.msra.mxu0 %v3527
  %4554 = vmatprep.subr.bf16.mxu0 0
  %4555 = vmatpush1.bf16.msra.mxu0 %v3528
  %4556 = vmatprep.subr.bf16.mxu0 0
  %4557 = vmatpush1.bf16.msra.mxu0 %v3529
  %4558 = vmatprep.subr.bf16.mxu0 0
  %4559 = vmatpush1.bf16.msra.mxu0 %v3530
  %4560 = vmatprep.subr.bf16.mxu0 0
  %4561 = vmatpush1.bf16.msra.mxu0 %v3531
  %4562 = vmatprep.subr.bf16.mxu0 0
  %4563 = vmatpush1.bf16.msra.mxu0 %v3532
  %4564 = vmatprep.subr.bf16.mxu0 0
  %4565 = vmatpush1.bf16.msra.mxu0 %v3533
  %4566 = vmatprep.subr.bf16.mxu0 0
  %4567 = vmatpush1.bf16.msra.mxu0 %v3534
  %4568 = vmatprep.subr.bf16.mxu0 0
  %4569 = vmatpush1.bf16.msra.mxu0 %v3535
  %4570 = vmatprep.subr.bf16.mxu0 0
  %4571 = vmatpush1.bf16.msra.mxu0 %v3536
  %4572 = vmatprep.subr.bf16.mxu0 0
  %4573 = vmatpush1.bf16.msra.mxu0 %v3537
  %4574 = vmatprep.subr.bf16.mxu0 0
  %4575 = vmatpush1.bf16.msra.mxu0 %v3538
  %4576 = vmatprep.subr.bf16.mxu0 0
  %4577 = vmatpush1.bf16.msra.mxu0 %v3539
  %4578 = vmatprep.subr.bf16.mxu0 0
  %4579 = vmatpush1.bf16.msra.mxu0 %v3540
  %4580 = vmatprep.subr.bf16.mxu0 0
  %4581 = vmatpush1.bf16.msra.mxu0 %v3541
  %4582 = vmatprep.mubr.bf16.mxu0 %v384
  %4583 = vmatmul.mubr.bf16.gmra.mrb[0].mxu0 %v383
  %v4584 = vpop.f32.mrb[0].mxu0
  %v4585 = vadd.f32 %v1476, %v4584
  %v4586 = vpop.f32.mrb[0].mxu0
  %v4587 = vpop.f32.mrb[0].mxu0
  %v4588 = vpop.f32.mrb[0].mxu0
  %4589 = vdwg.mxu0
  %4590 = vmatprep.subr.bf16.mxu0 0
  %4591 = vmatpush1.bf16.msra.mxu0 %v3542
  %4592 = vmatprep.subr.bf16.mxu0 0
  %4593 = vmatpush1.bf16.msra.mxu0 %v3543
  %4594 = vmatprep.subr.bf16.mxu0 0
  %4595 = vmatpush1.bf16.msra.mxu0 %v3544
  %4596 = vmatprep.subr.bf16.mxu0 0
  %4597 = vmatpush1.bf16.msra.mxu0 %v3545
  %4598 = vmatprep.subr.bf16.mxu0 0
  %4599 = vmatpush1.bf16.msra.mxu0 %v3546
  %4600 = vmatprep.subr.bf16.mxu0 0
  %4601 = vmatpush1.bf16.msra.mxu0 %v3547
  %4602 = vmatprep.subr.bf16.mxu0 0
  %4603 = vmatpush1.bf16.msra.mxu0 %v3548
  %4604 = vmatprep.subr.bf16.mxu0 0
  %4605 = vmatpush1.bf16.msra.mxu0 %v3549
  %4606 = vmatprep.subr.bf16.mxu0 0
  %4607 = vmatpush1.bf16.msra.mxu0 %v3550
  %4608 = vmatprep.subr.bf16.mxu0 0
  %4609 = vmatpush1.bf16.msra.mxu0 %v3551
  %4610 = vmatprep.subr.bf16.mxu0 0
  %4611 = vmatpush1.bf16.msra.mxu0 %v3552
  %4612 = vmatprep.subr.bf16.mxu0 0
  %4613 = vmatpush1.bf16.msra.mxu0 %v3553
  %4614 = vmatprep.subr.bf16.mxu0 0
  %4615 = vmatpush1.bf16.msra.mxu0 %v3554
  %4616 = vmatprep.subr.bf16.mxu0 0
  %4617 = vmatpush1.bf16.msra.mxu0 %v3555
  %4618 = vmatprep.subr.bf16.mxu0 0
  %4619 = vmatpush1.bf16.msra.mxu0 %v3556
  %4620 = vmatprep.subr.bf16.mxu0 0
  %4621 = vmatpush1.bf16.msra.mxu0 %v3557
  %4622 = vmatprep.mubr.bf16.mxu0 %v386
  %4623 = vmatmul.mubr.bf16.gmra.mrb[0].mxu0 %v385
  %v4624 = vpop.f32.mrb[0].mxu0
  %v4625 = vadd.f32 %v4585, %v4624
  %v4626 = vpop.f32.mrb[0].mxu0
  %v4627 = vpop.f32.mrb[0].mxu0
  %v4628 = vpop.f32.mrb[0].mxu0
  %4629 = vdwg.mxu0
  %4630 = vmatprep.subr.bf16.mxu0 0
  %4631 = vmatpush1.bf16.msra.mxu0 %v3558
  %4632 = vmatprep.subr.bf16.mxu0 0
  %4633 = vmatpush1.bf16.msra.mxu0 %v3559
  %4634 = vmatprep.subr.bf16.mxu0 0
  %4635 = vmatpush1.bf16.msra.mxu0 %v3560
  %4636 = vmatprep.subr.bf16.mxu0 0
  %4637 = vmatpush1.bf16.msra.mxu0 %v3561
  %4638 = vmatprep.subr.bf16.mxu0 0
  %4639 = vmatpush1.bf16.msra.mxu0 %v3562
  %4640 = vmatprep.subr.bf16.mxu0 0
  %4641 = vmatpush1.bf16.msra.mxu0 %v3563
  %4642 = vmatprep.subr.bf16.mxu0 0
  %4643 = vmatpush1.bf16.msra.mxu0 %v3564
  %4644 = vmatprep.subr.bf16.mxu0 0
  %4645 = vmatpush1.bf16.msra.mxu0 %v3565
  %4646 = vmatprep.subr.bf16.mxu0 0
  %4647 = vmatpush1.bf16.msra.mxu0 %v3566
  %4648 = vmatprep.subr.bf16.mxu0 0
  %4649 = vmatpush1.bf16.msra.mxu0 %v3567
  %4650 = vmatprep.subr.bf16.mxu0 0
  %4651 = vmatpush1.bf16.msra.mxu0 %v3568
  %4652 = vmatprep.subr.bf16.mxu0 0
  %4653 = vmatpush1.bf16.msra.mxu0 %v3569
  %4654 = vmatprep.subr.bf16.mxu0 0
  %4655 = vmatpush1.bf16.msra.mxu0 %v3570
  %4656 = vmatprep.subr.bf16.mxu0 0
  %4657 = vmatpush1.bf16.msra.mxu0 %v3571
  %4658 = vmatprep.subr.bf16.mxu0 0
  %4659 = vmatpush1.bf16.msra.mxu0 %v3572
  %4660 = vmatprep.subr.bf16.mxu0 0
  %4661 = vmatpush1.bf16.msra.mxu0 %v3573
  %4662 = vmatprep.mubr.bf16.mxu0 %v388
  %4663 = vmatmul.mubr.bf16.gmra.mrb[0].mxu0 %v387
  %v4664 = vpop.f32.mrb[0].mxu0
  %v4665 = vadd.f32 %v4625, %v4664
  %v4666 = vpop.f32.mrb[0].mxu0
  %v4667 = vpop.f32.mrb[0].mxu0
  %v4668 = vpop.f32.mrb[0].mxu0
  %4669 = vdwg.mxu0
  %4670 = vmatprep.subr.bf16.mxu0 0
  %4671 = vmatpush1.bf16.msra.mxu0 %v3574
  %4672 = vmatprep.subr.bf16.mxu0 0
  %4673 = vmatpush1.bf16.msra.mxu0 %v3575
  %4674 = vmatprep.subr.bf16.mxu0 0
  %4675 = vmatpush1.bf16.msra.mxu0 %v3576
  %4676 = vmatprep.subr.bf16.mxu0 0
  %4677 = vmatpush1.bf16.msra.mxu0 %v3577
  %4678 = vmatprep.subr.bf16.mxu0 0
  %4679 = vmatpush1.bf16.msra.mxu0 %v3578
  %4680 = vmatprep.subr.bf16.mxu0 0
  %4681 = vmatpush1.bf16.msra.mxu0 %v3579
  %4682 = vmatprep.subr.bf16.mxu0 0
  %4683 = vmatpush1.bf16.msra.mxu0 %v3580
  %4684 = vmatprep.subr.bf16.mxu0 0
  %4685 = vmatpush1.bf16.msra.mxu0 %v3581
  %4686 = vmatprep.subr.bf16.mxu0 0
  %4687 = vmatpush1.bf16.msra.mxu0 %v3582
  %4688 = vmatprep.subr.bf16.mxu0 0
  %4689 = vmatpush1.bf16.msra.mxu0 %v3583
  %4690 = vmatprep.subr.bf16.mxu0 0
  %4691 = vmatpush1.bf16.msra.mxu0 %v3584
  %4692 = vmatprep.subr.bf16.mxu0 0
  %4693 = vmatpush1.bf16.msra.mxu0 %v3585
  %4694 = vmatprep.subr.bf16.mxu0 0
  %4695 = vmatpush1.bf16.msra.mxu0 %v3586
  %4696 = vmatprep.subr.bf16.mxu0 0
  %4697 = vmatpush1.bf16.msra.mxu0 %v3587
  %4698 = vmatprep.subr.bf16.mxu0 0
  %4699 = vmatpush1.bf16.msra.mxu0 %v3588
  %4700 = vmatprep.subr.bf16.mxu0 0
  %4701 = vmatpush1.bf16.msra.mxu0 %v3589
  %4702 = vmatprep.mubr.bf16.mxu0 %v390
  %4703 = vmatmul.mubr.bf16.gmra.mrb[0].mxu0 %v389
  %v4704 = vpop.f32.mrb[0].mxu0
  %v4705 = vadd.f32 %v4665, %v4704
  %v4706 = vpop.f32.mrb[0].mxu0
  %v4707 = vpop.f32.mrb[0].mxu0
  %v4708 = vpop.f32.mrb[0].mxu0
  %4709 = vdwg.mxu0
  %4710 = vmatprep.subr.bf16.mxu0 0
  %4711 = vmatpush1.bf16.msra.mxu0 %v3590
  %4712 = vmatprep.subr.bf16.mxu0 0
  %4713 = vmatpush1.bf16.msra.mxu0 %v3591
  %4714 = vmatprep.subr.bf16.mxu0 0
  %4715 = vmatpush1.bf16.msra.mxu0 %v3592
  %4716 = vmatprep.subr.bf16.mxu0 0
  %4717 = vmatpush1.bf16.msra.mxu0 %v3593
  %4718 = vmatprep.subr.bf16.mxu0 0
  %4719 = vmatpush1.bf16.msra.mxu0 %v3594
  %4720 = vmatprep.subr.bf16.mxu0 0
  %4721 = vmatpush1.bf16.msra.mxu0 %v3595
  %4722 = vmatprep.subr.bf16.mxu0 0
  %4723 = vmatpush1.bf16.msra.mxu0 %v3596
  %4724 = vmatprep.subr.bf16.mxu0 0
  %4725 = vmatpush1.bf16.msra.mxu0 %v3597
  %4726 = vmatprep.subr.bf16.mxu0 0
  %4727 = vmatpush1.bf16.msra.mxu0 %v3598
  %4728 = vmatprep.subr.bf16.mxu0 0
  %4729 = vmatpush1.bf16.msra.mxu0 %v3599
  %4730 = vmatprep.subr.bf16.mxu0 0
  %4731 = vmatpush1.bf16.msra.mxu0 %v3600
  %4732 = vmatprep.subr.bf16.mxu0 0
  %4733 = vmatpush1.bf16.msra.mxu0 %v3601
  %4734 = vmatprep.subr.bf16.mxu0 0
  %4735 = vmatpush1.bf16.msra.mxu0 %v3602
  %4736 = vmatprep.subr.bf16.mxu0 0
  %4737 = vmatpush1.bf16.msra.mxu0 %v3603
  %4738 = vmatprep.subr.bf16.mxu0 0
  %4739 = vmatpush1.bf16.msra.mxu0 %v3604
  %4740 = vmatprep.subr.bf16.mxu0 0
  %4741 = vmatpush1.bf16.msra.mxu0 %v3605
  %4742 = vmatprep.mubr.bf16.mxu0 %v392
  %4743 = vmatmul.mubr.bf16.gmra.mrb[0].mxu0 %v391
  %v4744 = vpop.f32.mrb[0].mxu0
  %v4745 = vadd.f32 %v4705, %v4744
  %v4746 = vpop.f32.mrb[0].mxu0
  %v4747 = vpop.f32.mrb[0].mxu0
  %v4748 = vpop.f32.mrb[0].mxu0
  %4749 = vdwg.mxu0
  %4750 = vmatprep.subr.bf16.mxu0 0
  %4751 = vmatpush1.bf16.msra.mxu0 %v3606
  %4752 = vmatprep.subr.bf16.mxu0 0
  %4753 = vmatpush1.bf16.msra.mxu0 %v3607
  %4754 = vmatprep.subr.bf16.mxu0 0
  %4755 = vmatpush1.bf16.msra.mxu0 %v3608
  %4756 = vmatprep.subr.bf16.mxu0 0
  %4757 = vmatpush1.bf16.msra.mxu0 %v3609
  %4758 = vmatprep.subr.bf16.mxu0 0
  %4759 = vmatpush1.bf16.msra.mxu0 %v3610
  %4760 = vmatprep.subr.bf16.mxu0 0
  %4761 = vmatpush1.bf16.msra.mxu0 %v3611
  %4762 = vmatprep.subr.bf16.mxu0 0
  %4763 = vmatpush1.bf16.msra.mxu0 %v3612
  %4764 = vmatprep.subr.bf16.mxu0 0
  %4765 = vmatpush1.bf16.msra.mxu0 %v3613
  %4766 = vmatprep.subr.bf16.mxu0 0
  %4767 = vmatpush1.bf16.msra.mxu0 %v3614
  %4768 = vmatprep.subr.bf16.mxu0 0
  %4769 = vmatpush1.bf16.msra.mxu0 %v3615
  %4770 = vmatprep.subr.bf16.mxu0 0
  %4771 = vmatpush1.bf16.msra.mxu0 %v3616
  %4772 = vmatprep.subr.bf16.mxu0 0
  %4773 = vmatpush1.bf16.msra.mxu0 %v3617
  %4774 = vmatprep.subr.bf16.mxu0 0
  %4775 = vmatpush1.bf16.msra.mxu0 %v3618
  %4776 = vmatprep.subr.bf16.mxu0 0
  %4777 = vmatpush1.bf16.msra.mxu0 %v3619
  %4778 = vmatprep.subr.bf16.mxu0 0
  %4779 = vmatpush1.bf16.msra.mxu0 %v3620
  %4780 = vmatprep.subr.bf16.mxu0 0
  %4781 = vmatpush1.bf16.msra.mxu0 %v3621
  %4782 = vmatprep.mubr.bf16.mxu0 %v394
  %4783 = vmatmul.mubr.bf16.gmra.mrb[0].mxu0 %v393
  %v4784 = vpop.f32.mrb[0].mxu0
  %v4785 = vadd.f32 %v4745, %v4784
  %v4786 = vpop.f32.mrb[0].mxu0
  %v4787 = vpop.f32.mrb[0].mxu0
  %v4788 = vpop.f32.mrb[0].mxu0
  %4789 = vdwg.mxu0
  %4790 = vmatprep.subr.bf16.mxu0 0
  %4791 = vmatpush1.bf16.msra.mxu0 %v3622
  %4792 = vmatprep.subr.bf16.mxu0 0
  %4793 = vmatpush1.bf16.msra.mxu0 %v3623
  %4794 = vmatprep.subr.bf16.mxu0 0
  %4795 = vmatpush1.bf16.msra.mxu0 %v3624
  %4796 = vmatprep.subr.bf16.mxu0 0
  %4797 = vmatpush1.bf16.msra.mxu0 %v3625
  %4798 = vmatprep.subr.bf16.mxu0 0
  %4799 = vmatpush1.bf16.msra.mxu0 %v3626
  %4800 = vmatprep.subr.bf16.mxu0 0
  %4801 = vmatpush1.bf16.msra.mxu0 %v3627
  %4802 = vmatprep.subr.bf16.mxu0 0
  %4803 = vmatpush1.bf16.msra.mxu0 %v3628
  %4804 = vmatprep.subr.bf16.mxu0 0
  %4805 = vmatpush1.bf16.msra.mxu0 %v3629
  %4806 = vmatprep.subr.bf16.mxu0 0
  %4807 = vmatpush1.bf16.msra.mxu0 %v3630
  %4808 = vmatprep.subr.bf16.mxu0 0
  %4809 = vmatpush1.bf16.msra.mxu0 %v3631
  %4810 = vmatprep.subr.bf16.mxu0 0
  %4811 = vmatpush1.bf16.msra.mxu0 %v3632
  %4812 = vmatprep.subr.bf16.mxu0 0
  %4813 = vmatpush1.bf16.msra.mxu0 %v3633
  %4814 = vmatprep.subr.bf16.mxu0 0
  %4815 = vmatpush1.bf16.msra.mxu0 %v3634
  %4816 = vmatprep.subr.bf16.mxu0 0
  %4817 = vmatpush1.bf16.msra.mxu0 %v3635
  %4818 = vmatprep.subr.bf16.mxu0 0
  %4819 = vmatpush1.bf16.msra.mxu0 %v3636
  %4820 = vmatprep.subr.bf16.mxu0 0
  %4821 = vmatpush1.bf16.msra.mxu0 %v3637
  %4822 = vmatprep.mubr.bf16.mxu0 %v396
  %4823 = vmatmul.mubr.bf16.gmra.mrb[0].mxu0 %v395
  %v4824 = vpop.f32.mrb[0].mxu0
  %v4825 = vadd.f32 %v4785, %v4824
  %v4826 = vpop.f32.mrb[0].mxu0
  %v4827 = vpop.f32.mrb[0].mxu0
  %v4828 = vpop.f32.mrb[0].mxu0
  %4829 = vdwg.mxu0
  %4830 = vmatprep.subr.bf16.mxu0 0
  %4831 = vmatpush1.bf16.msra.mxu0 %v3638
  %4832 = vmatprep.subr.bf16.mxu0 0
  %4833 = vmatpush1.bf16.msra.mxu0 %v3639
  %4834 = vmatprep.subr.bf16.mxu0 0
  %4835 = vmatpush1.bf16.msra.mxu0 %v3640
  %4836 = vmatprep.subr.bf16.mxu0 0
  %4837 = vmatpush1.bf16.msra.mxu0 %v3641
  %4838 = vmatprep.subr.bf16.mxu0 0
  %4839 = vmatpush1.bf16.msra.mxu0 %v3642
  %4840 = vmatprep.subr.bf16.mxu0 0
  %4841 = vmatpush1.bf16.msra.mxu0 %v3643
  %4842 = vmatprep.subr.bf16.mxu0 0
  %4843 = vmatpush1.bf16.msra.mxu0 %v3644
  %4844 = vmatprep.subr.bf16.mxu0 0
  %4845 = vmatpush1.bf16.msra.mxu0 %v3645
  %4846 = vmatprep.subr.bf16.mxu0 0
  %4847 = vmatpush1.bf16.msra.mxu0 %v3646
  %4848 = vmatprep.subr.bf16.mxu0 0
  %4849 = vmatpush1.bf16.msra.mxu0 %v3647
  %4850 = vmatprep.subr.bf16.mxu0 0
  %4851 = vmatpush1.bf16.msra.mxu0 %v3648
  %4852 = vmatprep.subr.bf16.mxu0 0
  %4853 = vmatpush1.bf16.msra.mxu0 %v3649
  %4854 = vmatprep.subr.bf16.mxu0 0
  %4855 = vmatpush1.bf16.msra.mxu0 %v3650
  %4856 = vmatprep.subr.bf16.mxu0 0
  %4857 = vmatpush1.bf16.msra.mxu0 %v3651
  %4858 = vmatprep.subr.bf16.mxu0 0
  %4859 = vmatpush1.bf16.msra.mxu0 %v3652
  %4860 = vmatprep.subr.bf16.mxu0 0
  %4861 = vmatpush1.bf16.msra.mxu0 %v3653
  %4862 = vmatprep.mubr.bf16.mxu0 %v398
  %4863 = vmatmul.mubr.bf16.gmra.mrb[0].mxu0 %v397
  %v4864 = vpop.f32.mrb[0].mxu0
  %v4865 = vadd.f32 %v4825, %v4864
  %v4866 = vpop.f32.mrb[0].mxu0
  %v4867 = vpop.f32.mrb[0].mxu0
  %v4868 = vpop.f32.mrb[0].mxu0
  %4869 = vdwg.mxu0
  %4870 = vmatprep.subr.bf16.mxu0 0
  %4871 = vmatpush1.bf16.msra.mxu0 %v3654
  %4872 = vmatprep.subr.bf16.mxu0 0
  %4873 = vmatpush1.bf16.msra.mxu0 %v3655
  %4874 = vmatprep.subr.bf16.mxu0 0
  %4875 = vmatpush1.bf16.msra.mxu0 %v3656
  %4876 = vmatprep.subr.bf16.mxu0 0
  %4877 = vmatpush1.bf16.msra.mxu0 %v3657
  %4878 = vmatprep.subr.bf16.mxu0 0
  %4879 = vmatpush1.bf16.msra.mxu0 %v3658
  %4880 = vmatprep.subr.bf16.mxu0 0
  %4881 = vmatpush1.bf16.msra.mxu0 %v3659
  %4882 = vmatprep.subr.bf16.mxu0 0
  %4883 = vmatpush1.bf16.msra.mxu0 %v3660
  %4884 = vmatprep.subr.bf16.mxu0 0
  %4885 = vmatpush1.bf16.msra.mxu0 %v3661
  %4886 = vmatprep.subr.bf16.mxu0 0
  %4887 = vmatpush1.bf16.msra.mxu0 %v3662
  %4888 = vmatprep.subr.bf16.mxu0 0
  %4889 = vmatpush1.bf16.msra.mxu0 %v3663
  %4890 = vmatprep.subr.bf16.mxu0 0
  %4891 = vmatpush1.bf16.msra.mxu0 %v3664
  %4892 = vmatprep.subr.bf16.mxu0 0
  %4893 = vmatpush1.bf16.msra.mxu0 %v3665
  %4894 = vmatprep.subr.bf16.mxu0 0
  %4895 = vmatpush1.bf16.msra.mxu0 %v3666
  %4896 = vmatprep.subr.bf16.mxu0 0
  %4897 = vmatpush1.bf16.msra.mxu0 %v3667
  %4898 = vmatprep.subr.bf16.mxu0 0
  %4899 = vmatpush1.bf16.msra.mxu0 %v3668
  %4900 = vmatprep.subr.bf16.mxu0 0
  %4901 = vmatpush1.bf16.msra.mxu0 %v3669
  %4902 = vmatprep.mubr.bf16.mxu0 %v400
  %4903 = vmatmul.mubr.bf16.gmra.mrb[0].mxu0 %v399
  %v4904 = vpop.f32.mrb[0].mxu0
  %v4905 = vadd.f32 %v4865, %v4904
  %v4906 = vpop.f32.mrb[0].mxu0
  %v4907 = vpop.f32.mrb[0].mxu0
  %v4908 = vpop.f32.mrb[0].mxu0
  %4909 = vdwg.mxu0
  %4910 = vmatprep.subr.bf16.mxu0 0
  %4911 = vmatpush1.bf16.msra.mxu0 %v3670
  %4912 = vmatprep.subr.bf16.mxu0 0
  %4913 = vmatpush1.bf16.msra.mxu0 %v3671
  %4914 = vmatprep.subr.bf16.mxu0 0
  %4915 = vmatpush1.bf16.msra.mxu0 %v3672
  %4916 = vmatprep.subr.bf16.mxu0 0
  %4917 = vmatpush1.bf16.msra.mxu0 %v3673
  %4918 = vmatprep.subr.bf16.mxu0 0
  %4919 = vmatpush1.bf16.msra.mxu0 %v3674
  %4920 = vmatprep.subr.bf16.mxu0 0
  %4921 = vmatpush1.bf16.msra.mxu0 %v3675
  %4922 = vmatprep.subr.bf16.mxu0 0
  %4923 = vmatpush1.bf16.msra.mxu0 %v3676
  %4924 = vmatprep.subr.bf16.mxu0 0
  %4925 = vmatpush1.bf16.msra.mxu0 %v3677
  %4926 = vmatprep.subr.bf16.mxu0 0
  %4927 = vmatpush1.bf16.msra.mxu0 %v3678
  %4928 = vmatprep.subr.bf16.mxu0 0
  %4929 = vmatpush1.bf16.msra.mxu0 %v3679
  %4930 = vmatprep.subr.bf16.mxu0 0
  %4931 = vmatpush1.bf16.msra.mxu0 %v3680
  %4932 = vmatprep.subr.bf16.mxu0 0
  %4933 = vmatpush1.bf16.msra.mxu0 %v3681
  %4934 = vmatprep.subr.bf16.mxu0 0
  %4935 = vmatpush1.bf16.msra.mxu0 %v3682
  %4936 = vmatprep.subr.bf16.mxu0 0
  %4937 = vmatpush1.bf16.msra.mxu0 %v3683
  %4938 = vmatprep.subr.bf16.mxu0 0
  %4939 = vmatpush1.bf16.msra.mxu0 %v3684
  %4940 = vmatprep.subr.bf16.mxu0 0
  %4941 = vmatpush1.bf16.msra.mxu0 %v3685
  %4942 = vmatprep.mubr.bf16.mxu0 %v402
  %4943 = vmatmul.mubr.bf16.gmra.mrb[0].mxu0 %v401
  %v4944 = vpop.f32.mrb[0].mxu0
  %v4945 = vadd.f32 %v4905, %v4944
  %v4946 = vpop.f32.mrb[0].mxu0
  %v4947 = vpop.f32.mrb[0].mxu0
  %v4948 = vpop.f32.mrb[0].mxu0
  %4949 = vdwg.mxu0
  %4950 = vmatprep.subr.bf16.mxu0 0
  %4951 = vmatpush1.bf16.msra.mxu0 %v3686
  %4952 = vmatprep.subr.bf16.mxu0 0
  %4953 = vmatpush1.bf16.msra.mxu0 %v3687
  %4954 = vmatprep.subr.bf16.mxu0 0
  %4955 = vmatpush1.bf16.msra.mxu0 %v3688
  %4956 = vmatprep.subr.bf16.mxu0 0
  %4957 = vmatpush1.bf16.msra.mxu0 %v3689
  %4958 = vmatprep.subr.bf16.mxu0 0
  %4959 = vmatpush1.bf16.msra.mxu0 %v3690
  %4960 = vmatprep.subr.bf16.mxu0 0
  %4961 = vmatpush1.bf16.msra.mxu0 %v3691
  %4962 = vmatprep.subr.bf16.mxu0 0
  %4963 = vmatpush1.bf16.msra.mxu0 %v3692
  %4964 = vmatprep.subr.bf16.mxu0 0
  %4965 = vmatpush1.bf16.msra.mxu0 %v3693
  %4966 = vmatprep.subr.bf16.mxu0 0
  %4967 = vmatpush1.bf16.msra.mxu0 %v3694
  %4968 = vmatprep.subr.bf16.mxu0 0
  %4969 = vmatpush1.bf16.msra.mxu0 %v3695
  %4970 = vmatprep.subr.bf16.mxu0 0
  %4971 = vmatpush1.bf16.msra.mxu0 %v3696
  %4972 = vmatprep.subr.bf16.mxu0 0
  %4973 = vmatpush1.bf16.msra.mxu0 %v3697
  %4974 = vmatprep.subr.bf16.mxu0 0
  %4975 = vmatpush1.bf16.msra.mxu0 %v3698
  %4976 = vmatprep.subr.bf16.mxu0 0
  %4977 = vmatpush1.bf16.msra.mxu0 %v3699
  %4978 = vmatprep.subr.bf16.mxu0 0
  %4979 = vmatpush1.bf16.msra.mxu0 %v3700
  %4980 = vmatprep.subr.bf16.mxu0 0
  %4981 = vmatpush1.bf16.msra.mxu0 %v3701
  %4982 = vmatprep.mubr.bf16.mxu0 %v404
  %4983 = vmatmul.mubr.bf16.gmra.mrb[0].mxu0 %v403
  %v4984 = vpop.f32.mrb[0].mxu0
  %v4985 = vadd.f32 %v4945, %v4984
  %v4986 = vpop.f32.mrb[0].mxu0
  %v4987 = vpop.f32.mrb[0].mxu0
  %v4988 = vpop.f32.mrb[0].mxu0
  %4989 = vdwg.mxu0
  %4990 = vmatprep.subr.bf16.mxu0 0
  %4991 = vmatpush1.bf16.msra.mxu0 %v3702
  %4992 = vmatprep.subr.bf16.mxu0 0
  %4993 = vmatpush1.bf16.msra.mxu0 %v3703
  %4994 = vmatprep.subr.bf16.mxu0 0
  %4995 = vmatpush1.bf16.msra.mxu0 %v3704
  %4996 = vmatprep.subr.bf16.mxu0 0
  %4997 = vmatpush1.bf16.msra.mxu0 %v3705
  %4998 = vmatprep.subr.bf16.mxu0 0
  %4999 = vmatpush1.bf16.msra.mxu0 %v3706
  %5000 = vmatprep.subr.bf16.mxu0 0
  %5001 = vmatpush1.bf16.msra.mxu0 %v3707
  %5002 = vmatprep.subr.bf16.mxu0 0
  %5003 = vmatpush1.bf16.msra.mxu0 %v3708
  %5004 = vmatprep.subr.bf16.mxu0 0
  %5005 = vmatpush1.bf16.msra.mxu0 %v3709
  %5006 = vmatprep.subr.bf16.mxu0 0
  %5007 = vmatpush1.bf16.msra.mxu0 %v3710
  %5008 = vmatprep.subr.bf16.mxu0 0
  %5009 = vmatpush1.bf16.msra.mxu0 %v3711
  %5010 = vmatprep.subr.bf16.mxu0 0
  %5011 = vmatpush1.bf16.msra.mxu0 %v3712
  %5012 = vmatprep.subr.bf16.mxu0 0
  %5013 = vmatpush1.bf16.msra.mxu0 %v3713
  %5014 = vmatprep.subr.bf16.mxu0 0
  %5015 = vmatpush1.bf16.msra.mxu0 %v3714
  %5016 = vmatprep.subr.bf16.mxu0 0
  %5017 = vmatpush1.bf16.msra.mxu0 %v3715
  %5018 = vmatprep.subr.bf16.mxu0 0
  %5019 = vmatpush1.bf16.msra.mxu0 %v3716
  %5020 = vmatprep.subr.bf16.mxu0 0
  %5021 = vmatpush1.bf16.msra.mxu0 %v3717
  %5022 = vmatprep.mubr.bf16.mxu0 %v406
  %5023 = vmatmul.mubr.bf16.gmra.mrb[0].mxu0 %v405
  %v5024 = vpop.f32.mrb[0].mxu0
  %v5025 = vadd.f32 %v4985, %v5024
  %v5026 = vpop.f32.mrb[0].mxu0
  %v5027 = vpop.f32.mrb[0].mxu0
  %v5028 = vpop.f32.mrb[0].mxu0
  %5029 = vdwg.mxu0
  %5030 = vmatprep.subr.bf16.mxu0 0
  %5031 = vmatpush1.bf16.msra.mxu0 %v3718
  %5032 = vmatprep.subr.bf16.mxu0 0
  %5033 = vmatpush1.bf16.msra.mxu0 %v3719
  %5034 = vmatprep.subr.bf16.mxu0 0
  %5035 = vmatpush1.bf16.msra.mxu0 %v3720
  %5036 = vmatprep.subr.bf16.mxu0 0
  %5037 = vmatpush1.bf16.msra.mxu0 %v3721
  %5038 = vmatprep.subr.bf16.mxu0 0
  %5039 = vmatpush1.bf16.msra.mxu0 %v3722
  %5040 = vmatprep.subr.bf16.mxu0 0
  %5041 = vmatpush1.bf16.msra.mxu0 %v3723
  %5042 = vmatprep.subr.bf16.mxu0 0
  %5043 = vmatpush1.bf16.msra.mxu0 %v3724
  %5044 = vmatprep.subr.bf16.mxu0 0
  %5045 = vmatpush1.bf16.msra.mxu0 %v3725
  %5046 = vmatprep.subr.bf16.mxu0 0
  %5047 = vmatpush1.bf16.msra.mxu0 %v3726
  %5048 = vmatprep.subr.bf16.mxu0 0
  %5049 = vmatpush1.bf16.msra.mxu0 %v3727
  %5050 = vmatprep.subr.bf16.mxu0 0
  %5051 = vmatpush1.bf16.msra.mxu0 %v3728
  %5052 = vmatprep.subr.bf16.mxu0 0
  %5053 = vmatpush1.bf16.msra.mxu0 %v3729
  %5054 = vmatprep.subr.bf16.mxu0 0
  %5055 = vmatpush1.bf16.msra.mxu0 %v3730
  %5056 = vmatprep.subr.bf16.mxu0 0
  %5057 = vmatpush1.bf16.msra.mxu0 %v3731
  %5058 = vmatprep.subr.bf16.mxu0 0
  %5059 = vmatpush1.bf16.msra.mxu0 %v3732
  %5060 = vmatprep.subr.bf16.mxu0 0
  %5061 = vmatpush1.bf16.msra.mxu0 %v3733
  %5062 = vmatprep.mubr.bf16.mxu0 %v408
  %5063 = vmatmul.mubr.bf16.gmra.mrb[0].mxu0 %v407
  %v5064 = vpop.f32.mrb[0].mxu0
  %v5065 = vadd.f32 %v5025, %v5064
  %v5066 = vpop.f32.mrb[0].mxu0
  %v5067 = vpop.f32.mrb[0].mxu0
  %v5068 = vpop.f32.mrb[0].mxu0
  %5069 = vdwg.mxu0
  %5070 = vmatprep.subr.bf16.mxu0 0
  %5071 = vmatpush1.bf16.msra.mxu0 %v3734
  %5072 = vmatprep.subr.bf16.mxu0 0
  %5073 = vmatpush1.bf16.msra.mxu0 %v3735
  %5074 = vmatprep.subr.bf16.mxu0 0
  %5075 = vmatpush1.bf16.msra.mxu0 %v3736
  %5076 = vmatprep.subr.bf16.mxu0 0
  %5077 = vmatpush1.bf16.msra.mxu0 %v3737
  %5078 = vmatprep.subr.bf16.mxu0 0
  %5079 = vmatpush1.bf16.msra.mxu0 %v3738
  %5080 = vmatprep.subr.bf16.mxu0 0
  %5081 = vmatpush1.bf16.msra.mxu0 %v3739
  %5082 = vmatprep.subr.bf16.mxu0 0
  %5083 = vmatpush1.bf16.msra.mxu0 %v3740
  %5084 = vmatprep.subr.bf16.mxu0 0
  %5085 = vmatpush1.bf16.msra.mxu0 %v3741
  %5086 = vmatprep.subr.bf16.mxu0 0
  %5087 = vmatpush1.bf16.msra.mxu0 %v3742
  %5088 = vmatprep.subr.bf16.mxu0 0
  %5089 = vmatpush1.bf16.msra.mxu0 %v3743
  %5090 = vmatprep.subr.bf16.mxu0 0
  %5091 = vmatpush1.bf16.msra.mxu0 %v3744
  %5092 = vmatprep.subr.bf16.mxu0 0
  %5093 = vmatpush1.bf16.msra.mxu0 %v3745
  %5094 = vmatprep.subr.bf16.mxu0 0
  %5095 = vmatpush1.bf16.msra.mxu0 %v3746
  %5096 = vmatprep.subr.bf16.mxu0 0
  %5097 = vmatpush1.bf16.msra.mxu0 %v3747
  %5098 = vmatprep.subr.bf16.mxu0 0
  %5099 = vmatpush1.bf16.msra.mxu0 %v3748
  %5100 = vmatprep.subr.bf16.mxu0 0
  %5101 = vmatpush1.bf16.msra.mxu0 %v3749
  %5102 = vmatprep.mubr.bf16.mxu0 %v410
  %5103 = vmatmul.mubr.bf16.gmra.mrb[0].mxu0 %v409
  %v5104 = vpop.f32.mrb[0].mxu0
  %v5105 = vadd.f32 %v5065, %v5104
  %v5106 = vpop.f32.mrb[0].mxu0
  %v5107 = vpop.f32.mrb[0].mxu0
  %v5108 = vpop.f32.mrb[0].mxu0
  %5109 = vdwg.mxu0
  %5110 = vmatprep.subr.bf16.mxu0 0
  %5111 = vmatpush1.bf16.msra.mxu0 %v3750
  %5112 = vmatprep.subr.bf16.mxu0 0
  %5113 = vmatpush1.bf16.msra.mxu0 %v3751
  %5114 = vmatprep.subr.bf16.mxu0 0
  %5115 = vmatpush1.bf16.msra.mxu0 %v3752
  %5116 = vmatprep.subr.bf16.mxu0 0
  %5117 = vmatpush1.bf16.msra.mxu0 %v3753
  %5118 = vmatprep.subr.bf16.mxu0 0
  %5119 = vmatpush1.bf16.msra.mxu0 %v3754
  %5120 = vmatprep.subr.bf16.mxu0 0
  %5121 = vmatpush1.bf16.msra.mxu0 %v3755
  %5122 = vmatprep.subr.bf16.mxu0 0
  %5123 = vmatpush1.bf16.msra.mxu0 %v3756
  %5124 = vmatprep.subr.bf16.mxu0 0
  %5125 = vmatpush1.bf16.msra.mxu0 %v3757
  %5126 = vmatprep.subr.bf16.mxu0 0
  %5127 = vmatpush1.bf16.msra.mxu0 %v3758
  %5128 = vmatprep.subr.bf16.mxu0 0
  %5129 = vmatpush1.bf16.msra.mxu0 %v3759
  %5130 = vmatprep.subr.bf16.mxu0 0
  %5131 = vmatpush1.bf16.msra.mxu0 %v3760
  %5132 = vmatprep.subr.bf16.mxu0 0
  %5133 = vmatpush1.bf16.msra.mxu0 %v3761
  %5134 = vmatprep.subr.bf16.mxu0 0
  %5135 = vmatpush1.bf16.msra.mxu0 %v3762
  %5136 = vmatprep.subr.bf16.mxu0 0
  %5137 = vmatpush1.bf16.msra.mxu0 %v3763
  %5138 = vmatprep.subr.bf16.mxu0 0
  %5139 = vmatpush1.bf16.msra.mxu0 %v3764
  %5140 = vmatprep.subr.bf16.mxu0 0
  %5141 = vmatpush1.bf16.msra.mxu0 %v3765
  %5142 = vmatprep.mubr.bf16.mxu0 %v412
  %5143 = vmatmul.mubr.bf16.gmra.mrb[0].mxu0 %v411
  %v5144 = vpop.f32.mrb[0].mxu0
  %v5145 = vadd.f32 %v5105, %v5144
  %v5146 = vpop.f32.mrb[0].mxu0
  %v5147 = vpop.f32.mrb[0].mxu0
  %v5148 = vpop.f32.mrb[0].mxu0
  %5149 = vdwg.mxu0
  %5150 = vmatprep.subr.bf16.mxu0 0
  %5151 = vmatpush1.bf16.msra.mxu0 %v3766
  %5152 = vmatprep.subr.bf16.mxu0 0
  %5153 = vmatpush1.bf16.msra.mxu0 %v3767
  %5154 = vmatprep.subr.bf16.mxu0 0
  %5155 = vmatpush1.bf16.msra.mxu0 %v3768
  %5156 = vmatprep.subr.bf16.mxu0 0
  %5157 = vmatpush1.bf16.msra.mxu0 %v3769
  %5158 = vmatprep.subr.bf16.mxu0 0
  %5159 = vmatpush1.bf16.msra.mxu0 %v3770
  %5160 = vmatprep.subr.bf16.mxu0 0
  %5161 = vmatpush1.bf16.msra.mxu0 %v3771
  %5162 = vmatprep.subr.bf16.mxu0 0
  %5163 = vmatpush1.bf16.msra.mxu0 %v3772
  %5164 = vmatprep.subr.bf16.mxu0 0
  %5165 = vmatpush1.bf16.msra.mxu0 %v3773
  %5166 = vmatprep.subr.bf16.mxu0 0
  %5167 = vmatpush1.bf16.msra.mxu0 %v3774
  %5168 = vmatprep.subr.bf16.mxu0 0
  %5169 = vmatpush1.bf16.msra.mxu0 %v3775
  %5170 = vmatprep.subr.bf16.mxu0 0
  %5171 = vmatpush1.bf16.msra.mxu0 %v3776
  %5172 = vmatprep.subr.bf16.mxu0 0
  %5173 = vmatpush1.bf16.msra.mxu0 %v3777
  %5174 = vmatprep.subr.bf16.mxu0 0
  %5175 = vmatpush1.bf16.msra.mxu0 %v3778
  %5176 = vmatprep.subr.bf16.mxu0 0
  %5177 = vmatpush1.bf16.msra.mxu0 %v3779
  %5178 = vmatprep.subr.bf16.mxu0 0
  %5179 = vmatpush1.bf16.msra.mxu0 %v3780
  %5180 = vmatprep.subr.bf16.mxu0 0
  %5181 = vmatpush1.bf16.msra.mxu0 %v3781
  %5182 = vmatprep.mubr.bf16.mxu0 %v414
  %5183 = vmatmul.mubr.bf16.gmra.mrb[0].mxu0 %v413
  %v5184 = vpop.f32.mrb[0].mxu0
  %v5185 = vadd.f32 %v5145, %v5184
  %v5186 = vpop.f32.mrb[0].mxu0
  %v5187 = vpop.f32.mrb[0].mxu0
  %v5188 = vpop.f32.mrb[0].mxu0
  %5189 = vdwg.mxu0
  %5190 = vmatprep.subr.bf16.mxu0 0
  %5191 = vmatpush1.bf16.msra.mxu0 %v3782
  %5192 = vmatprep.subr.bf16.mxu0 0
  %5193 = vmatpush1.bf16.msra.mxu0 %v3783
  %5194 = vmatprep.subr.bf16.mxu0 0
  %5195 = vmatpush1.bf16.msra.mxu0 %v3784
  %5196 = vmatprep.subr.bf16.mxu0 0
  %5197 = vmatpush1.bf16.msra.mxu0 %v3785
  %5198 = vmatprep.subr.bf16.mxu0 0
  %5199 = vmatpush1.bf16.msra.mxu0 %v3786
  %5200 = vmatprep.subr.bf16.mxu0 0
  %5201 = vmatpush1.bf16.msra.mxu0 %v3787
  %5202 = vmatprep.subr.bf16.mxu0 0
  %5203 = vmatpush1.bf16.msra.mxu0 %v3788
  %5204 = vmatprep.subr.bf16.mxu0 0
  %5205 = vmatpush1.bf16.msra.mxu0 %v3789
  %5206 = vmatprep.subr.bf16.mxu0 0
  %5207 = vmatpush1.bf16.msra.mxu0 %v3790
  %5208 = vmatprep.subr.bf16.mxu0 0
  %5209 = vmatpush1.bf16.msra.mxu0 %v3791
  %5210 = vmatprep.subr.bf16.mxu0 0
  %5211 = vmatpush1.bf16.msra.mxu0 %v3792
  %5212 = vmatprep.subr.bf16.mxu0 0
  %5213 = vmatpush1.bf16.msra.mxu0 %v3793
  %5214 = vmatprep.subr.bf16.mxu0 0
  %5215 = vmatpush1.bf16.msra.mxu0 %v3794
  %5216 = vmatprep.subr.bf16.mxu0 0
  %5217 = vmatpush1.bf16.msra.mxu0 %v3795
  %5218 = vmatprep.subr.bf16.mxu0 0
  %5219 = vmatpush1.bf16.msra.mxu0 %v3796
  %5220 = vmatprep.subr.bf16.mxu0 0
  %5221 = vmatpush1.bf16.msra.mxu0 %v3797
  %5222 = vmatprep.mubr.bf16.mxu0 %v416
  %5223 = vmatmul.mubr.bf16.gmra.mrb[0].mxu0 %v415
  %v5224 = vpop.f32.mrb[0].mxu0
  %v5225 = vadd.f32 %v5185, %v5224
  %v5226 = vpop.f32.mrb[0].mxu0
  %v5227 = vpop.f32.mrb[0].mxu0
  %v5228 = vpop.f32.mrb[0].mxu0
  %5229 = vdwg.mxu0
  %5230 = vmatprep.subr.bf16.mxu0 0
  %5231 = vmatpush1.bf16.msra.mxu0 %v3798
  %5232 = vmatprep.subr.bf16.mxu0 0
  %5233 = vmatpush1.bf16.msra.mxu0 %v3799
  %5234 = vmatprep.subr.bf16.mxu0 0
  %5235 = vmatpush1.bf16.msra.mxu0 %v3800
  %5236 = vmatprep.subr.bf16.mxu0 0
  %5237 = vmatpush1.bf16.msra.mxu0 %v3801
  %5238 = vmatprep.subr.bf16.mxu0 0
  %5239 = vmatpush1.bf16.msra.mxu0 %v3802
  %5240 = vmatprep.subr.bf16.mxu0 0
  %5241 = vmatpush1.bf16.msra.mxu0 %v3803
  %5242 = vmatprep.subr.bf16.mxu0 0
  %5243 = vmatpush1.bf16.msra.mxu0 %v3804
  %5244 = vmatprep.subr.bf16.mxu0 0
  %5245 = vmatpush1.bf16.msra.mxu0 %v3805
  %5246 = vmatprep.subr.bf16.mxu0 0
  %5247 = vmatpush1.bf16.msra.mxu0 %v3806
  %5248 = vmatprep.subr.bf16.mxu0 0
  %5249 = vmatpush1.bf16.msra.mxu0 %v3807
  %5250 = vmatprep.subr.bf16.mxu0 0
  %5251 = vmatpush1.bf16.msra.mxu0 %v3808
  %5252 = vmatprep.subr.bf16.mxu0 0
  %5253 = vmatpush1.bf16.msra.mxu0 %v3809
  %5254 = vmatprep.subr.bf16.mxu0 0
  %5255 = vmatpush1.bf16.msra.mxu0 %v3810
  %5256 = vmatprep.subr.bf16.mxu0 0
  %5257 = vmatpush1.bf16.msra.mxu0 %v3811
  %5258 = vmatprep.subr.bf16.mxu0 0
  %5259 = vmatpush1.bf16.msra.mxu0 %v3812
  %5260 = vmatprep.subr.bf16.mxu0 0
  %5261 = vmatpush1.bf16.msra.mxu0 %v3813
  %5262 = vmatprep.mubr.bf16.mxu0 %v418
  %5263 = vmatmul.mubr.bf16.gmra.mrb[0].mxu0 %v417
  %v5264 = vpop.f32.mrb[0].mxu0
  %v5265 = vadd.f32 %v5225, %v5264
  %v5266 = vpop.f32.mrb[0].mxu0
  %v5267 = vpop.f32.mrb[0].mxu0
  %v5268 = vpop.f32.mrb[0].mxu0
  %5269 = vdwg.mxu0
  %5270 = vmatprep.subr.bf16.mxu0 0
  %5271 = vmatpush1.bf16.msra.mxu0 %v3814
  %5272 = vmatprep.subr.bf16.mxu0 0
  %5273 = vmatpush1.bf16.msra.mxu0 %v3815
  %5274 = vmatprep.subr.bf16.mxu0 0
  %5275 = vmatpush1.bf16.msra.mxu0 %v3816
  %5276 = vmatprep.subr.bf16.mxu0 0
  %5277 = vmatpush1.bf16.msra.mxu0 %v3817
  %5278 = vmatprep.subr.bf16.mxu0 0
  %5279 = vmatpush1.bf16.msra.mxu0 %v3818
  %5280 = vmatprep.subr.bf16.mxu0 0
  %5281 = vmatpush1.bf16.msra.mxu0 %v3819
  %5282 = vmatprep.subr.bf16.mxu0 0
  %5283 = vmatpush1.bf16.msra.mxu0 %v3820
  %5284 = vmatprep.subr.bf16.mxu0 0
  %5285 = vmatpush1.bf16.msra.mxu0 %v3821
  %5286 = vmatprep.subr.bf16.mxu0 0
  %5287 = vmatpush1.bf16.msra.mxu0 %v3822
  %5288 = vmatprep.subr.bf16.mxu0 0
  %5289 = vmatpush1.bf16.msra.mxu0 %v3823
  %5290 = vmatprep.subr.bf16.mxu0 0
  %5291 = vmatpush1.bf16.msra.mxu0 %v3824
  %5292 = vmatprep.subr.bf16.mxu0 0
  %5293 = vmatpush1.bf16.msra.mxu0 %v3825
  %5294 = vmatprep.subr.bf16.mxu0 0
  %5295 = vmatpush1.bf16.msra.mxu0 %v3826
  %5296 = vmatprep.subr.bf16.mxu0 0
  %5297 = vmatpush1.bf16.msra.mxu0 %v3827
  %5298 = vmatprep.subr.bf16.mxu0 0
  %5299 = vmatpush1.bf16.msra.mxu0 %v3828
  %5300 = vmatprep.subr.bf16.mxu0 0
  %5301 = vmatpush1.bf16.msra.mxu0 %v3829
  %5302 = vmatprep.mubr.bf16.mxu0 %v420
  %5303 = vmatmul.mubr.bf16.gmra.mrb[0].mxu0 %v419
  %v5304 = vpop.f32.mrb[0].mxu0
  %v5305 = vadd.f32 %v5265, %v5304
  %v5306 = vpop.f32.mrb[0].mxu0
  %v5307 = vpop.f32.mrb[0].mxu0
  %v5308 = vpop.f32.mrb[0].mxu0
  %5309 = vdwg.mxu0
  %5310 = vmatprep.subr.bf16.mxu0 0
  %5311 = vmatpush1.bf16.msra.mxu0 %v3830
  %5312 = vmatprep.subr.bf16.mxu0 0
  %5313 = vmatpush1.bf16.msra.mxu0 %v3831
  %5314 = vmatprep.subr.bf16.mxu0 0
  %5315 = vmatpush1.bf16.msra.mxu0 %v3832
  %5316 = vmatprep.subr.bf16.mxu0 0
  %5317 = vmatpush1.bf16.msra.mxu0 %v3833
  %5318 = vmatprep.subr.bf16.mxu0 0
  %5319 = vmatpush1.bf16.msra.mxu0 %v3834
  %5320 = vmatprep.subr.bf16.mxu0 0
  %5321 = vmatpush1.bf16.msra.mxu0 %v3835
  %5322 = vmatprep.subr.bf16.mxu0 0
  %5323 = vmatpush1.bf16.msra.mxu0 %v3836
  %5324 = vmatprep.subr.bf16.mxu0 0
  %5325 = vmatpush1.bf16.msra.mxu0 %v3837
  %5326 = vmatprep.subr.bf16.mxu0 0
  %5327 = vmatpush1.bf16.msra.mxu0 %v3838
  %5328 = vmatprep.subr.bf16.mxu0 0
  %5329 = vmatpush1.bf16.msra.mxu0 %v3839
  %5330 = vmatprep.subr.bf16.mxu0 0
  %5331 = vmatpush1.bf16.msra.mxu0 %v3840
  %5332 = vmatprep.subr.bf16.mxu0 0
  %5333 = vmatpush1.bf16.msra.mxu0 %v3841
  %5334 = vmatprep.subr.bf16.mxu0 0
  %5335 = vmatpush1.bf16.msra.mxu0 %v3842
  %5336 = vmatprep.subr.bf16.mxu0 0
  %5337 = vmatpush1.bf16.msra.mxu0 %v3843
  %5338 = vmatprep.subr.bf16.mxu0 0
  %5339 = vmatpush1.bf16.msra.mxu0 %v3844
  %5340 = vmatprep.subr.bf16.mxu0 0
  %5341 = vmatpush1.bf16.msra.mxu0 %v3845
  %5342 = vmatprep.mubr.bf16.mxu0 %v422
  %5343 = vmatmul.mubr.bf16.gmra.mrb[0].mxu0 %v421
  %v5344 = vpop.f32.mrb[0].mxu0
  %v5345 = vadd.f32 %v5305, %v5344
  %v5346 = vpop.f32.mrb[0].mxu0
  %v5347 = vpop.f32.mrb[0].mxu0
  %v5348 = vpop.f32.mrb[0].mxu0
  %5349 = vdwg.mxu0
  %5350 = vmatprep.subr.bf16.mxu0 0
  %5351 = vmatpush1.bf16.msra.mxu0 %v3846
  %5352 = vmatprep.subr.bf16.mxu0 0
  %5353 = vmatpush1.bf16.msra.mxu0 %v3847
  %5354 = vmatprep.subr.bf16.mxu0 0
  %5355 = vmatpush1.bf16.msra.mxu0 %v3848
  %5356 = vmatprep.subr.bf16.mxu0 0
  %5357 = vmatpush1.bf16.msra.mxu0 %v3849
  %5358 = vmatprep.subr.bf16.mxu0 0
  %5359 = vmatpush1.bf16.msra.mxu0 %v3850
  %5360 = vmatprep.subr.bf16.mxu0 0
  %5361 = vmatpush1.bf16.msra.mxu0 %v3851
  %5362 = vmatprep.subr.bf16.mxu0 0
  %5363 = vmatpush1.bf16.msra.mxu0 %v3852
  %5364 = vmatprep.subr.bf16.mxu0 0
  %5365 = vmatpush1.bf16.msra.mxu0 %v3853
  %5366 = vmatprep.subr.bf16.mxu0 0
  %5367 = vmatpush1.bf16.msra.mxu0 %v3854
  %5368 = vmatprep.subr.bf16.mxu0 0
  %5369 = vmatpush1.bf16.msra.mxu0 %v3855
  %5370 = vmatprep.subr.bf16.mxu0 0
  %5371 = vmatpush1.bf16.msra.mxu0 %v3856
  %5372 = vmatprep.subr.bf16.mxu0 0
  %5373 = vmatpush1.bf16.msra.mxu0 %v3857
  %5374 = vmatprep.subr.bf16.mxu0 0
  %5375 = vmatpush1.bf16.msra.mxu0 %v3858
  %5376 = vmatprep.subr.bf16.mxu0 0
  %5377 = vmatpush1.bf16.msra.mxu0 %v3859
  %5378 = vmatprep.subr.bf16.mxu0 0
  %5379 = vmatpush1.bf16.msra.mxu0 %v3860
  %5380 = vmatprep.subr.bf16.mxu0 0
  %5381 = vmatpush1.bf16.msra.mxu0 %v3861
  %5382 = vmatprep.mubr.bf16.mxu0 %v424
  %5383 = vmatmul.mubr.bf16.gmra.mrb[0].mxu0 %v423
  %v5384 = vpop.f32.mrb[0].mxu0
  %v5385 = vadd.f32 %v5345, %v5384
  %v5386 = vpop.f32.mrb[0].mxu0
  %v5387 = vpop.f32.mrb[0].mxu0
  %v5388 = vpop.f32.mrb[0].mxu0
  %5389 = vdwg.mxu0
  %5390 = vmatprep.subr.bf16.mxu0 0
  %5391 = vmatpush1.bf16.msra.mxu0 %v3862
  %5392 = vmatprep.subr.bf16.mxu0 0
  %5393 = vmatpush1.bf16.msra.mxu0 %v3863
  %5394 = vmatprep.subr.bf16.mxu0 0
  %5395 = vmatpush1.bf16.msra.mxu0 %v3864
  %5396 = vmatprep.subr.bf16.mxu0 0
  %5397 = vmatpush1.bf16.msra.mxu0 %v3865
  %5398 = vmatprep.subr.bf16.mxu0 0
  %5399 = vmatpush1.bf16.msra.mxu0 %v3866
  %5400 = vmatprep.subr.bf16.mxu0 0
  %5401 = vmatpush1.bf16.msra.mxu0 %v3867
  %5402 = vmatprep.subr.bf16.mxu0 0
  %5403 = vmatpush1.bf16.msra.mxu0 %v3868
  %5404 = vmatprep.subr.bf16.mxu0 0
  %5405 = vmatpush1.bf16.msra.mxu0 %v3869
  %5406 = vmatprep.subr.bf16.mxu0 0
  %5407 = vmatpush1.bf16.msra.mxu0 %v3870
  %5408 = vmatprep.subr.bf16.mxu0 0
  %5409 = vmatpush1.bf16.msra.mxu0 %v3871
  %5410 = vmatprep.subr.bf16.mxu0 0
  %5411 = vmatpush1.bf16.msra.mxu0 %v3872
  %5412 = vmatprep.subr.bf16.mxu0 0
  %5413 = vmatpush1.bf16.msra.mxu0 %v3873
  %5414 = vmatprep.subr.bf16.mxu0 0
  %5415 = vmatpush1.bf16.msra.mxu0 %v3874
  %5416 = vmatprep.subr.bf16.mxu0 0
  %5417 = vmatpush1.bf16.msra.mxu0 %v3875
  %5418 = vmatprep.subr.bf16.mxu0 0
  %5419 = vmatpush1.bf16.msra.mxu0 %v3876
  %5420 = vmatprep.subr.bf16.mxu0 0
  %5421 = vmatpush1.bf16.msra.mxu0 %v3877
  %5422 = vmatprep.mubr.bf16.mxu0 %v426
  %5423 = vmatmul.mubr.bf16.gmra.mrb[0].mxu0 %v425
  %v5424 = vpop.f32.mrb[0].mxu0
  %v5425 = vadd.f32 %v5385, %v5424
  %v5426 = vpop.f32.mrb[0].mxu0
  %v5427 = vpop.f32.mrb[0].mxu0
  %v5428 = vpop.f32.mrb[0].mxu0
  %5429 = vdwg.mxu0
  %5430 = vmatprep.subr.bf16.mxu0 0
  %5431 = vmatpush1.bf16.msra.mxu0 %v3878
  %5432 = vmatprep.subr.bf16.mxu0 0
  %5433 = vmatpush1.bf16.msra.mxu0 %v3879
  %5434 = vmatprep.subr.bf16.mxu0 0
  %5435 = vmatpush1.bf16.msra.mxu0 %v3880
  %5436 = vmatprep.subr.bf16.mxu0 0
  %5437 = vmatpush1.bf16.msra.mxu0 %v3881
  %5438 = vmatprep.subr.bf16.mxu0 0
  %5439 = vmatpush1.bf16.msra.mxu0 %v3882
  %5440 = vmatprep.subr.bf16.mxu0 0
  %5441 = vmatpush1.bf16.msra.mxu0 %v3883
  %5442 = vmatprep.subr.bf16.mxu0 0
  %5443 = vmatpush1.bf16.msra.mxu0 %v3884
  %5444 = vmatprep.subr.bf16.mxu0 0
  %5445 = vmatpush1.bf16.msra.mxu0 %v3885
  %5446 = vmatprep.subr.bf16.mxu0 0
  %5447 = vmatpush1.bf16.msra.mxu0 %v3886
  %5448 = vmatprep.subr.bf16.mxu0 0
  %5449 = vmatpush1.bf16.msra.mxu0 %v3887
  %5450 = vmatprep.subr.bf16.mxu0 0
  %5451 = vmatpush1.bf16.msra.mxu0 %v3888
  %5452 = vmatprep.subr.bf16.mxu0 0
  %5453 = vmatpush1.bf16.msra.mxu0 %v3889
  %5454 = vmatprep.subr.bf16.mxu0 0
  %5455 = vmatpush1.bf16.msra.mxu0 %v3890
  %5456 = vmatprep.subr.bf16.mxu0 0
  %5457 = vmatpush1.bf16.msra.mxu0 %v3891
  %5458 = vmatprep.subr.bf16.mxu0 0
  %5459 = vmatpush1.bf16.msra.mxu0 %v3892
  %5460 = vmatprep.subr.bf16.mxu0 0
  %5461 = vmatpush1.bf16.msra.mxu0 %v3893
  %5462 = vmatprep.mubr.bf16.mxu0 %v428
  %5463 = vmatmul.mubr.bf16.gmra.mrb[0].mxu0 %v427
  %v5464 = vpop.f32.mrb[0].mxu0
  %v5465 = vadd.f32 %v5425, %v5464
  %v5466 = vpop.f32.mrb[0].mxu0
  %v5467 = vpop.f32.mrb[0].mxu0
  %v5468 = vpop.f32.mrb[0].mxu0
  %5469 = vdwg.mxu0
  %5470 = vmatprep.subr.bf16.mxu0 0
  %5471 = vmatpush1.bf16.msra.mxu0 %v3894
  %5472 = vmatprep.subr.bf16.mxu0 0
  %5473 = vmatpush1.bf16.msra.mxu0 %v3895
  %5474 = vmatprep.subr.bf16.mxu0 0
  %5475 = vmatpush1.bf16.msra.mxu0 %v3896
  %5476 = vmatprep.subr.bf16.mxu0 0
  %5477 = vmatpush1.bf16.msra.mxu0 %v3897
  %5478 = vmatprep.subr.bf16.mxu0 0
  %5479 = vmatpush1.bf16.msra.mxu0 %v3898
  %5480 = vmatprep.subr.bf16.mxu0 0
  %5481 = vmatpush1.bf16.msra.mxu0 %v3899
  %5482 = vmatprep.subr.bf16.mxu0 0
  %5483 = vmatpush1.bf16.msra.mxu0 %v3900
  %5484 = vmatprep.subr.bf16.mxu0 0
  %5485 = vmatpush1.bf16.msra.mxu0 %v3901
  %5486 = vmatprep.subr.bf16.mxu0 0
  %5487 = vmatpush1.bf16.msra.mxu0 %v3902
  %5488 = vmatprep.subr.bf16.mxu0 0
  %5489 = vmatpush1.bf16.msra.mxu0 %v3903
  %5490 = vmatprep.subr.bf16.mxu0 0
  %5491 = vmatpush1.bf16.msra.mxu0 %v3904
  %5492 = vmatprep.subr.bf16.mxu0 0
  %5493 = vmatpush1.bf16.msra.mxu0 %v3905
  %5494 = vmatprep.subr.bf16.mxu0 0
  %5495 = vmatpush1.bf16.msra.mxu0 %v3906
  %5496 = vmatprep.subr.bf16.mxu0 0
  %5497 = vmatpush1.bf16.msra.mxu0 %v3907
  %5498 = vmatprep.subr.bf16.mxu0 0
  %5499 = vmatpush1.bf16.msra.mxu0 %v3908
  %5500 = vmatprep.subr.bf16.mxu0 0
  %5501 = vmatpush1.bf16.msra.mxu0 %v3909
  %5502 = vmatprep.mubr.bf16.mxu0 %v430
  %5503 = vmatmul.mubr.bf16.gmra.mrb[0].mxu0 %v429
  %v5504 = vpop.f32.mrb[0].mxu0
  %v5505 = vadd.f32 %v5465, %v5504
  %v5506 = vpop.f32.mrb[0].mxu0
  %v5507 = vpop.f32.mrb[0].mxu0
  %v5508 = vpop.f32.mrb[0].mxu0
  %5509 = vdwg.mxu0
  %5510 = vmatprep.subr.bf16.mxu0 0
  %5511 = vmatpush1.bf16.msra.mxu0 %v3910
  %5512 = vmatprep.subr.bf16.mxu0 0
  %5513 = vmatpush1.bf16.msra.mxu0 %v3911
  %5514 = vmatprep.subr.bf16.mxu0 0
  %5515 = vmatpush1.bf16.msra.mxu0 %v3912
  %5516 = vmatprep.subr.bf16.mxu0 0
  %5517 = vmatpush1.bf16.msra.mxu0 %v3913
  %5518 = vmatprep.subr.bf16.mxu0 0
  %5519 = vmatpush1.bf16.msra.mxu0 %v3914
  %5520 = vmatprep.subr.bf16.mxu0 0
  %5521 = vmatpush1.bf16.msra.mxu0 %v3915
  %5522 = vmatprep.subr.bf16.mxu0 0
  %5523 = vmatpush1.bf16.msra.mxu0 %v3916
  %5524 = vmatprep.subr.bf16.mxu0 0
  %5525 = vmatpush1.bf16.msra.mxu0 %v3917
  %5526 = vmatprep.subr.bf16.mxu0 0
  %5527 = vmatpush1.bf16.msra.mxu0 %v3918
  %5528 = vmatprep.subr.bf16.mxu0 0
  %5529 = vmatpush1.bf16.msra.mxu0 %v3919
  %5530 = vmatprep.subr.bf16.mxu0 0
  %5531 = vmatpush1.bf16.msra.mxu0 %v3920
  %5532 = vmatprep.subr.bf16.mxu0 0
  %5533 = vmatpush1.bf16.msra.mxu0 %v3921
  %5534 = vmatprep.subr.bf16.mxu0 0
  %5535 = vmatpush1.bf16.msra.mxu0 %v3922
  %5536 = vmatprep.subr.bf16.mxu0 0
  %5537 = vmatpush1.bf16.msra.mxu0 %v3923
  %5538 = vmatprep.subr.bf16.mxu0 0
  %5539 = vmatpush1.bf16.msra.mxu0 %v3924
  %5540 = vmatprep.subr.bf16.mxu0 0
  %5541 = vmatpush1.bf16.msra.mxu0 %v3925
  %5542 = vmatprep.mubr.bf16.mxu0 %v432
  %5543 = vmatmul.mubr.bf16.gmra.mrb[0].mxu0 %v431
  %v5544 = vpop.f32.mrb[0].mxu0
  %v5545 = vadd.f32 %v5505, %v5544
  %v5546 = vpop.f32.mrb[0].mxu0
  %v5547 = vpop.f32.mrb[0].mxu0
  %v5548 = vpop.f32.mrb[0].mxu0
  %5549 = vdwg.mxu0
  %5550 = vmatprep.subr.bf16.mxu0 0
  %5551 = vmatpush1.bf16.msra.mxu0 %v3926
  %5552 = vmatprep.subr.bf16.mxu0 0
  %5553 = vmatpush1.bf16.msra.mxu0 %v3927
  %5554 = vmatprep.subr.bf16.mxu0 0
  %5555 = vmatpush1.bf16.msra.mxu0 %v3928
  %5556 = vmatprep.subr.bf16.mxu0 0
  %5557 = vmatpush1.bf16.msra.mxu0 %v3929
  %5558 = vmatprep.subr.bf16.mxu0 0
  %5559 = vmatpush1.bf16.msra.mxu0 %v3930
  %5560 = vmatprep.subr.bf16.mxu0 0
  %5561 = vmatpush1.bf16.msra.mxu0 %v3931
  %5562 = vmatprep.subr.bf16.mxu0 0
  %5563 = vmatpush1.bf16.msra.mxu0 %v3932
  %5564 = vmatprep.subr.bf16.mxu0 0
  %5565 = vmatpush1.bf16.msra.mxu0 %v3933
  %5566 = vmatprep.subr.bf16.mxu0 0
  %5567 = vmatpush1.bf16.msra.mxu0 %v3934
  %5568 = vmatprep.subr.bf16.mxu0 0
  %5569 = vmatpush1.bf16.msra.mxu0 %v3935
  %5570 = vmatprep.subr.bf16.mxu0 0
  %5571 = vmatpush1.bf16.msra.mxu0 %v3936
  %5572 = vmatprep.subr.bf16.mxu0 0
  %5573 = vmatpush1.bf16.msra.mxu0 %v3937
  %5574 = vmatprep.subr.bf16.mxu0 0
  %5575 = vmatpush1.bf16.msra.mxu0 %v3938
  %5576 = vmatprep.subr.bf16.mxu0 0
  %5577 = vmatpush1.bf16.msra.mxu0 %v3939
  %5578 = vmatprep.subr.bf16.mxu0 0
  %5579 = vmatpush1.bf16.msra.mxu0 %v3940
  %5580 = vmatprep.subr.bf16.mxu0 0
  %5581 = vmatpush1.bf16.msra.mxu0 %v3941
  %5582 = vmatprep.mubr.bf16.mxu0 %v434
  %5583 = vmatmul.mubr.bf16.gmra.mrb[0].mxu0 %v433
  %v5584 = vpop.f32.mrb[0].mxu0
  %v5585 = vadd.f32 %v5545, %v5584
  %v5586 = vpop.f32.mrb[0].mxu0
  %v5587 = vpop.f32.mrb[0].mxu0
  %v5588 = vpop.f32.mrb[0].mxu0
  %5589 = vdwg.mxu0
  %5590 = vmatprep.subr.bf16.mxu0 0
  %5591 = vmatpush1.bf16.msra.mxu0 %v3942
  %5592 = vmatprep.subr.bf16.mxu0 0
  %5593 = vmatpush1.bf16.msra.mxu0 %v3943
  %5594 = vmatprep.subr.bf16.mxu0 0
  %5595 = vmatpush1.bf16.msra.mxu0 %v3944
  %5596 = vmatprep.subr.bf16.mxu0 0
  %5597 = vmatpush1.bf16.msra.mxu0 %v3945
  %5598 = vmatprep.subr.bf16.mxu0 0
  %5599 = vmatpush1.bf16.msra.mxu0 %v3946
  %5600 = vmatprep.subr.bf16.mxu0 0
  %5601 = vmatpush1.bf16.msra.mxu0 %v3947
  %5602 = vmatprep.subr.bf16.mxu0 0
  %5603 = vmatpush1.bf16.msra.mxu0 %v3948
  %5604 = vmatprep.subr.bf16.mxu0 0
  %5605 = vmatpush1.bf16.msra.mxu0 %v3949
  %5606 = vmatprep.subr.bf16.mxu0 0
  %5607 = vmatpush1.bf16.msra.mxu0 %v3950
  %5608 = vmatprep.subr.bf16.mxu0 0
  %5609 = vmatpush1.bf16.msra.mxu0 %v3951
  %5610 = vmatprep.subr.bf16.mxu0 0
  %5611 = vmatpush1.bf16.msra.mxu0 %v3952
  %5612 = vmatprep.subr.bf16.mxu0 0
  %5613 = vmatpush1.bf16.msra.mxu0 %v3953
  %5614 = vmatprep.subr.bf16.mxu0 0
  %5615 = vmatpush1.bf16.msra.mxu0 %v3954
  %5616 = vmatprep.subr.bf16.mxu0 0
  %5617 = vmatpush1.bf16.msra.mxu0 %v3955
  %5618 = vmatprep.subr.bf16.mxu0 0
  %5619 = vmatpush1.bf16.msra.mxu0 %v3956
  %5620 = vmatprep.subr.bf16.mxu0 0
  %5621 = vmatpush1.bf16.msra.mxu0 %v3957
  %5622 = vmatprep.mubr.bf16.mxu0 %v436
  %5623 = vmatmul.mubr.bf16.gmra.mrb[0].mxu0 %v435
  %v5624 = vpop.f32.mrb[0].mxu0
  %v5625 = vadd.f32 %v5585, %v5624
  %v5626 = vpop.f32.mrb[0].mxu0
  %v5627 = vpop.f32.mrb[0].mxu0
  %v5628 = vpop.f32.mrb[0].mxu0
  %5629 = vdwg.mxu0
  %5630 = vmatprep.subr.bf16.mxu0 0
  %5631 = vmatpush1.bf16.msra.mxu0 %v3958
  %5632 = vmatprep.subr.bf16.mxu0 0
  %5633 = vmatpush1.bf16.msra.mxu0 %v3959
  %5634 = vmatprep.subr.bf16.mxu0 0
  %5635 = vmatpush1.bf16.msra.mxu0 %v3960
  %5636 = vmatprep.subr.bf16.mxu0 0
  %5637 = vmatpush1.bf16.msra.mxu0 %v3961
  %5638 = vmatprep.subr.bf16.mxu0 0
  %5639 = vmatpush1.bf16.msra.mxu0 %v3962
  %5640 = vmatprep.subr.bf16.mxu0 0
  %5641 = vmatpush1.bf16.msra.mxu0 %v3963
  %5642 = vmatprep.subr.bf16.mxu0 0
  %5643 = vmatpush1.bf16.msra.mxu0 %v3964
  %5644 = vmatprep.subr.bf16.mxu0 0
  %5645 = vmatpush1.bf16.msra.mxu0 %v3965
  %5646 = vmatprep.subr.bf16.mxu0 0
  %5647 = vmatpush1.bf16.msra.mxu0 %v3966
  %5648 = vmatprep.subr.bf16.mxu0 0
  %5649 = vmatpush1.bf16.msra.mxu0 %v3967
  %5650 = vmatprep.subr.bf16.mxu0 0
  %5651 = vmatpush1.bf16.msra.mxu0 %v3968
  %5652 = vmatprep.subr.bf16.mxu0 0
  %5653 = vmatpush1.bf16.msra.mxu0 %v3969
  %5654 = vmatprep.subr.bf16.mxu0 0
  %5655 = vmatpush1.bf16.msra.mxu0 %v3970
  %5656 = vmatprep.subr.bf16.mxu0 0
  %5657 = vmatpush1.bf16.msra.mxu0 %v3971
  %5658 = vmatprep.subr.bf16.mxu0 0
  %5659 = vmatpush1.bf16.msra.mxu0 %v3972
  %5660 = vmatprep.subr.bf16.mxu0 0
  %5661 = vmatpush1.bf16.msra.mxu0 %v3973
  %5662 = vmatprep.mubr.bf16.mxu0 %v438
  %5663 = vmatmul.mubr.bf16.gmra.mrb[0].mxu0 %v437
  %v5664 = vpop.f32.mrb[0].mxu0
  %v5665 = vadd.f32 %v5625, %v5664
  %v5666 = vpop.f32.mrb[0].mxu0
  %v5667 = vpop.f32.mrb[0].mxu0
  %v5668 = vpop.f32.mrb[0].mxu0
  %5669 = vdwg.mxu0
  %5670 = vmatprep.subr.bf16.mxu0 0
  %5671 = vmatpush1.bf16.msra.mxu0 %v3974
  %5672 = vmatprep.subr.bf16.mxu0 0
  %5673 = vmatpush1.bf16.msra.mxu0 %v3975
  %5674 = vmatprep.subr.bf16.mxu0 0
  %5675 = vmatpush1.bf16.msra.mxu0 %v3976
  %5676 = vmatprep.subr.bf16.mxu0 0
  %5677 = vmatpush1.bf16.msra.mxu0 %v3977
  %5678 = vmatprep.subr.bf16.mxu0 0
  %5679 = vmatpush1.bf16.msra.mxu0 %v3978
  %5680 = vmatprep.subr.bf16.mxu0 0
  %5681 = vmatpush1.bf16.msra.mxu0 %v3979
  %5682 = vmatprep.subr.bf16.mxu0 0
  %5683 = vmatpush1.bf16.msra.mxu0 %v3980
  %5684 = vmatprep.subr.bf16.mxu0 0
  %5685 = vmatpush1.bf16.msra.mxu0 %v3981
  %5686 = vmatprep.subr.bf16.mxu0 0
  %5687 = vmatpush1.bf16.msra.mxu0 %v3982
  %5688 = vmatprep.subr.bf16.mxu0 0
  %5689 = vmatpush1.bf16.msra.mxu0 %v3983
  %5690 = vmatprep.subr.bf16.mxu0 0
  %5691 = vmatpush1.bf16.msra.mxu0 %v3984
  %5692 = vmatprep.subr.bf16.mxu0 0
  %5693 = vmatpush1.bf16.msra.mxu0 %v3985
  %5694 = vmatprep.subr.bf16.mxu0 0
  %5695 = vmatpush1.bf16.msra.mxu0 %v3986
  %5696 = vmatprep.subr.bf16.mxu0 0
  %5697 = vmatpush1.bf16.msra.mxu0 %v3987
  %5698 = vmatprep.subr.bf16.mxu0 0
  %5699 = vmatpush1.bf16.msra.mxu0 %v3988
  %5700 = vmatprep.subr.bf16.mxu0 0
  %5701 = vmatpush1.bf16.msra.mxu0 %v3989
  %5702 = vmatprep.mubr.bf16.mxu0 %v440
  %5703 = vmatmul.mubr.bf16.gmra.mrb[0].mxu0 %v439
  %v5704 = vpop.f32.mrb[0].mxu0
  %v5705 = vadd.f32 %v5665, %v5704
  %v5706 = vpop.f32.mrb[0].mxu0
  %v5707 = vpop.f32.mrb[0].mxu0
  %v5708 = vpop.f32.mrb[0].mxu0
  %5709 = vdwg.mxu0
  %5710 = vmatprep.subr.bf16.mxu0 0
  %5711 = vmatpush1.bf16.msra.mxu0 %v3990
  %5712 = vmatprep.subr.bf16.mxu0 0
  %5713 = vmatpush1.bf16.msra.mxu0 %v3991
  %5714 = vmatprep.subr.bf16.mxu0 0
  %5715 = vmatpush1.bf16.msra.mxu0 %v3992
  %5716 = vmatprep.subr.bf16.mxu0 0
  %5717 = vmatpush1.bf16.msra.mxu0 %v3993
  %5718 = vmatprep.subr.bf16.mxu0 0
  %5719 = vmatpush1.bf16.msra.mxu0 %v3994
  %5720 = vmatprep.subr.bf16.mxu0 0
  %5721 = vmatpush1.bf16.msra.mxu0 %v3995
  %5722 = vmatprep.subr.bf16.mxu0 0
  %5723 = vmatpush1.bf16.msra.mxu0 %v3996
  %5724 = vmatprep.subr.bf16.mxu0 0
  %5725 = vmatpush1.bf16.msra.mxu0 %v3997
  %5726 = vmatprep.subr.bf16.mxu0 0
  %5727 = vmatpush1.bf16.msra.mxu0 %v3998
  %5728 = vmatprep.subr.bf16.mxu0 0
  %5729 = vmatpush1.bf16.msra.mxu0 %v3999
  %5730 = vmatprep.subr.bf16.mxu0 0
  %5731 = vmatpush1.bf16.msra.mxu0 %v4000
  %5732 = vmatprep.subr.bf16.mxu0 0
  %5733 = vmatpush1.bf16.msra.mxu0 %v4001
  %5734 = vmatprep.subr.bf16.mxu0 0
  %5735 = vmatpush1.bf16.msra.mxu0 %v4002
  %5736 = vmatprep.subr.bf16.mxu0 0
  %5737 = vmatpush1.bf16.msra.mxu0 %v4003
  %5738 = vmatprep.subr.bf16.mxu0 0
  %5739 = vmatpush1.bf16.msra.mxu0 %v4004
  %5740 = vmatprep.subr.bf16.mxu0 0
  %5741 = vmatpush1.bf16.msra.mxu0 %v4005
  %5742 = vmatprep.mubr.bf16.mxu0 %v442
  %5743 = vmatmul.mubr.bf16.gmra.mrb[0].mxu0 %v441
  %v5744 = vpop.f32.mrb[0].mxu0
  %v5745 = vadd.f32 %v5705, %v5744
  %v5746 = vpop.f32.mrb[0].mxu0
  %v5747 = vpop.f32.mrb[0].mxu0
  %v5748 = vpop.f32.mrb[0].mxu0
  %5749 = vdwg.mxu0
  %5750 = vmatprep.subr.bf16.mxu0 0
  %5751 = vmatpush1.bf16.msra.mxu0 %v4006
  %5752 = vmatprep.subr.bf16.mxu0 0
  %5753 = vmatpush1.bf16.msra.mxu0 %v4007
  %5754 = vmatprep.subr.bf16.mxu0 0
  %5755 = vmatpush1.bf16.msra.mxu0 %v4008
  %5756 = vmatprep.subr.bf16.mxu0 0
  %5757 = vmatpush1.bf16.msra.mxu0 %v4009
  %5758 = vmatprep.subr.bf16.mxu0 0
  %5759 = vmatpush1.bf16.msra.mxu0 %v4010
  %5760 = vmatprep.subr.bf16.mxu0 0
  %5761 = vmatpush1.bf16.msra.mxu0 %v4011
  %5762 = vmatprep.subr.bf16.mxu0 0
  %5763 = vmatpush1.bf16.msra.mxu0 %v4012
  %5764 = vmatprep.subr.bf16.mxu0 0
  %5765 = vmatpush1.bf16.msra.mxu0 %v4013
  %5766 = vmatprep.subr.bf16.mxu0 0
  %5767 = vmatpush1.bf16.msra.mxu0 %v4014
  %5768 = vmatprep.subr.bf16.mxu0 0
  %5769 = vmatpush1.bf16.msra.mxu0 %v4015
  %5770 = vmatprep.subr.bf16.mxu0 0
  %5771 = vmatpush1.bf16.msra.mxu0 %v4016
  %5772 = vmatprep.subr.bf16.mxu0 0
  %5773 = vmatpush1.bf16.msra.mxu0 %v4017
  %5774 = vmatprep.subr.bf16.mxu0 0
  %5775 = vmatpush1.bf16.msra.mxu0 %v4018
  %5776 = vmatprep.subr.bf16.mxu0 0
  %5777 = vmatpush1.bf16.msra.mxu0 %v4019
  %5778 = vmatprep.subr.bf16.mxu0 0
  %5779 = vmatpush1.bf16.msra.mxu0 %v4020
  %5780 = vmatprep.subr.bf16.mxu0 0
  %5781 = vmatpush1.bf16.msra.mxu0 %v4021
  %5782 = vmatprep.mubr.bf16.mxu0 %v444
  %5783 = vmatmul.mubr.bf16.gmra.mrb[0].mxu0 %v443
  %v5784 = vpop.f32.mrb[0].mxu0
  %v5785 = vadd.f32 %v5745, %v5784
  %v5786 = vpop.f32.mrb[0].mxu0
  %v5787 = vpop.f32.mrb[0].mxu0
  %v5788 = vpop.f32.mrb[0].mxu0
  %5789 = vdwg.mxu0
  %5790 = vmatprep.subr.bf16.mxu0 0
  %5791 = vmatpush1.bf16.msra.mxu0 %v4022
  %5792 = vmatprep.subr.bf16.mxu0 0
  %5793 = vmatpush1.bf16.msra.mxu0 %v4023
  %5794 = vmatprep.subr.bf16.mxu0 0
  %5795 = vmatpush1.bf16.msra.mxu0 %v4024
  %5796 = vmatprep.subr.bf16.mxu0 0
  %5797 = vmatpush1.bf16.msra.mxu0 %v4025
  %5798 = vmatprep.subr.bf16.mxu0 0
  %5799 = vmatpush1.bf16.msra.mxu0 %v4026
  %5800 = vmatprep.subr.bf16.mxu0 0
  %5801 = vmatpush1.bf16.msra.mxu0 %v4027
  %5802 = vmatprep.subr.bf16.mxu0 0
  %5803 = vmatpush1.bf16.msra.mxu0 %v4028
  %5804 = vmatprep.subr.bf16.mxu0 0
  %5805 = vmatpush1.bf16.msra.mxu0 %v4029
  %5806 = vmatprep.subr.bf16.mxu0 0
  %5807 = vmatpush1.bf16.msra.mxu0 %v4030
  %5808 = vmatprep.subr.bf16.mxu0 0
  %5809 = vmatpush1.bf16.msra.mxu0 %v4031
  %5810 = vmatprep.subr.bf16.mxu0 0
  %5811 = vmatpush1.bf16.msra.mxu0 %v4032
  %5812 = vmatprep.subr.bf16.mxu0 0
  %5813 = vmatpush1.bf16.msra.mxu0 %v4033
  %5814 = vmatprep.subr.bf16.mxu0 0
  %5815 = vmatpush1.bf16.msra.mxu0 %v4034
  %5816 = vmatprep.subr.bf16.mxu0 0
  %5817 = vmatpush1.bf16.msra.mxu0 %v4035
  %5818 = vmatprep.subr.bf16.mxu0 0
  %5819 = vmatpush1.bf16.msra.mxu0 %v4036
  %5820 = vmatprep.subr.bf16.mxu0 0
  %5821 = vmatpush1.bf16.msra.mxu0 %v4037
  %5822 = vmatprep.mubr.bf16.mxu0 %v446
  %5823 = vmatmul.mubr.bf16.gmra.mrb[0].mxu0 %v445
  %v5824 = vpop.f32.mrb[0].mxu0
  %v5825 = vadd.f32 %v5785, %v5824
  %v5826 = vpop.f32.mrb[0].mxu0
  %v5827 = vpop.f32.mrb[0].mxu0
  %v5828 = vpop.f32.mrb[0].mxu0
  %5829 = vdwg.mxu0
  %5830 = vst [vmem:[%s3] sm:$0x3] %v5825
  // Predicated region
  $region14: #{encoder_forward.3} parent=0 // pred_check
    _
  $region15: #{encoder_forward.3} parent=0 // pred_check_branch
    %5832 = sbr.rel (0) target = $region17
  $region16: #{encoder_forward.3} parent=0 // pred_region
    _
  $region17: #{encoder_forward.3} parent=0 // pred_fallthru
    _
  // Predicated region
  $region18: #{encoder_forward.3} parent=0 // pred_check
    _
  $region19: #{encoder_forward.3} parent=0 // pred_check_branch
    %5834 = sbr.rel (0) target = $region21
  $region20: #{encoder_forward.3} parent=0 // pred_region
    _
  $region21: #{encoder_forward.3} parent=0 // pred_fallthru
    _

</llo_original>
